<compile_context>
chip_gen: v6e
topology: v6e:2x2x1
jax: 0.10.0
libtpu: 0.0.40
codegen_flags: <defaults>
</compile_context>

<pallas_src>
import numpy as np
import jax
import jax.numpy as jnp
from jax.experimental import pallas as pl
from jax.experimental.pallas import tpu as pltpu

# ---------------------------------------------------------------------------
# Model configuration (tiny Unet-style encoder/decoder).
# ---------------------------------------------------------------------------
H, W = 16, 16            # input spatial size
HQ, WQ = H // 2, W // 2  # after the 2x2 pool
IN_CH = 5                # spec: in_channels=5
NUM_CLASSES = 3
C1, C2 = 32, 64          # encoder channel widths
C_PAD = 128              # every channel axis zero-padded to 128 lanes
UP_LANE = C2             # conv2 / upsample real channels live in lanes [64:128)
K_WIDE = 9 * C_PAD       # im2col K of a 3x3 conv
W_PAD = 24               # halo-buffer W dim (>= W + 2, multiple of 8)
WQ_PAD = 16              # halo-buffer W dim at half res (>= WQ + 2, mult. of 8)


# ---------------------------------------------------------------------------
# Constant resampling matrices (built once on host, fed to the kernel).
# ---------------------------------------------------------------------------
def _make_pool_matrix(h, w):
    """(h//2*w//2, h*w) average-pool 2x2 matrix (row-major HW flattening)."""
    ho, wo = h // 2, w // 2
    m = np.zeros((ho * wo, h * w), np.float32)
    for y in range(ho):
        for x in range(wo):
            for dy in range(2):
                for dx in range(2):
                    m[y * wo + x, (2 * y + dy) * w + (2 * x + dx)] = 0.25
    return jnp.asarray(m, jnp.bfloat16)   # 0.25 is exact in bf16


def _make_upsample_matrix(ho, wo):
    """(2ho*2wo, ho*wo) nearest-neighbour x2 upsample matrix."""
    h, w = 2 * ho, 2 * wo
    m = np.zeros((h * w, ho * wo), np.float32)
    for y in range(h):
        for x in range(w):
            m[y * w + x, (y // 2) * wo + (x // 2)] = 1.0
    return jnp.asarray(m, jnp.bfloat16)


# ---------------------------------------------------------------------------
# The single fused Pallas kernel: one grid step == one image.
# ---------------------------------------------------------------------------
def _fused_unet_kernel(x_ref, w1_ref, b1_ref, w2_ref, b2_ref, w3_ref, b3_ref,
                       w4_ref, b4_ref, pool_ref, up_ref,
                       o_ref,
                       slab_ref, e1_ref, p1p_ref, dpad_ref):
    f32, bf16 = jnp.float32, jnp.bfloat16

    # Halo buffers: interiors are fully rewritten below; only the 1-px halo
    # must read as zero.  Re-zeroed every step (see module comment) - cheap.
    p1p_ref[...] = jnp.zeros_like(p1p_ref)
    dpad_ref[...] = jnp.zeros_like(dpad_ref)

    def conv3x3(window, rows, w_ref, b_ref):
        """3x3 'same' conv: im2col into a (rows, 9*128) bf16 slab, then ONE
        wide-K MXU dot (accumulation stays inside the MXU), f32 bias+ReLU."""
        for t in range(9):
            ky, kx = divmod(t, 3)
            win = window(ky, kx).reshape(rows, C_PAD)
            slab_ref[0:rows, t * C_PAD:(t + 1) * C_PAD] = win.astype(bf16)
        acc = jnp.dot(slab_ref[0:rows, :], w_ref[...],
                      preferred_element_type=f32)
        return jnp.maximum(acc + b_ref[...], 0.0)          # (rows, 128) f32

    # ---- encoder conv1: 5 -> 32 channels (lanes [0:32)), 16x16 -------------
    e1 = conv3x3(lambda ky, kx: x_ref[0, ky:ky + H, kx:kx + W, :],
                 H * W, w1_ref, b1_ref)
    e1_ref[...] = e1.astype(bf16)

    # ---- 2x2 average-pool as a constant MXU matmul (16x16 -> 8x8) ----------
    # TODO(synk): smp encoders use max-pool; avg-pool keeps this on the MXU.
    p1 = jnp.dot(pool_ref[...], e1_ref[...], preferred_element_type=f32)
    p1p_ref[1:1 + HQ, 1:1 + WQ, :] = p1.reshape(HQ, WQ, C_PAD)

    # ---- encoder conv2: 32 -> 64 channels, outputs land in lanes [64:128) --
    e2 = conv3x3(lambda ky, kx: p1p_ref[ky:ky + HQ, kx:kx + WQ, :],
                 HQ * WQ, w2_ref, b2_ref)

    # ---- nearest-neighbour x2 upsample as a constant MXU matmul ------------
    up = jnp.dot(up_ref[...], e2.astype(bf16), preferred_element_type=f32)

    # ---- skip "concat" == add of disjoint lanes: up in [64:128), e1 in [0:32)
    packed = up + e1_ref[...].astype(f32)
    dpad_ref[1:1 + H, 1:1 + W, :] = packed.reshape(H, W, C_PAD)

    # ---- merged decoder conv3: 96 -> 32 channels, a single 9-tap pass ------
    d1 = conv3x3(lambda ky, kx: dpad_ref[ky:ky + H, kx:kx + W, :],
                 H * W, w3_ref, b3_ref)

    # ---- 1x1 conv head (activation=None); lane-dense 128-wide output -------
    o_ref[0] = jnp.dot(d1.astype(bf16), w4_ref[...],
                       preferred_element_type=f32) + b4_ref[...]


def _fused_forward(x_padded, params):
    n = x_padded.shape[0]
    hw = H * W

    def const2d(shape):
        return pl.BlockSpec(shape, lambda i: (0, 0))

    return pl.pallas_call(
        _fused_unet_kernel,
        out_shape=jax.ShapeDtypeStruct((n, hw, C_PAD), jnp.float32),
        grid_spec=pltpu.PrefetchScalarGridSpec(
            num_scalar_prefetch=0,
            grid=(n,),
            in_specs=[
                pl.BlockSpec((1, H + 2, W_PAD, C_PAD), lambda i: (i, 0, 0, 0)),
                const2d((K_WIDE, C_PAD)), const2d((1, C_PAD)),     # w1, b1
                const2d((K_WIDE, C_PAD)), const2d((1, C_PAD)),     # w2, b2
                const2d((K_WIDE, C_PAD)), const2d((1, C_PAD)),     # w3, b3
                const2d((C_PAD, C_PAD)), const2d((1, C_PAD)),      # w4, b4
                const2d((hw // 4, hw)),                            # pool (64,256)
                const2d((hw, hw // 4)),                            # up   (256,64)
            ],
            out_specs=pl.BlockSpec((1, hw, C_PAD), lambda i: (i, 0, 0)),
            scratch_shapes=[
                pltpu.VMEM((hw, K_WIDE), jnp.bfloat16),             # im2col slab
                pltpu.VMEM((hw, C_PAD), jnp.bfloat16),              # e1 (flat)
                pltpu.VMEM((HQ + 2, WQ_PAD, C_PAD), jnp.float32),   # pooled + halo
                pltpu.VMEM((H + 2, W_PAD, C_PAD), jnp.float32),     # decoder + halo
            ],
        ),
        compiler_params=pltpu.CompilerParams(
            dimension_semantics=("parallel",)),
    )(x_padded, params["w1"], params["b1"], params["w2"], params["b2"],
      params["w3"], params["b3"], params["w4"], params["b4"],
      params["pool"], params["up"])


# ---------------------------------------------------------------------------
# Parameters.
# ---------------------------------------------------------------------------
def init_raw_params(key):
    ks = jax.random.split(key, 8)

    def kaiming(k, shape, fan_in):
        return jax.random.normal(k, shape, jnp.float32) * np.sqrt(2.0 / fan_in)

    def bias(k, n, fan_in):
        bound = 1.0 / np.sqrt(fan_in)
        return jax.random.uniform(k, (n,), jnp.float32, -bound, bound)

    return {
        "w1": kaiming(ks[0], (3, 3, IN_CH, C1), 9 * IN_CH),
        "b1": bias(ks[1], C1, 9 * IN_CH),
        "w2": kaiming(ks[2], (3, 3, C1, C2), 9 * C1),
        "b2": bias(ks[3], C2, 9 * C1),
        "w3": kaiming(ks[4], (3, 3, C2 + C1, C1), 9 * (C2 + C1)),
        "b3": bias(ks[5], C1, 9 * (C2 + C1)),
        "w4": kaiming(ks[6], (C1, NUM_CLASSES), C1),
        "b4": bias(ks[7], NUM_CLASSES, C1),
    }


def pack_params(raw):
    """Pad / reorder weights for the kernel's lane layout (bf16 MXU operands)."""

    def pack_conv(w, in_off, out_off):
        cin, cout = w.shape[2], w.shape[3]
        wp = np.zeros((9, C_PAD, C_PAD), np.float32)
        wp[:, in_off:in_off + cin, out_off:out_off + cout] = (
            np.asarray(w, np.float32).reshape(9, cin, cout))
        return jnp.asarray(wp.reshape(K_WIDE, C_PAD), jnp.bfloat16)

    def pack_bias(b, off):
        bp = np.zeros((1, C_PAD), np.float32)
        bp[0, off:off + b.shape[0]] = np.asarray(b, np.float32)
        return jnp.asarray(bp)

    # Merged decoder weight: torch channel order is concat([up, e1]); in the
    # kernel `up` occupies lanes [64:128) and `e1` lanes [0:32).
    w3 = np.asarray(raw["w3"], np.float32).reshape(9, C2 + C1, C1)
    w3p = np.zeros((9, C_PAD, C_PAD), np.float32)
    w3p[:, UP_LANE:UP_LANE + C2, :C1] = w3[:, :C2, :]    # upsampled path
    w3p[:, 0:C1, :C1] = w3[:, C2:, :]                    # e1 skip path

    w4p = np.zeros((C_PAD, C_PAD), np.float32)
    w4p[:C1, :NUM_CLASSES] = np.asarray(raw["w4"], np.float32)

    return {
        "w1": pack_conv(raw["w1"], 0, 0),
        "b1": pack_bias(raw["b1"], 0),
        "w2": pack_conv(raw["w2"], 0, UP_LANE),   # conv2 outputs -> lanes 64:128
        "b2": pack_bias(raw["b2"], UP_LANE),
        "w3": jnp.asarray(w3p.reshape(K_WIDE, C_PAD), jnp.bfloat16),
        "b3": pack_bias(raw["b3"], 0),
        "w4": jnp.asarray(w4p, jnp.bfloat16),
        "b4": pack_bias(raw["b4"], 0),
        "pool": _make_pool_matrix(H, W),        # (64, 256) avg-pool 2x2
        "up": _make_upsample_matrix(HQ, WQ),    # (256, 64) nearest x2
    }


# ---------------------------------------------------------------------------
# Host wrapper + pure-JAX reference.
# ---------------------------------------------------------------------------
@jax.jit
def model_forward(x_nchw, params):
    n, cin, h, w = x_nchw.shape
    assert (h, w) == (H, W) and cin == IN_CH
    # NCHW (PyTorch) -> NHWC; zero-pad channels to 128 lanes, add 1-px spatial
    # halo and right-pad the W axis to a multiple of 8.
    x = jnp.transpose(x_nchw, (0, 2, 3, 1)).astype(jnp.float32)
    x = jnp.pad(x, ((0, 0), (1, 1), (1, W_PAD - W - 1), (0, C_PAD - cin)))
    out = _fused_forward(x, params)                         # (n, H*W, 128) f32
    out = out.reshape(n, H, W, C_PAD)[..., :NUM_CLASSES]    # drop lane padding
    return jnp.transpose(out, (0, 3, 1, 2))                 # NCHW logits, f32


def reference_forward(x_nchw, raw):
    """Pure-JAX reference (weights rounded through bf16 to mirror storage)."""
    rw = lambda k: raw[k].astype(jnp.bfloat16).astype(jnp.float32)
    x = jnp.transpose(x_nchw, (0, 2, 3, 1)).astype(jnp.float32)

    def conv(h, w, b):
        y = jax.lax.conv_general_dilated(
            h, w, (1, 1), "SAME", dimension_numbers=("NHWC", "HWIO", "NHWC"))
        return jax.nn.relu(y + b)

    n = x.shape[0]
    e1 = conv(x, rw("w1"), raw["b1"])
    p1 = e1.reshape(n, HQ, 2, WQ, 2, C1).mean(axis=(2, 4))
    e2 = conv(p1, rw("w2"), raw["b2"])
    up = jnp.repeat(jnp.repeat(e2, 2, axis=1), 2, axis=2)
    d1 = conv(jnp.concatenate([up, e1], axis=-1), rw("w3"), raw["b3"])
    logits = jnp.einsum("nhwc,ck->nhwk", d1, rw("w4")) + raw["b4"]
    return jnp.transpose(logits, (0, 3, 1, 2))


if __name__ == "__main__":
    key = jax.random.PRNGKey(0)
    k_x, k_p = jax.random.split(key)

    x = jax.random.normal(k_x, (2, IN_CH, H, W), jnp.float32)   # NCHW, in_ch=5
    raw = init_raw_params(k_p)
    params = pack_params(raw)

    out = model_forward(x, params)
    jax.block_until_ready(out)

    assert out.shape == (2, NUM_CLASSES, H, W), out.shape
    assert out.dtype == jnp.float32
    assert bool(jnp.all(jnp.isfinite(out)))

    # Numerical check vs. pure-JAX reference: bf16 MXU operands with f32
    # accumulation -> small drift; a structural bug would be an O(1) error.
    ref = reference_forward(x, raw)
    np.testing.assert_allclose(np.asarray(out), np.asarray(ref),
                               atol=1e-1, rtol=1e-1)
    print("KERNEL_OK")
</pallas_src>

<mosaic_0001>
module attributes {stable_mosaic.version = 11 : i64} {
  func.func @_fused_unet_kernel(%arg0: i32, %arg1: memref<1x18x24x128xf32, #tpu.memory_space<vmem>>, %arg2: memref<1152x128xbf16, #tpu.memory_space<vmem>>, %arg3: memref<1x128xf32, #tpu.memory_space<vmem>>, %arg4: memref<1152x128xbf16, #tpu.memory_space<vmem>>, %arg5: memref<1x128xf32, #tpu.memory_space<vmem>>, %arg6: memref<1152x128xbf16, #tpu.memory_space<vmem>>, %arg7: memref<1x128xf32, #tpu.memory_space<vmem>>, %arg8: memref<128x128xbf16, #tpu.memory_space<vmem>>, %arg9: memref<1x128xf32, #tpu.memory_space<vmem>>, %arg10: memref<64x256xbf16, #tpu.memory_space<vmem>>, %arg11: memref<256x64xbf16, #tpu.memory_space<vmem>>, %arg12: memref<1x256x128xf32, #tpu.memory_space<vmem>>, %arg13: memref<256x1152xbf16, #tpu.memory_space<vmem>>, %arg14: memref<256x128xbf16, #tpu.memory_space<vmem>>, %arg15: memref<10x16x128xf32, #tpu.memory_space<vmem>>, %arg16: memref<18x24x128xf32, #tpu.memory_space<vmem>>) attributes {dimension_semantics = [#tpu.dimension_semantics<parallel>], iteration_bounds = array<i64: 2>, scalar_prefetch = 0 : i64, scratch_operands = 4 : i64, tpu.core_type = #tpu.core_type<tc>, window_params = [{transform_indices = @transform_0, window_bounds = array<i64: 1, 18, 24, 128>}, {pipeline_mode = #tpu.pipeline_mode<synchronous>, transform_indices = @transform_1, window_bounds = array<i64: 1152, 128>}, {pipeline_mode = #tpu.pipeline_mode<synchronous>, transform_indices = @transform_2, window_bounds = array<i64: 1, 128>}, {pipeline_mode = #tpu.pipeline_mode<synchronous>, transform_indices = @transform_3, window_bounds = array<i64: 1152, 128>}, {pipeline_mode = #tpu.pipeline_mode<synchronous>, transform_indices = @transform_4, window_bounds = array<i64: 1, 128>}, {pipeline_mode = #tpu.pipeline_mode<synchronous>, transform_indices = @transform_5, window_bounds = array<i64: 1152, 128>}, {pipeline_mode = #tpu.pipeline_mode<synchronous>, transform_indices = @transform_6, window_bounds = array<i64: 1, 128>}, {pipeline_mode = #tpu.pipeline_mode<synchronous>, transform_indices = @transform_7, window_bounds = array<i64: 128, 128>}, {pipeline_mode = #tpu.pipeline_mode<synchronous>, transform_indices = @transform_8, window_bounds = array<i64: 1, 128>}, {pipeline_mode = #tpu.pipeline_mode<synchronous>, transform_indices = @transform_9, window_bounds = array<i64: 64, 256>}, {pipeline_mode = #tpu.pipeline_mode<synchronous>, transform_indices = @transform_10, window_bounds = array<i64: 256, 64>}, {transform_indices = @transform_11, window_bounds = array<i64: 1, 256, 128>}]} {
    %cst = arith.constant 0.000000e+00 : f32
    %0 = vector.broadcast %cst : f32 to vector<10x16x128xf32>
    %c0 = arith.constant 0 : index
    %c0_0 = arith.constant 0 : index
    %c0_1 = arith.constant 0 : index
    %1 = vector.load %arg15[%c0, %c0_0, %c0_1] : memref<10x16x128xf32, #tpu.memory_space<vmem>>, vector<10x16x128xf32>
    tpu.vector_store %arg15[%c0, %c0_0, %c0_1], %0 {strides = array<i32>} : memref<10x16x128xf32, #tpu.memory_space<vmem>>, vector<10x16x128xf32>,
    %cst_2 = arith.constant 0.000000e+00 : f32
    %2 = vector.broadcast %cst_2 : f32 to vector<18x24x128xf32>
    %c0_3 = arith.constant 0 : index
    %c0_4 = arith.constant 0 : index
    %c0_5 = arith.constant 0 : index
    %3 = vector.load %arg16[%c0_3, %c0_4, %c0_5] : memref<18x24x128xf32, #tpu.memory_space<vmem>>, vector<18x24x128xf32>
    tpu.vector_store %arg16[%c0_3, %c0_4, %c0_5], %2 {strides = array<i32>} : memref<18x24x128xf32, #tpu.memory_space<vmem>>, vector<18x24x128xf32>,
    %c0_6 = arith.constant 0 : index
    %c0_7 = arith.constant 0 : index
    %c0_8 = arith.constant 0 : index
    %c0_9 = arith.constant 0 : index
    %4 = vector.load %arg1[%c0_6, %c0_7, %c0_8, %c0_9] : memref<1x18x24x128xf32, #tpu.memory_space<vmem>>, vector<1x16x16x128xf32>
    %5 = vector.shape_cast %4 : vector<1x16x16x128xf32> to vector<16x16x128xf32>
    %6 = vector.shape_cast %5 : vector<16x16x128xf32> to vector<256x128xf32>
    %7 = arith.truncf %6 : vector<256x128xf32> to vector<256x128xbf16>
    %c0_10 = arith.constant 0 : index
    %c0_11 = arith.constant 0 : index
    %8 = vector.load %arg13[%c0_10, %c0_11] : memref<256x1152xbf16, #tpu.memory_space<vmem>>, vector<256x128xbf16>
    tpu.vector_store %arg13[%c0_10, %c0_11], %7 {strides = array<i32>} : memref<256x1152xbf16, #tpu.memory_space<vmem>>, vector<256x128xbf16>,
    %c0_12 = arith.constant 0 : index
    %c0_13 = arith.constant 0 : index
    %c1 = arith.constant 1 : index
    %c0_14 = arith.constant 0 : index
    %9 = vector.load %arg1[%c0_12, %c0_13, %c1, %c0_14] : memref<1x18x24x128xf32, #tpu.memory_space<vmem>>, vector<1x16x16x128xf32>
    %10 = vector.shape_cast %9 : vector<1x16x16x128xf32> to vector<16x16x128xf32>
    %11 = vector.shape_cast %10 : vector<16x16x128xf32> to vector<256x128xf32>
    %12 = arith.truncf %11 : vector<256x128xf32> to vector<256x128xbf16>
    %c0_15 = arith.constant 0 : index
    %c128 = arith.constant 128 : index
    %13 = vector.load %arg13[%c0_15, %c128] : memref<256x1152xbf16, #tpu.memory_space<vmem>>, vector<256x128xbf16>
    tpu.vector_store %arg13[%c0_15, %c128], %12 {strides = array<i32>} : memref<256x1152xbf16, #tpu.memory_space<vmem>>, vector<256x128xbf16>,
    %c0_16 = arith.constant 0 : index
    %c0_17 = arith.constant 0 : index
    %c2 = arith.constant 2 : index
    %c0_18 = arith.constant 0 : index
    %14 = vector.load %arg1[%c0_16, %c0_17, %c2, %c0_18] : memref<1x18x24x128xf32, #tpu.memory_space<vmem>>, vector<1x16x16x128xf32>
    %15 = vector.shape_cast %14 : vector<1x16x16x128xf32> to vector<16x16x128xf32>
    %16 = vector.shape_cast %15 : vector<16x16x128xf32> to vector<256x128xf32>
    %17 = arith.truncf %16 : vector<256x128xf32> to vector<256x128xbf16>
    %c0_19 = arith.constant 0 : index
    %c256 = arith.constant 256 : index
    %18 = vector.load %arg13[%c0_19, %c256] : memref<256x1152xbf16, #tpu.memory_space<vmem>>, vector<256x128xbf16>
    tpu.vector_store %arg13[%c0_19, %c256], %17 {strides = array<i32>} : memref<256x1152xbf16, #tpu.memory_space<vmem>>, vector<256x128xbf16>,
    %c0_20 = arith.constant 0 : index
    %c1_21 = arith.constant 1 : index
    %c0_22 = arith.constant 0 : index
    %c0_23 = arith.constant 0 : index
    %19 = vector.load %arg1[%c0_20, %c1_21, %c0_22, %c0_23] : memref<1x18x24x128xf32, #tpu.memory_space<vmem>>, vector<1x16x16x128xf32>
    %20 = vector.shape_cast %19 : vector<1x16x16x128xf32> to vector<16x16x128xf32>
    %21 = vector.shape_cast %20 : vector<16x16x128xf32> to vector<256x128xf32>
    %22 = arith.truncf %21 : vector<256x128xf32> to vector<256x128xbf16>
    %c0_24 = arith.constant 0 : index
    %c384 = arith.constant 384 : index
    %23 = vector.load %arg13[%c0_24, %c384] : memref<256x1152xbf16, #tpu.memory_space<vmem>>, vector<256x128xbf16>
    tpu.vector_store %arg13[%c0_24, %c384], %22 {strides = array<i32>} : memref<256x1152xbf16, #tpu.memory_space<vmem>>, vector<256x128xbf16>,
    %c0_25 = arith.constant 0 : index
    %c1_26 = arith.constant 1 : index
    %c1_27 = arith.constant 1 : index
    %c0_28 = arith.constant 0 : index
    %24 = vector.load %arg1[%c0_25, %c1_26, %c1_27, %c0_28] : memref<1x18x24x128xf32, #tpu.memory_space<vmem>>, vector<1x16x16x128xf32>
    %25 = vector.shape_cast %24 : vector<1x16x16x128xf32> to vector<16x16x128xf32>
    %26 = vector.shape_cast %25 : vector<16x16x128xf32> to vector<256x128xf32>
    %27 = arith.truncf %26 : vector<256x128xf32> to vector<256x128xbf16>
    %c0_29 = arith.constant 0 : index
    %c512 = arith.constant 512 : index
    %28 = vector.load %arg13[%c0_29, %c512] : memref<256x1152xbf16, #tpu.memory_space<vmem>>, vector<256x128xbf16>
    tpu.vector_store %arg13[%c0_29, %c512], %27 {strides = array<i32>} : memref<256x1152xbf16, #tpu.memory_space<vmem>>, vector<256x128xbf16>,
    %c0_30 = arith.constant 0 : index
    %c1_31 = arith.constant 1 : index
    %c2_32 = arith.constant 2 : index
    %c0_33 = arith.constant 0 : index
    %29 = vector.load %arg1[%c0_30, %c1_31, %c2_32, %c0_33] : memref<1x18x24x128xf32, #tpu.memory_space<vmem>>, vector<1x16x16x128xf32>
    %30 = vector.shape_cast %29 : vector<1x16x16x128xf32> to vector<16x16x128xf32>
    %31 = vector.shape_cast %30 : vector<16x16x128xf32> to vector<256x128xf32>
    %32 = arith.truncf %31 : vector<256x128xf32> to vector<256x128xbf16>
    %c0_34 = arith.constant 0 : index
    %c640 = arith.constant 640 : index
    %33 = vector.load %arg13[%c0_34, %c640] : memref<256x1152xbf16, #tpu.memory_space<vmem>>, vector<256x128xbf16>
    tpu.vector_store %arg13[%c0_34, %c640], %32 {strides = array<i32>} : memref<256x1152xbf16, #tpu.memory_space<vmem>>, vector<256x128xbf16>,
    %c0_35 = arith.constant 0 : index
    %c2_36 = arith.constant 2 : index
    %c0_37 = arith.constant 0 : index
    %c0_38 = arith.constant 0 : index
    %34 = vector.load %arg1[%c0_35, %c2_36, %c0_37, %c0_38] : memref<1x18x24x128xf32, #tpu.memory_space<vmem>>, vector<1x16x16x128xf32>
    %35 = vector.shape_cast %34 : vector<1x16x16x128xf32> to vector<16x16x128xf32>
    %36 = vector.shape_cast %35 : vector<16x16x128xf32> to vector<256x128xf32>
    %37 = arith.truncf %36 : vector<256x128xf32> to vector<256x128xbf16>
    %c0_39 = arith.constant 0 : index
    %c768 = arith.constant 768 : index
    %38 = vector.load %arg13[%c0_39, %c768] : memref<256x1152xbf16, #tpu.memory_space<vmem>>, vector<256x128xbf16>
    tpu.vector_store %arg13[%c0_39, %c768], %37 {strides = array<i32>} : memref<256x1152xbf16, #tpu.memory_space<vmem>>, vector<256x128xbf16>,
    %c0_40 = arith.constant 0 : index
    %c2_41 = arith.constant 2 : index
    %c1_42 = arith.constant 1 : index
    %c0_43 = arith.constant 0 : index
    %39 = vector.load %arg1[%c0_40, %c2_41, %c1_42, %c0_43] : memref<1x18x24x128xf32, #tpu.memory_space<vmem>>, vector<1x16x16x128xf32>
    %40 = vector.shape_cast %39 : vector<1x16x16x128xf32> to vector<16x16x128xf32>
    %41 = vector.shape_cast %40 : vector<16x16x128xf32> to vector<256x128xf32>
    %42 = arith.truncf %41 : vector<256x128xf32> to vector<256x128xbf16>
    %c0_44 = arith.constant 0 : index
    %c896 = arith.constant 896 : index
    %43 = vector.load %arg13[%c0_44, %c896] : memref<256x1152xbf16, #tpu.memory_space<vmem>>, vector<256x128xbf16>
    tpu.vector_store %arg13[%c0_44, %c896], %42 {strides = array<i32>} : memref<256x1152xbf16, #tpu.memory_space<vmem>>, vector<256x128xbf16>,
    %c0_45 = arith.constant 0 : index
    %c2_46 = arith.constant 2 : index
    %c2_47 = arith.constant 2 : index
    %c0_48 = arith.constant 0 : index
    %44 = vector.load %arg1[%c0_45, %c2_46, %c2_47, %c0_48] : memref<1x18x24x128xf32, #tpu.memory_space<vmem>>, vector<1x16x16x128xf32>
    %45 = vector.shape_cast %44 : vector<1x16x16x128xf32> to vector<16x16x128xf32>
    %46 = vector.shape_cast %45 : vector<16x16x128xf32> to vector<256x128xf32>
    %47 = arith.truncf %46 : vector<256x128xf32> to vector<256x128xbf16>
    %c0_49 = arith.constant 0 : index
    %c1024 = arith.constant 1024 : index
    %48 = vector.load %arg13[%c0_49, %c1024] : memref<256x1152xbf16, #tpu.memory_space<vmem>>, vector<256x128xbf16>
    tpu.vector_store %arg13[%c0_49, %c1024], %47 {strides = array<i32>} : memref<256x1152xbf16, #tpu.memory_space<vmem>>, vector<256x128xbf16>,
    %c0_50 = arith.constant 0 : index
    %c0_51 = arith.constant 0 : index
    %49 = vector.load %arg13[%c0_50, %c0_51] : memref<256x1152xbf16, #tpu.memory_space<vmem>>, vector<256x1152xbf16>
    %c0_52 = arith.constant 0 : index
    %c0_53 = arith.constant 0 : index
    %50 = vector.load %arg2[%c0_52, %c0_53] : memref<1152x128xbf16, #tpu.memory_space<vmem>>, vector<1152x128xbf16>
    %cst_54 = arith.constant dense<0.000000e+00> : vector<256x128xf32>
    %51 = tpu.matmul %49, %50, %cst_54 {dimension_numbers = #tpu.dot_dimension_numbers<[1], [0], [0], [1], [0, 0, 1, 1], [], []>} : vector<256x1152xbf16>, vector<1152x128xbf16>, vector<256x128xf32> -> vector<256x128xf32>
    %c0_55 = arith.constant 0 : index
    %c0_56 = arith.constant 0 : index
    %52 = vector.load %arg3[%c0_55, %c0_56] : memref<1x128xf32, #tpu.memory_space<vmem>>, vector<1x128xf32>
    %53 = vector.broadcast %52 : vector<1x128xf32> to vector<256x128xf32>
    %54 = arith.addf %51, %53 : vector<256x128xf32>
    %cst_57 = arith.constant 0.000000e+00 : f32
    %55 = vector.broadcast %cst_57 : f32 to vector<256x128xf32>
    %56 = arith.maximumf %54, %55 : vector<256x128xf32>
    %57 = arith.truncf %56 : vector<256x128xf32> to vector<256x128xbf16>
    %c0_58 = arith.constant 0 : index
    %c0_59 = arith.constant 0 : index
    %58 = vector.load %arg14[%c0_58, %c0_59] : memref<256x128xbf16, #tpu.memory_space<vmem>>, vector<256x128xbf16>
    tpu.vector_store %arg14[%c0_58, %c0_59], %57 {strides = array<i32>} : memref<256x128xbf16, #tpu.memory_space<vmem>>, vector<256x128xbf16>,
    %c0_60 = arith.constant 0 : index
    %c0_61 = arith.constant 0 : index
    %59 = vector.load %arg10[%c0_60, %c0_61] : memref<64x256xbf16, #tpu.memory_space<vmem>>, vector<64x256xbf16>
    %c0_62 = arith.constant 0 : index
    %c0_63 = arith.constant 0 : index
    %60 = vector.load %arg14[%c0_62, %c0_63] : memref<256x128xbf16, #tpu.memory_space<vmem>>, vector<256x128xbf16>
    %cst_64 = arith.constant dense<0.000000e+00> : vector<64x128xf32>
    %61 = tpu.matmul %59, %60, %cst_64 {dimension_numbers = #tpu.dot_dimension_numbers<[1], [0], [0], [1], [0, 0, 1, 1], [], []>} : vector<64x256xbf16>, vector<256x128xbf16>, vector<64x128xf32> -> vector<64x128xf32>
    %62 = vector.shape_cast %61 : vector<64x128xf32> to vector<8x8x128xf32>
    %c1_65 = arith.constant 1 : index
    %c1_66 = arith.constant 1 : index
    %c0_67 = arith.constant 0 : index
    %63 = vector.load %arg15[%c1_65, %c1_66, %c0_67] : memref<10x16x128xf32, #tpu.memory_space<vmem>>, vector<8x8x128xf32>
    tpu.vector_store %arg15[%c1_65, %c1_66, %c0_67], %62 {strides = array<i32>} : memref<10x16x128xf32, #tpu.memory_space<vmem>>, vector<8x8x128xf32>,
    %c0_68 = arith.constant 0 : index
    %c0_69 = arith.constant 0 : index
    %c0_70 = arith.constant 0 : index
    %64 = vector.load %arg15[%c0_68, %c0_69, %c0_70] : memref<10x16x128xf32, #tpu.memory_space<vmem>>, vector<8x8x128xf32>
    %65 = vector.shape_cast %64 : vector<8x8x128xf32> to vector<64x128xf32>
    %66 = arith.truncf %65 : vector<64x128xf32> to vector<64x128xbf16>
    %c0_71 = arith.constant 0 : index
    %c0_72 = arith.constant 0 : index
    %67 = vector.load %arg13[%c0_71, %c0_72] : memref<256x1152xbf16, #tpu.memory_space<vmem>>, vector<64x128xbf16>
    tpu.vector_store %arg13[%c0_71, %c0_72], %66 {strides = array<i32>} : memref<256x1152xbf16, #tpu.memory_space<vmem>>, vector<64x128xbf16>,
    %c0_73 = arith.constant 0 : index
    %c1_74 = arith.constant 1 : index
    %c0_75 = arith.constant 0 : index
    %68 = vector.load %arg15[%c0_73, %c1_74, %c0_75] : memref<10x16x128xf32, #tpu.memory_space<vmem>>, vector<8x8x128xf32>
    %69 = vector.shape_cast %68 : vector<8x8x128xf32> to vector<64x128xf32>
    %70 = arith.truncf %69 : vector<64x128xf32> to vector<64x128xbf16>
    %c0_76 = arith.constant 0 : index
    %c128_77 = arith.constant 128 : index
    %71 = vector.load %arg13[%c0_76, %c128_77] : memref<256x1152xbf16, #tpu.memory_space<vmem>>, vector<64x128xbf16>
    tpu.vector_store %arg13[%c0_76, %c128_77], %70 {strides = array<i32>} : memref<256x1152xbf16, #tpu.memory_space<vmem>>, vector<64x128xbf16>,
    %c0_78 = arith.constant 0 : index
    %c2_79 = arith.constant 2 : index
    %c0_80 = arith.constant 0 : index
    %72 = vector.load %arg15[%c0_78, %c2_79, %c0_80] : memref<10x16x128xf32, #tpu.memory_space<vmem>>, vector<8x8x128xf32>
    %73 = vector.shape_cast %72 : vector<8x8x128xf32> to vector<64x128xf32>
    %74 = arith.truncf %73 : vector<64x128xf32> to vector<64x128xbf16>
    %c0_81 = arith.constant 0 : index
    %c256_82 = arith.constant 256 : index
    %75 = vector.load %arg13[%c0_81, %c256_82] : memref<256x1152xbf16, #tpu.memory_space<vmem>>, vector<64x128xbf16>
    tpu.vector_store %arg13[%c0_81, %c256_82], %74 {strides = array<i32>} : memref<256x1152xbf16, #tpu.memory_space<vmem>>, vector<64x128xbf16>,
    %c1_83 = arith.constant 1 : index
    %c0_84 = arith.constant 0 : index
    %c0_85 = arith.constant 0 : index
    %76 = vector.load %arg15[%c1_83, %c0_84, %c0_85] : memref<10x16x128xf32, #tpu.memory_space<vmem>>, vector<8x8x128xf32>
    %77 = vector.shape_cast %76 : vector<8x8x128xf32> to vector<64x128xf32>
    %78 = arith.truncf %77 : vector<64x128xf32> to vector<64x128xbf16>
    %c0_86 = arith.constant 0 : index
    %c384_87 = arith.constant 384 : index
    %79 = vector.load %arg13[%c0_86, %c384_87] : memref<256x1152xbf16, #tpu.memory_space<vmem>>, vector<64x128xbf16>
    tpu.vector_store %arg13[%c0_86, %c384_87], %78 {strides = array<i32>} : memref<256x1152xbf16, #tpu.memory_space<vmem>>, vector<64x128xbf16>,
    %c1_88 = arith.constant 1 : index
    %c1_89 = arith.constant 1 : index
    %c0_90 = arith.constant 0 : index
    %80 = vector.load %arg15[%c1_88, %c1_89, %c0_90] : memref<10x16x128xf32, #tpu.memory_space<vmem>>, vector<8x8x128xf32>
    %81 = vector.shape_cast %80 : vector<8x8x128xf32> to vector<64x128xf32>
    %82 = arith.truncf %81 : vector<64x128xf32> to vector<64x128xbf16>
    %c0_91 = arith.constant 0 : index
    %c512_92 = arith.constant 512 : index
    %83 = vector.load %arg13[%c0_91, %c512_92] : memref<256x1152xbf16, #tpu.memory_space<vmem>>, vector<64x128xbf16>
    tpu.vector_store %arg13[%c0_91, %c512_92], %82 {strides = array<i32>} : memref<256x1152xbf16, #tpu.memory_space<vmem>>, vector<64x128xbf16>,
    %c1_93 = arith.constant 1 : index
    %c2_94 = arith.constant 2 : index
    %c0_95 = arith.constant 0 : index
    %84 = vector.load %arg15[%c1_93, %c2_94, %c0_95] : memref<10x16x128xf32, #tpu.memory_space<vmem>>, vector<8x8x128xf32>
    %85 = vector.shape_cast %84 : vector<8x8x128xf32> to vector<64x128xf32>
    %86 = arith.truncf %85 : vector<64x128xf32> to vector<64x128xbf16>
    %c0_96 = arith.constant 0 : index
    %c640_97 = arith.constant 640 : index
    %87 = vector.load %arg13[%c0_96, %c640_97] : memref<256x1152xbf16, #tpu.memory_space<vmem>>, vector<64x128xbf16>
    tpu.vector_store %arg13[%c0_96, %c640_97], %86 {strides = array<i32>} : memref<256x1152xbf16, #tpu.memory_space<vmem>>, vector<64x128xbf16>,
    %c2_98 = arith.constant 2 : index
    %c0_99 = arith.constant 0 : index
    %c0_100 = arith.constant 0 : index
    %88 = vector.load %arg15[%c2_98, %c0_99, %c0_100] : memref<10x16x128xf32, #tpu.memory_space<vmem>>, vector<8x8x128xf32>
    %89 = vector.shape_cast %88 : vector<8x8x128xf32> to vector<64x128xf32>
    %90 = arith.truncf %89 : vector<64x128xf32> to vector<64x128xbf16>
    %c0_101 = arith.constant 0 : index
    %c768_102 = arith.constant 768 : index
    %91 = vector.load %arg13[%c0_101, %c768_102] : memref<256x1152xbf16, #tpu.memory_space<vmem>>, vector<64x128xbf16>
    tpu.vector_store %arg13[%c0_101, %c768_102], %90 {strides = array<i32>} : memref<256x1152xbf16, #tpu.memory_space<vmem>>, vector<64x128xbf16>,
    %c2_103 = arith.constant 2 : index
    %c1_104 = arith.constant 1 : index
    %c0_105 = arith.constant 0 : index
    %92 = vector.load %arg15[%c2_103, %c1_104, %c0_105] : memref<10x16x128xf32, #tpu.memory_space<vmem>>, vector<8x8x128xf32>
    %93 = vector.shape_cast %92 : vector<8x8x128xf32> to vector<64x128xf32>
    %94 = arith.truncf %93 : vector<64x128xf32> to vector<64x128xbf16>
    %c0_106 = arith.constant 0 : index
    %c896_107 = arith.constant 896 : index
    %95 = vector.load %arg13[%c0_106, %c896_107] : memref<256x1152xbf16, #tpu.memory_space<vmem>>, vector<64x128xbf16>
    tpu.vector_store %arg13[%c0_106, %c896_107], %94 {strides = array<i32>} : memref<256x1152xbf16, #tpu.memory_space<vmem>>, vector<64x128xbf16>,
    %c2_108 = arith.constant 2 : index
    %c2_109 = arith.constant 2 : index
    %c0_110 = arith.constant 0 : index
    %96 = vector.load %arg15[%c2_108, %c2_109, %c0_110] : memref<10x16x128xf32, #tpu.memory_space<vmem>>, vector<8x8x128xf32>
    %97 = vector.shape_cast %96 : vector<8x8x128xf32> to vector<64x128xf32>
    %98 = arith.truncf %97 : vector<64x128xf32> to vector<64x128xbf16>
    %c0_111 = arith.constant 0 : index
    %c1024_112 = arith.constant 1024 : index
    %99 = vector.load %arg13[%c0_111, %c1024_112] : memref<256x1152xbf16, #tpu.memory_space<vmem>>, vector<64x128xbf16>
    tpu.vector_store %arg13[%c0_111, %c1024_112], %98 {strides = array<i32>} : memref<256x1152xbf16, #tpu.memory_space<vmem>>, vector<64x128xbf16>,
    %c0_113 = arith.constant 0 : index
    %c0_114 = arith.constant 0 : index
    %100 = vector.load %arg13[%c0_113, %c0_114] : memref<256x1152xbf16, #tpu.memory_space<vmem>>, vector<64x1152xbf16>
    %c0_115 = arith.constant 0 : index
    %c0_116 = arith.constant 0 : index
    %101 = vector.load %arg4[%c0_115, %c0_116] : memref<1152x128xbf16, #tpu.memory_space<vmem>>, vector<1152x128xbf16>
    %cst_117 = arith.constant dense<0.000000e+00> : vector<64x128xf32>
    %102 = tpu.matmul %100, %101, %cst_117 {dimension_numbers = #tpu.dot_dimension_numbers<[1], [0], [0], [1], [0, 0, 1, 1], [], []>} : vector<64x1152xbf16>, vector<1152x128xbf16>, vector<64x128xf32> -> vector<64x128xf32>
    %c0_118 = arith.constant 0 : index
    %c0_119 = arith.constant 0 : index
    %103 = vector.load %arg5[%c0_118, %c0_119] : memref<1x128xf32, #tpu.memory_space<vmem>>, vector<1x128xf32>
    %104 = vector.broadcast %103 : vector<1x128xf32> to vector<64x128xf32>
    %105 = arith.addf %102, %104 : vector<64x128xf32>
    %cst_120 = arith.constant 0.000000e+00 : f32
    %106 = vector.broadcast %cst_120 : f32 to vector<64x128xf32>
    %107 = arith.maximumf %105, %106 : vector<64x128xf32>
    %c0_121 = arith.constant 0 : index
    %c0_122 = arith.constant 0 : index
    %108 = vector.load %arg11[%c0_121, %c0_122] : memref<256x64xbf16, #tpu.memory_space<vmem>>, vector<256x64xbf16>
    %109 = arith.truncf %107 : vector<64x128xf32> to vector<64x128xbf16>
    %cst_123 = arith.constant dense<0.000000e+00> : vector<256x128xf32>
    %110 = tpu.matmul %108, %109, %cst_123 {dimension_numbers = #tpu.dot_dimension_numbers<[1], [0], [0], [1], [0, 0, 1, 1], [], []>} : vector<256x64xbf16>, vector<64x128xbf16>, vector<256x128xf32> -> vector<256x128xf32>
    %c0_124 = arith.constant 0 : index
    %c0_125 = arith.constant 0 : index
    %111 = vector.load %arg14[%c0_124, %c0_125] : memref<256x128xbf16, #tpu.memory_space<vmem>>, vector<256x128xbf16>
    %112 = arith.extf %111 : vector<256x128xbf16> to vector<256x128xf32>
    %113 = arith.addf %110, %112 : vector<256x128xf32>
    %114 = vector.shape_cast %113 : vector<256x128xf32> to vector<16x16x128xf32>
    %c1_126 = arith.constant 1 : index
    %c1_127 = arith.constant 1 : index
    %c0_128 = arith.constant 0 : index
    %115 = vector.load %arg16[%c1_126, %c1_127, %c0_128] : memref<18x24x128xf32, #tpu.memory_space<vmem>>, vector<16x16x128xf32>
    tpu.vector_store %arg16[%c1_126, %c1_127, %c0_128], %114 {strides = array<i32>} : memref<18x24x128xf32, #tpu.memory_space<vmem>>, vector<16x16x128xf32>,
    %c0_129 = arith.constant 0 : index
    %c0_130 = arith.constant 0 : index
    %c0_131 = arith.constant 0 : index
    %116 = vector.load %arg16[%c0_129, %c0_130, %c0_131] : memref<18x24x128xf32, #tpu.memory_space<vmem>>, vector<16x16x128xf32>
    %117 = vector.shape_cast %116 : vector<16x16x128xf32> to vector<256x128xf32>
    %118 = arith.truncf %117 : vector<256x128xf32> to vector<256x128xbf16>
    %c0_132 = arith.constant 0 : index
    %c0_133 = arith.constant 0 : index
    %119 = vector.load %arg13[%c0_132, %c0_133] : memref<256x1152xbf16, #tpu.memory_space<vmem>>, vector<256x128xbf16>
    tpu.vector_store %arg13[%c0_132, %c0_133], %118 {strides = array<i32>} : memref<256x1152xbf16, #tpu.memory_space<vmem>>, vector<256x128xbf16>,
    %c0_134 = arith.constant 0 : index
    %c1_135 = arith.constant 1 : index
    %c0_136 = arith.constant 0 : index
    %120 = vector.load %arg16[%c0_134, %c1_135, %c0_136] : memref<18x24x128xf32, #tpu.memory_space<vmem>>, vector<16x16x128xf32>
    %121 = vector.shape_cast %120 : vector<16x16x128xf32> to vector<256x128xf32>
    %122 = arith.truncf %121 : vector<256x128xf32> to vector<256x128xbf16>
    %c0_137 = arith.constant 0 : index
    %c128_138 = arith.constant 128 : index
    %123 = vector.load %arg13[%c0_137, %c128_138] : memref<256x1152xbf16, #tpu.memory_space<vmem>>, vector<256x128xbf16>
    tpu.vector_store %arg13[%c0_137, %c128_138], %122 {strides = array<i32>} : memref<256x1152xbf16, #tpu.memory_space<vmem>>, vector<256x128xbf16>,
    %c0_139 = arith.constant 0 : index
    %c2_140 = arith.constant 2 : index
    %c0_141 = arith.constant 0 : index
    %124 = vector.load %arg16[%c0_139, %c2_140, %c0_141] : memref<18x24x128xf32, #tpu.memory_space<vmem>>, vector<16x16x128xf32>
    %125 = vector.shape_cast %124 : vector<16x16x128xf32> to vector<256x128xf32>
    %126 = arith.truncf %125 : vector<256x128xf32> to vector<256x128xbf16>
    %c0_142 = arith.constant 0 : index
    %c256_143 = arith.constant 256 : index
    %127 = vector.load %arg13[%c0_142, %c256_143] : memref<256x1152xbf16, #tpu.memory_space<vmem>>, vector<256x128xbf16>
    tpu.vector_store %arg13[%c0_142, %c256_143], %126 {strides = array<i32>} : memref<256x1152xbf16, #tpu.memory_space<vmem>>, vector<256x128xbf16>,
    %c1_144 = arith.constant 1 : index
    %c0_145 = arith.constant 0 : index
    %c0_146 = arith.constant 0 : index
    %128 = vector.load %arg16[%c1_144, %c0_145, %c0_146] : memref<18x24x128xf32, #tpu.memory_space<vmem>>, vector<16x16x128xf32>
    %129 = vector.shape_cast %128 : vector<16x16x128xf32> to vector<256x128xf32>
    %130 = arith.truncf %129 : vector<256x128xf32> to vector<256x128xbf16>
    %c0_147 = arith.constant 0 : index
    %c384_148 = arith.constant 384 : index
    %131 = vector.load %arg13[%c0_147, %c384_148] : memref<256x1152xbf16, #tpu.memory_space<vmem>>, vector<256x128xbf16>
    tpu.vector_store %arg13[%c0_147, %c384_148], %130 {strides = array<i32>} : memref<256x1152xbf16, #tpu.memory_space<vmem>>, vector<256x128xbf16>,
    %c1_149 = arith.constant 1 : index
    %c1_150 = arith.constant 1 : index
    %c0_151 = arith.constant 0 : index
    %132 = vector.load %arg16[%c1_149, %c1_150, %c0_151] : memref<18x24x128xf32, #tpu.memory_space<vmem>>, vector<16x16x128xf32>
    %133 = vector.shape_cast %132 : vector<16x16x128xf32> to vector<256x128xf32>
    %134 = arith.truncf %133 : vector<256x128xf32> to vector<256x128xbf16>
    %c0_152 = arith.constant 0 : index
    %c512_153 = arith.constant 512 : index
    %135 = vector.load %arg13[%c0_152, %c512_153] : memref<256x1152xbf16, #tpu.memory_space<vmem>>, vector<256x128xbf16>
    tpu.vector_store %arg13[%c0_152, %c512_153], %134 {strides = array<i32>} : memref<256x1152xbf16, #tpu.memory_space<vmem>>, vector<256x128xbf16>,
    %c1_154 = arith.constant 1 : index
    %c2_155 = arith.constant 2 : index
    %c0_156 = arith.constant 0 : index
    %136 = vector.load %arg16[%c1_154, %c2_155, %c0_156] : memref<18x24x128xf32, #tpu.memory_space<vmem>>, vector<16x16x128xf32>
    %137 = vector.shape_cast %136 : vector<16x16x128xf32> to vector<256x128xf32>
    %138 = arith.truncf %137 : vector<256x128xf32> to vector<256x128xbf16>
    %c0_157 = arith.constant 0 : index
    %c640_158 = arith.constant 640 : index
    %139 = vector.load %arg13[%c0_157, %c640_158] : memref<256x1152xbf16, #tpu.memory_space<vmem>>, vector<256x128xbf16>
    tpu.vector_store %arg13[%c0_157, %c640_158], %138 {strides = array<i32>} : memref<256x1152xbf16, #tpu.memory_space<vmem>>, vector<256x128xbf16>,
    %c2_159 = arith.constant 2 : index
    %c0_160 = arith.constant 0 : index
    %c0_161 = arith.constant 0 : index
    %140 = vector.load %arg16[%c2_159, %c0_160, %c0_161] : memref<18x24x128xf32, #tpu.memory_space<vmem>>, vector<16x16x128xf32>
    %141 = vector.shape_cast %140 : vector<16x16x128xf32> to vector<256x128xf32>
    %142 = arith.truncf %141 : vector<256x128xf32> to vector<256x128xbf16>
    %c0_162 = arith.constant 0 : index
    %c768_163 = arith.constant 768 : index
    %143 = vector.load %arg13[%c0_162, %c768_163] : memref<256x1152xbf16, #tpu.memory_space<vmem>>, vector<256x128xbf16>
    tpu.vector_store %arg13[%c0_162, %c768_163], %142 {strides = array<i32>} : memref<256x1152xbf16, #tpu.memory_space<vmem>>, vector<256x128xbf16>,
    %c2_164 = arith.constant 2 : index
    %c1_165 = arith.constant 1 : index
    %c0_166 = arith.constant 0 : index
    %144 = vector.load %arg16[%c2_164, %c1_165, %c0_166] : memref<18x24x128xf32, #tpu.memory_space<vmem>>, vector<16x16x128xf32>
    %145 = vector.shape_cast %144 : vector<16x16x128xf32> to vector<256x128xf32>
    %146 = arith.truncf %145 : vector<256x128xf32> to vector<256x128xbf16>
    %c0_167 = arith.constant 0 : index
    %c896_168 = arith.constant 896 : index
    %147 = vector.load %arg13[%c0_167, %c896_168] : memref<256x1152xbf16, #tpu.memory_space<vmem>>, vector<256x128xbf16>
    tpu.vector_store %arg13[%c0_167, %c896_168], %146 {strides = array<i32>} : memref<256x1152xbf16, #tpu.memory_space<vmem>>, vector<256x128xbf16>,
    %c2_169 = arith.constant 2 : index
    %c2_170 = arith.constant 2 : index
    %c0_171 = arith.constant 0 : index
    %148 = vector.load %arg16[%c2_169, %c2_170, %c0_171] : memref<18x24x128xf32, #tpu.memory_space<vmem>>, vector<16x16x128xf32>
    %149 = vector.shape_cast %148 : vector<16x16x128xf32> to vector<256x128xf32>
    %150 = arith.truncf %149 : vector<256x128xf32> to vector<256x128xbf16>
    %c0_172 = arith.constant 0 : index
    %c1024_173 = arith.constant 1024 : index
    %151 = vector.load %arg13[%c0_172, %c1024_173] : memref<256x1152xbf16, #tpu.memory_space<vmem>>, vector<256x128xbf16>
    tpu.vector_store %arg13[%c0_172, %c1024_173], %150 {strides = array<i32>} : memref<256x1152xbf16, #tpu.memory_space<vmem>>, vector<256x128xbf16>,
    %c0_174 = arith.constant 0 : index
    %c0_175 = arith.constant 0 : index
    %152 = vector.load %arg13[%c0_174, %c0_175] : memref<256x1152xbf16, #tpu.memory_space<vmem>>, vector<256x1152xbf16>
    %c0_176 = arith.constant 0 : index
    %c0_177 = arith.constant 0 : index
    %153 = vector.load %arg6[%c0_176, %c0_177] : memref<1152x128xbf16, #tpu.memory_space<vmem>>, vector<1152x128xbf16>
    %cst_178 = arith.constant dense<0.000000e+00> : vector<256x128xf32>
    %154 = tpu.matmul %152, %153, %cst_178 {dimension_numbers = #tpu.dot_dimension_numbers<[1], [0], [0], [1], [0, 0, 1, 1], [], []>} : vector<256x1152xbf16>, vector<1152x128xbf16>, vector<256x128xf32> -> vector<256x128xf32>
    %c0_179 = arith.constant 0 : index
    %c0_180 = arith.constant 0 : index
    %155 = vector.load %arg7[%c0_179, %c0_180] : memref<1x128xf32, #tpu.memory_space<vmem>>, vector<1x128xf32>
    %156 = vector.broadcast %155 : vector<1x128xf32> to vector<256x128xf32>
    %157 = arith.addf %154, %156 : vector<256x128xf32>
    %cst_181 = arith.constant 0.000000e+00 : f32
    %158 = vector.broadcast %cst_181 : f32 to vector<256x128xf32>
    %159 = arith.maximumf %157, %158 : vector<256x128xf32>
    %160 = arith.truncf %159 : vector<256x128xf32> to vector<256x128xbf16>
    %c0_182 = arith.constant 0 : index
    %c0_183 = arith.constant 0 : index
    %161 = vector.load %arg8[%c0_182, %c0_183] : memref<128x128xbf16, #tpu.memory_space<vmem>>, vector<128x128xbf16>
    %cst_184 = arith.constant dense<0.000000e+00> : vector<256x128xf32>
    %162 = tpu.matmul %160, %161, %cst_184 {dimension_numbers = #tpu.dot_dimension_numbers<[1], [0], [0], [1], [0, 0, 1, 1], [], []>} : vector<256x128xbf16>, vector<128x128xbf16>, vector<256x128xf32> -> vector<256x128xf32>
    %c0_185 = arith.constant 0 : index
    %c0_186 = arith.constant 0 : index
    %163 = vector.load %arg9[%c0_185, %c0_186] : memref<1x128xf32, #tpu.memory_space<vmem>>, vector<1x128xf32>
    %164 = vector.broadcast %163 : vector<1x128xf32> to vector<256x128xf32>
    %165 = arith.addf %162, %164 : vector<256x128xf32>
    %c0_187 = arith.constant 0 : index
    %c0_188 = arith.constant 0 : index
    %c0_189 = arith.constant 0 : index
    %166 = vector.load %arg12[%c0_187, %c0_188, %c0_189] : memref<1x256x128xf32, #tpu.memory_space<vmem>>, vector<1x256x128xf32>
    %167 = vector.shape_cast %166 : vector<1x256x128xf32> to vector<256x128xf32>
    %168 = vector.shape_cast %165 : vector<256x128xf32> to vector<1x256x128xf32>
    tpu.vector_store %arg12[%c0_187, %c0_188, %c0_189], %168 {strides = array<i32>} : memref<1x256x128xf32, #tpu.memory_space<vmem>>, vector<1x256x128xf32>,
    return
  }
  func.func @transform_0(%arg0: i32) -> (i32, i32, i32, i32) {
    %c0_i32 = arith.constant 0 : i32
    %c0_i32_0 = arith.constant 0 : i32
    %c0_i32_1 = arith.constant 0 : i32
    %c0_i32_2 = arith.constant 0 : i32
    return %arg0, %c0_i32, %c0_i32_0, %c0_i32_1 : i32, i32, i32, i32
  }
  func.func @transform_1(%arg0: i32) -> (i32, i32) {
    %c0_i32 = arith.constant 0 : i32
    %c0_i32_0 = arith.constant 0 : i32
    %c0_i32_1 = arith.constant 0 : i32
    return %c0_i32, %c0_i32_0 : i32, i32
  }
  func.func @transform_2(%arg0: i32) -> (i32, i32) {
    %c0_i32 = arith.constant 0 : i32
    %c0_i32_0 = arith.constant 0 : i32
    %c0_i32_1 = arith.constant 0 : i32
    return %c0_i32, %c0_i32_0 : i32, i32
  }
  func.func @transform_3(%arg0: i32) -> (i32, i32) {
    %c0_i32 = arith.constant 0 : i32
    %c0_i32_0 = arith.constant 0 : i32
    %c0_i32_1 = arith.constant 0 : i32
    return %c0_i32, %c0_i32_0 : i32, i32
  }
  func.func @transform_4(%arg0: i32) -> (i32, i32) {
    %c0_i32 = arith.constant 0 : i32
    %c0_i32_0 = arith.constant 0 : i32
    %c0_i32_1 = arith.constant 0 : i32
    return %c0_i32, %c0_i32_0 : i32, i32
  }
  func.func @transform_5(%arg0: i32) -> (i32, i32) {
    %c0_i32 = arith.constant 0 : i32
    %c0_i32_0 = arith.constant 0 : i32
    %c0_i32_1 = arith.constant 0 : i32
    return %c0_i32, %c0_i32_0 : i32, i32
  }
  func.func @transform_6(%arg0: i32) -> (i32, i32) {
    %c0_i32 = arith.constant 0 : i32
    %c0_i32_0 = arith.constant 0 : i32
    %c0_i32_1 = arith.constant 0 : i32
    return %c0_i32, %c0_i32_0 : i32, i32
  }
  func.func @transform_7(%arg0: i32) -> (i32, i32) {
    %c0_i32 = arith.constant 0 : i32
    %c0_i32_0 = arith.constant 0 : i32
    %c0_i32_1 = arith.constant 0 : i32
    return %c0_i32, %c0_i32_0 : i32, i32
  }
  func.func @transform_8(%arg0: i32) -> (i32, i32) {
    %c0_i32 = arith.constant 0 : i32
    %c0_i32_0 = arith.constant 0 : i32
    %c0_i32_1 = arith.constant 0 : i32
    return %c0_i32, %c0_i32_0 : i32, i32
  }
  func.func @transform_9(%arg0: i32) -> (i32, i32) {
    %c0_i32 = arith.constant 0 : i32
    %c0_i32_0 = arith.constant 0 : i32
    %c0_i32_1 = arith.constant 0 : i32
    return %c0_i32, %c0_i32_0 : i32, i32
  }
  func.func @transform_10(%arg0: i32) -> (i32, i32) {
    %c0_i32 = arith.constant 0 : i32
    %c0_i32_0 = arith.constant 0 : i32
    %c0_i32_1 = arith.constant 0 : i32
    return %c0_i32, %c0_i32_0 : i32, i32
  }
  func.func @transform_11(%arg0: i32) -> (i32, i32, i32) {
    %c0_i32 = arith.constant 0 : i32
    %c0_i32_0 = arith.constant 0 : i32
    %c0_i32_1 = arith.constant 0 : i32
    return %arg0, %c0_i32, %c0_i32_0 : i32, i32, i32
  }
}

</mosaic_0001>

<llo_original>
// kernel: model_forward.1
$region0: #{model_forward.1}
  #allocation0 [shape = 'u32[]', space=smem, size = 0x4, offset = 0x4, fixed_abs, tag = 'smem constant byte address 0x4 - core index']
  #allocation1 [shape = 'u32[144,128]{1,0:T(1,128)}', space=vmem, size = 0x12000, scoped, tag = 'internal scratch']
  #allocation2 [shape = 'bf16[256,1152]{1,0:T(8,128)(2,1)}', space=vmem, size = 0x90000, scoped, tag = 'scratch operand']
  #allocation3 [shape = 'bf16[256,128]{1,0:T(8,128)(2,1)}', space=vmem, size = 0x10000, scoped, tag = 'scratch operand']
  #allocation4 [shape = 'f32[10,16,128]{2,1,0:T(8,128)}', space=vmem, size = 0x14000, scoped, tag = 'scratch operand']
  #allocation5 [shape = 'f32[18,24,128]{2,1,0:T(8,128)}', space=vmem, size = 0x36000, scoped, tag = 'scratch operand']
  %s0 = inlined_call_operand.vmem [shape: f32[2,18,24,128], index: 0, kind: input, shape index: {}]
  %s1 = inlined_call_operand.vmem [shape: bf16[1152,128], index: 1, kind: input, shape index: {}]
  %s2 = inlined_call_operand.vmem [shape: f32[1,128], index: 2, kind: input, shape index: {}]
  %s3 = inlined_call_operand.vmem [shape: bf16[1152,128], index: 3, kind: input, shape index: {}]
  %s4 = inlined_call_operand.vmem [shape: f32[1,128], index: 4, kind: input, shape index: {}]
  %s5 = inlined_call_operand.vmem [shape: bf16[1152,128], index: 5, kind: input, shape index: {}]
  %s6 = inlined_call_operand.vmem [shape: f32[1,128], index: 6, kind: input, shape index: {}]
  %s7 = inlined_call_operand.vmem [shape: bf16[128,128], index: 7, kind: input, shape index: {}]
  %s8 = inlined_call_operand.vmem [shape: f32[1,128], index: 8, kind: input, shape index: {}]
  %s9 = inlined_call_operand.vmem [shape: bf16[64,256], index: 9, kind: input, shape index: {}]
  %s10 = inlined_call_operand.vmem [shape: bf16[256,64], index: 10, kind: input, shape index: {}]
  %s11 = inlined_call_operand.vmem [shape: f32[2,256,128], index: 11, kind: output, shape index: {}]
  %s12 = sld [smem:[#allocation0]]
  $region77: #{model_forward.1} parent=0
    _
  %s14 = ssub.s32 1, %s12
  %s15 = scalar_select 0, %s14, %s12
  loop: start=0, step=1, limit=4
  $region2: #{model_forward.1} parent=0 // loop_pre_header
    _
  $region3: #{model_forward.1} parent=0 // loop_header
    %s17 = sphi 0, %s21
    %p18 = scmp.ge.s32.totalorder %s17, 4
    %s27 = sphi 0, %s29
    %s30 = sphi 0, %s27
    %s31 = sphi 0, %s30
    %s47 = sphi 0, %s31
    %s51 = sphi 0, %s51
    %s53 = sphi 0, %s51
    %s54 = sphi 0, %s53
    %s68 = sphi 0, %s54
    %s72 = sphi 0, %s72
    %s74 = sphi 0, %s72
    %s75 = sphi 0, %s74
    %s89 = sphi 0, %s75
    %s93 = sphi 0, %s93
    %s95 = sphi 0, %s93
    %s96 = sphi 0, %s95
    %s110 = sphi 0, %s96
    %s114 = sphi 0, %s114
    %s116 = sphi 0, %s114
    %s117 = sphi 0, %s116
    %s131 = sphi 0, %s117
    %s135 = sphi 0, %s135
    %s137 = sphi 0, %s135
    %s138 = sphi 0, %s137
    %s152 = sphi 0, %s138
    %s156 = sphi 0, %s156
    %s158 = sphi 0, %s156
    %s159 = sphi 0, %s158
    %s173 = sphi 0, %s159
    %s177 = sphi 0, %s177
    %s179 = sphi 0, %s177
    %s180 = sphi 0, %s179
    %s194 = sphi 0, %s180
    %s198 = sphi 0, %s198
    %s200 = sphi 0, %s198
    %s201 = sphi 0, %s200
    %s215 = sphi 0, %s201
    %s219 = sphi 0, %s219
    %s221 = sphi 0, %s219
    %s222 = sphi 0, %s221
    %s236 = sphi 0, %s222
    %s240 = sphi 0, %s240
    %s242 = sphi 0, %s240
    %s243 = sphi 0, %s242
    %s257 = sphi 0, %s243
    %s263 = sphi 0, %s265
    %s266 = sphi 0, %s263
    %s267 = sphi 0, %s266
    %s283 = sphi 0, %s267
  $region4: #{model_forward.1} parent=0 // loop_header_branch
    %20 = sbr.rel (%p18) target = $region8
  $region5: #{model_forward.1} parent=0 // loop_body
    %s22 = ssub.s32 %s17, 1
    %s23 = ssub.s32 %s17, 2
    %s24 = sadd.s32 %s17, 1
    %s25 = ssub.s32 %s17, %s24
    %p26 = scmp.eq.s32.totalorder %s25, 0
    %s28 = sadd.s32 %s27, 1
    %s29 = scalar_select %p26, %s27, %s28
    %p32 = pneg %p26
    %p33 = scmp.eq.s32.totalorder %s17, 1
    %p34 = por %p32, %p33
    %p35 = scmp.ne.s32.totalorder %s27, %s30
    %p36 = scmp.eq.s32.totalorder %s17, 0
    %p37 = por %p35, %p36
    %p38 = scmp.ne.s32.totalorder %s27, %s30
    %p39 = scmp.eq.s32.totalorder %s22, 1
    %p40 = por %p38, %p39
    %p41 = scmp.ne.s32.totalorder %s30, %s31
    %p42 = scmp.eq.s32.totalorder %s22, 0
    %p43 = por %p41, %p42
    %p44 = scmp.ne.s32.totalorder %s30, %s31
    %p45 = scmp.eq.s32.totalorder %s23, 1
    %p46 = por %p44, %p45
    %p48 = scmp.ne.s32.totalorder %s31, %s47
    %p49 = scmp.eq.s32.totalorder %s23, 0
    %p50 = por %p48, %p49
    %s52 = sadd.s32 %s51, 1
    %p55 = scmp.eq.s32.totalorder %s17, 1
    %p56 = scmp.ne.s32.totalorder %s51, %s53
    %p57 = scmp.eq.s32.totalorder %s17, 0
    %p58 = por %p56, %p57
    %p59 = scmp.ne.s32.totalorder %s51, %s53
    %p60 = scmp.eq.s32.totalorder %s22, 1
    %p61 = por %p59, %p60
    %p62 = scmp.ne.s32.totalorder %s53, %s54
    %p63 = scmp.eq.s32.totalorder %s22, 0
    %p64 = por %p62, %p63
    %p65 = scmp.ne.s32.totalorder %s53, %s54
    %p66 = scmp.eq.s32.totalorder %s23, 1
    %p67 = por %p65, %p66
    %p69 = scmp.ne.s32.totalorder %s54, %s68
    %p70 = scmp.eq.s32.totalorder %s23, 0
    %p71 = por %p69, %p70
    %s73 = sadd.s32 %s72, 1
    %p76 = scmp.eq.s32.totalorder %s17, 1
    %p77 = scmp.ne.s32.totalorder %s72, %s74
    %p78 = scmp.eq.s32.totalorder %s17, 0
    %p79 = por %p77, %p78
    %p80 = scmp.ne.s32.totalorder %s72, %s74
    %p81 = scmp.eq.s32.totalorder %s22, 1
    %p82 = por %p80, %p81
    %p83 = scmp.ne.s32.totalorder %s74, %s75
    %p84 = scmp.eq.s32.totalorder %s22, 0
    %p85 = por %p83, %p84
    %p86 = scmp.ne.s32.totalorder %s74, %s75
    %p87 = scmp.eq.s32.totalorder %s23, 1
    %p88 = por %p86, %p87
    %p90 = scmp.ne.s32.totalorder %s75, %s89
    %p91 = scmp.eq.s32.totalorder %s23, 0
    %p92 = por %p90, %p91
    %s94 = sadd.s32 %s93, 1
    %p97 = scmp.eq.s32.totalorder %s17, 1
    %p98 = scmp.ne.s32.totalorder %s93, %s95
    %p99 = scmp.eq.s32.totalorder %s17, 0
    %p100 = por %p98, %p99
    %p101 = scmp.ne.s32.totalorder %s93, %s95
    %p102 = scmp.eq.s32.totalorder %s22, 1
    %p103 = por %p101, %p102
    %p104 = scmp.ne.s32.totalorder %s95, %s96
    %p105 = scmp.eq.s32.totalorder %s22, 0
    %p106 = por %p104, %p105
    %p107 = scmp.ne.s32.totalorder %s95, %s96
    %p108 = scmp.eq.s32.totalorder %s23, 1
    %p109 = por %p107, %p108
    %p111 = scmp.ne.s32.totalorder %s96, %s110
    %p112 = scmp.eq.s32.totalorder %s23, 0
    %p113 = por %p111, %p112
    %s115 = sadd.s32 %s114, 1
    %p118 = scmp.eq.s32.totalorder %s17, 1
    %p119 = scmp.ne.s32.totalorder %s114, %s116
    %p120 = scmp.eq.s32.totalorder %s17, 0
    %p121 = por %p119, %p120
    %p122 = scmp.ne.s32.totalorder %s114, %s116
    %p123 = scmp.eq.s32.totalorder %s22, 1
    %p124 = por %p122, %p123
    %p125 = scmp.ne.s32.totalorder %s116, %s117
    %p126 = scmp.eq.s32.totalorder %s22, 0
    %p127 = por %p125, %p126
    %p128 = scmp.ne.s32.totalorder %s116, %s117
    %p129 = scmp.eq.s32.totalorder %s23, 1
    %p130 = por %p128, %p129
    %p132 = scmp.ne.s32.totalorder %s117, %s131
    %p133 = scmp.eq.s32.totalorder %s23, 0
    %p134 = por %p132, %p133
    %s136 = sadd.s32 %s135, 1
    %p139 = scmp.eq.s32.totalorder %s17, 1
    %p140 = scmp.ne.s32.totalorder %s135, %s137
    %p141 = scmp.eq.s32.totalorder %s17, 0
    %p142 = por %p140, %p141
    %p143 = scmp.ne.s32.totalorder %s135, %s137
    %p144 = scmp.eq.s32.totalorder %s22, 1
    %p145 = por %p143, %p144
    %p146 = scmp.ne.s32.totalorder %s137, %s138
    %p147 = scmp.eq.s32.totalorder %s22, 0
    %p148 = por %p146, %p147
    %p149 = scmp.ne.s32.totalorder %s137, %s138
    %p150 = scmp.eq.s32.totalorder %s23, 1
    %p151 = por %p149, %p150
    %p153 = scmp.ne.s32.totalorder %s138, %s152
    %p154 = scmp.eq.s32.totalorder %s23, 0
    %p155 = por %p153, %p154
    %s157 = sadd.s32 %s156, 1
    %p160 = scmp.eq.s32.totalorder %s17, 1
    %p161 = scmp.ne.s32.totalorder %s156, %s158
    %p162 = scmp.eq.s32.totalorder %s17, 0
    %p163 = por %p161, %p162
    %p164 = scmp.ne.s32.totalorder %s156, %s158
    %p165 = scmp.eq.s32.totalorder %s22, 1
    %p166 = por %p164, %p165
    %p167 = scmp.ne.s32.totalorder %s158, %s159
    %p168 = scmp.eq.s32.totalorder %s22, 0
    %p169 = por %p167, %p168
    %p170 = scmp.ne.s32.totalorder %s158, %s159
    %p171 = scmp.eq.s32.totalorder %s23, 1
    %p172 = por %p170, %p171
    %p174 = scmp.ne.s32.totalorder %s159, %s173
    %p175 = scmp.eq.s32.totalorder %s23, 0
    %p176 = por %p174, %p175
    %s178 = sadd.s32 %s177, 1
    %p181 = scmp.eq.s32.totalorder %s17, 1
    %p182 = scmp.ne.s32.totalorder %s177, %s179
    %p183 = scmp.eq.s32.totalorder %s17, 0
    %p184 = por %p182, %p183
    %p185 = scmp.ne.s32.totalorder %s177, %s179
    %p186 = scmp.eq.s32.totalorder %s22, 1
    %p187 = por %p185, %p186
    %p188 = scmp.ne.s32.totalorder %s179, %s180
    %p189 = scmp.eq.s32.totalorder %s22, 0
    %p190 = por %p188, %p189
    %p191 = scmp.ne.s32.totalorder %s179, %s180
    %p192 = scmp.eq.s32.totalorder %s23, 1
    %p193 = por %p191, %p192
    %p195 = scmp.ne.s32.totalorder %s180, %s194
    %p196 = scmp.eq.s32.totalorder %s23, 0
    %p197 = por %p195, %p196
    %s199 = sadd.s32 %s198, 1
    %p202 = scmp.eq.s32.totalorder %s17, 1
    %p203 = scmp.ne.s32.totalorder %s198, %s200
    %p204 = scmp.eq.s32.totalorder %s17, 0
    %p205 = por %p203, %p204
    %p206 = scmp.ne.s32.totalorder %s198, %s200
    %p207 = scmp.eq.s32.totalorder %s22, 1
    %p208 = por %p206, %p207
    %p209 = scmp.ne.s32.totalorder %s200, %s201
    %p210 = scmp.eq.s32.totalorder %s22, 0
    %p211 = por %p209, %p210
    %p212 = scmp.ne.s32.totalorder %s200, %s201
    %p213 = scmp.eq.s32.totalorder %s23, 1
    %p214 = por %p212, %p213
    %p216 = scmp.ne.s32.totalorder %s201, %s215
    %p217 = scmp.eq.s32.totalorder %s23, 0
    %p218 = por %p216, %p217
    %s220 = sadd.s32 %s219, 1
    %p223 = scmp.eq.s32.totalorder %s17, 1
    %p224 = scmp.ne.s32.totalorder %s219, %s221
    %p225 = scmp.eq.s32.totalorder %s17, 0
    %p226 = por %p224, %p225
    %p227 = scmp.ne.s32.totalorder %s219, %s221
    %p228 = scmp.eq.s32.totalorder %s22, 1
    %p229 = por %p227, %p228
    %p230 = scmp.ne.s32.totalorder %s221, %s222
    %p231 = scmp.eq.s32.totalorder %s22, 0
    %p232 = por %p230, %p231
    %p233 = scmp.ne.s32.totalorder %s221, %s222
    %p234 = scmp.eq.s32.totalorder %s23, 1
    %p235 = por %p233, %p234
    %p237 = scmp.ne.s32.totalorder %s222, %s236
    %p238 = scmp.eq.s32.totalorder %s23, 0
    %p239 = por %p237, %p238
    %s241 = sadd.s32 %s240, 1
    %p244 = scmp.eq.s32.totalorder %s17, 1
    %p245 = scmp.ne.s32.totalorder %s240, %s242
    %p246 = scmp.eq.s32.totalorder %s17, 0
    %p247 = por %p245, %p246
    %p248 = scmp.ne.s32.totalorder %s240, %s242
    %p249 = scmp.eq.s32.totalorder %s22, 1
    %p250 = por %p248, %p249
    %p251 = scmp.ne.s32.totalorder %s242, %s243
    %p252 = scmp.eq.s32.totalorder %s22, 0
    %p253 = por %p251, %p252
    %p254 = scmp.ne.s32.totalorder %s242, %s243
    %p255 = scmp.eq.s32.totalorder %s23, 1
    %p256 = por %p254, %p255
    %p258 = scmp.ne.s32.totalorder %s243, %s257
    %p259 = scmp.eq.s32.totalorder %s23, 0
    %p260 = por %p258, %p259
    %s261 = ssub.s32 %s17, %s24
    %p262 = scmp.eq.s32.totalorder %s261, 0
    %s264 = sadd.s32 %s263, 1
    %s265 = scalar_select %p262, %s263, %s264
    %p268 = pneg %p262
    %p269 = scmp.eq.s32.totalorder %s17, 1
    %p270 = por %p268, %p269
    %p271 = scmp.ne.s32.totalorder %s263, %s266
    %p272 = scmp.eq.s32.totalorder %s17, 0
    %p273 = por %p271, %p272
    %p274 = scmp.ne.s32.totalorder %s263, %s266
    %p275 = scmp.eq.s32.totalorder %s22, 1
    %p276 = por %p274, %p275
    %p277 = scmp.ne.s32.totalorder %s266, %s267
    %p278 = scmp.eq.s32.totalorder %s22, 0
    %p279 = por %p277, %p278
    %p280 = scmp.ne.s32.totalorder %s266, %s267
    %p281 = scmp.eq.s32.totalorder %s23, 1
    %p282 = por %p280, %p281
    %p284 = scmp.ne.s32.totalorder %s267, %s283
    %p285 = scmp.eq.s32.totalorder %s23, 0
    %p286 = por %p284, %p285
    %p287 = scmp.le.s32.totalorder 1, %s17
    %p288 = scmp.lt.s32.totalorder %s17, 3
    %p289 = pnand %p287, %p288
    %p290 = pneg %p289
    // Predicated region
    $region9: #{model_forward.1} parent=5 // pred_check
      _
    $region10: #{model_forward.1} parent=5 // pred_check_branch
      %292 = sbr.rel (%p289) target = $region12
    $region11: #{model_forward.1} parent=5 // pred_region
      %s293 = ssub.s32 %s17, 1
      // Predicated region
      $region13: #{model_forward.1} parent=11 // pred_check
        %p294 = pneg %p64
      $region14: #{model_forward.1} parent=11 // pred_check_branch
        %296 = sbr.rel (%p294) target = $region16
      $region15: #{model_forward.1} parent=11 // pred_region
        _
      $region16: #{model_forward.1} parent=11 // pred_fallthru
        _
      // Predicated region
      $region17: #{model_forward.1} parent=11 // pred_check
        %p297 = pneg %p85
      $region18: #{model_forward.1} parent=11 // pred_check_branch
        %299 = sbr.rel (%p297) target = $region20
      $region19: #{model_forward.1} parent=11 // pred_region
        _
      $region20: #{model_forward.1} parent=11 // pred_fallthru
        _
      // Predicated region
      $region21: #{model_forward.1} parent=11 // pred_check
        %p300 = pneg %p106
      $region22: #{model_forward.1} parent=11 // pred_check_branch
        %302 = sbr.rel (%p300) target = $region24
      $region23: #{model_forward.1} parent=11 // pred_region
        _
      $region24: #{model_forward.1} parent=11 // pred_fallthru
        _
      // Predicated region
      $region25: #{model_forward.1} parent=11 // pred_check
        %p303 = pneg %p127
      $region26: #{model_forward.1} parent=11 // pred_check_branch
        %305 = sbr.rel (%p303) target = $region28
      $region27: #{model_forward.1} parent=11 // pred_region
        _
      $region28: #{model_forward.1} parent=11 // pred_fallthru
        _
      // Predicated region
      $region29: #{model_forward.1} parent=11 // pred_check
        %p306 = pneg %p148
      $region30: #{model_forward.1} parent=11 // pred_check_branch
        %308 = sbr.rel (%p306) target = $region32
      $region31: #{model_forward.1} parent=11 // pred_region
        _
      $region32: #{model_forward.1} parent=11 // pred_fallthru
        _
      // Predicated region
      $region33: #{model_forward.1} parent=11 // pred_check
        %p309 = pneg %p169
      $region34: #{model_forward.1} parent=11 // pred_check_branch
        %311 = sbr.rel (%p309) target = $region36
      $region35: #{model_forward.1} parent=11 // pred_region
        _
      $region36: #{model_forward.1} parent=11 // pred_fallthru
        _
      // Predicated region
      $region37: #{model_forward.1} parent=11 // pred_check
        %p312 = pneg %p190
      $region38: #{model_forward.1} parent=11 // pred_check_branch
        %314 = sbr.rel (%p312) target = $region40
      $region39: #{model_forward.1} parent=11 // pred_region
        _
      $region40: #{model_forward.1} parent=11 // pred_fallthru
        _
      // Predicated region
      $region41: #{model_forward.1} parent=11 // pred_check
        %p315 = pneg %p211
      $region42: #{model_forward.1} parent=11 // pred_check_branch
        %317 = sbr.rel (%p315) target = $region44
      $region43: #{model_forward.1} parent=11 // pred_region
        _
      $region44: #{model_forward.1} parent=11 // pred_fallthru
        _
      // Predicated region
      $region45: #{model_forward.1} parent=11 // pred_check
        %p318 = pneg %p232
      $region46: #{model_forward.1} parent=11 // pred_check_branch
        %320 = sbr.rel (%p318) target = $region48
      $region47: #{model_forward.1} parent=11 // pred_region
        _
      $region48: #{model_forward.1} parent=11 // pred_fallthru
        _
      // Predicated region
      $region49: #{model_forward.1} parent=11 // pred_check
        %p321 = pneg %p253
      $region50: #{model_forward.1} parent=11 // pred_check_branch
        %323 = sbr.rel (%p321) target = $region52
      $region51: #{model_forward.1} parent=11 // pred_region
        _
      $region52: #{model_forward.1} parent=11 // pred_fallthru
        _
    $region12: #{model_forward.1} parent=5 // pred_fallthru
      _
    %p324 = scmp.lt.s32.totalorder %s17, 2
    // Predicated region
    $region53: #{model_forward.1} parent=5 // pred_check
      %p325 = pneg %p324
    $region54: #{model_forward.1} parent=5 // pred_check_branch
      %327 = sbr.rel (%p325) target = $region56
    $region55: #{model_forward.1} parent=5 // pred_region
      // Predicated region
      $region57: #{model_forward.1} parent=55 // pred_check
        %p328 = pneg %p37
      $region58: #{model_forward.1} parent=55 // pred_check_branch
        %330 = sbr.rel (%p328) target = $region60
      $region59: #{model_forward.1} parent=55 // pred_region
        %p331 = scmp.lt.s32.totalorder %s17, 1
        %s332 = scalar_select %p331, %s17, 1
        %s333 = smul.addr %s332, 54
        %s334 = smul.addr %s333, 8
        %s335 = scalar_lea.vmem %s0, %s334
      $region60: #{model_forward.1} parent=55 // pred_fallthru
        _
    $region56: #{model_forward.1} parent=5 // pred_fallthru
      _
    %p336 = scmp.le.s32.totalorder 1, %s17
    %p337 = scmp.lt.s32.totalorder %s17, 3
    %p338 = pnand %p336, %p337
    %p339 = pneg %p338
    // Predicated region
    $region61: #{model_forward.1} parent=5 // pred_check
      _
    $region62: #{model_forward.1} parent=5 // pred_check_branch
      %341 = sbr.rel (%p338) target = $region64
    $region63: #{model_forward.1} parent=5 // pred_region
      %s342 = ssub.s32 %s17, 1
      %p343 = scmp.lt.s32.totalorder %s22, 1
      %s344 = scalar_select %p343, %s22, 1
      %s345 = smul.addr %s344, 54
      %s346 = smul.addr %s345, 8
      %s347 = scalar_lea.vmem %s0, %s346
      %p348 = pneg %p43
      %p349 = pneg %p40
      %p350 = pneg %p64
      %p351 = pneg %p61
      %p352 = pneg %p85
      %p353 = pneg %p82
      %p354 = pneg %p106
      %p355 = pneg %p103
      %p356 = pneg %p127
      %p357 = pneg %p124
      %p358 = pneg %p148
      %p359 = pneg %p145
      %p360 = pneg %p169
      %p361 = pneg %p166
      %p362 = pneg %p190
      %p363 = pneg %p187
      %p364 = pneg %p211
      %p365 = pneg %p208
      %p366 = pneg %p232
      %p367 = pneg %p229
      %p368 = pneg %p253
      %p369 = pneg %p250
      %p370 = pneg %p279
      %p371 = pneg %p276
      %p372 = scmp.lt.s32.totalorder %s22, 1
      %s373 = scalar_select %p372, %s22, 1
      %s374 = smul.addr %s373, 32
      %s375 = smul.addr %s374, 8
      %s376 = scalar_lea.vmem %s11, %s375
      %p377 = scmp.lt.s32.totalorder %s22, 1
      %s378 = scalar_select %p377, %s22, 1
      %s379 = smul.addr %s378, 54
      %s380 = smul.addr %s379, 8
      %s381 = scalar_lea.vmem %s0, %s380
      %p382 = scmp.lt.s32.totalorder %s22, 1
      %s383 = scalar_select %p382, %s22, 1
      %s384 = smul.addr %s383, 32
      %s385 = smul.addr %s384, 8
      %s386 = scalar_lea.vmem %s11, %s385
      %388 = vst [vmem:[#allocation4] sm:$0xff] 0.0
      %389 = vst [vmem:[#allocation4 + $0x8] sm:$0xff] 0.0
      %390 = vst [vmem:[#allocation4 + $0x10] sm:$0xff] 0.0
      %391 = vst [vmem:[#allocation4 + $0x18] sm:$0xff] 0.0
      %392 = vst [vmem:[#allocation4 + $0x20] sm:$0xff] 0.0
      %393 = vst [vmem:[#allocation4 + $0x28] sm:$0xff] 0.0
      %394 = vst [vmem:[#allocation4 + $0x30] sm:$0xff] 0.0
      %395 = vst [vmem:[#allocation4 + $0x38] sm:$0xff] 0.0
      %396 = vst [vmem:[#allocation4 + $0x40] sm:$0xff] 0.0
      %397 = vst [vmem:[#allocation4 + $0x48] sm:$0xff] 0.0
      %398 = vst [vmem:[#allocation4 + $0x50] sm:$0xff] 0.0
      %399 = vst [vmem:[#allocation4 + $0x58] sm:$0xff] 0.0
      %400 = vst [vmem:[#allocation4 + $0x60] sm:$0xff] 0.0
      %401 = vst [vmem:[#allocation4 + $0x68] sm:$0xff] 0.0
      %402 = vst [vmem:[#allocation4 + $0x70] sm:$0xff] 0.0
      %403 = vst [vmem:[#allocation4 + $0x78] sm:$0xff] 0.0
      %404 = vst [vmem:[#allocation4 + $0x80] sm:$0xff] 0.0
      %405 = vst [vmem:[#allocation4 + $0x88] sm:$0xff] 0.0
      %406 = vst [vmem:[#allocation4 + $0x90] sm:$0xff] 0.0
      %407 = vst [vmem:[#allocation4 + $0x98] sm:$0xff] 0.0
      %408 = vst [vmem:[#allocation5] sm:$0xff] 0.0
      %409 = vst [vmem:[#allocation5 + $0x8] sm:$0xff] 0.0
      %410 = vst [vmem:[#allocation5 + $0x10] sm:$0xff] 0.0
      %411 = vst [vmem:[#allocation5 + $0x18] sm:$0xff] 0.0
      %412 = vst [vmem:[#allocation5 + $0x20] sm:$0xff] 0.0
      %413 = vst [vmem:[#allocation5 + $0x28] sm:$0xff] 0.0
      %414 = vst [vmem:[#allocation5 + $0x30] sm:$0xff] 0.0
      %415 = vst [vmem:[#allocation5 + $0x38] sm:$0xff] 0.0
      %416 = vst [vmem:[#allocation5 + $0x40] sm:$0xff] 0.0
      %417 = vst [vmem:[#allocation5 + $0x48] sm:$0xff] 0.0
      %418 = vst [vmem:[#allocation5 + $0x50] sm:$0xff] 0.0
      %419 = vst [vmem:[#allocation5 + $0x58] sm:$0xff] 0.0
      %420 = vst [vmem:[#allocation5 + $0x60] sm:$0xff] 0.0
      %421 = vst [vmem:[#allocation5 + $0x68] sm:$0xff] 0.0
      %422 = vst [vmem:[#allocation5 + $0x70] sm:$0xff] 0.0
      %423 = vst [vmem:[#allocation5 + $0x78] sm:$0xff] 0.0
      %424 = vst [vmem:[#allocation5 + $0x80] sm:$0xff] 0.0
      %425 = vst [vmem:[#allocation5 + $0x88] sm:$0xff] 0.0
      %426 = vst [vmem:[#allocation5 + $0x90] sm:$0xff] 0.0
      %427 = vst [vmem:[#allocation5 + $0x98] sm:$0xff] 0.0
      %428 = vst [vmem:[#allocation5 + $0xa0] sm:$0xff] 0.0
      %429 = vst [vmem:[#allocation5 + $0xa8] sm:$0xff] 0.0
      %430 = vst [vmem:[#allocation5 + $0xb0] sm:$0xff] 0.0
      %431 = vst [vmem:[#allocation5 + $0xb8] sm:$0xff] 0.0
      %432 = vst [vmem:[#allocation5 + $0xc0] sm:$0xff] 0.0
      %433 = vst [vmem:[#allocation5 + $0xc8] sm:$0xff] 0.0
      %434 = vst [vmem:[#allocation5 + $0xd0] sm:$0xff] 0.0
      %435 = vst [vmem:[#allocation5 + $0xd8] sm:$0xff] 0.0
      %436 = vst [vmem:[#allocation5 + $0xe0] sm:$0xff] 0.0
      %437 = vst [vmem:[#allocation5 + $0xe8] sm:$0xff] 0.0
      %438 = vst [vmem:[#allocation5 + $0xf0] sm:$0xff] 0.0
      %439 = vst [vmem:[#allocation5 + $0xf8] sm:$0xff] 0.0
      %440 = vst [vmem:[#allocation5 + $0x100] sm:$0xff] 0.0
      %441 = vst [vmem:[#allocation5 + $0x108] sm:$0xff] 0.0
      %442 = vst [vmem:[#allocation5 + $0x110] sm:$0xff] 0.0
      %443 = vst [vmem:[#allocation5 + $0x118] sm:$0xff] 0.0
      %444 = vst [vmem:[#allocation5 + $0x120] sm:$0xff] 0.0
      %445 = vst [vmem:[#allocation5 + $0x128] sm:$0xff] 0.0
      %446 = vst [vmem:[#allocation5 + $0x130] sm:$0xff] 0.0
      %447 = vst [vmem:[#allocation5 + $0x138] sm:$0xff] 0.0
      %448 = vst [vmem:[#allocation5 + $0x140] sm:$0xff] 0.0
      %449 = vst [vmem:[#allocation5 + $0x148] sm:$0xff] 0.0
      %450 = vst [vmem:[#allocation5 + $0x150] sm:$0xff] 0.0
      %451 = vst [vmem:[#allocation5 + $0x158] sm:$0xff] 0.0
      %452 = vst [vmem:[#allocation5 + $0x160] sm:$0xff] 0.0
      %453 = vst [vmem:[#allocation5 + $0x168] sm:$0xff] 0.0
      %454 = vst [vmem:[#allocation5 + $0x170] sm:$0xff] 0.0
      %455 = vst [vmem:[#allocation5 + $0x178] sm:$0xff] 0.0
      %456 = vst [vmem:[#allocation5 + $0x180] sm:$0xff] 0.0
      %457 = vst [vmem:[#allocation5 + $0x188] sm:$0xff] 0.0
      %458 = vst [vmem:[#allocation5 + $0x190] sm:$0xff] 0.0
      %459 = vst [vmem:[#allocation5 + $0x198] sm:$0xff] 0.0
      %460 = vst [vmem:[#allocation5 + $0x1a0] sm:$0xff] 0.0
      %461 = vst [vmem:[#allocation5 + $0x1a8] sm:$0xff] 0.0
      %v462 = vld [vmem:[%s381] sm:$0xff]
      %v463 = vld [vmem:[%s381 + $0x8] sm:$0xff]
      %v464 = vld [vmem:[%s381 + $0x18] sm:$0xff]
      %v465 = vld [vmem:[%s381 + $0x20] sm:$0xff]
      %v466 = vld [vmem:[%s381 + $0x30] sm:$0xff]
      %v467 = vld [vmem:[%s381 + $0x38] sm:$0xff]
      %v468 = vld [vmem:[%s381 + $0x48] sm:$0xff]
      %v469 = vld [vmem:[%s381 + $0x50] sm:$0xff]
      %v470 = vld [vmem:[%s381 + $0x60] sm:$0xff]
      %v471 = vld [vmem:[%s381 + $0x68] sm:$0xff]
      %v472 = vld [vmem:[%s381 + $0x78] sm:$0xff]
      %v473 = vld [vmem:[%s381 + $0x80] sm:$0xff]
      %v474 = vld [vmem:[%s381 + $0x90] sm:$0xff]
      %v475 = vld [vmem:[%s381 + $0x98] sm:$0xff]
      %v476 = vld [vmem:[%s381 + $0xa8] sm:$0xff]
      %v477 = vld [vmem:[%s381 + $0xb0] sm:$0xff]
      %v478 = vld [vmem:[%s381 + $0xc0] sm:$0xff]
      %v479 = vld [vmem:[%s381 + $0xc8] sm:$0xff]
      %v480 = vld [vmem:[%s381 + $0xd8] sm:$0xff]
      %v481 = vld [vmem:[%s381 + $0xe0] sm:$0xff]
      %v482 = vld [vmem:[%s381 + $0xf0] sm:$0xff]
      %v483 = vld [vmem:[%s381 + $0xf8] sm:$0xff]
      %v484 = vld [vmem:[%s381 + $0x108] sm:$0xff]
      %v485 = vld [vmem:[%s381 + $0x110] sm:$0xff]
      %v486 = vld [vmem:[%s381 + $0x120] sm:$0xff]
      %v487 = vld [vmem:[%s381 + $0x128] sm:$0xff]
      %v488 = vld [vmem:[%s381 + $0x138] sm:$0xff]
      %v489 = vld [vmem:[%s381 + $0x140] sm:$0xff]
      %v490 = vld [vmem:[%s381 + $0x150] sm:$0xff]
      %v491 = vld [vmem:[%s381 + $0x158] sm:$0xff]
      %v492 = vld [vmem:[%s381 + $0x168] sm:$0xff]
      %v493 = vld [vmem:[%s381 + $0x170] sm:$0xff]
      %v494 = vpack.c.bf16 %v463, %v462
      %v495 = vpack.c.bf16 %v465, %v464
      %v496 = vpack.c.bf16 %v467, %v466
      %v497 = vpack.c.bf16 %v469, %v468
      %v498 = vpack.c.bf16 %v471, %v470
      %v499 = vpack.c.bf16 %v473, %v472
      %v500 = vpack.c.bf16 %v475, %v474
      %v501 = vpack.c.bf16 %v477, %v476
      %v502 = vpack.c.bf16 %v479, %v478
      %v503 = vpack.c.bf16 %v481, %v480
      %v504 = vpack.c.bf16 %v483, %v482
      %v505 = vpack.c.bf16 %v485, %v484
      %v506 = vpack.c.bf16 %v487, %v486
      %v507 = vpack.c.bf16 %v489, %v488
      %v508 = vpack.c.bf16 %v491, %v490
      %v509 = vpack.c.bf16 %v493, %v492
      %v526 = vunpack.c.l.b16 %v494
      %v527 = vunpack.c.h.b16 %v494
      %v528 = vunpack.c.l.b16 %v495
      %v529 = vunpack.c.h.b16 %v495
      %v530 = vunpack.c.l.b16 %v496
      %v531 = vunpack.c.h.b16 %v496
      %v532 = vunpack.c.l.b16 %v497
      %v533 = vunpack.c.h.b16 %v497
      %v534 = vunpack.c.l.b16 %v498
      %v535 = vunpack.c.h.b16 %v498
      %v536 = vunpack.c.l.b16 %v499
      %v537 = vunpack.c.h.b16 %v499
      %v538 = vunpack.c.l.b16 %v500
      %v539 = vunpack.c.h.b16 %v500
      %v540 = vunpack.c.l.b16 %v501
      %v541 = vunpack.c.h.b16 %v501
      %v542 = vunpack.c.l.b16 %v502
      %v543 = vunpack.c.h.b16 %v502
      %v544 = vunpack.c.l.b16 %v503
      %v545 = vunpack.c.h.b16 %v503
      %v546 = vunpack.c.l.b16 %v504
      %v547 = vunpack.c.h.b16 %v504
      %v548 = vunpack.c.l.b16 %v505
      %v549 = vunpack.c.h.b16 %v505
      %v550 = vunpack.c.l.b16 %v506
      %v551 = vunpack.c.h.b16 %v506
      %v552 = vunpack.c.l.b16 %v507
      %v553 = vunpack.c.h.b16 %v507
      %v554 = vunpack.c.l.b16 %v508
      %v555 = vunpack.c.h.b16 %v508
      %v556 = vunpack.c.l.b16 %v509
      %v557 = vunpack.c.h.b16 %v509
      %v558 = vpack.c.b16 %v526, %v526
      %v559 = vpack.c.b16 %v527, %v527
      %v560 = vpack.c.b16 %v528, %v528
      %v561 = vpack.c.b16 %v529, %v529
      %v562 = vpack.c.b16 %v530, %v530
      %v563 = vpack.c.b16 %v531, %v531
      %v564 = vpack.c.b16 %v532, %v532
      %v565 = vpack.c.b16 %v533, %v533
      %v566 = vpack.c.b16 %v534, %v534
      %v567 = vpack.c.b16 %v535, %v535
      %v568 = vpack.c.b16 %v536, %v536
      %v569 = vpack.c.b16 %v537, %v537
      %v570 = vpack.c.b16 %v538, %v538
      %v571 = vpack.c.b16 %v539, %v539
      %v572 = vpack.c.b16 %v540, %v540
      %v573 = vpack.c.b16 %v541, %v541
      %v574 = vpack.c.b16 %v542, %v542
      %v575 = vpack.c.b16 %v543, %v543
      %v576 = vpack.c.b16 %v544, %v544
      %v577 = vpack.c.b16 %v545, %v545
      %v578 = vpack.c.b16 %v546, %v546
      %v579 = vpack.c.b16 %v547, %v547
      %v580 = vpack.c.b16 %v548, %v548
      %v581 = vpack.c.b16 %v549, %v549
      %v582 = vpack.c.b16 %v550, %v550
      %v583 = vpack.c.b16 %v551, %v551
      %v584 = vpack.c.b16 %v552, %v552
      %v585 = vpack.c.b16 %v553, %v553
      %v586 = vpack.c.b16 %v554, %v554
      %v587 = vpack.c.b16 %v555, %v555
      %v588 = vpack.c.b16 %v556, %v556
      %v589 = vpack.c.b16 %v557, %v557
      %622 = vst [vmem:[#allocation2] sm:$0xf] %v558
      %623 = vst [vmem:[#allocation2 + $0x24] sm:$0xf] %v559
      %624 = vst [vmem:[#allocation2 + $0x48] sm:$0xf] %v560
      %625 = vst [vmem:[#allocation2 + $0x6c] sm:$0xf] %v561
      %626 = vst [vmem:[#allocation2 + $0x90] sm:$0xf] %v562
      %627 = vst [vmem:[#allocation2 + $0xb4] sm:$0xf] %v563
      %628 = vst [vmem:[#allocation2 + $0xd8] sm:$0xf] %v564
      %629 = vst [vmem:[#allocation2 + $0xfc] sm:$0xf] %v565
      %630 = vst [vmem:[#allocation2 + $0x120] sm:$0xf] %v566
      %631 = vst [vmem:[#allocation2 + $0x144] sm:$0xf] %v567
      %632 = vst [vmem:[#allocation2 + $0x168] sm:$0xf] %v568
      %633 = vst [vmem:[#allocation2 + $0x18c] sm:$0xf] %v569
      %634 = vst [vmem:[#allocation2 + $0x1b0] sm:$0xf] %v570
      %635 = vst [vmem:[#allocation2 + $0x1d4] sm:$0xf] %v571
      %636 = vst [vmem:[#allocation2 + $0x1f8] sm:$0xf] %v572
      %637 = vst [vmem:[#allocation2 + $0x21c] sm:$0xf] %v573
      %638 = vst [vmem:[#allocation2 + $0x240] sm:$0xf] %v574
      %639 = vst [vmem:[#allocation2 + $0x264] sm:$0xf] %v575
      %640 = vst [vmem:[#allocation2 + $0x288] sm:$0xf] %v576
      %641 = vst [vmem:[#allocation2 + $0x2ac] sm:$0xf] %v577
      %642 = vst [vmem:[#allocation2 + $0x2d0] sm:$0xf] %v578
      %643 = vst [vmem:[#allocation2 + $0x2f4] sm:$0xf] %v579
      %644 = vst [vmem:[#allocation2 + $0x318] sm:$0xf] %v580
      %645 = vst [vmem:[#allocation2 + $0x33c] sm:$0xf] %v581
      %646 = vst [vmem:[#allocation2 + $0x360] sm:$0xf] %v582
      %647 = vst [vmem:[#allocation2 + $0x384] sm:$0xf] %v583
      %648 = vst [vmem:[#allocation2 + $0x3a8] sm:$0xf] %v584
      %649 = vst [vmem:[#allocation2 + $0x3cc] sm:$0xf] %v585
      %650 = vst [vmem:[#allocation2 + $0x3f0] sm:$0xf] %v586
      %651 = vst [vmem:[#allocation2 + $0x414] sm:$0xf] %v587
      %652 = vst [vmem:[#allocation2 + $0x438] sm:$0xf] %v588
      %653 = vst [vmem:[#allocation2 + $0x45c] sm:$0xf] %v589
      %v654 = vld [vmem:[%s381 + $0x1] sm:$0xff]
      %v655 = vld [vmem:[%s381 + $0x9] sm:$0xff]
      %v656 = vld [vmem:[%s381 + $0x19] sm:$0xff]
      %v657 = vld [vmem:[%s381 + $0x21] sm:$0xff]
      %v658 = vld [vmem:[%s381 + $0x31] sm:$0xff]
      %v659 = vld [vmem:[%s381 + $0x39] sm:$0xff]
      %v660 = vld [vmem:[%s381 + $0x49] sm:$0xff]
      %v661 = vld [vmem:[%s381 + $0x51] sm:$0xff]
      %v662 = vld [vmem:[%s381 + $0x61] sm:$0xff]
      %v663 = vld [vmem:[%s381 + $0x69] sm:$0xff]
      %v664 = vld [vmem:[%s381 + $0x79] sm:$0xff]
      %v665 = vld [vmem:[%s381 + $0x81] sm:$0xff]
      %v666 = vld [vmem:[%s381 + $0x91] sm:$0xff]
      %v667 = vld [vmem:[%s381 + $0x99] sm:$0xff]
      %v668 = vld [vmem:[%s381 + $0xa9] sm:$0xff]
      %v669 = vld [vmem:[%s381 + $0xb1] sm:$0xff]
      %v670 = vld [vmem:[%s381 + $0xc1] sm:$0xff]
      %v671 = vld [vmem:[%s381 + $0xc9] sm:$0xff]
      %v672 = vld [vmem:[%s381 + $0xd9] sm:$0xff]
      %v673 = vld [vmem:[%s381 + $0xe1] sm:$0xff]
      %v674 = vld [vmem:[%s381 + $0xf1] sm:$0xff]
      %v675 = vld [vmem:[%s381 + $0xf9] sm:$0xff]
      %v676 = vld [vmem:[%s381 + $0x109] sm:$0xff]
      %v677 = vld [vmem:[%s381 + $0x111] sm:$0xff]
      %v678 = vld [vmem:[%s381 + $0x121] sm:$0xff]
      %v679 = vld [vmem:[%s381 + $0x129] sm:$0xff]
      %v680 = vld [vmem:[%s381 + $0x139] sm:$0xff]
      %v681 = vld [vmem:[%s381 + $0x141] sm:$0xff]
      %v682 = vld [vmem:[%s381 + $0x151] sm:$0xff]
      %v683 = vld [vmem:[%s381 + $0x159] sm:$0xff]
      %v684 = vld [vmem:[%s381 + $0x169] sm:$0xff]
      %v685 = vld [vmem:[%s381 + $0x171] sm:$0xff]
      %v686 = vpack.c.bf16 %v655, %v654
      %v687 = vpack.c.bf16 %v657, %v656
      %v688 = vpack.c.bf16 %v659, %v658
      %v689 = vpack.c.bf16 %v661, %v660
      %v690 = vpack.c.bf16 %v663, %v662
      %v691 = vpack.c.bf16 %v665, %v664
      %v692 = vpack.c.bf16 %v667, %v666
      %v693 = vpack.c.bf16 %v669, %v668
      %v694 = vpack.c.bf16 %v671, %v670
      %v695 = vpack.c.bf16 %v673, %v672
      %v696 = vpack.c.bf16 %v675, %v674
      %v697 = vpack.c.bf16 %v677, %v676
      %v698 = vpack.c.bf16 %v679, %v678
      %v699 = vpack.c.bf16 %v681, %v680
      %v700 = vpack.c.bf16 %v683, %v682
      %v701 = vpack.c.bf16 %v685, %v684
      %v718 = vunpack.c.l.b16 %v686
      %v719 = vunpack.c.h.b16 %v686
      %v720 = vunpack.c.l.b16 %v687
      %v721 = vunpack.c.h.b16 %v687
      %v722 = vunpack.c.l.b16 %v688
      %v723 = vunpack.c.h.b16 %v688
      %v724 = vunpack.c.l.b16 %v689
      %v725 = vunpack.c.h.b16 %v689
      %v726 = vunpack.c.l.b16 %v690
      %v727 = vunpack.c.h.b16 %v690
      %v728 = vunpack.c.l.b16 %v691
      %v729 = vunpack.c.h.b16 %v691
      %v730 = vunpack.c.l.b16 %v692
      %v731 = vunpack.c.h.b16 %v692
      %v732 = vunpack.c.l.b16 %v693
      %v733 = vunpack.c.h.b16 %v693
      %v734 = vunpack.c.l.b16 %v694
      %v735 = vunpack.c.h.b16 %v694
      %v736 = vunpack.c.l.b16 %v695
      %v737 = vunpack.c.h.b16 %v695
      %v738 = vunpack.c.l.b16 %v696
      %v739 = vunpack.c.h.b16 %v696
      %v740 = vunpack.c.l.b16 %v697
      %v741 = vunpack.c.h.b16 %v697
      %v742 = vunpack.c.l.b16 %v698
      %v743 = vunpack.c.h.b16 %v698
      %v744 = vunpack.c.l.b16 %v699
      %v745 = vunpack.c.h.b16 %v699
      %v746 = vunpack.c.l.b16 %v700
      %v747 = vunpack.c.h.b16 %v700
      %v748 = vunpack.c.l.b16 %v701
      %v749 = vunpack.c.h.b16 %v701
      %v750 = vpack.c.b16 %v718, %v718
      %v751 = vpack.c.b16 %v719, %v719
      %v752 = vpack.c.b16 %v720, %v720
      %v753 = vpack.c.b16 %v721, %v721
      %v754 = vpack.c.b16 %v722, %v722
      %v755 = vpack.c.b16 %v723, %v723
      %v756 = vpack.c.b16 %v724, %v724
      %v757 = vpack.c.b16 %v725, %v725
      %v758 = vpack.c.b16 %v726, %v726
      %v759 = vpack.c.b16 %v727, %v727
      %v760 = vpack.c.b16 %v728, %v728
      %v761 = vpack.c.b16 %v729, %v729
      %v762 = vpack.c.b16 %v730, %v730
      %v763 = vpack.c.b16 %v731, %v731
      %v764 = vpack.c.b16 %v732, %v732
      %v765 = vpack.c.b16 %v733, %v733
      %v766 = vpack.c.b16 %v734, %v734
      %v767 = vpack.c.b16 %v735, %v735
      %v768 = vpack.c.b16 %v736, %v736
      %v769 = vpack.c.b16 %v737, %v737
      %v770 = vpack.c.b16 %v738, %v738
      %v771 = vpack.c.b16 %v739, %v739
      %v772 = vpack.c.b16 %v740, %v740
      %v773 = vpack.c.b16 %v741, %v741
      %v774 = vpack.c.b16 %v742, %v742
      %v775 = vpack.c.b16 %v743, %v743
      %v776 = vpack.c.b16 %v744, %v744
      %v777 = vpack.c.b16 %v745, %v745
      %v778 = vpack.c.b16 %v746, %v746
      %v779 = vpack.c.b16 %v747, %v747
      %v780 = vpack.c.b16 %v748, %v748
      %v781 = vpack.c.b16 %v749, %v749
      %814 = vst [vmem:[#allocation2 + $0x4] sm:$0xf] %v750
      %815 = vst [vmem:[#allocation2 + $0x28] sm:$0xf] %v751
      %816 = vst [vmem:[#allocation2 + $0x4c] sm:$0xf] %v752
      %817 = vst [vmem:[#allocation2 + $0x70] sm:$0xf] %v753
      %818 = vst [vmem:[#allocation2 + $0x94] sm:$0xf] %v754
      %819 = vst [vmem:[#allocation2 + $0xb8] sm:$0xf] %v755
      %820 = vst [vmem:[#allocation2 + $0xdc] sm:$0xf] %v756
      %821 = vst [vmem:[#allocation2 + $0x100] sm:$0xf] %v757
      %822 = vst [vmem:[#allocation2 + $0x124] sm:$0xf] %v758
      %823 = vst [vmem:[#allocation2 + $0x148] sm:$0xf] %v759
      %824 = vst [vmem:[#allocation2 + $0x16c] sm:$0xf] %v760
      %825 = vst [vmem:[#allocation2 + $0x190] sm:$0xf] %v761
      %826 = vst [vmem:[#allocation2 + $0x1b4] sm:$0xf] %v762
      %827 = vst [vmem:[#allocation2 + $0x1d8] sm:$0xf] %v763
      %828 = vst [vmem:[#allocation2 + $0x1fc] sm:$0xf] %v764
      %829 = vst [vmem:[#allocation2 + $0x220] sm:$0xf] %v765
      %830 = vst [vmem:[#allocation2 + $0x244] sm:$0xf] %v766
      %831 = vst [vmem:[#allocation2 + $0x268] sm:$0xf] %v767
      %832 = vst [vmem:[#allocation2 + $0x28c] sm:$0xf] %v768
      %833 = vst [vmem:[#allocation2 + $0x2b0] sm:$0xf] %v769
      %834 = vst [vmem:[#allocation2 + $0x2d4] sm:$0xf] %v770
      %835 = vst [vmem:[#allocation2 + $0x2f8] sm:$0xf] %v771
      %836 = vst [vmem:[#allocation2 + $0x31c] sm:$0xf] %v772
      %837 = vst [vmem:[#allocation2 + $0x340] sm:$0xf] %v773
      %838 = vst [vmem:[#allocation2 + $0x364] sm:$0xf] %v774
      %839 = vst [vmem:[#allocation2 + $0x388] sm:$0xf] %v775
      %840 = vst [vmem:[#allocation2 + $0x3ac] sm:$0xf] %v776
      %841 = vst [vmem:[#allocation2 + $0x3d0] sm:$0xf] %v777
      %842 = vst [vmem:[#allocation2 + $0x3f4] sm:$0xf] %v778
      %843 = vst [vmem:[#allocation2 + $0x418] sm:$0xf] %v779
      %844 = vst [vmem:[#allocation2 + $0x43c] sm:$0xf] %v780
      %845 = vst [vmem:[#allocation2 + $0x460] sm:$0xf] %v781
      %v846 = vld [vmem:[%s381 + $0x2] sm:$0xff]
      %v847 = vld [vmem:[%s381 + $0xa] sm:$0xff]
      %v848 = vld [vmem:[%s381 + $0x1a] sm:$0xff]
      %v849 = vld [vmem:[%s381 + $0x22] sm:$0xff]
      %v850 = vld [vmem:[%s381 + $0x32] sm:$0xff]
      %v851 = vld [vmem:[%s381 + $0x3a] sm:$0xff]
      %v852 = vld [vmem:[%s381 + $0x4a] sm:$0xff]
      %v853 = vld [vmem:[%s381 + $0x52] sm:$0xff]
      %v854 = vld [vmem:[%s381 + $0x62] sm:$0xff]
      %v855 = vld [vmem:[%s381 + $0x6a] sm:$0xff]
      %v856 = vld [vmem:[%s381 + $0x7a] sm:$0xff]
      %v857 = vld [vmem:[%s381 + $0x82] sm:$0xff]
      %v858 = vld [vmem:[%s381 + $0x92] sm:$0xff]
      %v859 = vld [vmem:[%s381 + $0x9a] sm:$0xff]
      %v860 = vld [vmem:[%s381 + $0xaa] sm:$0xff]
      %v861 = vld [vmem:[%s381 + $0xb2] sm:$0xff]
      %v862 = vld [vmem:[%s381 + $0xc2] sm:$0xff]
      %v863 = vld [vmem:[%s381 + $0xca] sm:$0xff]
      %v864 = vld [vmem:[%s381 + $0xda] sm:$0xff]
      %v865 = vld [vmem:[%s381 + $0xe2] sm:$0xff]
      %v866 = vld [vmem:[%s381 + $0xf2] sm:$0xff]
      %v867 = vld [vmem:[%s381 + $0xfa] sm:$0xff]
      %v868 = vld [vmem:[%s381 + $0x10a] sm:$0xff]
      %v869 = vld [vmem:[%s381 + $0x112] sm:$0xff]
      %v870 = vld [vmem:[%s381 + $0x122] sm:$0xff]
      %v871 = vld [vmem:[%s381 + $0x12a] sm:$0xff]
      %v872 = vld [vmem:[%s381 + $0x13a] sm:$0xff]
      %v873 = vld [vmem:[%s381 + $0x142] sm:$0xff]
      %v874 = vld [vmem:[%s381 + $0x152] sm:$0xff]
      %v875 = vld [vmem:[%s381 + $0x15a] sm:$0xff]
      %v876 = vld [vmem:[%s381 + $0x16a] sm:$0xff]
      %v877 = vld [vmem:[%s381 + $0x172] sm:$0xff]
      %v878 = vpack.c.bf16 %v847, %v846
      %v879 = vpack.c.bf16 %v849, %v848
      %v880 = vpack.c.bf16 %v851, %v850
      %v881 = vpack.c.bf16 %v853, %v852
      %v882 = vpack.c.bf16 %v855, %v854
      %v883 = vpack.c.bf16 %v857, %v856
      %v884 = vpack.c.bf16 %v859, %v858
      %v885 = vpack.c.bf16 %v861, %v860
      %v886 = vpack.c.bf16 %v863, %v862
      %v887 = vpack.c.bf16 %v865, %v864
      %v888 = vpack.c.bf16 %v867, %v866
      %v889 = vpack.c.bf16 %v869, %v868
      %v890 = vpack.c.bf16 %v871, %v870
      %v891 = vpack.c.bf16 %v873, %v872
      %v892 = vpack.c.bf16 %v875, %v874
      %v893 = vpack.c.bf16 %v877, %v876
      %v910 = vunpack.c.l.b16 %v878
      %v911 = vunpack.c.h.b16 %v878
      %v912 = vunpack.c.l.b16 %v879
      %v913 = vunpack.c.h.b16 %v879
      %v914 = vunpack.c.l.b16 %v880
      %v915 = vunpack.c.h.b16 %v880
      %v916 = vunpack.c.l.b16 %v881
      %v917 = vunpack.c.h.b16 %v881
      %v918 = vunpack.c.l.b16 %v882
      %v919 = vunpack.c.h.b16 %v882
      %v920 = vunpack.c.l.b16 %v883
      %v921 = vunpack.c.h.b16 %v883
      %v922 = vunpack.c.l.b16 %v884
      %v923 = vunpack.c.h.b16 %v884
      %v924 = vunpack.c.l.b16 %v885
      %v925 = vunpack.c.h.b16 %v885
      %v926 = vunpack.c.l.b16 %v886
      %v927 = vunpack.c.h.b16 %v886
      %v928 = vunpack.c.l.b16 %v887
      %v929 = vunpack.c.h.b16 %v887
      %v930 = vunpack.c.l.b16 %v888
      %v931 = vunpack.c.h.b16 %v888
      %v932 = vunpack.c.l.b16 %v889
      %v933 = vunpack.c.h.b16 %v889
      %v934 = vunpack.c.l.b16 %v890
      %v935 = vunpack.c.h.b16 %v890
      %v936 = vunpack.c.l.b16 %v891
      %v937 = vunpack.c.h.b16 %v891
      %v938 = vunpack.c.l.b16 %v892
      %v939 = vunpack.c.h.b16 %v892
      %v940 = vunpack.c.l.b16 %v893
      %v941 = vunpack.c.h.b16 %v893
      %v942 = vpack.c.b16 %v910, %v910
      %v943 = vpack.c.b16 %v911, %v911
      %v944 = vpack.c.b16 %v912, %v912
      %v945 = vpack.c.b16 %v913, %v913
      %v946 = vpack.c.b16 %v914, %v914
      %v947 = vpack.c.b16 %v915, %v915
      %v948 = vpack.c.b16 %v916, %v916
      %v949 = vpack.c.b16 %v917, %v917
      %v950 = vpack.c.b16 %v918, %v918
      %v951 = vpack.c.b16 %v919, %v919
      %v952 = vpack.c.b16 %v920, %v920
      %v953 = vpack.c.b16 %v921, %v921
      %v954 = vpack.c.b16 %v922, %v922
      %v955 = vpack.c.b16 %v923, %v923
      %v956 = vpack.c.b16 %v924, %v924
      %v957 = vpack.c.b16 %v925, %v925
      %v958 = vpack.c.b16 %v926, %v926
      %v959 = vpack.c.b16 %v927, %v927
      %v960 = vpack.c.b16 %v928, %v928
      %v961 = vpack.c.b16 %v929, %v929
      %v962 = vpack.c.b16 %v930, %v930
      %v963 = vpack.c.b16 %v931, %v931
      %v964 = vpack.c.b16 %v932, %v932
      %v965 = vpack.c.b16 %v933, %v933
      %v966 = vpack.c.b16 %v934, %v934
      %v967 = vpack.c.b16 %v935, %v935
      %v968 = vpack.c.b16 %v936, %v936
      %v969 = vpack.c.b16 %v937, %v937
      %v970 = vpack.c.b16 %v938, %v938
      %v971 = vpack.c.b16 %v939, %v939
      %v972 = vpack.c.b16 %v940, %v940
      %v973 = vpack.c.b16 %v941, %v941
      %1006 = vst [vmem:[#allocation2 + $0x8] sm:$0xf] %v942
      %1007 = vst [vmem:[#allocation2 + $0x2c] sm:$0xf] %v943
      %1008 = vst [vmem:[#allocation2 + $0x50] sm:$0xf] %v944
      %1009 = vst [vmem:[#allocation2 + $0x74] sm:$0xf] %v945
      %1010 = vst [vmem:[#allocation2 + $0x98] sm:$0xf] %v946
      %1011 = vst [vmem:[#allocation2 + $0xbc] sm:$0xf] %v947
      %1012 = vst [vmem:[#allocation2 + $0xe0] sm:$0xf] %v948
      %1013 = vst [vmem:[#allocation2 + $0x104] sm:$0xf] %v949
      %1014 = vst [vmem:[#allocation2 + $0x128] sm:$0xf] %v950
      %1015 = vst [vmem:[#allocation2 + $0x14c] sm:$0xf] %v951
      %1016 = vst [vmem:[#allocation2 + $0x170] sm:$0xf] %v952
      %1017 = vst [vmem:[#allocation2 + $0x194] sm:$0xf] %v953
      %1018 = vst [vmem:[#allocation2 + $0x1b8] sm:$0xf] %v954
      %1019 = vst [vmem:[#allocation2 + $0x1dc] sm:$0xf] %v955
      %1020 = vst [vmem:[#allocation2 + $0x200] sm:$0xf] %v956
      %1021 = vst [vmem:[#allocation2 + $0x224] sm:$0xf] %v957
      %1022 = vst [vmem:[#allocation2 + $0x248] sm:$0xf] %v958
      %1023 = vst [vmem:[#allocation2 + $0x26c] sm:$0xf] %v959
      %1024 = vst [vmem:[#allocation2 + $0x290] sm:$0xf] %v960
      %1025 = vst [vmem:[#allocation2 + $0x2b4] sm:$0xf] %v961
      %1026 = vst [vmem:[#allocation2 + $0x2d8] sm:$0xf] %v962
      %1027 = vst [vmem:[#allocation2 + $0x2fc] sm:$0xf] %v963
      %1028 = vst [vmem:[#allocation2 + $0x320] sm:$0xf] %v964
      %1029 = vst [vmem:[#allocation2 + $0x344] sm:$0xf] %v965
      %1030 = vst [vmem:[#allocation2 + $0x368] sm:$0xf] %v966
      %1031 = vst [vmem:[#allocation2 + $0x38c] sm:$0xf] %v967
      %1032 = vst [vmem:[#allocation2 + $0x3b0] sm:$0xf] %v968
      %1033 = vst [vmem:[#allocation2 + $0x3d4] sm:$0xf] %v969
      %1034 = vst [vmem:[#allocation2 + $0x3f8] sm:$0xf] %v970
      %1035 = vst [vmem:[#allocation2 + $0x41c] sm:$0xf] %v971
      %1036 = vst [vmem:[#allocation2 + $0x440] sm:$0xf] %v972
      %1037 = vst [vmem:[#allocation2 + $0x464] sm:$0xf] %v973
      %s1038 = scalar_lea.vmem %s381, 24
      %v1039 = vld [vmem:[%s1038] sm:$0xff]
      %v1040 = vld [vmem:[%s1038 + $0x8] sm:$0xff]
      %v1041 = vld [vmem:[%s1038 + $0x18] sm:$0xff]
      %v1042 = vld [vmem:[%s1038 + $0x20] sm:$0xff]
      %v1043 = vld [vmem:[%s1038 + $0x30] sm:$0xff]
      %v1044 = vld [vmem:[%s1038 + $0x38] sm:$0xff]
      %v1045 = vld [vmem:[%s1038 + $0x48] sm:$0xff]
      %v1046 = vld [vmem:[%s1038 + $0x50] sm:$0xff]
      %v1047 = vld [vmem:[%s1038 + $0x60] sm:$0xff]
      %v1048 = vld [vmem:[%s1038 + $0x68] sm:$0xff]
      %v1049 = vld [vmem:[%s1038 + $0x78] sm:$0xff]
      %v1050 = vld [vmem:[%s1038 + $0x80] sm:$0xff]
      %v1051 = vld [vmem:[%s1038 + $0x90] sm:$0xff]
      %v1052 = vld [vmem:[%s1038 + $0x98] sm:$0xff]
      %v1053 = vld [vmem:[%s1038 + $0xa8] sm:$0xff]
      %v1054 = vld [vmem:[%s1038 + $0xb0] sm:$0xff]
      %v1055 = vld [vmem:[%s1038 + $0xc0] sm:$0xff]
      %v1056 = vld [vmem:[%s1038 + $0xc8] sm:$0xff]
      %v1057 = vld [vmem:[%s1038 + $0xd8] sm:$0xff]
      %v1058 = vld [vmem:[%s1038 + $0xe0] sm:$0xff]
      %v1059 = vld [vmem:[%s1038 + $0xf0] sm:$0xff]
      %v1060 = vld [vmem:[%s1038 + $0xf8] sm:$0xff]
      %v1061 = vld [vmem:[%s1038 + $0x108] sm:$0xff]
      %v1062 = vld [vmem:[%s1038 + $0x110] sm:$0xff]
      %v1063 = vld [vmem:[%s1038 + $0x120] sm:$0xff]
      %v1064 = vld [vmem:[%s1038 + $0x128] sm:$0xff]
      %v1065 = vld [vmem:[%s1038 + $0x138] sm:$0xff]
      %v1066 = vld [vmem:[%s1038 + $0x140] sm:$0xff]
      %v1067 = vld [vmem:[%s1038 + $0x150] sm:$0xff]
      %v1068 = vld [vmem:[%s1038 + $0x158] sm:$0xff]
      %v1069 = vld [vmem:[%s1038 + $0x168] sm:$0xff]
      %v1070 = vld [vmem:[%s1038 + $0x170] sm:$0xff]
      %v1071 = vpack.c.bf16 %v1040, %v1039
      %v1072 = vpack.c.bf16 %v1042, %v1041
      %v1073 = vpack.c.bf16 %v1044, %v1043
      %v1074 = vpack.c.bf16 %v1046, %v1045
      %v1075 = vpack.c.bf16 %v1048, %v1047
      %v1076 = vpack.c.bf16 %v1050, %v1049
      %v1077 = vpack.c.bf16 %v1052, %v1051
      %v1078 = vpack.c.bf16 %v1054, %v1053
      %v1079 = vpack.c.bf16 %v1056, %v1055
      %v1080 = vpack.c.bf16 %v1058, %v1057
      %v1081 = vpack.c.bf16 %v1060, %v1059
      %v1082 = vpack.c.bf16 %v1062, %v1061
      %v1083 = vpack.c.bf16 %v1064, %v1063
      %v1084 = vpack.c.bf16 %v1066, %v1065
      %v1085 = vpack.c.bf16 %v1068, %v1067
      %v1086 = vpack.c.bf16 %v1070, %v1069
      %v1103 = vunpack.c.l.b16 %v1071
      %v1104 = vunpack.c.h.b16 %v1071
      %v1105 = vunpack.c.l.b16 %v1072
      %v1106 = vunpack.c.h.b16 %v1072
      %v1107 = vunpack.c.l.b16 %v1073
      %v1108 = vunpack.c.h.b16 %v1073
      %v1109 = vunpack.c.l.b16 %v1074
      %v1110 = vunpack.c.h.b16 %v1074
      %v1111 = vunpack.c.l.b16 %v1075
      %v1112 = vunpack.c.h.b16 %v1075
      %v1113 = vunpack.c.l.b16 %v1076
      %v1114 = vunpack.c.h.b16 %v1076
      %v1115 = vunpack.c.l.b16 %v1077
      %v1116 = vunpack.c.h.b16 %v1077
      %v1117 = vunpack.c.l.b16 %v1078
      %v1118 = vunpack.c.h.b16 %v1078
      %v1119 = vunpack.c.l.b16 %v1079
      %v1120 = vunpack.c.h.b16 %v1079
      %v1121 = vunpack.c.l.b16 %v1080
      %v1122 = vunpack.c.h.b16 %v1080
      %v1123 = vunpack.c.l.b16 %v1081
      %v1124 = vunpack.c.h.b16 %v1081
      %v1125 = vunpack.c.l.b16 %v1082
      %v1126 = vunpack.c.h.b16 %v1082
      %v1127 = vunpack.c.l.b16 %v1083
      %v1128 = vunpack.c.h.b16 %v1083
      %v1129 = vunpack.c.l.b16 %v1084
      %v1130 = vunpack.c.h.b16 %v1084
      %v1131 = vunpack.c.l.b16 %v1085
      %v1132 = vunpack.c.h.b16 %v1085
      %v1133 = vunpack.c.l.b16 %v1086
      %v1134 = vunpack.c.h.b16 %v1086
      %v1135 = vpack.c.b16 %v1103, %v1103
      %v1136 = vpack.c.b16 %v1104, %v1104
      %v1137 = vpack.c.b16 %v1105, %v1105
      %v1138 = vpack.c.b16 %v1106, %v1106
      %v1139 = vpack.c.b16 %v1107, %v1107
      %v1140 = vpack.c.b16 %v1108, %v1108
      %v1141 = vpack.c.b16 %v1109, %v1109
      %v1142 = vpack.c.b16 %v1110, %v1110
      %v1143 = vpack.c.b16 %v1111, %v1111
      %v1144 = vpack.c.b16 %v1112, %v1112
      %v1145 = vpack.c.b16 %v1113, %v1113
      %v1146 = vpack.c.b16 %v1114, %v1114
      %v1147 = vpack.c.b16 %v1115, %v1115
      %v1148 = vpack.c.b16 %v1116, %v1116
      %v1149 = vpack.c.b16 %v1117, %v1117
      %v1150 = vpack.c.b16 %v1118, %v1118
      %v1151 = vpack.c.b16 %v1119, %v1119
      %v1152 = vpack.c.b16 %v1120, %v1120
      %v1153 = vpack.c.b16 %v1121, %v1121
      %v1154 = vpack.c.b16 %v1122, %v1122
      %v1155 = vpack.c.b16 %v1123, %v1123
      %v1156 = vpack.c.b16 %v1124, %v1124
      %v1157 = vpack.c.b16 %v1125, %v1125
      %v1158 = vpack.c.b16 %v1126, %v1126
      %v1159 = vpack.c.b16 %v1127, %v1127
      %v1160 = vpack.c.b16 %v1128, %v1128
      %v1161 = vpack.c.b16 %v1129, %v1129
      %v1162 = vpack.c.b16 %v1130, %v1130
      %v1163 = vpack.c.b16 %v1131, %v1131
      %v1164 = vpack.c.b16 %v1132, %v1132
      %v1165 = vpack.c.b16 %v1133, %v1133
      %v1166 = vpack.c.b16 %v1134, %v1134
      %1199 = vst [vmem:[#allocation2 + $0xc] sm:$0xf] %v1135
      %1200 = vst [vmem:[#allocation2 + $0x30] sm:$0xf] %v1136
      %1201 = vst [vmem:[#allocation2 + $0x54] sm:$0xf] %v1137
      %1202 = vst [vmem:[#allocation2 + $0x78] sm:$0xf] %v1138
      %1203 = vst [vmem:[#allocation2 + $0x9c] sm:$0xf] %v1139
      %1204 = vst [vmem:[#allocation2 + $0xc0] sm:$0xf] %v1140
      %1205 = vst [vmem:[#allocation2 + $0xe4] sm:$0xf] %v1141
      %1206 = vst [vmem:[#allocation2 + $0x108] sm:$0xf] %v1142
      %1207 = vst [vmem:[#allocation2 + $0x12c] sm:$0xf] %v1143
      %1208 = vst [vmem:[#allocation2 + $0x150] sm:$0xf] %v1144
      %1209 = vst [vmem:[#allocation2 + $0x174] sm:$0xf] %v1145
      %1210 = vst [vmem:[#allocation2 + $0x198] sm:$0xf] %v1146
      %1211 = vst [vmem:[#allocation2 + $0x1bc] sm:$0xf] %v1147
      %1212 = vst [vmem:[#allocation2 + $0x1e0] sm:$0xf] %v1148
      %1213 = vst [vmem:[#allocation2 + $0x204] sm:$0xf] %v1149
      %1214 = vst [vmem:[#allocation2 + $0x228] sm:$0xf] %v1150
      %1215 = vst [vmem:[#allocation2 + $0x24c] sm:$0xf] %v1151
      %1216 = vst [vmem:[#allocation2 + $0x270] sm:$0xf] %v1152
      %1217 = vst [vmem:[#allocation2 + $0x294] sm:$0xf] %v1153
      %1218 = vst [vmem:[#allocation2 + $0x2b8] sm:$0xf] %v1154
      %1219 = vst [vmem:[#allocation2 + $0x2dc] sm:$0xf] %v1155
      %1220 = vst [vmem:[#allocation2 + $0x300] sm:$0xf] %v1156
      %1221 = vst [vmem:[#allocation2 + $0x324] sm:$0xf] %v1157
      %1222 = vst [vmem:[#allocation2 + $0x348] sm:$0xf] %v1158
      %1223 = vst [vmem:[#allocation2 + $0x36c] sm:$0xf] %v1159
      %1224 = vst [vmem:[#allocation2 + $0x390] sm:$0xf] %v1160
      %1225 = vst [vmem:[#allocation2 + $0x3b4] sm:$0xf] %v1161
      %1226 = vst [vmem:[#allocation2 + $0x3d8] sm:$0xf] %v1162
      %1227 = vst [vmem:[#allocation2 + $0x3fc] sm:$0xf] %v1163
      %1228 = vst [vmem:[#allocation2 + $0x420] sm:$0xf] %v1164
      %1229 = vst [vmem:[#allocation2 + $0x444] sm:$0xf] %v1165
      %1230 = vst [vmem:[#allocation2 + $0x468] sm:$0xf] %v1166
      %v1231 = vld [vmem:[%s1038 + $0x1] sm:$0xff]
      %v1232 = vld [vmem:[%s1038 + $0x9] sm:$0xff]
      %v1233 = vld [vmem:[%s1038 + $0x19] sm:$0xff]
      %v1234 = vld [vmem:[%s1038 + $0x21] sm:$0xff]
      %v1235 = vld [vmem:[%s1038 + $0x31] sm:$0xff]
      %v1236 = vld [vmem:[%s1038 + $0x39] sm:$0xff]
      %v1237 = vld [vmem:[%s1038 + $0x49] sm:$0xff]
      %v1238 = vld [vmem:[%s1038 + $0x51] sm:$0xff]
      %v1239 = vld [vmem:[%s1038 + $0x61] sm:$0xff]
      %v1240 = vld [vmem:[%s1038 + $0x69] sm:$0xff]
      %v1241 = vld [vmem:[%s1038 + $0x79] sm:$0xff]
      %v1242 = vld [vmem:[%s1038 + $0x81] sm:$0xff]
      %v1243 = vld [vmem:[%s1038 + $0x91] sm:$0xff]
      %v1244 = vld [vmem:[%s1038 + $0x99] sm:$0xff]
      %v1245 = vld [vmem:[%s1038 + $0xa9] sm:$0xff]
      %v1246 = vld [vmem:[%s1038 + $0xb1] sm:$0xff]
      %v1247 = vld [vmem:[%s1038 + $0xc1] sm:$0xff]
      %v1248 = vld [vmem:[%s1038 + $0xc9] sm:$0xff]
      %v1249 = vld [vmem:[%s1038 + $0xd9] sm:$0xff]
      %v1250 = vld [vmem:[%s1038 + $0xe1] sm:$0xff]
      %v1251 = vld [vmem:[%s1038 + $0xf1] sm:$0xff]
      %v1252 = vld [vmem:[%s1038 + $0xf9] sm:$0xff]
      %v1253 = vld [vmem:[%s1038 + $0x109] sm:$0xff]
      %v1254 = vld [vmem:[%s1038 + $0x111] sm:$0xff]
      %v1255 = vld [vmem:[%s1038 + $0x121] sm:$0xff]
      %v1256 = vld [vmem:[%s1038 + $0x129] sm:$0xff]
      %v1257 = vld [vmem:[%s1038 + $0x139] sm:$0xff]
      %v1258 = vld [vmem:[%s1038 + $0x141] sm:$0xff]
      %v1259 = vld [vmem:[%s1038 + $0x151] sm:$0xff]
      %v1260 = vld [vmem:[%s1038 + $0x159] sm:$0xff]
      %v1261 = vld [vmem:[%s1038 + $0x169] sm:$0xff]
      %v1262 = vld [vmem:[%s1038 + $0x171] sm:$0xff]
      %v1263 = vpack.c.bf16 %v1232, %v1231
      %v1264 = vpack.c.bf16 %v1234, %v1233
      %v1265 = vpack.c.bf16 %v1236, %v1235
      %v1266 = vpack.c.bf16 %v1238, %v1237
      %v1267 = vpack.c.bf16 %v1240, %v1239
      %v1268 = vpack.c.bf16 %v1242, %v1241
      %v1269 = vpack.c.bf16 %v1244, %v1243
      %v1270 = vpack.c.bf16 %v1246, %v1245
      %v1271 = vpack.c.bf16 %v1248, %v1247
      %v1272 = vpack.c.bf16 %v1250, %v1249
      %v1273 = vpack.c.bf16 %v1252, %v1251
      %v1274 = vpack.c.bf16 %v1254, %v1253
      %v1275 = vpack.c.bf16 %v1256, %v1255
      %v1276 = vpack.c.bf16 %v1258, %v1257
      %v1277 = vpack.c.bf16 %v1260, %v1259
      %v1278 = vpack.c.bf16 %v1262, %v1261
      %v1295 = vunpack.c.l.b16 %v1263
      %v1296 = vunpack.c.h.b16 %v1263
      %v1297 = vunpack.c.l.b16 %v1264
      %v1298 = vunpack.c.h.b16 %v1264
      %v1299 = vunpack.c.l.b16 %v1265
      %v1300 = vunpack.c.h.b16 %v1265
      %v1301 = vunpack.c.l.b16 %v1266
      %v1302 = vunpack.c.h.b16 %v1266
      %v1303 = vunpack.c.l.b16 %v1267
      %v1304 = vunpack.c.h.b16 %v1267
      %v1305 = vunpack.c.l.b16 %v1268
      %v1306 = vunpack.c.h.b16 %v1268
      %v1307 = vunpack.c.l.b16 %v1269
      %v1308 = vunpack.c.h.b16 %v1269
      %v1309 = vunpack.c.l.b16 %v1270
      %v1310 = vunpack.c.h.b16 %v1270
      %v1311 = vunpack.c.l.b16 %v1271
      %v1312 = vunpack.c.h.b16 %v1271
      %v1313 = vunpack.c.l.b16 %v1272
      %v1314 = vunpack.c.h.b16 %v1272
      %v1315 = vunpack.c.l.b16 %v1273
      %v1316 = vunpack.c.h.b16 %v1273
      %v1317 = vunpack.c.l.b16 %v1274
      %v1318 = vunpack.c.h.b16 %v1274
      %v1319 = vunpack.c.l.b16 %v1275
      %v1320 = vunpack.c.h.b16 %v1275
      %v1321 = vunpack.c.l.b16 %v1276
      %v1322 = vunpack.c.h.b16 %v1276
      %v1323 = vunpack.c.l.b16 %v1277
      %v1324 = vunpack.c.h.b16 %v1277
      %v1325 = vunpack.c.l.b16 %v1278
      %v1326 = vunpack.c.h.b16 %v1278
      %v1327 = vpack.c.b16 %v1295, %v1295
      %v1328 = vpack.c.b16 %v1296, %v1296
      %v1329 = vpack.c.b16 %v1297, %v1297
      %v1330 = vpack.c.b16 %v1298, %v1298
      %v1331 = vpack.c.b16 %v1299, %v1299
      %v1332 = vpack.c.b16 %v1300, %v1300
      %v1333 = vpack.c.b16 %v1301, %v1301
      %v1334 = vpack.c.b16 %v1302, %v1302
      %v1335 = vpack.c.b16 %v1303, %v1303
      %v1336 = vpack.c.b16 %v1304, %v1304
      %v1337 = vpack.c.b16 %v1305, %v1305
      %v1338 = vpack.c.b16 %v1306, %v1306
      %v1339 = vpack.c.b16 %v1307, %v1307
      %v1340 = vpack.c.b16 %v1308, %v1308
      %v1341 = vpack.c.b16 %v1309, %v1309
      %v1342 = vpack.c.b16 %v1310, %v1310
      %v1343 = vpack.c.b16 %v1311, %v1311
      %v1344 = vpack.c.b16 %v1312, %v1312
      %v1345 = vpack.c.b16 %v1313, %v1313
      %v1346 = vpack.c.b16 %v1314, %v1314
      %v1347 = vpack.c.b16 %v1315, %v1315
      %v1348 = vpack.c.b16 %v1316, %v1316
      %v1349 = vpack.c.b16 %v1317, %v1317
      %v1350 = vpack.c.b16 %v1318, %v1318
      %v1351 = vpack.c.b16 %v1319, %v1319
      %v1352 = vpack.c.b16 %v1320, %v1320
      %v1353 = vpack.c.b16 %v1321, %v1321
      %v1354 = vpack.c.b16 %v1322, %v1322
      %v1355 = vpack.c.b16 %v1323, %v1323
      %v1356 = vpack.c.b16 %v1324, %v1324
      %v1357 = vpack.c.b16 %v1325, %v1325
      %v1358 = vpack.c.b16 %v1326, %v1326
      %1391 = vst [vmem:[#allocation2 + $0x10] sm:$0xf] %v1327
      %1392 = vst [vmem:[#allocation2 + $0x34] sm:$0xf] %v1328
      %1393 = vst [vmem:[#allocation2 + $0x58] sm:$0xf] %v1329
      %1394 = vst [vmem:[#allocation2 + $0x7c] sm:$0xf] %v1330
      %1395 = vst [vmem:[#allocation2 + $0xa0] sm:$0xf] %v1331
      %1396 = vst [vmem:[#allocation2 + $0xc4] sm:$0xf] %v1332
      %1397 = vst [vmem:[#allocation2 + $0xe8] sm:$0xf] %v1333
      %1398 = vst [vmem:[#allocation2 + $0x10c] sm:$0xf] %v1334
      %1399 = vst [vmem:[#allocation2 + $0x130] sm:$0xf] %v1335
      %1400 = vst [vmem:[#allocation2 + $0x154] sm:$0xf] %v1336
      %1401 = vst [vmem:[#allocation2 + $0x178] sm:$0xf] %v1337
      %1402 = vst [vmem:[#allocation2 + $0x19c] sm:$0xf] %v1338
      %1403 = vst [vmem:[#allocation2 + $0x1c0] sm:$0xf] %v1339
      %1404 = vst [vmem:[#allocation2 + $0x1e4] sm:$0xf] %v1340
      %1405 = vst [vmem:[#allocation2 + $0x208] sm:$0xf] %v1341
      %1406 = vst [vmem:[#allocation2 + $0x22c] sm:$0xf] %v1342
      %1407 = vst [vmem:[#allocation2 + $0x250] sm:$0xf] %v1343
      %1408 = vst [vmem:[#allocation2 + $0x274] sm:$0xf] %v1344
      %1409 = vst [vmem:[#allocation2 + $0x298] sm:$0xf] %v1345
      %1410 = vst [vmem:[#allocation2 + $0x2bc] sm:$0xf] %v1346
      %1411 = vst [vmem:[#allocation2 + $0x2e0] sm:$0xf] %v1347
      %1412 = vst [vmem:[#allocation2 + $0x304] sm:$0xf] %v1348
      %1413 = vst [vmem:[#allocation2 + $0x328] sm:$0xf] %v1349
      %1414 = vst [vmem:[#allocation2 + $0x34c] sm:$0xf] %v1350
      %1415 = vst [vmem:[#allocation2 + $0x370] sm:$0xf] %v1351
      %1416 = vst [vmem:[#allocation2 + $0x394] sm:$0xf] %v1352
      %1417 = vst [vmem:[#allocation2 + $0x3b8] sm:$0xf] %v1353
      %1418 = vst [vmem:[#allocation2 + $0x3dc] sm:$0xf] %v1354
      %1419 = vst [vmem:[#allocation2 + $0x400] sm:$0xf] %v1355
      %1420 = vst [vmem:[#allocation2 + $0x424] sm:$0xf] %v1356
      %1421 = vst [vmem:[#allocation2 + $0x448] sm:$0xf] %v1357
      %1422 = vst [vmem:[#allocation2 + $0x46c] sm:$0xf] %v1358
      %v1423 = vld [vmem:[%s1038 + $0x2] sm:$0xff]
      %v1424 = vld [vmem:[%s1038 + $0xa] sm:$0xff]
      %v1425 = vld [vmem:[%s1038 + $0x1a] sm:$0xff]
      %v1426 = vld [vmem:[%s1038 + $0x22] sm:$0xff]
      %v1427 = vld [vmem:[%s1038 + $0x32] sm:$0xff]
      %v1428 = vld [vmem:[%s1038 + $0x3a] sm:$0xff]
      %v1429 = vld [vmem:[%s1038 + $0x4a] sm:$0xff]
      %v1430 = vld [vmem:[%s1038 + $0x52] sm:$0xff]
      %v1431 = vld [vmem:[%s1038 + $0x62] sm:$0xff]
      %v1432 = vld [vmem:[%s1038 + $0x6a] sm:$0xff]
      %v1433 = vld [vmem:[%s1038 + $0x7a] sm:$0xff]
      %v1434 = vld [vmem:[%s1038 + $0x82] sm:$0xff]
      %v1435 = vld [vmem:[%s1038 + $0x92] sm:$0xff]
      %v1436 = vld [vmem:[%s1038 + $0x9a] sm:$0xff]
      %v1437 = vld [vmem:[%s1038 + $0xaa] sm:$0xff]
      %v1438 = vld [vmem:[%s1038 + $0xb2] sm:$0xff]
      %v1439 = vld [vmem:[%s1038 + $0xc2] sm:$0xff]
      %v1440 = vld [vmem:[%s1038 + $0xca] sm:$0xff]
      %v1441 = vld [vmem:[%s1038 + $0xda] sm:$0xff]
      %v1442 = vld [vmem:[%s1038 + $0xe2] sm:$0xff]
      %v1443 = vld [vmem:[%s1038 + $0xf2] sm:$0xff]
      %v1444 = vld [vmem:[%s1038 + $0xfa] sm:$0xff]
      %v1445 = vld [vmem:[%s1038 + $0x10a] sm:$0xff]
      %v1446 = vld [vmem:[%s1038 + $0x112] sm:$0xff]
      %v1447 = vld [vmem:[%s1038 + $0x122] sm:$0xff]
      %v1448 = vld [vmem:[%s1038 + $0x12a] sm:$0xff]
      %v1449 = vld [vmem:[%s1038 + $0x13a] sm:$0xff]
      %v1450 = vld [vmem:[%s1038 + $0x142] sm:$0xff]
      %v1451 = vld [vmem:[%s1038 + $0x152] sm:$0xff]
      %v1452 = vld [vmem:[%s1038 + $0x15a] sm:$0xff]
      %v1453 = vld [vmem:[%s1038 + $0x16a] sm:$0xff]
      %v1454 = vld [vmem:[%s1038 + $0x172] sm:$0xff]
      %v1455 = vpack.c.bf16 %v1424, %v1423
      %v1456 = vpack.c.bf16 %v1426, %v1425
      %v1457 = vpack.c.bf16 %v1428, %v1427
      %v1458 = vpack.c.bf16 %v1430, %v1429
      %v1459 = vpack.c.bf16 %v1432, %v1431
      %v1460 = vpack.c.bf16 %v1434, %v1433
      %v1461 = vpack.c.bf16 %v1436, %v1435
      %v1462 = vpack.c.bf16 %v1438, %v1437
      %v1463 = vpack.c.bf16 %v1440, %v1439
      %v1464 = vpack.c.bf16 %v1442, %v1441
      %v1465 = vpack.c.bf16 %v1444, %v1443
      %v1466 = vpack.c.bf16 %v1446, %v1445
      %v1467 = vpack.c.bf16 %v1448, %v1447
      %v1468 = vpack.c.bf16 %v1450, %v1449
      %v1469 = vpack.c.bf16 %v1452, %v1451
      %v1470 = vpack.c.bf16 %v1454, %v1453
      %v1487 = vunpack.c.l.b16 %v1455
      %v1488 = vunpack.c.h.b16 %v1455
      %v1489 = vunpack.c.l.b16 %v1456
      %v1490 = vunpack.c.h.b16 %v1456
      %v1491 = vunpack.c.l.b16 %v1457
      %v1492 = vunpack.c.h.b16 %v1457
      %v1493 = vunpack.c.l.b16 %v1458
      %v1494 = vunpack.c.h.b16 %v1458
      %v1495 = vunpack.c.l.b16 %v1459
      %v1496 = vunpack.c.h.b16 %v1459
      %v1497 = vunpack.c.l.b16 %v1460
      %v1498 = vunpack.c.h.b16 %v1460
      %v1499 = vunpack.c.l.b16 %v1461
      %v1500 = vunpack.c.h.b16 %v1461
      %v1501 = vunpack.c.l.b16 %v1462
      %v1502 = vunpack.c.h.b16 %v1462
      %v1503 = vunpack.c.l.b16 %v1463
      %v1504 = vunpack.c.h.b16 %v1463
      %v1505 = vunpack.c.l.b16 %v1464
      %v1506 = vunpack.c.h.b16 %v1464
      %v1507 = vunpack.c.l.b16 %v1465
      %v1508 = vunpack.c.h.b16 %v1465
      %v1509 = vunpack.c.l.b16 %v1466
      %v1510 = vunpack.c.h.b16 %v1466
      %v1511 = vunpack.c.l.b16 %v1467
      %v1512 = vunpack.c.h.b16 %v1467
      %v1513 = vunpack.c.l.b16 %v1468
      %v1514 = vunpack.c.h.b16 %v1468
      %v1515 = vunpack.c.l.b16 %v1469
      %v1516 = vunpack.c.h.b16 %v1469
      %v1517 = vunpack.c.l.b16 %v1470
      %v1518 = vunpack.c.h.b16 %v1470
      %v1519 = vpack.c.b16 %v1487, %v1487
      %v1520 = vpack.c.b16 %v1488, %v1488
      %v1521 = vpack.c.b16 %v1489, %v1489
      %v1522 = vpack.c.b16 %v1490, %v1490
      %v1523 = vpack.c.b16 %v1491, %v1491
      %v1524 = vpack.c.b16 %v1492, %v1492
      %v1525 = vpack.c.b16 %v1493, %v1493
      %v1526 = vpack.c.b16 %v1494, %v1494
      %v1527 = vpack.c.b16 %v1495, %v1495
      %v1528 = vpack.c.b16 %v1496, %v1496
      %v1529 = vpack.c.b16 %v1497, %v1497
      %v1530 = vpack.c.b16 %v1498, %v1498
      %v1531 = vpack.c.b16 %v1499, %v1499
      %v1532 = vpack.c.b16 %v1500, %v1500
      %v1533 = vpack.c.b16 %v1501, %v1501
      %v1534 = vpack.c.b16 %v1502, %v1502
      %v1535 = vpack.c.b16 %v1503, %v1503
      %v1536 = vpack.c.b16 %v1504, %v1504
      %v1537 = vpack.c.b16 %v1505, %v1505
      %v1538 = vpack.c.b16 %v1506, %v1506
      %v1539 = vpack.c.b16 %v1507, %v1507
      %v1540 = vpack.c.b16 %v1508, %v1508
      %v1541 = vpack.c.b16 %v1509, %v1509
      %v1542 = vpack.c.b16 %v1510, %v1510
      %v1543 = vpack.c.b16 %v1511, %v1511
      %v1544 = vpack.c.b16 %v1512, %v1512
      %v1545 = vpack.c.b16 %v1513, %v1513
      %v1546 = vpack.c.b16 %v1514, %v1514
      %v1547 = vpack.c.b16 %v1515, %v1515
      %v1548 = vpack.c.b16 %v1516, %v1516
      %v1549 = vpack.c.b16 %v1517, %v1517
      %v1550 = vpack.c.b16 %v1518, %v1518
      %1583 = vst [vmem:[#allocation2 + $0x14] sm:$0xf] %v1519
      %1584 = vst [vmem:[#allocation2 + $0x38] sm:$0xf] %v1520
      %1585 = vst [vmem:[#allocation2 + $0x5c] sm:$0xf] %v1521
      %1586 = vst [vmem:[#allocation2 + $0x80] sm:$0xf] %v1522
      %1587 = vst [vmem:[#allocation2 + $0xa4] sm:$0xf] %v1523
      %1588 = vst [vmem:[#allocation2 + $0xc8] sm:$0xf] %v1524
      %1589 = vst [vmem:[#allocation2 + $0xec] sm:$0xf] %v1525
      %1590 = vst [vmem:[#allocation2 + $0x110] sm:$0xf] %v1526
      %1591 = vst [vmem:[#allocation2 + $0x134] sm:$0xf] %v1527
      %1592 = vst [vmem:[#allocation2 + $0x158] sm:$0xf] %v1528
      %1593 = vst [vmem:[#allocation2 + $0x17c] sm:$0xf] %v1529
      %1594 = vst [vmem:[#allocation2 + $0x1a0] sm:$0xf] %v1530
      %1595 = vst [vmem:[#allocation2 + $0x1c4] sm:$0xf] %v1531
      %1596 = vst [vmem:[#allocation2 + $0x1e8] sm:$0xf] %v1532
      %1597 = vst [vmem:[#allocation2 + $0x20c] sm:$0xf] %v1533
      %1598 = vst [vmem:[#allocation2 + $0x230] sm:$0xf] %v1534
      %1599 = vst [vmem:[#allocation2 + $0x254] sm:$0xf] %v1535
      %1600 = vst [vmem:[#allocation2 + $0x278] sm:$0xf] %v1536
      %1601 = vst [vmem:[#allocation2 + $0x29c] sm:$0xf] %v1537
      %1602 = vst [vmem:[#allocation2 + $0x2c0] sm:$0xf] %v1538
      %1603 = vst [vmem:[#allocation2 + $0x2e4] sm:$0xf] %v1539
      %1604 = vst [vmem:[#allocation2 + $0x308] sm:$0xf] %v1540
      %1605 = vst [vmem:[#allocation2 + $0x32c] sm:$0xf] %v1541
      %1606 = vst [vmem:[#allocation2 + $0x350] sm:$0xf] %v1542
      %1607 = vst [vmem:[#allocation2 + $0x374] sm:$0xf] %v1543
      %1608 = vst [vmem:[#allocation2 + $0x398] sm:$0xf] %v1544
      %1609 = vst [vmem:[#allocation2 + $0x3bc] sm:$0xf] %v1545
      %1610 = vst [vmem:[#allocation2 + $0x3e0] sm:$0xf] %v1546
      %1611 = vst [vmem:[#allocation2 + $0x404] sm:$0xf] %v1547
      %1612 = vst [vmem:[#allocation2 + $0x428] sm:$0xf] %v1548
      %1613 = vst [vmem:[#allocation2 + $0x44c] sm:$0xf] %v1549
      %1614 = vst [vmem:[#allocation2 + $0x470] sm:$0xf] %v1550
      %s1615 = scalar_lea.vmem %s381, 48
      %v1616 = vld [vmem:[%s1615] sm:$0xff]
      %v1617 = vld [vmem:[%s1615 + $0x8] sm:$0xff]
      %v1618 = vld [vmem:[%s1615 + $0x18] sm:$0xff]
      %v1619 = vld [vmem:[%s1615 + $0x20] sm:$0xff]
      %v1620 = vld [vmem:[%s1615 + $0x30] sm:$0xff]
      %v1621 = vld [vmem:[%s1615 + $0x38] sm:$0xff]
      %v1622 = vld [vmem:[%s1615 + $0x48] sm:$0xff]
      %v1623 = vld [vmem:[%s1615 + $0x50] sm:$0xff]
      %v1624 = vld [vmem:[%s1615 + $0x60] sm:$0xff]
      %v1625 = vld [vmem:[%s1615 + $0x68] sm:$0xff]
      %v1626 = vld [vmem:[%s1615 + $0x78] sm:$0xff]
      %v1627 = vld [vmem:[%s1615 + $0x80] sm:$0xff]
      %v1628 = vld [vmem:[%s1615 + $0x90] sm:$0xff]
      %v1629 = vld [vmem:[%s1615 + $0x98] sm:$0xff]
      %v1630 = vld [vmem:[%s1615 + $0xa8] sm:$0xff]
      %v1631 = vld [vmem:[%s1615 + $0xb0] sm:$0xff]
      %v1632 = vld [vmem:[%s1615 + $0xc0] sm:$0xff]
      %v1633 = vld [vmem:[%s1615 + $0xc8] sm:$0xff]
      %v1634 = vld [vmem:[%s1615 + $0xd8] sm:$0xff]
      %v1635 = vld [vmem:[%s1615 + $0xe0] sm:$0xff]
      %v1636 = vld [vmem:[%s1615 + $0xf0] sm:$0xff]
      %v1637 = vld [vmem:[%s1615 + $0xf8] sm:$0xff]
      %v1638 = vld [vmem:[%s1615 + $0x108] sm:$0xff]
      %v1639 = vld [vmem:[%s1615 + $0x110] sm:$0xff]
      %v1640 = vld [vmem:[%s1615 + $0x120] sm:$0xff]
      %v1641 = vld [vmem:[%s1615 + $0x128] sm:$0xff]
      %v1642 = vld [vmem:[%s1615 + $0x138] sm:$0xff]
      %v1643 = vld [vmem:[%s1615 + $0x140] sm:$0xff]
      %v1644 = vld [vmem:[%s1615 + $0x150] sm:$0xff]
      %v1645 = vld [vmem:[%s1615 + $0x158] sm:$0xff]
      %v1646 = vld [vmem:[%s1615 + $0x168] sm:$0xff]
      %v1647 = vld [vmem:[%s1615 + $0x170] sm:$0xff]
      %v1648 = vpack.c.bf16 %v1617, %v1616
      %v1649 = vpack.c.bf16 %v1619, %v1618
      %v1650 = vpack.c.bf16 %v1621, %v1620
      %v1651 = vpack.c.bf16 %v1623, %v1622
      %v1652 = vpack.c.bf16 %v1625, %v1624
      %v1653 = vpack.c.bf16 %v1627, %v1626
      %v1654 = vpack.c.bf16 %v1629, %v1628
      %v1655 = vpack.c.bf16 %v1631, %v1630
      %v1656 = vpack.c.bf16 %v1633, %v1632
      %v1657 = vpack.c.bf16 %v1635, %v1634
      %v1658 = vpack.c.bf16 %v1637, %v1636
      %v1659 = vpack.c.bf16 %v1639, %v1638
      %v1660 = vpack.c.bf16 %v1641, %v1640
      %v1661 = vpack.c.bf16 %v1643, %v1642
      %v1662 = vpack.c.bf16 %v1645, %v1644
      %v1663 = vpack.c.bf16 %v1647, %v1646
      %v1680 = vunpack.c.l.b16 %v1648
      %v1681 = vunpack.c.h.b16 %v1648
      %v1682 = vunpack.c.l.b16 %v1649
      %v1683 = vunpack.c.h.b16 %v1649
      %v1684 = vunpack.c.l.b16 %v1650
      %v1685 = vunpack.c.h.b16 %v1650
      %v1686 = vunpack.c.l.b16 %v1651
      %v1687 = vunpack.c.h.b16 %v1651
      %v1688 = vunpack.c.l.b16 %v1652
      %v1689 = vunpack.c.h.b16 %v1652
      %v1690 = vunpack.c.l.b16 %v1653
      %v1691 = vunpack.c.h.b16 %v1653
      %v1692 = vunpack.c.l.b16 %v1654
      %v1693 = vunpack.c.h.b16 %v1654
      %v1694 = vunpack.c.l.b16 %v1655
      %v1695 = vunpack.c.h.b16 %v1655
      %v1696 = vunpack.c.l.b16 %v1656
      %v1697 = vunpack.c.h.b16 %v1656
      %v1698 = vunpack.c.l.b16 %v1657
      %v1699 = vunpack.c.h.b16 %v1657
      %v1700 = vunpack.c.l.b16 %v1658
      %v1701 = vunpack.c.h.b16 %v1658
      %v1702 = vunpack.c.l.b16 %v1659
      %v1703 = vunpack.c.h.b16 %v1659
      %v1704 = vunpack.c.l.b16 %v1660
      %v1705 = vunpack.c.h.b16 %v1660
      %v1706 = vunpack.c.l.b16 %v1661
      %v1707 = vunpack.c.h.b16 %v1661
      %v1708 = vunpack.c.l.b16 %v1662
      %v1709 = vunpack.c.h.b16 %v1662
      %v1710 = vunpack.c.l.b16 %v1663
      %v1711 = vunpack.c.h.b16 %v1663
      %v1712 = vpack.c.b16 %v1680, %v1680
      %v1713 = vpack.c.b16 %v1681, %v1681
      %v1714 = vpack.c.b16 %v1682, %v1682
      %v1715 = vpack.c.b16 %v1683, %v1683
      %v1716 = vpack.c.b16 %v1684, %v1684
      %v1717 = vpack.c.b16 %v1685, %v1685
      %v1718 = vpack.c.b16 %v1686, %v1686
      %v1719 = vpack.c.b16 %v1687, %v1687
      %v1720 = vpack.c.b16 %v1688, %v1688
      %v1721 = vpack.c.b16 %v1689, %v1689
      %v1722 = vpack.c.b16 %v1690, %v1690
      %v1723 = vpack.c.b16 %v1691, %v1691
      %v1724 = vpack.c.b16 %v1692, %v1692
      %v1725 = vpack.c.b16 %v1693, %v1693
      %v1726 = vpack.c.b16 %v1694, %v1694
      %v1727 = vpack.c.b16 %v1695, %v1695
      %v1728 = vpack.c.b16 %v1696, %v1696
      %v1729 = vpack.c.b16 %v1697, %v1697
      %v1730 = vpack.c.b16 %v1698, %v1698
      %v1731 = vpack.c.b16 %v1699, %v1699
      %v1732 = vpack.c.b16 %v1700, %v1700
      %v1733 = vpack.c.b16 %v1701, %v1701
      %v1734 = vpack.c.b16 %v1702, %v1702
      %v1735 = vpack.c.b16 %v1703, %v1703
      %v1736 = vpack.c.b16 %v1704, %v1704
      %v1737 = vpack.c.b16 %v1705, %v1705
      %v1738 = vpack.c.b16 %v1706, %v1706
      %v1739 = vpack.c.b16 %v1707, %v1707
      %v1740 = vpack.c.b16 %v1708, %v1708
      %v1741 = vpack.c.b16 %v1709, %v1709
      %v1742 = vpack.c.b16 %v1710, %v1710
      %v1743 = vpack.c.b16 %v1711, %v1711
      %1776 = vst [vmem:[#allocation2 + $0x18] sm:$0xf] %v1712
      %1777 = vst [vmem:[#allocation2 + $0x3c] sm:$0xf] %v1713
      %1778 = vst [vmem:[#allocation2 + $0x60] sm:$0xf] %v1714
      %1779 = vst [vmem:[#allocation2 + $0x84] sm:$0xf] %v1715
      %1780 = vst [vmem:[#allocation2 + $0xa8] sm:$0xf] %v1716
      %1781 = vst [vmem:[#allocation2 + $0xcc] sm:$0xf] %v1717
      %1782 = vst [vmem:[#allocation2 + $0xf0] sm:$0xf] %v1718
      %1783 = vst [vmem:[#allocation2 + $0x114] sm:$0xf] %v1719
      %1784 = vst [vmem:[#allocation2 + $0x138] sm:$0xf] %v1720
      %1785 = vst [vmem:[#allocation2 + $0x15c] sm:$0xf] %v1721
      %1786 = vst [vmem:[#allocation2 + $0x180] sm:$0xf] %v1722
      %1787 = vst [vmem:[#allocation2 + $0x1a4] sm:$0xf] %v1723
      %1788 = vst [vmem:[#allocation2 + $0x1c8] sm:$0xf] %v1724
      %1789 = vst [vmem:[#allocation2 + $0x1ec] sm:$0xf] %v1725
      %1790 = vst [vmem:[#allocation2 + $0x210] sm:$0xf] %v1726
      %1791 = vst [vmem:[#allocation2 + $0x234] sm:$0xf] %v1727
      %1792 = vst [vmem:[#allocation2 + $0x258] sm:$0xf] %v1728
      %1793 = vst [vmem:[#allocation2 + $0x27c] sm:$0xf] %v1729
      %1794 = vst [vmem:[#allocation2 + $0x2a0] sm:$0xf] %v1730
      %1795 = vst [vmem:[#allocation2 + $0x2c4] sm:$0xf] %v1731
      %1796 = vst [vmem:[#allocation2 + $0x2e8] sm:$0xf] %v1732
      %1797 = vst [vmem:[#allocation2 + $0x30c] sm:$0xf] %v1733
      %1798 = vst [vmem:[#allocation2 + $0x330] sm:$0xf] %v1734
      %1799 = vst [vmem:[#allocation2 + $0x354] sm:$0xf] %v1735
      %1800 = vst [vmem:[#allocation2 + $0x378] sm:$0xf] %v1736
      %1801 = vst [vmem:[#allocation2 + $0x39c] sm:$0xf] %v1737
      %1802 = vst [vmem:[#allocation2 + $0x3c0] sm:$0xf] %v1738
      %1803 = vst [vmem:[#allocation2 + $0x3e4] sm:$0xf] %v1739
      %1804 = vst [vmem:[#allocation2 + $0x408] sm:$0xf] %v1740
      %1805 = vst [vmem:[#allocation2 + $0x42c] sm:$0xf] %v1741
      %1806 = vst [vmem:[#allocation2 + $0x450] sm:$0xf] %v1742
      %1807 = vst [vmem:[#allocation2 + $0x474] sm:$0xf] %v1743
      %v1808 = vld [vmem:[%s1615 + $0x1] sm:$0xff]
      %v1809 = vld [vmem:[%s1615 + $0x9] sm:$0xff]
      %v1810 = vld [vmem:[%s1615 + $0x19] sm:$0xff]
      %v1811 = vld [vmem:[%s1615 + $0x21] sm:$0xff]
      %v1812 = vld [vmem:[%s1615 + $0x31] sm:$0xff]
      %v1813 = vld [vmem:[%s1615 + $0x39] sm:$0xff]
      %v1814 = vld [vmem:[%s1615 + $0x49] sm:$0xff]
      %v1815 = vld [vmem:[%s1615 + $0x51] sm:$0xff]
      %v1816 = vld [vmem:[%s1615 + $0x61] sm:$0xff]
      %v1817 = vld [vmem:[%s1615 + $0x69] sm:$0xff]
      %v1818 = vld [vmem:[%s1615 + $0x79] sm:$0xff]
      %v1819 = vld [vmem:[%s1615 + $0x81] sm:$0xff]
      %v1820 = vld [vmem:[%s1615 + $0x91] sm:$0xff]
      %v1821 = vld [vmem:[%s1615 + $0x99] sm:$0xff]
      %v1822 = vld [vmem:[%s1615 + $0xa9] sm:$0xff]
      %v1823 = vld [vmem:[%s1615 + $0xb1] sm:$0xff]
      %v1824 = vld [vmem:[%s1615 + $0xc1] sm:$0xff]
      %v1825 = vld [vmem:[%s1615 + $0xc9] sm:$0xff]
      %v1826 = vld [vmem:[%s1615 + $0xd9] sm:$0xff]
      %v1827 = vld [vmem:[%s1615 + $0xe1] sm:$0xff]
      %v1828 = vld [vmem:[%s1615 + $0xf1] sm:$0xff]
      %v1829 = vld [vmem:[%s1615 + $0xf9] sm:$0xff]
      %v1830 = vld [vmem:[%s1615 + $0x109] sm:$0xff]
      %v1831 = vld [vmem:[%s1615 + $0x111] sm:$0xff]
      %v1832 = vld [vmem:[%s1615 + $0x121] sm:$0xff]
      %v1833 = vld [vmem:[%s1615 + $0x129] sm:$0xff]
      %v1834 = vld [vmem:[%s1615 + $0x139] sm:$0xff]
      %v1835 = vld [vmem:[%s1615 + $0x141] sm:$0xff]
      %v1836 = vld [vmem:[%s1615 + $0x151] sm:$0xff]
      %v1837 = vld [vmem:[%s1615 + $0x159] sm:$0xff]
      %v1838 = vld [vmem:[%s1615 + $0x169] sm:$0xff]
      %v1839 = vld [vmem:[%s1615 + $0x171] sm:$0xff]
      %v1840 = vpack.c.bf16 %v1809, %v1808
      %v1841 = vpack.c.bf16 %v1811, %v1810
      %v1842 = vpack.c.bf16 %v1813, %v1812
      %v1843 = vpack.c.bf16 %v1815, %v1814
      %v1844 = vpack.c.bf16 %v1817, %v1816
      %v1845 = vpack.c.bf16 %v1819, %v1818
      %v1846 = vpack.c.bf16 %v1821, %v1820
      %v1847 = vpack.c.bf16 %v1823, %v1822
      %v1848 = vpack.c.bf16 %v1825, %v1824
      %v1849 = vpack.c.bf16 %v1827, %v1826
      %v1850 = vpack.c.bf16 %v1829, %v1828
      %v1851 = vpack.c.bf16 %v1831, %v1830
      %v1852 = vpack.c.bf16 %v1833, %v1832
      %v1853 = vpack.c.bf16 %v1835, %v1834
      %v1854 = vpack.c.bf16 %v1837, %v1836
      %v1855 = vpack.c.bf16 %v1839, %v1838
      %v1872 = vunpack.c.l.b16 %v1840
      %v1873 = vunpack.c.h.b16 %v1840
      %v1874 = vunpack.c.l.b16 %v1841
      %v1875 = vunpack.c.h.b16 %v1841
      %v1876 = vunpack.c.l.b16 %v1842
      %v1877 = vunpack.c.h.b16 %v1842
      %v1878 = vunpack.c.l.b16 %v1843
      %v1879 = vunpack.c.h.b16 %v1843
      %v1880 = vunpack.c.l.b16 %v1844
      %v1881 = vunpack.c.h.b16 %v1844
      %v1882 = vunpack.c.l.b16 %v1845
      %v1883 = vunpack.c.h.b16 %v1845
      %v1884 = vunpack.c.l.b16 %v1846
      %v1885 = vunpack.c.h.b16 %v1846
      %v1886 = vunpack.c.l.b16 %v1847
      %v1887 = vunpack.c.h.b16 %v1847
      %v1888 = vunpack.c.l.b16 %v1848
      %v1889 = vunpack.c.h.b16 %v1848
      %v1890 = vunpack.c.l.b16 %v1849
      %v1891 = vunpack.c.h.b16 %v1849
      %v1892 = vunpack.c.l.b16 %v1850
      %v1893 = vunpack.c.h.b16 %v1850
      %v1894 = vunpack.c.l.b16 %v1851
      %v1895 = vunpack.c.h.b16 %v1851
      %v1896 = vunpack.c.l.b16 %v1852
      %v1897 = vunpack.c.h.b16 %v1852
      %v1898 = vunpack.c.l.b16 %v1853
      %v1899 = vunpack.c.h.b16 %v1853
      %v1900 = vunpack.c.l.b16 %v1854
      %v1901 = vunpack.c.h.b16 %v1854
      %v1902 = vunpack.c.l.b16 %v1855
      %v1903 = vunpack.c.h.b16 %v1855
      %v1904 = vpack.c.b16 %v1872, %v1872
      %v1905 = vpack.c.b16 %v1873, %v1873
      %v1906 = vpack.c.b16 %v1874, %v1874
      %v1907 = vpack.c.b16 %v1875, %v1875
      %v1908 = vpack.c.b16 %v1876, %v1876
      %v1909 = vpack.c.b16 %v1877, %v1877
      %v1910 = vpack.c.b16 %v1878, %v1878
      %v1911 = vpack.c.b16 %v1879, %v1879
      %v1912 = vpack.c.b16 %v1880, %v1880
      %v1913 = vpack.c.b16 %v1881, %v1881
      %v1914 = vpack.c.b16 %v1882, %v1882
      %v1915 = vpack.c.b16 %v1883, %v1883
      %v1916 = vpack.c.b16 %v1884, %v1884
      %v1917 = vpack.c.b16 %v1885, %v1885
      %v1918 = vpack.c.b16 %v1886, %v1886
      %v1919 = vpack.c.b16 %v1887, %v1887
      %v1920 = vpack.c.b16 %v1888, %v1888
      %v1921 = vpack.c.b16 %v1889, %v1889
      %v1922 = vpack.c.b16 %v1890, %v1890
      %v1923 = vpack.c.b16 %v1891, %v1891
      %v1924 = vpack.c.b16 %v1892, %v1892
      %v1925 = vpack.c.b16 %v1893, %v1893
      %v1926 = vpack.c.b16 %v1894, %v1894
      %v1927 = vpack.c.b16 %v1895, %v1895
      %v1928 = vpack.c.b16 %v1896, %v1896
      %v1929 = vpack.c.b16 %v1897, %v1897
      %v1930 = vpack.c.b16 %v1898, %v1898
      %v1931 = vpack.c.b16 %v1899, %v1899
      %v1932 = vpack.c.b16 %v1900, %v1900
      %v1933 = vpack.c.b16 %v1901, %v1901
      %v1934 = vpack.c.b16 %v1902, %v1902
      %v1935 = vpack.c.b16 %v1903, %v1903
      %1968 = vst [vmem:[#allocation2 + $0x1c] sm:$0xf] %v1904
      %1969 = vst [vmem:[#allocation2 + $0x40] sm:$0xf] %v1905
      %1970 = vst [vmem:[#allocation2 + $0x64] sm:$0xf] %v1906
      %1971 = vst [vmem:[#allocation2 + $0x88] sm:$0xf] %v1907
      %1972 = vst [vmem:[#allocation2 + $0xac] sm:$0xf] %v1908
      %1973 = vst [vmem:[#allocation2 + $0xd0] sm:$0xf] %v1909
      %1974 = vst [vmem:[#allocation2 + $0xf4] sm:$0xf] %v1910
      %1975 = vst [vmem:[#allocation2 + $0x118] sm:$0xf] %v1911
      %1976 = vst [vmem:[#allocation2 + $0x13c] sm:$0xf] %v1912
      %1977 = vst [vmem:[#allocation2 + $0x160] sm:$0xf] %v1913
      %1978 = vst [vmem:[#allocation2 + $0x184] sm:$0xf] %v1914
      %1979 = vst [vmem:[#allocation2 + $0x1a8] sm:$0xf] %v1915
      %1980 = vst [vmem:[#allocation2 + $0x1cc] sm:$0xf] %v1916
      %1981 = vst [vmem:[#allocation2 + $0x1f0] sm:$0xf] %v1917
      %1982 = vst [vmem:[#allocation2 + $0x214] sm:$0xf] %v1918
      %1983 = vst [vmem:[#allocation2 + $0x238] sm:$0xf] %v1919
      %1984 = vst [vmem:[#allocation2 + $0x25c] sm:$0xf] %v1920
      %1985 = vst [vmem:[#allocation2 + $0x280] sm:$0xf] %v1921
      %1986 = vst [vmem:[#allocation2 + $0x2a4] sm:$0xf] %v1922
      %1987 = vst [vmem:[#allocation2 + $0x2c8] sm:$0xf] %v1923
      %1988 = vst [vmem:[#allocation2 + $0x2ec] sm:$0xf] %v1924
      %1989 = vst [vmem:[#allocation2 + $0x310] sm:$0xf] %v1925
      %1990 = vst [vmem:[#allocation2 + $0x334] sm:$0xf] %v1926
      %1991 = vst [vmem:[#allocation2 + $0x358] sm:$0xf] %v1927
      %1992 = vst [vmem:[#allocation2 + $0x37c] sm:$0xf] %v1928
      %1993 = vst [vmem:[#allocation2 + $0x3a0] sm:$0xf] %v1929
      %1994 = vst [vmem:[#allocation2 + $0x3c4] sm:$0xf] %v1930
      %1995 = vst [vmem:[#allocation2 + $0x3e8] sm:$0xf] %v1931
      %1996 = vst [vmem:[#allocation2 + $0x40c] sm:$0xf] %v1932
      %1997 = vst [vmem:[#allocation2 + $0x430] sm:$0xf] %v1933
      %1998 = vst [vmem:[#allocation2 + $0x454] sm:$0xf] %v1934
      %1999 = vst [vmem:[#allocation2 + $0x478] sm:$0xf] %v1935
      %v2000 = vld [vmem:[%s1615 + $0x2] sm:$0xff]
      %v2001 = vld [vmem:[%s1615 + $0xa] sm:$0xff]
      %v2002 = vld [vmem:[%s1615 + $0x1a] sm:$0xff]
      %v2003 = vld [vmem:[%s1615 + $0x22] sm:$0xff]
      %v2004 = vld [vmem:[%s1615 + $0x32] sm:$0xff]
      %v2005 = vld [vmem:[%s1615 + $0x3a] sm:$0xff]
      %v2006 = vld [vmem:[%s1615 + $0x4a] sm:$0xff]
      %v2007 = vld [vmem:[%s1615 + $0x52] sm:$0xff]
      %v2008 = vld [vmem:[%s1615 + $0x62] sm:$0xff]
      %v2009 = vld [vmem:[%s1615 + $0x6a] sm:$0xff]
      %v2010 = vld [vmem:[%s1615 + $0x7a] sm:$0xff]
      %v2011 = vld [vmem:[%s1615 + $0x82] sm:$0xff]
      %v2012 = vld [vmem:[%s1615 + $0x92] sm:$0xff]
      %v2013 = vld [vmem:[%s1615 + $0x9a] sm:$0xff]
      %v2014 = vld [vmem:[%s1615 + $0xaa] sm:$0xff]
      %v2015 = vld [vmem:[%s1615 + $0xb2] sm:$0xff]
      %v2016 = vld [vmem:[%s1615 + $0xc2] sm:$0xff]
      %v2017 = vld [vmem:[%s1615 + $0xca] sm:$0xff]
      %v2018 = vld [vmem:[%s1615 + $0xda] sm:$0xff]
      %v2019 = vld [vmem:[%s1615 + $0xe2] sm:$0xff]
      %v2020 = vld [vmem:[%s1615 + $0xf2] sm:$0xff]
      %v2021 = vld [vmem:[%s1615 + $0xfa] sm:$0xff]
      %v2022 = vld [vmem:[%s1615 + $0x10a] sm:$0xff]
      %v2023 = vld [vmem:[%s1615 + $0x112] sm:$0xff]
      %v2024 = vld [vmem:[%s1615 + $0x122] sm:$0xff]
      %v2025 = vld [vmem:[%s1615 + $0x12a] sm:$0xff]
      %v2026 = vld [vmem:[%s1615 + $0x13a] sm:$0xff]
      %v2027 = vld [vmem:[%s1615 + $0x142] sm:$0xff]
      %v2028 = vld [vmem:[%s1615 + $0x152] sm:$0xff]
      %v2029 = vld [vmem:[%s1615 + $0x15a] sm:$0xff]
      %v2030 = vld [vmem:[%s1615 + $0x16a] sm:$0xff]
      %v2031 = vld [vmem:[%s1615 + $0x172] sm:$0xff]
      %v2032 = vpack.c.bf16 %v2001, %v2000
      %v2033 = vpack.c.bf16 %v2003, %v2002
      %v2034 = vpack.c.bf16 %v2005, %v2004
      %v2035 = vpack.c.bf16 %v2007, %v2006
      %v2036 = vpack.c.bf16 %v2009, %v2008
      %v2037 = vpack.c.bf16 %v2011, %v2010
      %v2038 = vpack.c.bf16 %v2013, %v2012
      %v2039 = vpack.c.bf16 %v2015, %v2014
      %v2040 = vpack.c.bf16 %v2017, %v2016
      %v2041 = vpack.c.bf16 %v2019, %v2018
      %v2042 = vpack.c.bf16 %v2021, %v2020
      %v2043 = vpack.c.bf16 %v2023, %v2022
      %v2044 = vpack.c.bf16 %v2025, %v2024
      %v2045 = vpack.c.bf16 %v2027, %v2026
      %v2046 = vpack.c.bf16 %v2029, %v2028
      %v2047 = vpack.c.bf16 %v2031, %v2030
      %v2064 = vunpack.c.l.b16 %v2032
      %v2065 = vunpack.c.h.b16 %v2032
      %v2066 = vunpack.c.l.b16 %v2033
      %v2067 = vunpack.c.h.b16 %v2033
      %v2068 = vunpack.c.l.b16 %v2034
      %v2069 = vunpack.c.h.b16 %v2034
      %v2070 = vunpack.c.l.b16 %v2035
      %v2071 = vunpack.c.h.b16 %v2035
      %v2072 = vunpack.c.l.b16 %v2036
      %v2073 = vunpack.c.h.b16 %v2036
      %v2074 = vunpack.c.l.b16 %v2037
      %v2075 = vunpack.c.h.b16 %v2037
      %v2076 = vunpack.c.l.b16 %v2038
      %v2077 = vunpack.c.h.b16 %v2038
      %v2078 = vunpack.c.l.b16 %v2039
      %v2079 = vunpack.c.h.b16 %v2039
      %v2080 = vunpack.c.l.b16 %v2040
      %v2081 = vunpack.c.h.b16 %v2040
      %v2082 = vunpack.c.l.b16 %v2041
      %v2083 = vunpack.c.h.b16 %v2041
      %v2084 = vunpack.c.l.b16 %v2042
      %v2085 = vunpack.c.h.b16 %v2042
      %v2086 = vunpack.c.l.b16 %v2043
      %v2087 = vunpack.c.h.b16 %v2043
      %v2088 = vunpack.c.l.b16 %v2044
      %v2089 = vunpack.c.h.b16 %v2044
      %v2090 = vunpack.c.l.b16 %v2045
      %v2091 = vunpack.c.h.b16 %v2045
      %v2092 = vunpack.c.l.b16 %v2046
      %v2093 = vunpack.c.h.b16 %v2046
      %v2094 = vunpack.c.l.b16 %v2047
      %v2095 = vunpack.c.h.b16 %v2047
      %v2096 = vpack.c.b16 %v2064, %v2064
      %v2097 = vpack.c.b16 %v2065, %v2065
      %v2098 = vpack.c.b16 %v2066, %v2066
      %v2099 = vpack.c.b16 %v2067, %v2067
      %v2100 = vpack.c.b16 %v2068, %v2068
      %v2101 = vpack.c.b16 %v2069, %v2069
      %v2102 = vpack.c.b16 %v2070, %v2070
      %v2103 = vpack.c.b16 %v2071, %v2071
      %v2104 = vpack.c.b16 %v2072, %v2072
      %v2105 = vpack.c.b16 %v2073, %v2073
      %v2106 = vpack.c.b16 %v2074, %v2074
      %v2107 = vpack.c.b16 %v2075, %v2075
      %v2108 = vpack.c.b16 %v2076, %v2076
      %v2109 = vpack.c.b16 %v2077, %v2077
      %v2110 = vpack.c.b16 %v2078, %v2078
      %v2111 = vpack.c.b16 %v2079, %v2079
      %v2112 = vpack.c.b16 %v2080, %v2080
      %v2113 = vpack.c.b16 %v2081, %v2081
      %v2114 = vpack.c.b16 %v2082, %v2082
      %v2115 = vpack.c.b16 %v2083, %v2083
      %v2116 = vpack.c.b16 %v2084, %v2084
      %v2117 = vpack.c.b16 %v2085, %v2085
      %v2118 = vpack.c.b16 %v2086, %v2086
      %v2119 = vpack.c.b16 %v2087, %v2087
      %v2120 = vpack.c.b16 %v2088, %v2088
      %v2121 = vpack.c.b16 %v2089, %v2089
      %v2122 = vpack.c.b16 %v2090, %v2090
      %v2123 = vpack.c.b16 %v2091, %v2091
      %v2124 = vpack.c.b16 %v2092, %v2092
      %v2125 = vpack.c.b16 %v2093, %v2093
      %v2126 = vpack.c.b16 %v2094, %v2094
      %v2127 = vpack.c.b16 %v2095, %v2095
      %2160 = vst [vmem:[#allocation2 + $0x20] sm:$0xf] %v2096
      %2161 = vst [vmem:[#allocation2 + $0x44] sm:$0xf] %v2097
      %2162 = vst [vmem:[#allocation2 + $0x68] sm:$0xf] %v2098
      %2163 = vst [vmem:[#allocation2 + $0x8c] sm:$0xf] %v2099
      %2164 = vst [vmem:[#allocation2 + $0xb0] sm:$0xf] %v2100
      %2165 = vst [vmem:[#allocation2 + $0xd4] sm:$0xf] %v2101
      %2166 = vst [vmem:[#allocation2 + $0xf8] sm:$0xf] %v2102
      %2167 = vst [vmem:[#allocation2 + $0x11c] sm:$0xf] %v2103
      %2168 = vst [vmem:[#allocation2 + $0x140] sm:$0xf] %v2104
      %2169 = vst [vmem:[#allocation2 + $0x164] sm:$0xf] %v2105
      %2170 = vst [vmem:[#allocation2 + $0x188] sm:$0xf] %v2106
      %2171 = vst [vmem:[#allocation2 + $0x1ac] sm:$0xf] %v2107
      %2172 = vst [vmem:[#allocation2 + $0x1d0] sm:$0xf] %v2108
      %2173 = vst [vmem:[#allocation2 + $0x1f4] sm:$0xf] %v2109
      %2174 = vst [vmem:[#allocation2 + $0x218] sm:$0xf] %v2110
      %2175 = vst [vmem:[#allocation2 + $0x23c] sm:$0xf] %v2111
      %2176 = vst [vmem:[#allocation2 + $0x260] sm:$0xf] %v2112
      %2177 = vst [vmem:[#allocation2 + $0x284] sm:$0xf] %v2113
      %2178 = vst [vmem:[#allocation2 + $0x2a8] sm:$0xf] %v2114
      %2179 = vst [vmem:[#allocation2 + $0x2cc] sm:$0xf] %v2115
      %2180 = vst [vmem:[#allocation2 + $0x2f0] sm:$0xf] %v2116
      %2181 = vst [vmem:[#allocation2 + $0x314] sm:$0xf] %v2117
      %2182 = vst [vmem:[#allocation2 + $0x338] sm:$0xf] %v2118
      %2183 = vst [vmem:[#allocation2 + $0x35c] sm:$0xf] %v2119
      %2184 = vst [vmem:[#allocation2 + $0x380] sm:$0xf] %v2120
      %2185 = vst [vmem:[#allocation2 + $0x3a4] sm:$0xf] %v2121
      %2186 = vst [vmem:[#allocation2 + $0x3c8] sm:$0xf] %v2122
      %2187 = vst [vmem:[#allocation2 + $0x3ec] sm:$0xf] %v2123
      %2188 = vst [vmem:[#allocation2 + $0x410] sm:$0xf] %v2124
      %2189 = vst [vmem:[#allocation2 + $0x434] sm:$0xf] %v2125
      %2190 = vst [vmem:[#allocation2 + $0x458] sm:$0xf] %v2126
      %2191 = vst [vmem:[#allocation2 + $0x47c] sm:$0xf] %v2127
      %v2192 = vld [vmem:[#allocation2] sm:$0xff]
      %v2193 = vld [vmem:[#allocation2 + $0x8] sm:$0xff]
      %v2194 = vld [vmem:[#allocation2 + $0x10] sm:$0xff]
      %v2195 = vld [vmem:[#allocation2 + $0x18] sm:$0xff]
      %v2196 = vld [vmem:[#allocation2 + $0x20] sm:$0xf]
      %v2197 = vld [vmem:[#allocation2 + $0x24] sm:$0xff]
      %v2198 = vld [vmem:[#allocation2 + $0x2c] sm:$0xff]
      %v2199 = vld [vmem:[#allocation2 + $0x34] sm:$0xff]
      %v2200 = vld [vmem:[#allocation2 + $0x3c] sm:$0xff]
      %v2201 = vld [vmem:[#allocation2 + $0x44] sm:$0xf]
      %v2202 = vld [vmem:[#allocation2 + $0x48] sm:$0xff]
      %v2203 = vld [vmem:[#allocation2 + $0x50] sm:$0xff]
      %v2204 = vld [vmem:[#allocation2 + $0x58] sm:$0xff]
      %v2205 = vld [vmem:[#allocation2 + $0x60] sm:$0xff]
      %v2206 = vld [vmem:[#allocation2 + $0x68] sm:$0xf]
      %v2207 = vld [vmem:[#allocation2 + $0x6c] sm:$0xff]
      %v2208 = vld [vmem:[#allocation2 + $0x74] sm:$0xff]
      %v2209 = vld [vmem:[#allocation2 + $0x7c] sm:$0xff]
      %v2210 = vld [vmem:[#allocation2 + $0x84] sm:$0xff]
      %v2211 = vld [vmem:[#allocation2 + $0x8c] sm:$0xf]
      %v2212 = vld [vmem:[#allocation2 + $0x90] sm:$0xff]
      %v2213 = vld [vmem:[#allocation2 + $0x98] sm:$0xff]
      %v2214 = vld [vmem:[#allocation2 + $0xa0] sm:$0xff]
      %v2215 = vld [vmem:[#allocation2 + $0xa8] sm:$0xff]
      %v2216 = vld [vmem:[#allocation2 + $0xb0] sm:$0xf]
      %v2217 = vld [vmem:[#allocation2 + $0xb4] sm:$0xff]
      %v2218 = vld [vmem:[#allocation2 + $0xbc] sm:$0xff]
      %v2219 = vld [vmem:[#allocation2 + $0xc4] sm:$0xff]
      %v2220 = vld [vmem:[#allocation2 + $0xcc] sm:$0xff]
      %v2221 = vld [vmem:[#allocation2 + $0xd4] sm:$0xf]
      %v2222 = vld [vmem:[#allocation2 + $0xd8] sm:$0xff]
      %v2223 = vld [vmem:[#allocation2 + $0xe0] sm:$0xff]
      %v2224 = vld [vmem:[#allocation2 + $0xe8] sm:$0xff]
      %v2225 = vld [vmem:[#allocation2 + $0xf0] sm:$0xff]
      %v2226 = vld [vmem:[#allocation2 + $0xf8] sm:$0xf]
      %v2227 = vld [vmem:[#allocation2 + $0xfc] sm:$0xff]
      %v2228 = vld [vmem:[#allocation2 + $0x104] sm:$0xff]
      %v2229 = vld [vmem:[#allocation2 + $0x10c] sm:$0xff]
      %v2230 = vld [vmem:[#allocation2 + $0x114] sm:$0xff]
      %v2231 = vld [vmem:[#allocation2 + $0x11c] sm:$0xf]
      %v2232 = vld [vmem:[#allocation2 + $0x120] sm:$0xff]
      %v2233 = vld [vmem:[#allocation2 + $0x128] sm:$0xff]
      %v2234 = vld [vmem:[#allocation2 + $0x130] sm:$0xff]
      %v2235 = vld [vmem:[#allocation2 + $0x138] sm:$0xff]
      %v2236 = vld [vmem:[#allocation2 + $0x140] sm:$0xf]
      %v2237 = vld [vmem:[#allocation2 + $0x144] sm:$0xff]
      %v2238 = vld [vmem:[#allocation2 + $0x14c] sm:$0xff]
      %v2239 = vld [vmem:[#allocation2 + $0x154] sm:$0xff]
      %v2240 = vld [vmem:[#allocation2 + $0x15c] sm:$0xff]
      %v2241 = vld [vmem:[#allocation2 + $0x164] sm:$0xf]
      %v2242 = vld [vmem:[#allocation2 + $0x168] sm:$0xff]
      %v2243 = vld [vmem:[#allocation2 + $0x170] sm:$0xff]
      %v2244 = vld [vmem:[#allocation2 + $0x178] sm:$0xff]
      %v2245 = vld [vmem:[#allocation2 + $0x180] sm:$0xff]
      %v2246 = vld [vmem:[#allocation2 + $0x188] sm:$0xf]
      %v2247 = vld [vmem:[#allocation2 + $0x18c] sm:$0xff]
      %v2248 = vld [vmem:[#allocation2 + $0x194] sm:$0xff]
      %v2249 = vld [vmem:[#allocation2 + $0x19c] sm:$0xff]
      %v2250 = vld [vmem:[#allocation2 + $0x1a4] sm:$0xff]
      %v2251 = vld [vmem:[#allocation2 + $0x1ac] sm:$0xf]
      %v2252 = vld [vmem:[#allocation2 + $0x1b0] sm:$0xff]
      %v2253 = vld [vmem:[#allocation2 + $0x1b8] sm:$0xff]
      %v2254 = vld [vmem:[#allocation2 + $0x1c0] sm:$0xff]
      %v2255 = vld [vmem:[#allocation2 + $0x1c8] sm:$0xff]
      %v2256 = vld [vmem:[#allocation2 + $0x1d0] sm:$0xf]
      %v2257 = vld [vmem:[#allocation2 + $0x1d4] sm:$0xff]
      %v2258 = vld [vmem:[#allocation2 + $0x1dc] sm:$0xff]
      %v2259 = vld [vmem:[#allocation2 + $0x1e4] sm:$0xff]
      %v2260 = vld [vmem:[#allocation2 + $0x1ec] sm:$0xff]
      %v2261 = vld [vmem:[#allocation2 + $0x1f4] sm:$0xf]
      %v2262 = vld [vmem:[#allocation2 + $0x1f8] sm:$0xff]
      %v2263 = vld [vmem:[#allocation2 + $0x200] sm:$0xff]
      %v2264 = vld [vmem:[#allocation2 + $0x208] sm:$0xff]
      %v2265 = vld [vmem:[#allocation2 + $0x210] sm:$0xff]
      %v2266 = vld [vmem:[#allocation2 + $0x218] sm:$0xf]
      %v2267 = vld [vmem:[#allocation2 + $0x21c] sm:$0xff]
      %v2268 = vld [vmem:[#allocation2 + $0x224] sm:$0xff]
      %v2269 = vld [vmem:[#allocation2 + $0x22c] sm:$0xff]
      %v2270 = vld [vmem:[#allocation2 + $0x234] sm:$0xff]
      %v2271 = vld [vmem:[#allocation2 + $0x23c] sm:$0xf]
      %v2272 = vld [vmem:[#allocation2 + $0x240] sm:$0xff]
      %v2273 = vld [vmem:[#allocation2 + $0x248] sm:$0xff]
      %v2274 = vld [vmem:[#allocation2 + $0x250] sm:$0xff]
      %v2275 = vld [vmem:[#allocation2 + $0x258] sm:$0xff]
      %v2276 = vld [vmem:[#allocation2 + $0x260] sm:$0xf]
      %v2277 = vld [vmem:[#allocation2 + $0x264] sm:$0xff]
      %v2278 = vld [vmem:[#allocation2 + $0x26c] sm:$0xff]
      %v2279 = vld [vmem:[#allocation2 + $0x274] sm:$0xff]
      %v2280 = vld [vmem:[#allocation2 + $0x27c] sm:$0xff]
      %v2281 = vld [vmem:[#allocation2 + $0x284] sm:$0xf]
      %v2282 = vld [vmem:[#allocation2 + $0x288] sm:$0xff]
      %v2283 = vld [vmem:[#allocation2 + $0x290] sm:$0xff]
      %v2284 = vld [vmem:[#allocation2 + $0x298] sm:$0xff]
      %v2285 = vld [vmem:[#allocation2 + $0x2a0] sm:$0xff]
      %v2286 = vld [vmem:[#allocation2 + $0x2a8] sm:$0xf]
      %v2287 = vld [vmem:[#allocation2 + $0x2ac] sm:$0xff]
      %v2288 = vld [vmem:[#allocation2 + $0x2b4] sm:$0xff]
      %v2289 = vld [vmem:[#allocation2 + $0x2bc] sm:$0xff]
      %v2290 = vld [vmem:[#allocation2 + $0x2c4] sm:$0xff]
      %v2291 = vld [vmem:[#allocation2 + $0x2cc] sm:$0xf]
      %v2292 = vld [vmem:[#allocation2 + $0x2d0] sm:$0xff]
      %v2293 = vld [vmem:[#allocation2 + $0x2d8] sm:$0xff]
      %v2294 = vld [vmem:[#allocation2 + $0x2e0] sm:$0xff]
      %v2295 = vld [vmem:[#allocation2 + $0x2e8] sm:$0xff]
      %v2296 = vld [vmem:[#allocation2 + $0x2f0] sm:$0xf]
      %v2297 = vld [vmem:[#allocation2 + $0x2f4] sm:$0xff]
      %v2298 = vld [vmem:[#allocation2 + $0x2fc] sm:$0xff]
      %v2299 = vld [vmem:[#allocation2 + $0x304] sm:$0xff]
      %v2300 = vld [vmem:[#allocation2 + $0x30c] sm:$0xff]
      %v2301 = vld [vmem:[#allocation2 + $0x314] sm:$0xf]
      %v2302 = vld [vmem:[#allocation2 + $0x318] sm:$0xff]
      %v2303 = vld [vmem:[#allocation2 + $0x320] sm:$0xff]
      %v2304 = vld [vmem:[#allocation2 + $0x328] sm:$0xff]
      %v2305 = vld [vmem:[#allocation2 + $0x330] sm:$0xff]
      %v2306 = vld [vmem:[#allocation2 + $0x338] sm:$0xf]
      %v2307 = vld [vmem:[#allocation2 + $0x33c] sm:$0xff]
      %v2308 = vld [vmem:[#allocation2 + $0x344] sm:$0xff]
      %v2309 = vld [vmem:[#allocation2 + $0x34c] sm:$0xff]
      %v2310 = vld [vmem:[#allocation2 + $0x354] sm:$0xff]
      %v2311 = vld [vmem:[#allocation2 + $0x35c] sm:$0xf]
      %v2312 = vld [vmem:[#allocation2 + $0x360] sm:$0xff]
      %v2313 = vld [vmem:[#allocation2 + $0x368] sm:$0xff]
      %v2314 = vld [vmem:[#allocation2 + $0x370] sm:$0xff]
      %v2315 = vld [vmem:[#allocation2 + $0x378] sm:$0xff]
      %v2316 = vld [vmem:[#allocation2 + $0x380] sm:$0xf]
      %v2317 = vld [vmem:[#allocation2 + $0x384] sm:$0xff]
      %v2318 = vld [vmem:[#allocation2 + $0x38c] sm:$0xff]
      %v2319 = vld [vmem:[#allocation2 + $0x394] sm:$0xff]
      %v2320 = vld [vmem:[#allocation2 + $0x39c] sm:$0xff]
      %v2321 = vld [vmem:[#allocation2 + $0x3a4] sm:$0xf]
      %v2322 = vld [vmem:[#allocation2 + $0x3a8] sm:$0xff]
      %v2323 = vld [vmem:[#allocation2 + $0x3b0] sm:$0xff]
      %v2324 = vld [vmem:[#allocation2 + $0x3b8] sm:$0xff]
      %v2325 = vld [vmem:[#allocation2 + $0x3c0] sm:$0xff]
      %v2326 = vld [vmem:[#allocation2 + $0x3c8] sm:$0xf]
      %v2327 = vld [vmem:[#allocation2 + $0x3cc] sm:$0xff]
      %v2328 = vld [vmem:[#allocation2 + $0x3d4] sm:$0xff]
      %v2329 = vld [vmem:[#allocation2 + $0x3dc] sm:$0xff]
      %v2330 = vld [vmem:[#allocation2 + $0x3e4] sm:$0xff]
      %v2331 = vld [vmem:[#allocation2 + $0x3ec] sm:$0xf]
      %v2332 = vld [vmem:[#allocation2 + $0x3f0] sm:$0xff]
      %v2333 = vld [vmem:[#allocation2 + $0x3f8] sm:$0xff]
      %v2334 = vld [vmem:[#allocation2 + $0x400] sm:$0xff]
      %v2335 = vld [vmem:[#allocation2 + $0x408] sm:$0xff]
      %v2336 = vld [vmem:[#allocation2 + $0x410] sm:$0xf]
      %v2337 = vld [vmem:[#allocation2 + $0x414] sm:$0xff]
      %v2338 = vld [vmem:[#allocation2 + $0x41c] sm:$0xff]
      %v2339 = vld [vmem:[#allocation2 + $0x424] sm:$0xff]
      %v2340 = vld [vmem:[#allocation2 + $0x42c] sm:$0xff]
      %v2341 = vld [vmem:[#allocation2 + $0x434] sm:$0xf]
      %v2342 = vld [vmem:[#allocation2 + $0x438] sm:$0xff]
      %v2343 = vld [vmem:[#allocation2 + $0x440] sm:$0xff]
      %v2344 = vld [vmem:[#allocation2 + $0x448] sm:$0xff]
      %v2345 = vld [vmem:[#allocation2 + $0x450] sm:$0xff]
      %v2346 = vld [vmem:[#allocation2 + $0x458] sm:$0xf]
      %v2347 = vld [vmem:[#allocation2 + $0x45c] sm:$0xff]
      %v2348 = vld [vmem:[#allocation2 + $0x464] sm:$0xff]
      %v2349 = vld [vmem:[#allocation2 + $0x46c] sm:$0xff]
      %v2350 = vld [vmem:[#allocation2 + $0x474] sm:$0xff]
      %v2351 = vld [vmem:[#allocation2 + $0x47c] sm:$0xf]
      %v2352 = vld [vmem:[%s1] sm:$0xf]
      %v2353 = vld [vmem:[%s1 + $0x4] sm:$0xf]
      %v2354 = vld [vmem:[%s1 + $0x8] sm:$0xf]
      %v2355 = vld [vmem:[%s1 + $0xc] sm:$0xf]
      %v2356 = vld [vmem:[%s1 + $0x10] sm:$0xf]
      %v2357 = vld [vmem:[%s1 + $0x14] sm:$0xf]
      %v2358 = vld [vmem:[%s1 + $0x18] sm:$0xf]
      %v2359 = vld [vmem:[%s1 + $0x1c] sm:$0xf]
      %v2360 = vld [vmem:[%s1 + $0x20] sm:$0xf]
      %v2361 = vld [vmem:[%s1 + $0x24] sm:$0xf]
      %v2362 = vld [vmem:[%s1 + $0x28] sm:$0xf]
      %v2363 = vld [vmem:[%s1 + $0x2c] sm:$0xf]
      %v2364 = vld [vmem:[%s1 + $0x30] sm:$0xf]
      %v2365 = vld [vmem:[%s1 + $0x34] sm:$0xf]
      %v2366 = vld [vmem:[%s1 + $0x38] sm:$0xf]
      %v2367 = vld [vmem:[%s1 + $0x3c] sm:$0xf]
      %v2368 = vld [vmem:[%s1 + $0x40] sm:$0xf]
      %v2369 = vld [vmem:[%s1 + $0x44] sm:$0xf]
      %v2370 = vld [vmem:[%s1 + $0x48] sm:$0xf]
      %v2371 = vld [vmem:[%s1 + $0x4c] sm:$0xf]
      %v2372 = vld [vmem:[%s1 + $0x50] sm:$0xf]
      %v2373 = vld [vmem:[%s1 + $0x54] sm:$0xf]
      %v2374 = vld [vmem:[%s1 + $0x58] sm:$0xf]
      %v2375 = vld [vmem:[%s1 + $0x5c] sm:$0xf]
      %v2376 = vld [vmem:[%s1 + $0x60] sm:$0xf]
      %v2377 = vld [vmem:[%s1 + $0x64] sm:$0xf]
      %v2378 = vld [vmem:[%s1 + $0x68] sm:$0xf]
      %v2379 = vld [vmem:[%s1 + $0x6c] sm:$0xf]
      %v2380 = vld [vmem:[%s1 + $0x70] sm:$0xf]
      %v2381 = vld [vmem:[%s1 + $0x74] sm:$0xf]
      %v2382 = vld [vmem:[%s1 + $0x78] sm:$0xf]
      %v2383 = vld [vmem:[%s1 + $0x7c] sm:$0xf]
      %v2384 = vld [vmem:[%s1 + $0x80] sm:$0xf]
      %v2385 = vld [vmem:[%s1 + $0x84] sm:$0xf]
      %v2386 = vld [vmem:[%s1 + $0x88] sm:$0xf]
      %v2387 = vld [vmem:[%s1 + $0x8c] sm:$0xf]
      %v2388 = vld [vmem:[%s1 + $0x90] sm:$0xf]
      %v2389 = vld [vmem:[%s1 + $0x94] sm:$0xf]
      %v2390 = vld [vmem:[%s1 + $0x98] sm:$0xf]
      %v2391 = vld [vmem:[%s1 + $0x9c] sm:$0xf]
      %v2392 = vld [vmem:[%s1 + $0xa0] sm:$0xf]
      %v2393 = vld [vmem:[%s1 + $0xa4] sm:$0xf]
      %v2394 = vld [vmem:[%s1 + $0xa8] sm:$0xf]
      %v2395 = vld [vmem:[%s1 + $0xac] sm:$0xf]
      %v2396 = vld [vmem:[%s1 + $0xb0] sm:$0xf]
      %v2397 = vld [vmem:[%s1 + $0xb4] sm:$0xf]
      %v2398 = vld [vmem:[%s1 + $0xb8] sm:$0xf]
      %v2399 = vld [vmem:[%s1 + $0xbc] sm:$0xf]
      %v2400 = vld [vmem:[%s1 + $0xc0] sm:$0xf]
      %v2401 = vld [vmem:[%s1 + $0xc4] sm:$0xf]
      %v2402 = vld [vmem:[%s1 + $0xc8] sm:$0xf]
      %v2403 = vld [vmem:[%s1 + $0xcc] sm:$0xf]
      %v2404 = vld [vmem:[%s1 + $0xd0] sm:$0xf]
      %v2405 = vld [vmem:[%s1 + $0xd4] sm:$0xf]
      %v2406 = vld [vmem:[%s1 + $0xd8] sm:$0xf]
      %v2407 = vld [vmem:[%s1 + $0xdc] sm:$0xf]
      %v2408 = vld [vmem:[%s1 + $0xe0] sm:$0xf]
      %v2409 = vld [vmem:[%s1 + $0xe4] sm:$0xf]
      %v2410 = vld [vmem:[%s1 + $0xe8] sm:$0xf]
      %v2411 = vld [vmem:[%s1 + $0xec] sm:$0xf]
      %v2412 = vld [vmem:[%s1 + $0xf0] sm:$0xf]
      %v2413 = vld [vmem:[%s1 + $0xf4] sm:$0xf]
      %v2414 = vld [vmem:[%s1 + $0xf8] sm:$0xf]
      %v2415 = vld [vmem:[%s1 + $0xfc] sm:$0xf]
      %v2416 = vld [vmem:[%s1 + $0x100] sm:$0xf]
      %v2417 = vld [vmem:[%s1 + $0x104] sm:$0xf]
      %v2418 = vld [vmem:[%s1 + $0x108] sm:$0xf]
      %v2419 = vld [vmem:[%s1 + $0x10c] sm:$0xf]
      %v2420 = vld [vmem:[%s1 + $0x110] sm:$0xf]
      %v2421 = vld [vmem:[%s1 + $0x114] sm:$0xf]
      %v2422 = vld [vmem:[%s1 + $0x118] sm:$0xf]
      %v2423 = vld [vmem:[%s1 + $0x11c] sm:$0xf]
      %v2424 = vld [vmem:[%s1 + $0x120] sm:$0xf]
      %v2425 = vld [vmem:[%s1 + $0x124] sm:$0xf]
      %v2426 = vld [vmem:[%s1 + $0x128] sm:$0xf]
      %v2427 = vld [vmem:[%s1 + $0x12c] sm:$0xf]
      %v2428 = vld [vmem:[%s1 + $0x130] sm:$0xf]
      %v2429 = vld [vmem:[%s1 + $0x134] sm:$0xf]
      %v2430 = vld [vmem:[%s1 + $0x138] sm:$0xf]
      %v2431 = vld [vmem:[%s1 + $0x13c] sm:$0xf]
      %v2432 = vld [vmem:[%s1 + $0x140] sm:$0xf]
      %v2433 = vld [vmem:[%s1 + $0x144] sm:$0xf]
      %v2434 = vld [vmem:[%s1 + $0x148] sm:$0xf]
      %v2435 = vld [vmem:[%s1 + $0x14c] sm:$0xf]
      %v2436 = vld [vmem:[%s1 + $0x150] sm:$0xf]
      %v2437 = vld [vmem:[%s1 + $0x154] sm:$0xf]
      %v2438 = vld [vmem:[%s1 + $0x158] sm:$0xf]
      %v2439 = vld [vmem:[%s1 + $0x15c] sm:$0xf]
      %v2440 = vld [vmem:[%s1 + $0x160] sm:$0xf]
      %v2441 = vld [vmem:[%s1 + $0x164] sm:$0xf]
      %v2442 = vld [vmem:[%s1 + $0x168] sm:$0xf]
      %v2443 = vld [vmem:[%s1 + $0x16c] sm:$0xf]
      %v2444 = vld [vmem:[%s1 + $0x170] sm:$0xf]
      %v2445 = vld [vmem:[%s1 + $0x174] sm:$0xf]
      %v2446 = vld [vmem:[%s1 + $0x178] sm:$0xf]
      %v2447 = vld [vmem:[%s1 + $0x17c] sm:$0xf]
      %v2448 = vld [vmem:[%s1 + $0x180] sm:$0xf]
      %v2449 = vld [vmem:[%s1 + $0x184] sm:$0xf]
      %v2450 = vld [vmem:[%s1 + $0x188] sm:$0xf]
      %v2451 = vld [vmem:[%s1 + $0x18c] sm:$0xf]
      %v2452 = vld [vmem:[%s1 + $0x190] sm:$0xf]
      %v2453 = vld [vmem:[%s1 + $0x194] sm:$0xf]
      %v2454 = vld [vmem:[%s1 + $0x198] sm:$0xf]
      %v2455 = vld [vmem:[%s1 + $0x19c] sm:$0xf]
      %v2456 = vld [vmem:[%s1 + $0x1a0] sm:$0xf]
      %v2457 = vld [vmem:[%s1 + $0x1a4] sm:$0xf]
      %v2458 = vld [vmem:[%s1 + $0x1a8] sm:$0xf]
      %v2459 = vld [vmem:[%s1 + $0x1ac] sm:$0xf]
      %v2460 = vld [vmem:[%s1 + $0x1b0] sm:$0xf]
      %v2461 = vld [vmem:[%s1 + $0x1b4] sm:$0xf]
      %v2462 = vld [vmem:[%s1 + $0x1b8] sm:$0xf]
      %v2463 = vld [vmem:[%s1 + $0x1bc] sm:$0xf]
      %v2464 = vld [vmem:[%s1 + $0x1c0] sm:$0xf]
      %v2465 = vld [vmem:[%s1 + $0x1c4] sm:$0xf]
      %v2466 = vld [vmem:[%s1 + $0x1c8] sm:$0xf]
      %v2467 = vld [vmem:[%s1 + $0x1cc] sm:$0xf]
      %v2468 = vld [vmem:[%s1 + $0x1d0] sm:$0xf]
      %v2469 = vld [vmem:[%s1 + $0x1d4] sm:$0xf]
      %v2470 = vld [vmem:[%s1 + $0x1d8] sm:$0xf]
      %v2471 = vld [vmem:[%s1 + $0x1dc] sm:$0xf]
      %v2472 = vld [vmem:[%s1 + $0x1e0] sm:$0xf]
      %v2473 = vld [vmem:[%s1 + $0x1e4] sm:$0xf]
      %v2474 = vld [vmem:[%s1 + $0x1e8] sm:$0xf]
      %v2475 = vld [vmem:[%s1 + $0x1ec] sm:$0xf]
      %v2476 = vld [vmem:[%s1 + $0x1f0] sm:$0xf]
      %v2477 = vld [vmem:[%s1 + $0x1f4] sm:$0xf]
      %v2478 = vld [vmem:[%s1 + $0x1f8] sm:$0xf]
      %v2479 = vld [vmem:[%s1 + $0x1fc] sm:$0xf]
      %v2480 = vld [vmem:[%s1 + $0x200] sm:$0xf]
      %v2481 = vld [vmem:[%s1 + $0x204] sm:$0xf]
      %v2482 = vld [vmem:[%s1 + $0x208] sm:$0xf]
      %v2483 = vld [vmem:[%s1 + $0x20c] sm:$0xf]
      %v2484 = vld [vmem:[%s1 + $0x210] sm:$0xf]
      %v2485 = vld [vmem:[%s1 + $0x214] sm:$0xf]
      %v2486 = vld [vmem:[%s1 + $0x218] sm:$0xf]
      %v2487 = vld [vmem:[%s1 + $0x21c] sm:$0xf]
      %v2488 = vld [vmem:[%s1 + $0x220] sm:$0xf]
      %v2489 = vld [vmem:[%s1 + $0x224] sm:$0xf]
      %v2490 = vld [vmem:[%s1 + $0x228] sm:$0xf]
      %v2491 = vld [vmem:[%s1 + $0x22c] sm:$0xf]
      %v2492 = vld [vmem:[%s1 + $0x230] sm:$0xf]
      %v2493 = vld [vmem:[%s1 + $0x234] sm:$0xf]
      %v2494 = vld [vmem:[%s1 + $0x238] sm:$0xf]
      %v2495 = vld [vmem:[%s1 + $0x23c] sm:$0xf]
      %v2496 = vld [vmem:[%s2] sm:$0x1]
      %v2498 = vlaneseq
      %v2499 = vshrl.u32 %v2498, 7
      %v2500 = vsub.s32 0, %v2499
      %v2501 = vrot.slane %v2496, %v2500
      %v2663 = vunpack.c.l.b16 %v2192
      %v2664 = vunpack.c.h.b16 %v2192
      %v2665 = vunpack.c.l.b16 %v2193
      %v2666 = vunpack.c.h.b16 %v2193
      %v2667 = vunpack.c.l.b16 %v2194
      %v2668 = vunpack.c.h.b16 %v2194
      %v2669 = vunpack.c.l.b16 %v2195
      %v2670 = vunpack.c.h.b16 %v2195
      %v2671 = vunpack.c.l.b16 %v2196
      %v2672 = vunpack.c.l.b16 %v2197
      %v2673 = vunpack.c.h.b16 %v2197
      %v2674 = vunpack.c.l.b16 %v2198
      %v2675 = vunpack.c.h.b16 %v2198
      %v2676 = vunpack.c.l.b16 %v2199
      %v2677 = vunpack.c.h.b16 %v2199
      %v2678 = vunpack.c.l.b16 %v2200
      %v2679 = vunpack.c.h.b16 %v2200
      %v2680 = vunpack.c.l.b16 %v2201
      %v2681 = vunpack.c.l.b16 %v2202
      %v2682 = vunpack.c.h.b16 %v2202
      %v2683 = vunpack.c.l.b16 %v2203
      %v2684 = vunpack.c.h.b16 %v2203
      %v2685 = vunpack.c.l.b16 %v2204
      %v2686 = vunpack.c.h.b16 %v2204
      %v2687 = vunpack.c.l.b16 %v2205
      %v2688 = vunpack.c.h.b16 %v2205
      %v2689 = vunpack.c.l.b16 %v2206
      %v2690 = vunpack.c.l.b16 %v2207
      %v2691 = vunpack.c.h.b16 %v2207
      %v2692 = vunpack.c.l.b16 %v2208
      %v2693 = vunpack.c.h.b16 %v2208
      %v2694 = vunpack.c.l.b16 %v2209
      %v2695 = vunpack.c.h.b16 %v2209
      %v2696 = vunpack.c.l.b16 %v2210
      %v2697 = vunpack.c.h.b16 %v2210
      %v2698 = vunpack.c.l.b16 %v2211
      %v2699 = vunpack.c.l.b16 %v2212
      %v2700 = vunpack.c.h.b16 %v2212
      %v2701 = vunpack.c.l.b16 %v2213
      %v2702 = vunpack.c.h.b16 %v2213
      %v2703 = vunpack.c.l.b16 %v2214
      %v2704 = vunpack.c.h.b16 %v2214
      %v2705 = vunpack.c.l.b16 %v2215
      %v2706 = vunpack.c.h.b16 %v2215
      %v2707 = vunpack.c.l.b16 %v2216
      %v2708 = vunpack.c.l.b16 %v2217
      %v2709 = vunpack.c.h.b16 %v2217
      %v2710 = vunpack.c.l.b16 %v2218
      %v2711 = vunpack.c.h.b16 %v2218
      %v2712 = vunpack.c.l.b16 %v2219
      %v2713 = vunpack.c.h.b16 %v2219
      %v2714 = vunpack.c.l.b16 %v2220
      %v2715 = vunpack.c.h.b16 %v2220
      %v2716 = vunpack.c.l.b16 %v2221
      %v2717 = vunpack.c.l.b16 %v2222
      %v2718 = vunpack.c.h.b16 %v2222
      %v2719 = vunpack.c.l.b16 %v2223
      %v2720 = vunpack.c.h.b16 %v2223
      %v2721 = vunpack.c.l.b16 %v2224
      %v2722 = vunpack.c.h.b16 %v2224
      %v2723 = vunpack.c.l.b16 %v2225
      %v2724 = vunpack.c.h.b16 %v2225
      %v2725 = vunpack.c.l.b16 %v2226
      %v2726 = vunpack.c.l.b16 %v2227
      %v2727 = vunpack.c.h.b16 %v2227
      %v2728 = vunpack.c.l.b16 %v2228
      %v2729 = vunpack.c.h.b16 %v2228
      %v2730 = vunpack.c.l.b16 %v2229
      %v2731 = vunpack.c.h.b16 %v2229
      %v2732 = vunpack.c.l.b16 %v2230
      %v2733 = vunpack.c.h.b16 %v2230
      %v2734 = vunpack.c.l.b16 %v2231
      %v2735 = vunpack.c.l.b16 %v2232
      %v2736 = vunpack.c.h.b16 %v2232
      %v2737 = vunpack.c.l.b16 %v2233
      %v2738 = vunpack.c.h.b16 %v2233
      %v2739 = vunpack.c.l.b16 %v2234
      %v2740 = vunpack.c.h.b16 %v2234
      %v2741 = vunpack.c.l.b16 %v2235
      %v2742 = vunpack.c.h.b16 %v2235
      %v2743 = vunpack.c.l.b16 %v2236
      %v2744 = vunpack.c.l.b16 %v2237
      %v2745 = vunpack.c.h.b16 %v2237
      %v2746 = vunpack.c.l.b16 %v2238
      %v2747 = vunpack.c.h.b16 %v2238
      %v2748 = vunpack.c.l.b16 %v2239
      %v2749 = vunpack.c.h.b16 %v2239
      %v2750 = vunpack.c.l.b16 %v2240
      %v2751 = vunpack.c.h.b16 %v2240
      %v2752 = vunpack.c.l.b16 %v2241
      %v2753 = vunpack.c.l.b16 %v2242
      %v2754 = vunpack.c.h.b16 %v2242
      %v2755 = vunpack.c.l.b16 %v2243
      %v2756 = vunpack.c.h.b16 %v2243
      %v2757 = vunpack.c.l.b16 %v2244
      %v2758 = vunpack.c.h.b16 %v2244
      %v2759 = vunpack.c.l.b16 %v2245
      %v2760 = vunpack.c.h.b16 %v2245
      %v2761 = vunpack.c.l.b16 %v2246
      %v2762 = vunpack.c.l.b16 %v2247
      %v2763 = vunpack.c.h.b16 %v2247
      %v2764 = vunpack.c.l.b16 %v2248
      %v2765 = vunpack.c.h.b16 %v2248
      %v2766 = vunpack.c.l.b16 %v2249
      %v2767 = vunpack.c.h.b16 %v2249
      %v2768 = vunpack.c.l.b16 %v2250
      %v2769 = vunpack.c.h.b16 %v2250
      %v2770 = vunpack.c.l.b16 %v2251
      %v2771 = vunpack.c.l.b16 %v2252
      %v2772 = vunpack.c.h.b16 %v2252
      %v2773 = vunpack.c.l.b16 %v2253
      %v2774 = vunpack.c.h.b16 %v2253
      %v2775 = vunpack.c.l.b16 %v2254
      %v2776 = vunpack.c.h.b16 %v2254
      %v2777 = vunpack.c.l.b16 %v2255
      %v2778 = vunpack.c.h.b16 %v2255
      %v2779 = vunpack.c.l.b16 %v2256
      %v2780 = vunpack.c.l.b16 %v2257
      %v2781 = vunpack.c.h.b16 %v2257
      %v2782 = vunpack.c.l.b16 %v2258
      %v2783 = vunpack.c.h.b16 %v2258
      %v2784 = vunpack.c.l.b16 %v2259
      %v2785 = vunpack.c.h.b16 %v2259
      %v2786 = vunpack.c.l.b16 %v2260
      %v2787 = vunpack.c.h.b16 %v2260
      %v2788 = vunpack.c.l.b16 %v2261
      %v2789 = vunpack.c.l.b16 %v2262
      %v2790 = vunpack.c.h.b16 %v2262
      %v2791 = vunpack.c.l.b16 %v2263
      %v2792 = vunpack.c.h.b16 %v2263
      %v2793 = vunpack.c.l.b16 %v2264
      %v2794 = vunpack.c.h.b16 %v2264
      %v2795 = vunpack.c.l.b16 %v2265
      %v2796 = vunpack.c.h.b16 %v2265
      %v2797 = vunpack.c.l.b16 %v2266
      %v2798 = vunpack.c.l.b16 %v2267
      %v2799 = vunpack.c.h.b16 %v2267
      %v2800 = vunpack.c.l.b16 %v2268
      %v2801 = vunpack.c.h.b16 %v2268
      %v2802 = vunpack.c.l.b16 %v2269
      %v2803 = vunpack.c.h.b16 %v2269
      %v2804 = vunpack.c.l.b16 %v2270
      %v2805 = vunpack.c.h.b16 %v2270
      %v2806 = vunpack.c.l.b16 %v2271
      %v2807 = vunpack.c.l.b16 %v2272
      %v2808 = vunpack.c.h.b16 %v2272
      %v2809 = vunpack.c.l.b16 %v2273
      %v2810 = vunpack.c.h.b16 %v2273
      %v2811 = vunpack.c.l.b16 %v2274
      %v2812 = vunpack.c.h.b16 %v2274
      %v2813 = vunpack.c.l.b16 %v2275
      %v2814 = vunpack.c.h.b16 %v2275
      %v2815 = vunpack.c.l.b16 %v2276
      %v2816 = vunpack.c.l.b16 %v2277
      %v2817 = vunpack.c.h.b16 %v2277
      %v2818 = vunpack.c.l.b16 %v2278
      %v2819 = vunpack.c.h.b16 %v2278
      %v2820 = vunpack.c.l.b16 %v2279
      %v2821 = vunpack.c.h.b16 %v2279
      %v2822 = vunpack.c.l.b16 %v2280
      %v2823 = vunpack.c.h.b16 %v2280
      %v2824 = vunpack.c.l.b16 %v2281
      %v2825 = vunpack.c.l.b16 %v2282
      %v2826 = vunpack.c.h.b16 %v2282
      %v2827 = vunpack.c.l.b16 %v2283
      %v2828 = vunpack.c.h.b16 %v2283
      %v2829 = vunpack.c.l.b16 %v2284
      %v2830 = vunpack.c.h.b16 %v2284
      %v2831 = vunpack.c.l.b16 %v2285
      %v2832 = vunpack.c.h.b16 %v2285
      %v2833 = vunpack.c.l.b16 %v2286
      %v2834 = vunpack.c.l.b16 %v2287
      %v2835 = vunpack.c.h.b16 %v2287
      %v2836 = vunpack.c.l.b16 %v2288
      %v2837 = vunpack.c.h.b16 %v2288
      %v2838 = vunpack.c.l.b16 %v2289
      %v2839 = vunpack.c.h.b16 %v2289
      %v2840 = vunpack.c.l.b16 %v2290
      %v2841 = vunpack.c.h.b16 %v2290
      %v2842 = vunpack.c.l.b16 %v2291
      %v2843 = vunpack.c.l.b16 %v2292
      %v2844 = vunpack.c.h.b16 %v2292
      %v2845 = vunpack.c.l.b16 %v2293
      %v2846 = vunpack.c.h.b16 %v2293
      %v2847 = vunpack.c.l.b16 %v2294
      %v2848 = vunpack.c.h.b16 %v2294
      %v2849 = vunpack.c.l.b16 %v2295
      %v2850 = vunpack.c.h.b16 %v2295
      %v2851 = vunpack.c.l.b16 %v2296
      %v2852 = vunpack.c.l.b16 %v2297
      %v2853 = vunpack.c.h.b16 %v2297
      %v2854 = vunpack.c.l.b16 %v2298
      %v2855 = vunpack.c.h.b16 %v2298
      %v2856 = vunpack.c.l.b16 %v2299
      %v2857 = vunpack.c.h.b16 %v2299
      %v2858 = vunpack.c.l.b16 %v2300
      %v2859 = vunpack.c.h.b16 %v2300
      %v2860 = vunpack.c.l.b16 %v2301
      %v2861 = vunpack.c.l.b16 %v2302
      %v2862 = vunpack.c.h.b16 %v2302
      %v2863 = vunpack.c.l.b16 %v2303
      %v2864 = vunpack.c.h.b16 %v2303
      %v2865 = vunpack.c.l.b16 %v2304
      %v2866 = vunpack.c.h.b16 %v2304
      %v2867 = vunpack.c.l.b16 %v2305
      %v2868 = vunpack.c.h.b16 %v2305
      %v2869 = vunpack.c.l.b16 %v2306
      %v2870 = vunpack.c.l.b16 %v2307
      %v2871 = vunpack.c.h.b16 %v2307
      %v2872 = vunpack.c.l.b16 %v2308
      %v2873 = vunpack.c.h.b16 %v2308
      %v2874 = vunpack.c.l.b16 %v2309
      %v2875 = vunpack.c.h.b16 %v2309
      %v2876 = vunpack.c.l.b16 %v2310
      %v2877 = vunpack.c.h.b16 %v2310
      %v2878 = vunpack.c.l.b16 %v2311
      %v2879 = vunpack.c.l.b16 %v2312
      %v2880 = vunpack.c.h.b16 %v2312
      %v2881 = vunpack.c.l.b16 %v2313
      %v2882 = vunpack.c.h.b16 %v2313
      %v2883 = vunpack.c.l.b16 %v2314
      %v2884 = vunpack.c.h.b16 %v2314
      %v2885 = vunpack.c.l.b16 %v2315
      %v2886 = vunpack.c.h.b16 %v2315
      %v2887 = vunpack.c.l.b16 %v2316
      %v2888 = vunpack.c.l.b16 %v2317
      %v2889 = vunpack.c.h.b16 %v2317
      %v2890 = vunpack.c.l.b16 %v2318
      %v2891 = vunpack.c.h.b16 %v2318
      %v2892 = vunpack.c.l.b16 %v2319
      %v2893 = vunpack.c.h.b16 %v2319
      %v2894 = vunpack.c.l.b16 %v2320
      %v2895 = vunpack.c.h.b16 %v2320
      %v2896 = vunpack.c.l.b16 %v2321
      %v2897 = vunpack.c.l.b16 %v2322
      %v2898 = vunpack.c.h.b16 %v2322
      %v2899 = vunpack.c.l.b16 %v2323
      %v2900 = vunpack.c.h.b16 %v2323
      %v2901 = vunpack.c.l.b16 %v2324
      %v2902 = vunpack.c.h.b16 %v2324
      %v2903 = vunpack.c.l.b16 %v2325
      %v2904 = vunpack.c.h.b16 %v2325
      %v2905 = vunpack.c.l.b16 %v2326
      %v2906 = vunpack.c.l.b16 %v2327
      %v2907 = vunpack.c.h.b16 %v2327
      %v2908 = vunpack.c.l.b16 %v2328
      %v2909 = vunpack.c.h.b16 %v2328
      %v2910 = vunpack.c.l.b16 %v2329
      %v2911 = vunpack.c.h.b16 %v2329
      %v2912 = vunpack.c.l.b16 %v2330
      %v2913 = vunpack.c.h.b16 %v2330
      %v2914 = vunpack.c.l.b16 %v2331
      %v2915 = vunpack.c.l.b16 %v2332
      %v2916 = vunpack.c.h.b16 %v2332
      %v2917 = vunpack.c.l.b16 %v2333
      %v2918 = vunpack.c.h.b16 %v2333
      %v2919 = vunpack.c.l.b16 %v2334
      %v2920 = vunpack.c.h.b16 %v2334
      %v2921 = vunpack.c.l.b16 %v2335
      %v2922 = vunpack.c.h.b16 %v2335
      %v2923 = vunpack.c.l.b16 %v2336
      %v2924 = vunpack.c.l.b16 %v2337
      %v2925 = vunpack.c.h.b16 %v2337
      %v2926 = vunpack.c.l.b16 %v2338
      %v2927 = vunpack.c.h.b16 %v2338
      %v2928 = vunpack.c.l.b16 %v2339
      %v2929 = vunpack.c.h.b16 %v2339
      %v2930 = vunpack.c.l.b16 %v2340
      %v2931 = vunpack.c.h.b16 %v2340
      %v2932 = vunpack.c.l.b16 %v2341
      %v2933 = vunpack.c.l.b16 %v2342
      %v2934 = vunpack.c.h.b16 %v2342
      %v2935 = vunpack.c.l.b16 %v2343
      %v2936 = vunpack.c.h.b16 %v2343
      %v2937 = vunpack.c.l.b16 %v2344
      %v2938 = vunpack.c.h.b16 %v2344
      %v2939 = vunpack.c.l.b16 %v2345
      %v2940 = vunpack.c.h.b16 %v2345
      %v2941 = vunpack.c.l.b16 %v2346
      %v2942 = vunpack.c.l.b16 %v2347
      %v2943 = vunpack.c.h.b16 %v2347
      %v2944 = vunpack.c.l.b16 %v2348
      %v2945 = vunpack.c.h.b16 %v2348
      %v2946 = vunpack.c.l.b16 %v2349
      %v2947 = vunpack.c.h.b16 %v2349
      %v2948 = vunpack.c.l.b16 %v2350
      %v2949 = vunpack.c.h.b16 %v2350
      %v2950 = vunpack.c.l.b16 %v2351
      %v2951 = vpack.c.b16 %v2672, %v2663
      %v2952 = vpack.c.b16 %v2673, %v2664
      %v2953 = vpack.c.b16 %v2674, %v2665
      %v2954 = vpack.c.b16 %v2675, %v2666
      %v2955 = vpack.c.b16 %v2676, %v2667
      %v2956 = vpack.c.b16 %v2677, %v2668
      %v2957 = vpack.c.b16 %v2678, %v2669
      %v2958 = vpack.c.b16 %v2679, %v2670
      %v2959 = vpack.c.b16 %v2680, %v2671
      %v2960 = vpack.c.b16 %v2690, %v2681
      %v2961 = vpack.c.b16 %v2691, %v2682
      %v2962 = vpack.c.b16 %v2692, %v2683
      %v2963 = vpack.c.b16 %v2693, %v2684
      %v2964 = vpack.c.b16 %v2694, %v2685
      %v2965 = vpack.c.b16 %v2695, %v2686
      %v2966 = vpack.c.b16 %v2696, %v2687
      %v2967 = vpack.c.b16 %v2697, %v2688
      %v2968 = vpack.c.b16 %v2698, %v2689
      %v2969 = vpack.c.b16 %v2708, %v2699
      %v2970 = vpack.c.b16 %v2709, %v2700
      %v2971 = vpack.c.b16 %v2710, %v2701
      %v2972 = vpack.c.b16 %v2711, %v2702
      %v2973 = vpack.c.b16 %v2712, %v2703
      %v2974 = vpack.c.b16 %v2713, %v2704
      %v2975 = vpack.c.b16 %v2714, %v2705
      %v2976 = vpack.c.b16 %v2715, %v2706
      %v2977 = vpack.c.b16 %v2716, %v2707
      %v2978 = vpack.c.b16 %v2726, %v2717
      %v2979 = vpack.c.b16 %v2727, %v2718
      %v2980 = vpack.c.b16 %v2728, %v2719
      %v2981 = vpack.c.b16 %v2729, %v2720
      %v2982 = vpack.c.b16 %v2730, %v2721
      %v2983 = vpack.c.b16 %v2731, %v2722
      %v2984 = vpack.c.b16 %v2732, %v2723
      %v2985 = vpack.c.b16 %v2733, %v2724
      %v2986 = vpack.c.b16 %v2734, %v2725
      %v2987 = vpack.c.b16 %v2744, %v2735
      %v2988 = vpack.c.b16 %v2745, %v2736
      %v2989 = vpack.c.b16 %v2746, %v2737
      %v2990 = vpack.c.b16 %v2747, %v2738
      %v2991 = vpack.c.b16 %v2748, %v2739
      %v2992 = vpack.c.b16 %v2749, %v2740
      %v2993 = vpack.c.b16 %v2750, %v2741
      %v2994 = vpack.c.b16 %v2751, %v2742
      %v2995 = vpack.c.b16 %v2752, %v2743
      %v2996 = vpack.c.b16 %v2762, %v2753
      %v2997 = vpack.c.b16 %v2763, %v2754
      %v2998 = vpack.c.b16 %v2764, %v2755
      %v2999 = vpack.c.b16 %v2765, %v2756
      %v3000 = vpack.c.b16 %v2766, %v2757
      %v3001 = vpack.c.b16 %v2767, %v2758
      %v3002 = vpack.c.b16 %v2768, %v2759
      %v3003 = vpack.c.b16 %v2769, %v2760
      %v3004 = vpack.c.b16 %v2770, %v2761
      %v3005 = vpack.c.b16 %v2780, %v2771
      %v3006 = vpack.c.b16 %v2781, %v2772
      %v3007 = vpack.c.b16 %v2782, %v2773
      %v3008 = vpack.c.b16 %v2783, %v2774
      %v3009 = vpack.c.b16 %v2784, %v2775
      %v3010 = vpack.c.b16 %v2785, %v2776
      %v3011 = vpack.c.b16 %v2786, %v2777
      %v3012 = vpack.c.b16 %v2787, %v2778
      %v3013 = vpack.c.b16 %v2788, %v2779
      %v3014 = vpack.c.b16 %v2798, %v2789
      %v3015 = vpack.c.b16 %v2799, %v2790
      %v3016 = vpack.c.b16 %v2800, %v2791
      %v3017 = vpack.c.b16 %v2801, %v2792
      %v3018 = vpack.c.b16 %v2802, %v2793
      %v3019 = vpack.c.b16 %v2803, %v2794
      %v3020 = vpack.c.b16 %v2804, %v2795
      %v3021 = vpack.c.b16 %v2805, %v2796
      %v3022 = vpack.c.b16 %v2806, %v2797
      %v3023 = vpack.c.b16 %v2816, %v2807
      %v3024 = vpack.c.b16 %v2817, %v2808
      %v3025 = vpack.c.b16 %v2818, %v2809
      %v3026 = vpack.c.b16 %v2819, %v2810
      %v3027 = vpack.c.b16 %v2820, %v2811
      %v3028 = vpack.c.b16 %v2821, %v2812
      %v3029 = vpack.c.b16 %v2822, %v2813
      %v3030 = vpack.c.b16 %v2823, %v2814
      %v3031 = vpack.c.b16 %v2824, %v2815
      %v3032 = vpack.c.b16 %v2834, %v2825
      %v3033 = vpack.c.b16 %v2835, %v2826
      %v3034 = vpack.c.b16 %v2836, %v2827
      %v3035 = vpack.c.b16 %v2837, %v2828
      %v3036 = vpack.c.b16 %v2838, %v2829
      %v3037 = vpack.c.b16 %v2839, %v2830
      %v3038 = vpack.c.b16 %v2840, %v2831
      %v3039 = vpack.c.b16 %v2841, %v2832
      %v3040 = vpack.c.b16 %v2842, %v2833
      %v3041 = vpack.c.b16 %v2852, %v2843
      %v3042 = vpack.c.b16 %v2853, %v2844
      %v3043 = vpack.c.b16 %v2854, %v2845
      %v3044 = vpack.c.b16 %v2855, %v2846
      %v3045 = vpack.c.b16 %v2856, %v2847
      %v3046 = vpack.c.b16 %v2857, %v2848
      %v3047 = vpack.c.b16 %v2858, %v2849
      %v3048 = vpack.c.b16 %v2859, %v2850
      %v3049 = vpack.c.b16 %v2860, %v2851
      %v3050 = vpack.c.b16 %v2870, %v2861
      %v3051 = vpack.c.b16 %v2871, %v2862
      %v3052 = vpack.c.b16 %v2872, %v2863
      %v3053 = vpack.c.b16 %v2873, %v2864
      %v3054 = vpack.c.b16 %v2874, %v2865
      %v3055 = vpack.c.b16 %v2875, %v2866
      %v3056 = vpack.c.b16 %v2876, %v2867
      %v3057 = vpack.c.b16 %v2877, %v2868
      %v3058 = vpack.c.b16 %v2878, %v2869
      %v3059 = vpack.c.b16 %v2888, %v2879
      %v3060 = vpack.c.b16 %v2889, %v2880
      %v3061 = vpack.c.b16 %v2890, %v2881
      %v3062 = vpack.c.b16 %v2891, %v2882
      %v3063 = vpack.c.b16 %v2892, %v2883
      %v3064 = vpack.c.b16 %v2893, %v2884
      %v3065 = vpack.c.b16 %v2894, %v2885
      %v3066 = vpack.c.b16 %v2895, %v2886
      %v3067 = vpack.c.b16 %v2896, %v2887
      %v3068 = vpack.c.b16 %v2906, %v2897
      %v3069 = vpack.c.b16 %v2907, %v2898
      %v3070 = vpack.c.b16 %v2908, %v2899
      %v3071 = vpack.c.b16 %v2909, %v2900
      %v3072 = vpack.c.b16 %v2910, %v2901
      %v3073 = vpack.c.b16 %v2911, %v2902
      %v3074 = vpack.c.b16 %v2912, %v2903
      %v3075 = vpack.c.b16 %v2913, %v2904
      %v3076 = vpack.c.b16 %v2914, %v2905
      %v3077 = vpack.c.b16 %v2924, %v2915
      %v3078 = vpack.c.b16 %v2925, %v2916
      %v3079 = vpack.c.b16 %v2926, %v2917
      %v3080 = vpack.c.b16 %v2927, %v2918
      %v3081 = vpack.c.b16 %v2928, %v2919
      %v3082 = vpack.c.b16 %v2929, %v2920
      %v3083 = vpack.c.b16 %v2930, %v2921
      %v3084 = vpack.c.b16 %v2931, %v2922
      %v3085 = vpack.c.b16 %v2932, %v2923
      %v3086 = vpack.c.b16 %v2942, %v2933
      %v3087 = vpack.c.b16 %v2943, %v2934
      %v3088 = vpack.c.b16 %v2944, %v2935
      %v3089 = vpack.c.b16 %v2945, %v2936
      %v3090 = vpack.c.b16 %v2946, %v2937
      %v3091 = vpack.c.b16 %v2947, %v2938
      %v3092 = vpack.c.b16 %v2948, %v2939
      %v3093 = vpack.c.b16 %v2949, %v2940
      %v3094 = vpack.c.b16 %v2950, %v2941
      %v3383 = vunpack.c.l.b16 %v2352
      %v3384 = vunpack.c.l.b16 %v2353
      %v3385 = vunpack.c.l.b16 %v2354
      %v3386 = vunpack.c.l.b16 %v2355
      %v3387 = vunpack.c.l.b16 %v2356
      %v3388 = vunpack.c.l.b16 %v2357
      %v3389 = vunpack.c.l.b16 %v2358
      %v3390 = vunpack.c.l.b16 %v2359
      %v3391 = vunpack.c.l.b16 %v2360
      %v3392 = vunpack.c.l.b16 %v2361
      %v3393 = vunpack.c.l.b16 %v2362
      %v3394 = vunpack.c.l.b16 %v2363
      %v3395 = vunpack.c.l.b16 %v2364
      %v3396 = vunpack.c.l.b16 %v2365
      %v3397 = vunpack.c.l.b16 %v2366
      %v3398 = vunpack.c.l.b16 %v2367
      %v3399 = vunpack.c.l.b16 %v2368
      %v3400 = vunpack.c.l.b16 %v2369
      %v3401 = vunpack.c.l.b16 %v2370
      %v3402 = vunpack.c.l.b16 %v2371
      %v3403 = vunpack.c.l.b16 %v2372
      %v3404 = vunpack.c.l.b16 %v2373
      %v3405 = vunpack.c.l.b16 %v2374
      %v3406 = vunpack.c.l.b16 %v2375
      %v3407 = vunpack.c.l.b16 %v2376
      %v3408 = vunpack.c.l.b16 %v2377
      %v3409 = vunpack.c.l.b16 %v2378
      %v3410 = vunpack.c.l.b16 %v2379
      %v3411 = vunpack.c.l.b16 %v2380
      %v3412 = vunpack.c.l.b16 %v2381
      %v3413 = vunpack.c.l.b16 %v2382
      %v3414 = vunpack.c.l.b16 %v2383
      %v3415 = vunpack.c.l.b16 %v2384
      %v3416 = vunpack.c.l.b16 %v2385
      %v3417 = vunpack.c.l.b16 %v2386
      %v3418 = vunpack.c.l.b16 %v2387
      %v3419 = vunpack.c.l.b16 %v2388
      %v3420 = vunpack.c.l.b16 %v2389
      %v3421 = vunpack.c.l.b16 %v2390
      %v3422 = vunpack.c.l.b16 %v2391
      %v3423 = vunpack.c.l.b16 %v2392
      %v3424 = vunpack.c.l.b16 %v2393
      %v3425 = vunpack.c.l.b16 %v2394
      %v3426 = vunpack.c.l.b16 %v2395
      %v3427 = vunpack.c.l.b16 %v2396
      %v3428 = vunpack.c.l.b16 %v2397
      %v3429 = vunpack.c.l.b16 %v2398
      %v3430 = vunpack.c.l.b16 %v2399
      %v3431 = vunpack.c.l.b16 %v2400
      %v3432 = vunpack.c.l.b16 %v2401
      %v3433 = vunpack.c.l.b16 %v2402
      %v3434 = vunpack.c.l.b16 %v2403
      %v3435 = vunpack.c.l.b16 %v2404
      %v3436 = vunpack.c.l.b16 %v2405
      %v3437 = vunpack.c.l.b16 %v2406
      %v3438 = vunpack.c.l.b16 %v2407
      %v3439 = vunpack.c.l.b16 %v2408
      %v3440 = vunpack.c.l.b16 %v2409
      %v3441 = vunpack.c.l.b16 %v2410
      %v3442 = vunpack.c.l.b16 %v2411
      %v3443 = vunpack.c.l.b16 %v2412
      %v3444 = vunpack.c.l.b16 %v2413
      %v3445 = vunpack.c.l.b16 %v2414
      %v3446 = vunpack.c.l.b16 %v2415
      %v3447 = vunpack.c.l.b16 %v2416
      %v3448 = vunpack.c.l.b16 %v2417
      %v3449 = vunpack.c.l.b16 %v2418
      %v3450 = vunpack.c.l.b16 %v2419
      %v3451 = vunpack.c.l.b16 %v2420
      %v3452 = vunpack.c.l.b16 %v2421
      %v3453 = vunpack.c.l.b16 %v2422
      %v3454 = vunpack.c.l.b16 %v2423
      %v3455 = vunpack.c.l.b16 %v2424
      %v3456 = vunpack.c.l.b16 %v2425
      %v3457 = vunpack.c.l.b16 %v2426
      %v3458 = vunpack.c.l.b16 %v2427
      %v3459 = vunpack.c.l.b16 %v2428
      %v3460 = vunpack.c.l.b16 %v2429
      %v3461 = vunpack.c.l.b16 %v2430
      %v3462 = vunpack.c.l.b16 %v2431
      %v3463 = vunpack.c.l.b16 %v2432
      %v3464 = vunpack.c.l.b16 %v2433
      %v3465 = vunpack.c.l.b16 %v2434
      %v3466 = vunpack.c.l.b16 %v2435
      %v3467 = vunpack.c.l.b16 %v2436
      %v3468 = vunpack.c.l.b16 %v2437
      %v3469 = vunpack.c.l.b16 %v2438
      %v3470 = vunpack.c.l.b16 %v2439
      %v3471 = vunpack.c.l.b16 %v2440
      %v3472 = vunpack.c.l.b16 %v2441
      %v3473 = vunpack.c.l.b16 %v2442
      %v3474 = vunpack.c.l.b16 %v2443
      %v3475 = vunpack.c.l.b16 %v2444
      %v3476 = vunpack.c.l.b16 %v2445
      %v3477 = vunpack.c.l.b16 %v2446
      %v3478 = vunpack.c.l.b16 %v2447
      %v3479 = vunpack.c.l.b16 %v2448
      %v3480 = vunpack.c.l.b16 %v2449
      %v3481 = vunpack.c.l.b16 %v2450
      %v3482 = vunpack.c.l.b16 %v2451
      %v3483 = vunpack.c.l.b16 %v2452
      %v3484 = vunpack.c.l.b16 %v2453
      %v3485 = vunpack.c.l.b16 %v2454
      %v3486 = vunpack.c.l.b16 %v2455
      %v3487 = vunpack.c.l.b16 %v2456
      %v3488 = vunpack.c.l.b16 %v2457
      %v3489 = vunpack.c.l.b16 %v2458
      %v3490 = vunpack.c.l.b16 %v2459
      %v3491 = vunpack.c.l.b16 %v2460
      %v3492 = vunpack.c.l.b16 %v2461
      %v3493 = vunpack.c.l.b16 %v2462
      %v3494 = vunpack.c.l.b16 %v2463
      %v3495 = vunpack.c.l.b16 %v2464
      %v3496 = vunpack.c.l.b16 %v2465
      %v3497 = vunpack.c.l.b16 %v2466
      %v3498 = vunpack.c.l.b16 %v2467
      %v3499 = vunpack.c.l.b16 %v2468
      %v3500 = vunpack.c.l.b16 %v2469
      %v3501 = vunpack.c.l.b16 %v2470
      %v3502 = vunpack.c.l.b16 %v2471
      %v3503 = vunpack.c.l.b16 %v2472
      %v3504 = vunpack.c.l.b16 %v2473
      %v3505 = vunpack.c.l.b16 %v2474
      %v3506 = vunpack.c.l.b16 %v2475
      %v3507 = vunpack.c.l.b16 %v2476
      %v3508 = vunpack.c.l.b16 %v2477
      %v3509 = vunpack.c.l.b16 %v2478
      %v3510 = vunpack.c.l.b16 %v2479
      %v3511 = vunpack.c.l.b16 %v2480
      %v3512 = vunpack.c.l.b16 %v2481
      %v3513 = vunpack.c.l.b16 %v2482
      %v3514 = vunpack.c.l.b16 %v2483
      %v3515 = vunpack.c.l.b16 %v2484
      %v3516 = vunpack.c.l.b16 %v2485
      %v3517 = vunpack.c.l.b16 %v2486
      %v3518 = vunpack.c.l.b16 %v2487
      %v3519 = vunpack.c.l.b16 %v2488
      %v3520 = vunpack.c.l.b16 %v2489
      %v3521 = vunpack.c.l.b16 %v2490
      %v3522 = vunpack.c.l.b16 %v2491
      %v3523 = vunpack.c.l.b16 %v2492
      %v3524 = vunpack.c.l.b16 %v2493
      %v3525 = vunpack.c.l.b16 %v2494
      %v3526 = vunpack.c.l.b16 %v2495
      %v3527 = vpack.c.b16 %v3384, %v3383
      %v3528 = vpack.c.b16 %v3386, %v3385
      %v3529 = vpack.c.b16 %v3388, %v3387
      %v3530 = vpack.c.b16 %v3390, %v3389
      %v3531 = vpack.c.b16 %v3392, %v3391
      %v3532 = vpack.c.b16 %v3394, %v3393
      %v3533 = vpack.c.b16 %v3396, %v3395
      %v3534 = vpack.c.b16 %v3398, %v3397
      %v3535 = vpack.c.b16 %v3400, %v3399
      %v3536 = vpack.c.b16 %v3402, %v3401
      %v3537 = vpack.c.b16 %v3404, %v3403
      %v3538 = vpack.c.b16 %v3406, %v3405
      %v3539 = vpack.c.b16 %v3408, %v3407
      %v3540 = vpack.c.b16 %v3410, %v3409
      %v3541 = vpack.c.b16 %v3412, %v3411
      %v3542 = vpack.c.b16 %v3414, %v3413
      %v3543 = vpack.c.b16 %v3416, %v3415
      %v3544 = vpack.c.b16 %v3418, %v3417
      %v3545 = vpack.c.b16 %v3420, %v3419
      %v3546 = vpack.c.b16 %v3422, %v3421
      %v3547 = vpack.c.b16 %v3424, %v3423
      %v3548 = vpack.c.b16 %v3426, %v3425
      %v3549 = vpack.c.b16 %v3428, %v3427
      %v3550 = vpack.c.b16 %v3430, %v3429
      %v3551 = vpack.c.b16 %v3432, %v3431
      %v3552 = vpack.c.b16 %v3434, %v3433
      %v3553 = vpack.c.b16 %v3436, %v3435
      %v3554 = vpack.c.b16 %v3438, %v3437
      %v3555 = vpack.c.b16 %v3440, %v3439
      %v3556 = vpack.c.b16 %v3442, %v3441
      %v3557 = vpack.c.b16 %v3444, %v3443
      %v3558 = vpack.c.b16 %v3446, %v3445
      %v3559 = vpack.c.b16 %v3448, %v3447
      %v3560 = vpack.c.b16 %v3450, %v3449
      %v3561 = vpack.c.b16 %v3452, %v3451
      %v3562 = vpack.c.b16 %v3454, %v3453
      %v3563 = vpack.c.b16 %v3456, %v3455
      %v3564 = vpack.c.b16 %v3458, %v3457
      %v3565 = vpack.c.b16 %v3460, %v3459
      %v3566 = vpack.c.b16 %v3462, %v3461
      %v3567 = vpack.c.b16 %v3464, %v3463
      %v3568 = vpack.c.b16 %v3466, %v3465
      %v3569 = vpack.c.b16 %v3468, %v3467
      %v3570 = vpack.c.b16 %v3470, %v3469
      %v3571 = vpack.c.b16 %v3472, %v3471
      %v3572 = vpack.c.b16 %v3474, %v3473
      %v3573 = vpack.c.b16 %v3476, %v3475
      %v3574 = vpack.c.b16 %v3478, %v3477
      %v3575 = vpack.c.b16 %v3480, %v3479
      %v3576 = vpack.c.b16 %v3482, %v3481
      %v3577 = vpack.c.b16 %v3484, %v3483
      %v3578 = vpack.c.b16 %v3486, %v3485
      %v3579 = vpack.c.b16 %v3488, %v3487
      %v3580 = vpack.c.b16 %v3490, %v3489
      %v3581 = vpack.c.b16 %v3492, %v3491
      %v3582 = vpack.c.b16 %v3494, %v3493
      %v3583 = vpack.c.b16 %v3496, %v3495
      %v3584 = vpack.c.b16 %v3498, %v3497
      %v3585 = vpack.c.b16 %v3500, %v3499
      %v3586 = vpack.c.b16 %v3502, %v3501
      %v3587 = vpack.c.b16 %v3504, %v3503
      %v3588 = vpack.c.b16 %v3506, %v3505
      %v3589 = vpack.c.b16 %v3508, %v3507
      %v3590 = vpack.c.b16 %v3510, %v3509
      %v3591 = vpack.c.b16 %v3512, %v3511
      %v3592 = vpack.c.b16 %v3514, %v3513
      %v3593 = vpack.c.b16 %v3516, %v3515
      %v3594 = vpack.c.b16 %v3518, %v3517
      %v3595 = vpack.c.b16 %v3520, %v3519
      %v3596 = vpack.c.b16 %v3522, %v3521
      %v3597 = vpack.c.b16 %v3524, %v3523
      %v3598 = vpack.c.b16 %v3526, %v3525
      %3671 = vmatprep.subr.bf16.mxu0 0
      %3672 = vmatpush1.bf16.msra.mxu0 %v3534
      %3673 = vmatprep.subr.bf16.mxu0 0
      %3674 = vmatpush1.bf16.msra.mxu0 %v3533
      %3675 = vmatprep.subr.bf16.mxu0 0
      %3676 = vmatpush1.bf16.msra.mxu0 %v3532
      %3677 = vmatprep.subr.bf16.mxu0 0
      %3678 = vmatpush1.bf16.msra.mxu0 %v3531
      %3679 = vmatprep.subr.bf16.mxu0 0
      %3680 = vmatpush1.bf16.msra.mxu0 %v3530
      %3681 = vmatprep.subr.bf16.mxu0 0
      %3682 = vmatpush1.bf16.msra.mxu0 %v3529
      %3683 = vmatprep.subr.bf16.mxu0 0
      %3684 = vmatpush1.bf16.msra.mxu0 %v3528
      %3685 = vmatprep.subr.bf16.mxu0 0
      %3686 = vmatpush1.bf16.msra.mxu0 %v3527
      %3687 = vmatprep.subr.bf16.mxu0 0
      %3688 = vmatpush2.bf16.msra.mxu0 %v3542
      %3689 = vmatprep.subr.bf16.mxu0 0
      %3690 = vmatpush2.bf16.msra.mxu0 %v3541
      %3691 = vmatprep.subr.bf16.mxu0 0
      %3692 = vmatpush2.bf16.msra.mxu0 %v3540
      %3693 = vmatprep.subr.bf16.mxu0 0
      %3694 = vmatpush2.bf16.msra.mxu0 %v3539
      %3695 = vmatprep.subr.bf16.mxu0 0
      %3696 = vmatpush2.bf16.msra.mxu0 %v3538
      %3697 = vmatprep.subr.bf16.mxu0 0
      %3698 = vmatpush2.bf16.msra.mxu0 %v3537
      %3699 = vmatprep.subr.bf16.mxu0 0
      %3700 = vmatpush2.bf16.msra.mxu0 %v3536
      %3701 = vmatprep.subr.bf16.mxu0 0
      %3702 = vmatpush2.bf16.msra.mxu0 %v3535
      %3703 = vmatprep.mubr.bf16.mxu0 %v2952
      %3704 = vmatmul.mubr.bf16.gmra.mxu0 %v2951
      %v3705 = vpop.f32.mrf.mxu0
      %v3706 = vadd.f32 %v2501, %v3705
      %v3707 = vpop.f32.mrf.mxu0
      %v3708 = vpop.f32.mrf.mxu0
      %v3709 = vadd.f32 %v2501, %v3708
      %v3710 = vpop.f32.mrf.mxu0
      %3711 = vmatprep.mubr.bf16.mxu0 %v2961
      %3712 = vmatmul.mubr.bf16.gmra.mxu0 %v2960
      %v3713 = vpop.f32.mrf.mxu0
      %v3714 = vadd.f32 %v2501, %v3713
      %v3715 = vpop.f32.mrf.mxu0
      %v3716 = vpop.f32.mrf.mxu0
      %v3717 = vadd.f32 %v2501, %v3716
      %v3718 = vpop.f32.mrf.mxu0
      %3719 = vmatprep.mubr.bf16.mxu0 %v2970
      %3720 = vmatmul.mubr.bf16.gmra.mxu0 %v2969
      %v3721 = vpop.f32.mrf.mxu0
      %v3722 = vadd.f32 %v2501, %v3721
      %v3723 = vpop.f32.mrf.mxu0
      %v3724 = vpop.f32.mrf.mxu0
      %v3725 = vadd.f32 %v2501, %v3724
      %v3726 = vpop.f32.mrf.mxu0
      %3727 = vmatprep.mubr.bf16.mxu0 %v2979
      %3728 = vmatmul.mubr.bf16.gmra.mxu0 %v2978
      %v3729 = vpop.f32.mrf.mxu0
      %v3730 = vadd.f32 %v2501, %v3729
      %v3731 = vpop.f32.mrf.mxu0
      %v3732 = vpop.f32.mrf.mxu0
      %v3733 = vadd.f32 %v2501, %v3732
      %v3734 = vpop.f32.mrf.mxu0
      %3735 = vmatprep.mubr.bf16.mxu0 %v2988
      %3736 = vmatmul.mubr.bf16.gmra.mxu0 %v2987
      %v3737 = vpop.f32.mrf.mxu0
      %v3738 = vadd.f32 %v2501, %v3737
      %v3739 = vpop.f32.mrf.mxu0
      %v3740 = vpop.f32.mrf.mxu0
      %v3741 = vadd.f32 %v2501, %v3740
      %v3742 = vpop.f32.mrf.mxu0
      %3743 = vmatprep.mubr.bf16.mxu0 %v2997
      %3744 = vmatmul.mubr.bf16.gmra.mxu0 %v2996
      %v3745 = vpop.f32.mrf.mxu0
      %v3746 = vadd.f32 %v2501, %v3745
      %v3747 = vpop.f32.mrf.mxu0
      %v3748 = vpop.f32.mrf.mxu0
      %v3749 = vadd.f32 %v2501, %v3748
      %v3750 = vpop.f32.mrf.mxu0
      %3751 = vmatprep.mubr.bf16.mxu0 %v3006
      %3752 = vmatmul.mubr.bf16.gmra.mxu0 %v3005
      %v3753 = vpop.f32.mrf.mxu0
      %v3754 = vadd.f32 %v2501, %v3753
      %v3755 = vpop.f32.mrf.mxu0
      %v3756 = vpop.f32.mrf.mxu0
      %v3757 = vadd.f32 %v2501, %v3756
      %v3758 = vpop.f32.mrf.mxu0
      %3759 = vmatprep.mubr.bf16.mxu0 %v3015
      %3760 = vmatmul.mubr.bf16.gmra.mxu0 %v3014
      %v3761 = vpop.f32.mrf.mxu0
      %v3762 = vadd.f32 %v2501, %v3761
      %v3763 = vpop.f32.mrf.mxu0
      %v3764 = vpop.f32.mrf.mxu0
      %v3765 = vadd.f32 %v2501, %v3764
      %v3766 = vpop.f32.mrf.mxu0
      %3767 = vmatprep.mubr.bf16.mxu0 %v3024
      %3768 = vmatmul.mubr.bf16.gmra.mxu0 %v3023
      %v3769 = vpop.f32.mrf.mxu0
      %v3770 = vadd.f32 %v2501, %v3769
      %v3771 = vpop.f32.mrf.mxu0
      %v3772 = vpop.f32.mrf.mxu0
      %v3773 = vadd.f32 %v2501, %v3772
      %v3774 = vpop.f32.mrf.mxu0
      %3775 = vmatprep.mubr.bf16.mxu0 %v3033
      %3776 = vmatmul.mubr.bf16.gmra.mxu0 %v3032
      %v3777 = vpop.f32.mrf.mxu0
      %v3778 = vadd.f32 %v2501, %v3777
      %v3779 = vpop.f32.mrf.mxu0
      %v3780 = vpop.f32.mrf.mxu0
      %v3781 = vadd.f32 %v2501, %v3780
      %v3782 = vpop.f32.mrf.mxu0
      %3783 = vmatprep.mubr.bf16.mxu0 %v3042
      %3784 = vmatmul.mubr.bf16.gmra.mxu0 %v3041
      %v3785 = vpop.f32.mrf.mxu0
      %v3786 = vadd.f32 %v2501, %v3785
      %v3787 = vpop.f32.mrf.mxu0
      %v3788 = vpop.f32.mrf.mxu0
      %v3789 = vadd.f32 %v2501, %v3788
      %v3790 = vpop.f32.mrf.mxu0
      %3791 = vmatprep.mubr.bf16.mxu0 %v3051
      %3792 = vmatmul.mubr.bf16.gmra.mxu0 %v3050
      %v3793 = vpop.f32.mrf.mxu0
      %v3794 = vadd.f32 %v2501, %v3793
      %v3795 = vpop.f32.mrf.mxu0
      %v3796 = vpop.f32.mrf.mxu0
      %v3797 = vadd.f32 %v2501, %v3796
      %v3798 = vpop.f32.mrf.mxu0
      %3799 = vmatprep.mubr.bf16.mxu0 %v3060
      %3800 = vmatmul.mubr.bf16.gmra.mxu0 %v3059
      %v3801 = vpop.f32.mrf.mxu0
      %v3802 = vadd.f32 %v2501, %v3801
      %v3803 = vpop.f32.mrf.mxu0
      %v3804 = vpop.f32.mrf.mxu0
      %v3805 = vadd.f32 %v2501, %v3804
      %v3806 = vpop.f32.mrf.mxu0
      %3807 = vmatprep.mubr.bf16.mxu0 %v3069
      %3808 = vmatmul.mubr.bf16.gmra.mxu0 %v3068
      %v3809 = vpop.f32.mrf.mxu0
      %v3810 = vadd.f32 %v2501, %v3809
      %v3811 = vpop.f32.mrf.mxu0
      %v3812 = vpop.f32.mrf.mxu0
      %v3813 = vadd.f32 %v2501, %v3812
      %v3814 = vpop.f32.mrf.mxu0
      %3815 = vmatprep.mubr.bf16.mxu0 %v3078
      %3816 = vmatmul.mubr.bf16.gmra.mxu0 %v3077
      %v3817 = vpop.f32.mrf.mxu0
      %v3818 = vadd.f32 %v2501, %v3817
      %v3819 = vpop.f32.mrf.mxu0
      %v3820 = vpop.f32.mrf.mxu0
      %v3821 = vadd.f32 %v2501, %v3820
      %v3822 = vpop.f32.mrf.mxu0
      %3823 = vmatprep.mubr.bf16.mxu0 %v3087
      %3824 = vmatmul.mubr.bf16.gmra.mxu0 %v3086
      %v3825 = vpop.f32.mrf.mxu0
      %v3826 = vadd.f32 %v2501, %v3825
      %v3827 = vpop.f32.mrf.mxu0
      %v3828 = vpop.f32.mrf.mxu0
      %v3829 = vadd.f32 %v2501, %v3828
      %v3830 = vpop.f32.mrf.mxu0
      %3831 = vdwg.mxu0
      %3832 = vmatprep.subr.bf16.mxu0 0
      %3833 = vmatpush1.bf16.msra.mxu0 %v3550
      %3834 = vmatprep.subr.bf16.mxu0 0
      %3835 = vmatpush1.bf16.msra.mxu0 %v3549
      %3836 = vmatprep.subr.bf16.mxu0 0
      %3837 = vmatpush1.bf16.msra.mxu0 %v3548
      %3838 = vmatprep.subr.bf16.mxu0 0
      %3839 = vmatpush1.bf16.msra.mxu0 %v3547
      %3840 = vmatprep.subr.bf16.mxu0 0
      %3841 = vmatpush1.bf16.msra.mxu0 %v3546
      %3842 = vmatprep.subr.bf16.mxu0 0
      %3843 = vmatpush1.bf16.msra.mxu0 %v3545
      %3844 = vmatprep.subr.bf16.mxu0 0
      %3845 = vmatpush1.bf16.msra.mxu0 %v3544
      %3846 = vmatprep.subr.bf16.mxu0 0
      %3847 = vmatpush1.bf16.msra.mxu0 %v3543
      %3848 = vmatprep.subr.bf16.mxu0 0
      %3849 = vmatpush2.bf16.msra.mxu0 %v3558
      %3850 = vmatprep.subr.bf16.mxu0 0
      %3851 = vmatpush2.bf16.msra.mxu0 %v3557
      %3852 = vmatprep.subr.bf16.mxu0 0
      %3853 = vmatpush2.bf16.msra.mxu0 %v3556
      %3854 = vmatprep.subr.bf16.mxu0 0
      %3855 = vmatpush2.bf16.msra.mxu0 %v3555
      %3856 = vmatprep.subr.bf16.mxu0 0
      %3857 = vmatpush2.bf16.msra.mxu0 %v3554
      %3858 = vmatprep.subr.bf16.mxu0 0
      %3859 = vmatpush2.bf16.msra.mxu0 %v3553
      %3860 = vmatprep.subr.bf16.mxu0 0
      %3861 = vmatpush2.bf16.msra.mxu0 %v3552
      %3862 = vmatprep.subr.bf16.mxu0 0
      %3863 = vmatpush2.bf16.msra.mxu0 %v3551
      %3864 = vmatprep.mubr.bf16.mxu0 %v2954
      %3865 = vmatmul.mubr.bf16.gmra.mxu0 %v2953
      %v3866 = vpop.f32.mrf.mxu0
      %v3867 = vadd.f32 %v3706, %v3866
      %v3868 = vpop.f32.mrf.mxu0
      %v3869 = vpop.f32.mrf.mxu0
      %v3870 = vadd.f32 %v3709, %v3869
      %v3871 = vpop.f32.mrf.mxu0
      %3872 = vmatprep.mubr.bf16.mxu0 %v2963
      %3873 = vmatmul.mubr.bf16.gmra.mxu0 %v2962
      %v3874 = vpop.f32.mrf.mxu0
      %v3875 = vadd.f32 %v3714, %v3874
      %v3876 = vpop.f32.mrf.mxu0
      %v3877 = vpop.f32.mrf.mxu0
      %v3878 = vadd.f32 %v3717, %v3877
      %v3879 = vpop.f32.mrf.mxu0
      %3880 = vmatprep.mubr.bf16.mxu0 %v2972
      %3881 = vmatmul.mubr.bf16.gmra.mxu0 %v2971
      %v3882 = vpop.f32.mrf.mxu0
      %v3883 = vadd.f32 %v3722, %v3882
      %v3884 = vpop.f32.mrf.mxu0
      %v3885 = vpop.f32.mrf.mxu0
      %v3886 = vadd.f32 %v3725, %v3885
      %v3887 = vpop.f32.mrf.mxu0
      %3888 = vmatprep.mubr.bf16.mxu0 %v2981
      %3889 = vmatmul.mubr.bf16.gmra.mxu0 %v2980
      %v3890 = vpop.f32.mrf.mxu0
      %v3891 = vadd.f32 %v3730, %v3890
      %v3892 = vpop.f32.mrf.mxu0
      %v3893 = vpop.f32.mrf.mxu0
      %v3894 = vadd.f32 %v3733, %v3893
      %v3895 = vpop.f32.mrf.mxu0
      %3896 = vmatprep.mubr.bf16.mxu0 %v2990
      %3897 = vmatmul.mubr.bf16.gmra.mxu0 %v2989
      %v3898 = vpop.f32.mrf.mxu0
      %v3899 = vadd.f32 %v3738, %v3898
      %v3900 = vpop.f32.mrf.mxu0
      %v3901 = vpop.f32.mrf.mxu0
      %v3902 = vadd.f32 %v3741, %v3901
      %v3903 = vpop.f32.mrf.mxu0
      %3904 = vmatprep.mubr.bf16.mxu0 %v2999
      %3905 = vmatmul.mubr.bf16.gmra.mxu0 %v2998
      %v3906 = vpop.f32.mrf.mxu0
      %v3907 = vadd.f32 %v3746, %v3906
      %v3908 = vpop.f32.mrf.mxu0
      %v3909 = vpop.f32.mrf.mxu0
      %v3910 = vadd.f32 %v3749, %v3909
      %v3911 = vpop.f32.mrf.mxu0
      %3912 = vmatprep.mubr.bf16.mxu0 %v3008
      %3913 = vmatmul.mubr.bf16.gmra.mxu0 %v3007
      %v3914 = vpop.f32.mrf.mxu0
      %v3915 = vadd.f32 %v3754, %v3914
      %v3916 = vpop.f32.mrf.mxu0
      %v3917 = vpop.f32.mrf.mxu0
      %v3918 = vadd.f32 %v3757, %v3917
      %v3919 = vpop.f32.mrf.mxu0
      %3920 = vmatprep.mubr.bf16.mxu0 %v3017
      %3921 = vmatmul.mubr.bf16.gmra.mxu0 %v3016
      %v3922 = vpop.f32.mrf.mxu0
      %v3923 = vadd.f32 %v3762, %v3922
      %v3924 = vpop.f32.mrf.mxu0
      %v3925 = vpop.f32.mrf.mxu0
      %v3926 = vadd.f32 %v3765, %v3925
      %v3927 = vpop.f32.mrf.mxu0
      %3928 = vmatprep.mubr.bf16.mxu0 %v3026
      %3929 = vmatmul.mubr.bf16.gmra.mxu0 %v3025
      %v3930 = vpop.f32.mrf.mxu0
      %v3931 = vadd.f32 %v3770, %v3930
      %v3932 = vpop.f32.mrf.mxu0
      %v3933 = vpop.f32.mrf.mxu0
      %v3934 = vadd.f32 %v3773, %v3933
      %v3935 = vpop.f32.mrf.mxu0
      %3936 = vmatprep.mubr.bf16.mxu0 %v3035
      %3937 = vmatmul.mubr.bf16.gmra.mxu0 %v3034
      %v3938 = vpop.f32.mrf.mxu0
      %v3939 = vadd.f32 %v3778, %v3938
      %v3940 = vpop.f32.mrf.mxu0
      %v3941 = vpop.f32.mrf.mxu0
      %v3942 = vadd.f32 %v3781, %v3941
      %v3943 = vpop.f32.mrf.mxu0
      %3944 = vmatprep.mubr.bf16.mxu0 %v3044
      %3945 = vmatmul.mubr.bf16.gmra.mxu0 %v3043
      %v3946 = vpop.f32.mrf.mxu0
      %v3947 = vadd.f32 %v3786, %v3946
      %v3948 = vpop.f32.mrf.mxu0
      %v3949 = vpop.f32.mrf.mxu0
      %v3950 = vadd.f32 %v3789, %v3949
      %v3951 = vpop.f32.mrf.mxu0
      %3952 = vmatprep.mubr.bf16.mxu0 %v3053
      %3953 = vmatmul.mubr.bf16.gmra.mxu0 %v3052
      %v3954 = vpop.f32.mrf.mxu0
      %v3955 = vadd.f32 %v3794, %v3954
      %v3956 = vpop.f32.mrf.mxu0
      %v3957 = vpop.f32.mrf.mxu0
      %v3958 = vadd.f32 %v3797, %v3957
      %v3959 = vpop.f32.mrf.mxu0
      %3960 = vmatprep.mubr.bf16.mxu0 %v3062
      %3961 = vmatmul.mubr.bf16.gmra.mxu0 %v3061
      %v3962 = vpop.f32.mrf.mxu0
      %v3963 = vadd.f32 %v3802, %v3962
      %v3964 = vpop.f32.mrf.mxu0
      %v3965 = vpop.f32.mrf.mxu0
      %v3966 = vadd.f32 %v3805, %v3965
      %v3967 = vpop.f32.mrf.mxu0
      %3968 = vmatprep.mubr.bf16.mxu0 %v3071
      %3969 = vmatmul.mubr.bf16.gmra.mxu0 %v3070
      %v3970 = vpop.f32.mrf.mxu0
      %v3971 = vadd.f32 %v3810, %v3970
      %v3972 = vpop.f32.mrf.mxu0
      %v3973 = vpop.f32.mrf.mxu0
      %v3974 = vadd.f32 %v3813, %v3973
      %v3975 = vpop.f32.mrf.mxu0
      %3976 = vmatprep.mubr.bf16.mxu0 %v3080
      %3977 = vmatmul.mubr.bf16.gmra.mxu0 %v3079
      %v3978 = vpop.f32.mrf.mxu0
      %v3979 = vadd.f32 %v3818, %v3978
      %v3980 = vpop.f32.mrf.mxu0
      %v3981 = vpop.f32.mrf.mxu0
      %v3982 = vadd.f32 %v3821, %v3981
      %v3983 = vpop.f32.mrf.mxu0
      %3984 = vmatprep.mubr.bf16.mxu0 %v3089
      %3985 = vmatmul.mubr.bf16.gmra.mxu0 %v3088
      %v3986 = vpop.f32.mrf.mxu0
      %v3987 = vadd.f32 %v3826, %v3986
      %v3988 = vpop.f32.mrf.mxu0
      %v3989 = vpop.f32.mrf.mxu0
      %v3990 = vadd.f32 %v3829, %v3989
      %v3991 = vpop.f32.mrf.mxu0
      %3992 = vdwg.mxu0
      %3993 = vmatprep.subr.bf16.mxu0 0
      %3994 = vmatpush1.bf16.msra.mxu0 %v3566
      %3995 = vmatprep.subr.bf16.mxu0 0
      %3996 = vmatpush1.bf16.msra.mxu0 %v3565
      %3997 = vmatprep.subr.bf16.mxu0 0
      %3998 = vmatpush1.bf16.msra.mxu0 %v3564
      %3999 = vmatprep.subr.bf16.mxu0 0
      %4000 = vmatpush1.bf16.msra.mxu0 %v3563
      %4001 = vmatprep.subr.bf16.mxu0 0
      %4002 = vmatpush1.bf16.msra.mxu0 %v3562
      %4003 = vmatprep.subr.bf16.mxu0 0
      %4004 = vmatpush1.bf16.msra.mxu0 %v3561
      %4005 = vmatprep.subr.bf16.mxu0 0
      %4006 = vmatpush1.bf16.msra.mxu0 %v3560
      %4007 = vmatprep.subr.bf16.mxu0 0
      %4008 = vmatpush1.bf16.msra.mxu0 %v3559
      %4009 = vmatprep.subr.bf16.mxu0 0
      %4010 = vmatpush2.bf16.msra.mxu0 %v3574
      %4011 = vmatprep.subr.bf16.mxu0 0
      %4012 = vmatpush2.bf16.msra.mxu0 %v3573
      %4013 = vmatprep.subr.bf16.mxu0 0
      %4014 = vmatpush2.bf16.msra.mxu0 %v3572
      %4015 = vmatprep.subr.bf16.mxu0 0
      %4016 = vmatpush2.bf16.msra.mxu0 %v3571
      %4017 = vmatprep.subr.bf16.mxu0 0
      %4018 = vmatpush2.bf16.msra.mxu0 %v3570
      %4019 = vmatprep.subr.bf16.mxu0 0
      %4020 = vmatpush2.bf16.msra.mxu0 %v3569
      %4021 = vmatprep.subr.bf16.mxu0 0
      %4022 = vmatpush2.bf16.msra.mxu0 %v3568
      %4023 = vmatprep.subr.bf16.mxu0 0
      %4024 = vmatpush2.bf16.msra.mxu0 %v3567
      %4025 = vmatprep.mubr.bf16.mxu0 %v2956
      %4026 = vmatmul.mubr.bf16.gmra.mxu0 %v2955
      %v4027 = vpop.f32.mrf.mxu0
      %v4028 = vadd.f32 %v3867, %v4027
      %v4029 = vpop.f32.mrf.mxu0
      %v4030 = vpop.f32.mrf.mxu0
      %v4031 = vadd.f32 %v3870, %v4030
      %v4032 = vpop.f32.mrf.mxu0
      %4033 = vmatprep.mubr.bf16.mxu0 %v2965
      %4034 = vmatmul.mubr.bf16.gmra.mxu0 %v2964
      %v4035 = vpop.f32.mrf.mxu0
      %v4036 = vadd.f32 %v3875, %v4035
      %v4037 = vpop.f32.mrf.mxu0
      %v4038 = vpop.f32.mrf.mxu0
      %v4039 = vadd.f32 %v3878, %v4038
      %v4040 = vpop.f32.mrf.mxu0
      %4041 = vmatprep.mubr.bf16.mxu0 %v2974
      %4042 = vmatmul.mubr.bf16.gmra.mxu0 %v2973
      %v4043 = vpop.f32.mrf.mxu0
      %v4044 = vadd.f32 %v3883, %v4043
      %v4045 = vpop.f32.mrf.mxu0
      %v4046 = vpop.f32.mrf.mxu0
      %v4047 = vadd.f32 %v3886, %v4046
      %v4048 = vpop.f32.mrf.mxu0
      %4049 = vmatprep.mubr.bf16.mxu0 %v2983
      %4050 = vmatmul.mubr.bf16.gmra.mxu0 %v2982
      %v4051 = vpop.f32.mrf.mxu0
      %v4052 = vadd.f32 %v3891, %v4051
      %v4053 = vpop.f32.mrf.mxu0
      %v4054 = vpop.f32.mrf.mxu0
      %v4055 = vadd.f32 %v3894, %v4054
      %v4056 = vpop.f32.mrf.mxu0
      %4057 = vmatprep.mubr.bf16.mxu0 %v2992
      %4058 = vmatmul.mubr.bf16.gmra.mxu0 %v2991
      %v4059 = vpop.f32.mrf.mxu0
      %v4060 = vadd.f32 %v3899, %v4059
      %v4061 = vpop.f32.mrf.mxu0
      %v4062 = vpop.f32.mrf.mxu0
      %v4063 = vadd.f32 %v3902, %v4062
      %v4064 = vpop.f32.mrf.mxu0
      %4065 = vmatprep.mubr.bf16.mxu0 %v3001
      %4066 = vmatmul.mubr.bf16.gmra.mxu0 %v3000
      %v4067 = vpop.f32.mrf.mxu0
      %v4068 = vadd.f32 %v3907, %v4067
      %v4069 = vpop.f32.mrf.mxu0
      %v4070 = vpop.f32.mrf.mxu0
      %v4071 = vadd.f32 %v3910, %v4070
      %v4072 = vpop.f32.mrf.mxu0
      %4073 = vmatprep.mubr.bf16.mxu0 %v3010
      %4074 = vmatmul.mubr.bf16.gmra.mxu0 %v3009
      %v4075 = vpop.f32.mrf.mxu0
      %v4076 = vadd.f32 %v3915, %v4075
      %v4077 = vpop.f32.mrf.mxu0
      %v4078 = vpop.f32.mrf.mxu0
      %v4079 = vadd.f32 %v3918, %v4078
      %v4080 = vpop.f32.mrf.mxu0
      %4081 = vmatprep.mubr.bf16.mxu0 %v3019
      %4082 = vmatmul.mubr.bf16.gmra.mxu0 %v3018
      %v4083 = vpop.f32.mrf.mxu0
      %v4084 = vadd.f32 %v3923, %v4083
      %v4085 = vpop.f32.mrf.mxu0
      %v4086 = vpop.f32.mrf.mxu0
      %v4087 = vadd.f32 %v3926, %v4086
      %v4088 = vpop.f32.mrf.mxu0
      %4089 = vmatprep.mubr.bf16.mxu0 %v3028
      %4090 = vmatmul.mubr.bf16.gmra.mxu0 %v3027
      %v4091 = vpop.f32.mrf.mxu0
      %v4092 = vadd.f32 %v3931, %v4091
      %v4093 = vpop.f32.mrf.mxu0
      %v4094 = vpop.f32.mrf.mxu0
      %v4095 = vadd.f32 %v3934, %v4094
      %v4096 = vpop.f32.mrf.mxu0
      %4097 = vmatprep.mubr.bf16.mxu0 %v3037
      %4098 = vmatmul.mubr.bf16.gmra.mxu0 %v3036
      %v4099 = vpop.f32.mrf.mxu0
      %v4100 = vadd.f32 %v3939, %v4099
      %v4101 = vpop.f32.mrf.mxu0
      %v4102 = vpop.f32.mrf.mxu0
      %v4103 = vadd.f32 %v3942, %v4102
      %v4104 = vpop.f32.mrf.mxu0
      %4105 = vmatprep.mubr.bf16.mxu0 %v3046
      %4106 = vmatmul.mubr.bf16.gmra.mxu0 %v3045
      %v4107 = vpop.f32.mrf.mxu0
      %v4108 = vadd.f32 %v3947, %v4107
      %v4109 = vpop.f32.mrf.mxu0
      %v4110 = vpop.f32.mrf.mxu0
      %v4111 = vadd.f32 %v3950, %v4110
      %v4112 = vpop.f32.mrf.mxu0
      %4113 = vmatprep.mubr.bf16.mxu0 %v3055
      %4114 = vmatmul.mubr.bf16.gmra.mxu0 %v3054
      %v4115 = vpop.f32.mrf.mxu0
      %v4116 = vadd.f32 %v3955, %v4115
      %v4117 = vpop.f32.mrf.mxu0
      %v4118 = vpop.f32.mrf.mxu0
      %v4119 = vadd.f32 %v3958, %v4118
      %v4120 = vpop.f32.mrf.mxu0
      %4121 = vmatprep.mubr.bf16.mxu0 %v3064
      %4122 = vmatmul.mubr.bf16.gmra.mxu0 %v3063
      %v4123 = vpop.f32.mrf.mxu0
      %v4124 = vadd.f32 %v3963, %v4123
      %v4125 = vpop.f32.mrf.mxu0
      %v4126 = vpop.f32.mrf.mxu0
      %v4127 = vadd.f32 %v3966, %v4126
      %v4128 = vpop.f32.mrf.mxu0
      %4129 = vmatprep.mubr.bf16.mxu0 %v3073
      %4130 = vmatmul.mubr.bf16.gmra.mxu0 %v3072
      %v4131 = vpop.f32.mrf.mxu0
      %v4132 = vadd.f32 %v3971, %v4131
      %v4133 = vpop.f32.mrf.mxu0
      %v4134 = vpop.f32.mrf.mxu0
      %v4135 = vadd.f32 %v3974, %v4134
      %v4136 = vpop.f32.mrf.mxu0
      %4137 = vmatprep.mubr.bf16.mxu0 %v3082
      %4138 = vmatmul.mubr.bf16.gmra.mxu0 %v3081
      %v4139 = vpop.f32.mrf.mxu0
      %v4140 = vadd.f32 %v3979, %v4139
      %v4141 = vpop.f32.mrf.mxu0
      %v4142 = vpop.f32.mrf.mxu0
      %v4143 = vadd.f32 %v3982, %v4142
      %v4144 = vpop.f32.mrf.mxu0
      %4145 = vmatprep.mubr.bf16.mxu0 %v3091
      %4146 = vmatmul.mubr.bf16.gmra.mxu0 %v3090
      %v4147 = vpop.f32.mrf.mxu0
      %v4148 = vadd.f32 %v3987, %v4147
      %v4149 = vpop.f32.mrf.mxu0
      %v4150 = vpop.f32.mrf.mxu0
      %v4151 = vadd.f32 %v3990, %v4150
      %v4152 = vpop.f32.mrf.mxu0
      %4153 = vdwg.mxu0
      %4154 = vmatprep.subr.bf16.mxu0 0
      %4155 = vmatpush1.bf16.msra.mxu0 %v3582
      %4156 = vmatprep.subr.bf16.mxu0 0
      %4157 = vmatpush1.bf16.msra.mxu0 %v3581
      %4158 = vmatprep.subr.bf16.mxu0 0
      %4159 = vmatpush1.bf16.msra.mxu0 %v3580
      %4160 = vmatprep.subr.bf16.mxu0 0
      %4161 = vmatpush1.bf16.msra.mxu0 %v3579
      %4162 = vmatprep.subr.bf16.mxu0 0
      %4163 = vmatpush1.bf16.msra.mxu0 %v3578
      %4164 = vmatprep.subr.bf16.mxu0 0
      %4165 = vmatpush1.bf16.msra.mxu0 %v3577
      %4166 = vmatprep.subr.bf16.mxu0 0
      %4167 = vmatpush1.bf16.msra.mxu0 %v3576
      %4168 = vmatprep.subr.bf16.mxu0 0
      %4169 = vmatpush1.bf16.msra.mxu0 %v3575
      %4170 = vmatprep.subr.bf16.mxu0 0
      %4171 = vmatpush2.bf16.msra.mxu0 %v3590
      %4172 = vmatprep.subr.bf16.mxu0 0
      %4173 = vmatpush2.bf16.msra.mxu0 %v3589
      %4174 = vmatprep.subr.bf16.mxu0 0
      %4175 = vmatpush2.bf16.msra.mxu0 %v3588
      %4176 = vmatprep.subr.bf16.mxu0 0
      %4177 = vmatpush2.bf16.msra.mxu0 %v3587
      %4178 = vmatprep.subr.bf16.mxu0 0
      %4179 = vmatpush2.bf16.msra.mxu0 %v3586
      %4180 = vmatprep.subr.bf16.mxu0 0
      %4181 = vmatpush2.bf16.msra.mxu0 %v3585
      %4182 = vmatprep.subr.bf16.mxu0 0
      %4183 = vmatpush2.bf16.msra.mxu0 %v3584
      %4184 = vmatprep.subr.bf16.mxu0 0
      %4185 = vmatpush2.bf16.msra.mxu0 %v3583
      %4186 = vmatprep.mubr.bf16.mxu0 %v2958
      %4187 = vmatmul.mubr.bf16.gmra.mxu0 %v2957
      %v4188 = vpop.f32.mrf.mxu0
      %v4189 = vadd.f32 %v4028, %v4188
      %v4190 = vpop.f32.mrf.mxu0
      %v4191 = vpop.f32.mrf.mxu0
      %v4192 = vadd.f32 %v4031, %v4191
      %v4193 = vpop.f32.mrf.mxu0
      %4194 = vmatprep.mubr.bf16.mxu0 %v2967
      %4195 = vmatmul.mubr.bf16.gmra.mxu0 %v2966
      %v4196 = vpop.f32.mrf.mxu0
      %v4197 = vadd.f32 %v4036, %v4196
      %v4198 = vpop.f32.mrf.mxu0
      %v4199 = vpop.f32.mrf.mxu0
      %v4200 = vadd.f32 %v4039, %v4199
      %v4201 = vpop.f32.mrf.mxu0
      %4202 = vmatprep.mubr.bf16.mxu0 %v2976
      %4203 = vmatmul.mubr.bf16.gmra.mxu0 %v2975
      %v4204 = vpop.f32.mrf.mxu0
      %v4205 = vadd.f32 %v4044, %v4204
      %v4206 = vpop.f32.mrf.mxu0
      %v4207 = vpop.f32.mrf.mxu0
      %v4208 = vadd.f32 %v4047, %v4207
      %v4209 = vpop.f32.mrf.mxu0
      %4210 = vmatprep.mubr.bf16.mxu0 %v2985
      %4211 = vmatmul.mubr.bf16.gmra.mxu0 %v2984
      %v4212 = vpop.f32.mrf.mxu0
      %v4213 = vadd.f32 %v4052, %v4212
      %v4214 = vpop.f32.mrf.mxu0
      %v4215 = vpop.f32.mrf.mxu0
      %v4216 = vadd.f32 %v4055, %v4215
      %v4217 = vpop.f32.mrf.mxu0
      %4218 = vmatprep.mubr.bf16.mxu0 %v2994
      %4219 = vmatmul.mubr.bf16.gmra.mxu0 %v2993
      %v4220 = vpop.f32.mrf.mxu0
      %v4221 = vadd.f32 %v4060, %v4220
      %v4222 = vpop.f32.mrf.mxu0
      %v4223 = vpop.f32.mrf.mxu0
      %v4224 = vadd.f32 %v4063, %v4223
      %v4225 = vpop.f32.mrf.mxu0
      %4226 = vmatprep.mubr.bf16.mxu0 %v3003
      %4227 = vmatmul.mubr.bf16.gmra.mxu0 %v3002
      %v4228 = vpop.f32.mrf.mxu0
      %v4229 = vadd.f32 %v4068, %v4228
      %v4230 = vpop.f32.mrf.mxu0
      %v4231 = vpop.f32.mrf.mxu0
      %v4232 = vadd.f32 %v4071, %v4231
      %v4233 = vpop.f32.mrf.mxu0
      %4234 = vmatprep.mubr.bf16.mxu0 %v3012
      %4235 = vmatmul.mubr.bf16.gmra.mxu0 %v3011
      %v4236 = vpop.f32.mrf.mxu0
      %v4237 = vadd.f32 %v4076, %v4236
      %v4238 = vpop.f32.mrf.mxu0
      %v4239 = vpop.f32.mrf.mxu0
      %v4240 = vadd.f32 %v4079, %v4239
      %v4241 = vpop.f32.mrf.mxu0
      %4242 = vmatprep.mubr.bf16.mxu0 %v3021
      %4243 = vmatmul.mubr.bf16.gmra.mxu0 %v3020
      %v4244 = vpop.f32.mrf.mxu0
      %v4245 = vadd.f32 %v4084, %v4244
      %v4246 = vpop.f32.mrf.mxu0
      %v4247 = vpop.f32.mrf.mxu0
      %v4248 = vadd.f32 %v4087, %v4247
      %v4249 = vpop.f32.mrf.mxu0
      %4250 = vmatprep.mubr.bf16.mxu0 %v3030
      %4251 = vmatmul.mubr.bf16.gmra.mxu0 %v3029
      %v4252 = vpop.f32.mrf.mxu0
      %v4253 = vadd.f32 %v4092, %v4252
      %v4254 = vpop.f32.mrf.mxu0
      %v4255 = vpop.f32.mrf.mxu0
      %v4256 = vadd.f32 %v4095, %v4255
      %v4257 = vpop.f32.mrf.mxu0
      %4258 = vmatprep.mubr.bf16.mxu0 %v3039
      %4259 = vmatmul.mubr.bf16.gmra.mxu0 %v3038
      %v4260 = vpop.f32.mrf.mxu0
      %v4261 = vadd.f32 %v4100, %v4260
      %v4262 = vpop.f32.mrf.mxu0
      %v4263 = vpop.f32.mrf.mxu0
      %v4264 = vadd.f32 %v4103, %v4263
      %v4265 = vpop.f32.mrf.mxu0
      %4266 = vmatprep.mubr.bf16.mxu0 %v3048
      %4267 = vmatmul.mubr.bf16.gmra.mxu0 %v3047
      %v4268 = vpop.f32.mrf.mxu0
      %v4269 = vadd.f32 %v4108, %v4268
      %v4270 = vpop.f32.mrf.mxu0
      %v4271 = vpop.f32.mrf.mxu0
      %v4272 = vadd.f32 %v4111, %v4271
      %v4273 = vpop.f32.mrf.mxu0
      %4274 = vmatprep.mubr.bf16.mxu0 %v3057
      %4275 = vmatmul.mubr.bf16.gmra.mxu0 %v3056
      %v4276 = vpop.f32.mrf.mxu0
      %v4277 = vadd.f32 %v4116, %v4276
      %v4278 = vpop.f32.mrf.mxu0
      %v4279 = vpop.f32.mrf.mxu0
      %v4280 = vadd.f32 %v4119, %v4279
      %v4281 = vpop.f32.mrf.mxu0
      %4282 = vmatprep.mubr.bf16.mxu0 %v3066
      %4283 = vmatmul.mubr.bf16.gmra.mxu0 %v3065
      %v4284 = vpop.f32.mrf.mxu0
      %v4285 = vadd.f32 %v4124, %v4284
      %v4286 = vpop.f32.mrf.mxu0
      %v4287 = vpop.f32.mrf.mxu0
      %v4288 = vadd.f32 %v4127, %v4287
      %v4289 = vpop.f32.mrf.mxu0
      %4290 = vmatprep.mubr.bf16.mxu0 %v3075
      %4291 = vmatmul.mubr.bf16.gmra.mxu0 %v3074
      %v4292 = vpop.f32.mrf.mxu0
      %v4293 = vadd.f32 %v4132, %v4292
      %v4294 = vpop.f32.mrf.mxu0
      %v4295 = vpop.f32.mrf.mxu0
      %v4296 = vadd.f32 %v4135, %v4295
      %v4297 = vpop.f32.mrf.mxu0
      %4298 = vmatprep.mubr.bf16.mxu0 %v3084
      %4299 = vmatmul.mubr.bf16.gmra.mxu0 %v3083
      %v4300 = vpop.f32.mrf.mxu0
      %v4301 = vadd.f32 %v4140, %v4300
      %v4302 = vpop.f32.mrf.mxu0
      %v4303 = vpop.f32.mrf.mxu0
      %v4304 = vadd.f32 %v4143, %v4303
      %v4305 = vpop.f32.mrf.mxu0
      %4306 = vmatprep.mubr.bf16.mxu0 %v3093
      %4307 = vmatmul.mubr.bf16.gmra.mxu0 %v3092
      %v4308 = vpop.f32.mrf.mxu0
      %v4309 = vadd.f32 %v4148, %v4308
      %v4310 = vpop.f32.mrf.mxu0
      %v4311 = vpop.f32.mrf.mxu0
      %v4312 = vadd.f32 %v4151, %v4311
      %v4313 = vpop.f32.mrf.mxu0
      %4314 = vdwg.mxu0
      %4315 = vmatprep.subr.bf16.mxu0 0
      %4316 = vmatpush1.bf16.msra.mxu0 %v3598
      %4317 = vmatprep.subr.bf16.mxu0 0
      %4318 = vmatpush1.bf16.msra.mxu0 %v3597
      %4319 = vmatprep.subr.bf16.mxu0 0
      %4320 = vmatpush1.bf16.msra.mxu0 %v3596
      %4321 = vmatprep.subr.bf16.mxu0 0
      %4322 = vmatpush1.bf16.msra.mxu0 %v3595
      %4323 = vmatprep.subr.bf16.mxu0 0
      %4324 = vmatpush1.bf16.msra.mxu0 %v3594
      %4325 = vmatprep.subr.bf16.mxu0 0
      %4326 = vmatpush1.bf16.msra.mxu0 %v3593
      %4327 = vmatprep.subr.bf16.mxu0 0
      %4328 = vmatpush1.bf16.msra.mxu0 %v3592
      %4329 = vmatprep.subr.bf16.mxu0 0
      %4330 = vmatpush1.bf16.msra.mxu0 %v3591
      %4331 = vmatprep.subr.bf16.mxu0 0
      %4332 = vmatpush2.bf16.msra.mxu0 0
      %4333 = vmatprep.subr.bf16.mxu0 0
      %4334 = vmatpush2.bf16.msra.mxu0 0
      %4335 = vmatprep.subr.bf16.mxu0 0
      %4336 = vmatpush2.bf16.msra.mxu0 0
      %4337 = vmatprep.subr.bf16.mxu0 0
      %4338 = vmatpush2.bf16.msra.mxu0 0
      %4339 = vmatprep.subr.bf16.mxu0 0
      %4340 = vmatpush2.bf16.msra.mxu0 0
      %4341 = vmatprep.subr.bf16.mxu0 0
      %4342 = vmatpush2.bf16.msra.mxu0 0
      %4343 = vmatprep.subr.bf16.mxu0 0
      %4344 = vmatpush2.bf16.msra.mxu0 0
      %4345 = vmatprep.subr.bf16.mxu0 0
      %4346 = vmatpush2.bf16.msra.mxu0 0
      %4347 = vmatprep.mubr.bf16.mxu0 0
      %4348 = vmatmul.mubr.bf16.gmra.mxu0 %v2959
      %v4349 = vpop.f32.mrf.mxu0
      %v4350 = vadd.f32 %v4189, %v4349
      %v4351 = vpop.f32.mrf.mxu0
      %v4352 = vpop.f32.mrf.mxu0
      %v4353 = vadd.f32 %v4192, %v4352
      %v4354 = vpop.f32.mrf.mxu0
      %4355 = vmatprep.mubr.bf16.mxu0 0
      %4356 = vmatmul.mubr.bf16.gmra.mxu0 %v2968
      %v4357 = vpop.f32.mrf.mxu0
      %v4358 = vadd.f32 %v4197, %v4357
      %v4359 = vpop.f32.mrf.mxu0
      %v4360 = vpop.f32.mrf.mxu0
      %v4361 = vadd.f32 %v4200, %v4360
      %v4362 = vpop.f32.mrf.mxu0
      %4363 = vmatprep.mubr.bf16.mxu0 0
      %4364 = vmatmul.mubr.bf16.gmra.mxu0 %v2977
      %v4365 = vpop.f32.mrf.mxu0
      %v4366 = vadd.f32 %v4205, %v4365
      %v4367 = vpop.f32.mrf.mxu0
      %v4368 = vpop.f32.mrf.mxu0
      %v4369 = vadd.f32 %v4208, %v4368
      %v4370 = vpop.f32.mrf.mxu0
      %4371 = vmatprep.mubr.bf16.mxu0 0
      %4372 = vmatmul.mubr.bf16.gmra.mxu0 %v2986
      %v4373 = vpop.f32.mrf.mxu0
      %v4374 = vadd.f32 %v4213, %v4373
      %v4375 = vpop.f32.mrf.mxu0
      %v4376 = vpop.f32.mrf.mxu0
      %v4377 = vadd.f32 %v4216, %v4376
      %v4378 = vpop.f32.mrf.mxu0
      %4379 = vmatprep.mubr.bf16.mxu0 0
      %4380 = vmatmul.mubr.bf16.gmra.mxu0 %v2995
      %v4381 = vpop.f32.mrf.mxu0
      %v4382 = vadd.f32 %v4221, %v4381
      %v4383 = vpop.f32.mrf.mxu0
      %v4384 = vpop.f32.mrf.mxu0
      %v4385 = vadd.f32 %v4224, %v4384
      %v4386 = vpop.f32.mrf.mxu0
      %4387 = vmatprep.mubr.bf16.mxu0 0
      %4388 = vmatmul.mubr.bf16.gmra.mxu0 %v3004
      %v4389 = vpop.f32.mrf.mxu0
      %v4390 = vadd.f32 %v4229, %v4389
      %v4391 = vpop.f32.mrf.mxu0
      %v4392 = vpop.f32.mrf.mxu0
      %v4393 = vadd.f32 %v4232, %v4392
      %v4394 = vpop.f32.mrf.mxu0
      %4395 = vmatprep.mubr.bf16.mxu0 0
      %4396 = vmatmul.mubr.bf16.gmra.mxu0 %v3013
      %v4397 = vpop.f32.mrf.mxu0
      %v4398 = vadd.f32 %v4237, %v4397
      %v4399 = vpop.f32.mrf.mxu0
      %v4400 = vpop.f32.mrf.mxu0
      %v4401 = vadd.f32 %v4240, %v4400
      %v4402 = vpop.f32.mrf.mxu0
      %4403 = vmatprep.mubr.bf16.mxu0 0
      %4404 = vmatmul.mubr.bf16.gmra.mxu0 %v3022
      %v4405 = vpop.f32.mrf.mxu0
      %v4406 = vadd.f32 %v4245, %v4405
      %v4407 = vpop.f32.mrf.mxu0
      %v4408 = vpop.f32.mrf.mxu0
      %v4409 = vadd.f32 %v4248, %v4408
      %v4410 = vpop.f32.mrf.mxu0
      %4411 = vmatprep.mubr.bf16.mxu0 0
      %4412 = vmatmul.mubr.bf16.gmra.mxu0 %v3031
      %v4413 = vpop.f32.mrf.mxu0
      %v4414 = vadd.f32 %v4253, %v4413
      %v4415 = vpop.f32.mrf.mxu0
      %v4416 = vpop.f32.mrf.mxu0
      %v4417 = vadd.f32 %v4256, %v4416
      %v4418 = vpop.f32.mrf.mxu0
      %4419 = vmatprep.mubr.bf16.mxu0 0
      %4420 = vmatmul.mubr.bf16.gmra.mxu0 %v3040
      %v4421 = vpop.f32.mrf.mxu0
      %v4422 = vadd.f32 %v4261, %v4421
      %v4423 = vpop.f32.mrf.mxu0
      %v4424 = vpop.f32.mrf.mxu0
      %v4425 = vadd.f32 %v4264, %v4424
      %v4426 = vpop.f32.mrf.mxu0
      %4427 = vmatprep.mubr.bf16.mxu0 0
      %4428 = vmatmul.mubr.bf16.gmra.mxu0 %v3049
      %v4429 = vpop.f32.mrf.mxu0
      %v4430 = vadd.f32 %v4269, %v4429
      %v4431 = vpop.f32.mrf.mxu0
      %v4432 = vpop.f32.mrf.mxu0
      %v4433 = vadd.f32 %v4272, %v4432
      %v4434 = vpop.f32.mrf.mxu0
      %4435 = vmatprep.mubr.bf16.mxu0 0
      %4436 = vmatmul.mubr.bf16.gmra.mxu0 %v3058
      %v4437 = vpop.f32.mrf.mxu0
      %v4438 = vadd.f32 %v4277, %v4437
      %v4439 = vpop.f32.mrf.mxu0
      %v4440 = vpop.f32.mrf.mxu0
      %v4441 = vadd.f32 %v4280, %v4440
      %v4442 = vpop.f32.mrf.mxu0
      %4443 = vmatprep.mubr.bf16.mxu0 0
      %4444 = vmatmul.mubr.bf16.gmra.mxu0 %v3067
      %v4445 = vpop.f32.mrf.mxu0
      %v4446 = vadd.f32 %v4285, %v4445
      %v4447 = vpop.f32.mrf.mxu0
      %v4448 = vpop.f32.mrf.mxu0
      %v4449 = vadd.f32 %v4288, %v4448
      %v4450 = vpop.f32.mrf.mxu0
      %4451 = vmatprep.mubr.bf16.mxu0 0
      %4452 = vmatmul.mubr.bf16.gmra.mxu0 %v3076
      %v4453 = vpop.f32.mrf.mxu0
      %v4454 = vadd.f32 %v4293, %v4453
      %v4455 = vpop.f32.mrf.mxu0
      %v4456 = vpop.f32.mrf.mxu0
      %v4457 = vadd.f32 %v4296, %v4456
      %v4458 = vpop.f32.mrf.mxu0
      %4459 = vmatprep.mubr.bf16.mxu0 0
      %4460 = vmatmul.mubr.bf16.gmra.mxu0 %v3085
      %v4461 = vpop.f32.mrf.mxu0
      %v4462 = vadd.f32 %v4301, %v4461
      %v4463 = vpop.f32.mrf.mxu0
      %v4464 = vpop.f32.mrf.mxu0
      %v4465 = vadd.f32 %v4304, %v4464
      %v4466 = vpop.f32.mrf.mxu0
      %4467 = vmatprep.mubr.bf16.mxu0 0
      %4468 = vmatmul.mubr.bf16.gmra.mxu0 %v3094
      %v4469 = vpop.f32.mrf.mxu0
      %v4470 = vadd.f32 %v4309, %v4469
      %v4471 = vpop.f32.mrf.mxu0
      %v4472 = vpop.f32.mrf.mxu0
      %v4473 = vadd.f32 %v4312, %v4472
      %v4474 = vpop.f32.mrf.mxu0
      %4475 = vdwg.mxu0
      %v4476 = vmax.f32 %v4350, 0.0
      %v4477 = vmax.f32 %v4353, 0.0
      %v4478 = vmax.f32 %v4358, 0.0
      %v4479 = vmax.f32 %v4361, 0.0
      %v4480 = vmax.f32 %v4366, 0.0
      %v4481 = vmax.f32 %v4369, 0.0
      %v4482 = vmax.f32 %v4374, 0.0
      %v4483 = vmax.f32 %v4377, 0.0
      %v4484 = vmax.f32 %v4382, 0.0
      %v4485 = vmax.f32 %v4385, 0.0
      %v4486 = vmax.f32 %v4390, 0.0
      %v4487 = vmax.f32 %v4393, 0.0
      %v4488 = vmax.f32 %v4398, 0.0
      %v4489 = vmax.f32 %v4401, 0.0
      %v4490 = vmax.f32 %v4406, 0.0
      %v4491 = vmax.f32 %v4409, 0.0
      %v4492 = vmax.f32 %v4414, 0.0
      %v4493 = vmax.f32 %v4417, 0.0
      %v4494 = vmax.f32 %v4422, 0.0
      %v4495 = vmax.f32 %v4425, 0.0
      %v4496 = vmax.f32 %v4430, 0.0
      %v4497 = vmax.f32 %v4433, 0.0
      %v4498 = vmax.f32 %v4438, 0.0
      %v4499 = vmax.f32 %v4441, 0.0
      %v4500 = vmax.f32 %v4446, 0.0
      %v4501 = vmax.f32 %v4449, 0.0
      %v4502 = vmax.f32 %v4454, 0.0
      %v4503 = vmax.f32 %v4457, 0.0
      %v4504 = vmax.f32 %v4462, 0.0
      %v4505 = vmax.f32 %v4465, 0.0
      %v4506 = vmax.f32 %v4470, 0.0
      %v4507 = vmax.f32 %v4473, 0.0
      %v4508 = vpack.c.bf16 %v4477, %v4476
      %v4509 = vpack.c.bf16 %v4479, %v4478
      %v4510 = vpack.c.bf16 %v4481, %v4480
      %v4511 = vpack.c.bf16 %v4483, %v4482
      %v4512 = vpack.c.bf16 %v4485, %v4484
      %v4513 = vpack.c.bf16 %v4487, %v4486
      %v4514 = vpack.c.bf16 %v4489, %v4488
      %v4515 = vpack.c.bf16 %v4491, %v4490
      %v4516 = vpack.c.bf16 %v4493, %v4492
      %v4517 = vpack.c.bf16 %v4495, %v4494
      %v4518 = vpack.c.bf16 %v4497, %v4496
      %v4519 = vpack.c.bf16 %v4499, %v4498
      %v4520 = vpack.c.bf16 %v4501, %v4500
      %v4521 = vpack.c.bf16 %v4503, %v4502
      %v4522 = vpack.c.bf16 %v4505, %v4504
      %v4523 = vpack.c.bf16 %v4507, %v4506
      %v4540 = vunpack.c.l.b16 %v4508
      %v4541 = vunpack.c.h.b16 %v4508
      %v4542 = vunpack.c.l.b16 %v4509
      %v4543 = vunpack.c.h.b16 %v4509
      %v4544 = vunpack.c.l.b16 %v4510
      %v4545 = vunpack.c.h.b16 %v4510
      %v4546 = vunpack.c.l.b16 %v4511
      %v4547 = vunpack.c.h.b16 %v4511
      %v4548 = vunpack.c.l.b16 %v4512
      %v4549 = vunpack.c.h.b16 %v4512
      %v4550 = vunpack.c.l.b16 %v4513
      %v4551 = vunpack.c.h.b16 %v4513
      %v4552 = vunpack.c.l.b16 %v4514
      %v4553 = vunpack.c.h.b16 %v4514
      %v4554 = vunpack.c.l.b16 %v4515
      %v4555 = vunpack.c.h.b16 %v4515
      %v4556 = vunpack.c.l.b16 %v4516
      %v4557 = vunpack.c.h.b16 %v4516
      %v4558 = vunpack.c.l.b16 %v4517
      %v4559 = vunpack.c.h.b16 %v4517
      %v4560 = vunpack.c.l.b16 %v4518
      %v4561 = vunpack.c.h.b16 %v4518
      %v4562 = vunpack.c.l.b16 %v4519
      %v4563 = vunpack.c.h.b16 %v4519
      %v4564 = vunpack.c.l.b16 %v4520
      %v4565 = vunpack.c.h.b16 %v4520
      %v4566 = vunpack.c.l.b16 %v4521
      %v4567 = vunpack.c.h.b16 %v4521
      %v4568 = vunpack.c.l.b16 %v4522
      %v4569 = vunpack.c.h.b16 %v4522
      %v4570 = vunpack.c.l.b16 %v4523
      %v4571 = vunpack.c.h.b16 %v4523
      %v4572 = vpack.c.b16 %v4540, %v4540
      %v4573 = vpack.c.b16 %v4541, %v4541
      %v4574 = vpack.c.b16 %v4542, %v4542
      %v4575 = vpack.c.b16 %v4543, %v4543
      %v4576 = vpack.c.b16 %v4544, %v4544
      %v4577 = vpack.c.b16 %v4545, %v4545
      %v4578 = vpack.c.b16 %v4546, %v4546
      %v4579 = vpack.c.b16 %v4547, %v4547
      %v4580 = vpack.c.b16 %v4548, %v4548
      %v4581 = vpack.c.b16 %v4549, %v4549
      %v4582 = vpack.c.b16 %v4550, %v4550
      %v4583 = vpack.c.b16 %v4551, %v4551
      %v4584 = vpack.c.b16 %v4552, %v4552
      %v4585 = vpack.c.b16 %v4553, %v4553
      %v4586 = vpack.c.b16 %v4554, %v4554
      %v4587 = vpack.c.b16 %v4555, %v4555
      %v4588 = vpack.c.b16 %v4556, %v4556
      %v4589 = vpack.c.b16 %v4557, %v4557
      %v4590 = vpack.c.b16 %v4558, %v4558
      %v4591 = vpack.c.b16 %v4559, %v4559
      %v4592 = vpack.c.b16 %v4560, %v4560
      %v4593 = vpack.c.b16 %v4561, %v4561
      %v4594 = vpack.c.b16 %v4562, %v4562
      %v4595 = vpack.c.b16 %v4563, %v4563
      %v4596 = vpack.c.b16 %v4564, %v4564
      %v4597 = vpack.c.b16 %v4565, %v4565
      %v4598 = vpack.c.b16 %v4566, %v4566
      %v4599 = vpack.c.b16 %v4567, %v4567
      %v4600 = vpack.c.b16 %v4568, %v4568
      %v4601 = vpack.c.b16 %v4569, %v4569
      %v4602 = vpack.c.b16 %v4570, %v4570
      %v4603 = vpack.c.b16 %v4571, %v4571
      %4636 = vst [vmem:[#allocation3] sm:$0xf] %v4572
      %4637 = vst [vmem:[#allocation3 + $0x4] sm:$0xf] %v4573
      %4638 = vst [vmem:[#allocation3 + $0x8] sm:$0xf] %v4574
      %4639 = vst [vmem:[#allocation3 + $0xc] sm:$0xf] %v4575
      %4640 = vst [vmem:[#allocation3 + $0x10] sm:$0xf] %v4576
      %4641 = vst [vmem:[#allocation3 + $0x14] sm:$0xf] %v4577
      %4642 = vst [vmem:[#allocation3 + $0x18] sm:$0xf] %v4578
      %4643 = vst [vmem:[#allocation3 + $0x1c] sm:$0xf] %v4579
      %4644 = vst [vmem:[#allocation3 + $0x20] sm:$0xf] %v4580
      %4645 = vst [vmem:[#allocation3 + $0x24] sm:$0xf] %v4581
      %4646 = vst [vmem:[#allocation3 + $0x28] sm:$0xf] %v4582
      %4647 = vst [vmem:[#allocation3 + $0x2c] sm:$0xf] %v4583
      %4648 = vst [vmem:[#allocation3 + $0x30] sm:$0xf] %v4584
      %4649 = vst [vmem:[#allocation3 + $0x34] sm:$0xf] %v4585
      %4650 = vst [vmem:[#allocation3 + $0x38] sm:$0xf] %v4586
      %4651 = vst [vmem:[#allocation3 + $0x3c] sm:$0xf] %v4587
      %4652 = vst [vmem:[#allocation3 + $0x40] sm:$0xf] %v4588
      %4653 = vst [vmem:[#allocation3 + $0x44] sm:$0xf] %v4589
      %4654 = vst [vmem:[#allocation3 + $0x48] sm:$0xf] %v4590
      %4655 = vst [vmem:[#allocation3 + $0x4c] sm:$0xf] %v4591
      %4656 = vst [vmem:[#allocation3 + $0x50] sm:$0xf] %v4592
      %4657 = vst [vmem:[#allocation3 + $0x54] sm:$0xf] %v4593
      %4658 = vst [vmem:[#allocation3 + $0x58] sm:$0xf] %v4594
      %4659 = vst [vmem:[#allocation3 + $0x5c] sm:$0xf] %v4595
      %4660 = vst [vmem:[#allocation3 + $0x60] sm:$0xf] %v4596
      %4661 = vst [vmem:[#allocation3 + $0x64] sm:$0xf] %v4597
      %4662 = vst [vmem:[#allocation3 + $0x68] sm:$0xf] %v4598
      %4663 = vst [vmem:[#allocation3 + $0x6c] sm:$0xf] %v4599
      %4664 = vst [vmem:[#allocation3 + $0x70] sm:$0xf] %v4600
      %4665 = vst [vmem:[#allocation3 + $0x74] sm:$0xf] %v4601
      %4666 = vst [vmem:[#allocation3 + $0x78] sm:$0xf] %v4602
      %4667 = vst [vmem:[#allocation3 + $0x7c] sm:$0xf] %v4603
      %v4668 = vld [vmem:[%s9] sm:$0xff]
      %v4669 = vld [vmem:[%s9 + $0x8] sm:$0xff]
      %v4670 = vld [vmem:[%s9 + $0x10] sm:$0xff]
      %v4671 = vld [vmem:[%s9 + $0x18] sm:$0xff]
      %v4672 = vld [vmem:[%s9 + $0x20] sm:$0xff]
      %v4673 = vld [vmem:[%s9 + $0x28] sm:$0xff]
      %v4674 = vld [vmem:[%s9 + $0x30] sm:$0xff]
      %v4675 = vld [vmem:[%s9 + $0x38] sm:$0xff]
      %v4676 = vld [vmem:[#allocation3] sm:$0xf]
      %v4677 = vld [vmem:[#allocation3 + $0x4] sm:$0xf]
      %v4678 = vld [vmem:[#allocation3 + $0x8] sm:$0xf]
      %v4679 = vld [vmem:[#allocation3 + $0xc] sm:$0xf]
      %v4680 = vld [vmem:[#allocation3 + $0x10] sm:$0xf]
      %v4681 = vld [vmem:[#allocation3 + $0x14] sm:$0xf]
      %v4682 = vld [vmem:[#allocation3 + $0x18] sm:$0xf]
      %v4683 = vld [vmem:[#allocation3 + $0x1c] sm:$0xf]
      %v4684 = vld [vmem:[#allocation3 + $0x20] sm:$0xf]
      %v4685 = vld [vmem:[#allocation3 + $0x24] sm:$0xf]
      %v4686 = vld [vmem:[#allocation3 + $0x28] sm:$0xf]
      %v4687 = vld [vmem:[#allocation3 + $0x2c] sm:$0xf]
      %v4688 = vld [vmem:[#allocation3 + $0x30] sm:$0xf]
      %v4689 = vld [vmem:[#allocation3 + $0x34] sm:$0xf]
      %v4690 = vld [vmem:[#allocation3 + $0x38] sm:$0xf]
      %v4691 = vld [vmem:[#allocation3 + $0x3c] sm:$0xf]
      %v4692 = vld [vmem:[#allocation3 + $0x40] sm:$0xf]
      %v4693 = vld [vmem:[#allocation3 + $0x44] sm:$0xf]
      %v4694 = vld [vmem:[#allocation3 + $0x48] sm:$0xf]
      %v4695 = vld [vmem:[#allocation3 + $0x4c] sm:$0xf]
      %v4696 = vld [vmem:[#allocation3 + $0x50] sm:$0xf]
      %v4697 = vld [vmem:[#allocation3 + $0x54] sm:$0xf]
      %v4698 = vld [vmem:[#allocation3 + $0x58] sm:$0xf]
      %v4699 = vld [vmem:[#allocation3 + $0x5c] sm:$0xf]
      %v4700 = vld [vmem:[#allocation3 + $0x60] sm:$0xf]
      %v4701 = vld [vmem:[#allocation3 + $0x64] sm:$0xf]
      %v4702 = vld [vmem:[#allocation3 + $0x68] sm:$0xf]
      %v4703 = vld [vmem:[#allocation3 + $0x6c] sm:$0xf]
      %v4704 = vld [vmem:[#allocation3 + $0x70] sm:$0xf]
      %v4705 = vld [vmem:[#allocation3 + $0x74] sm:$0xf]
      %v4706 = vld [vmem:[#allocation3 + $0x78] sm:$0xf]
      %v4707 = vld [vmem:[#allocation3 + $0x7c] sm:$0xf]
      %v4716 = vunpack.c.l.b16 %v4668
      %v4717 = vunpack.c.h.b16 %v4668
      %v4718 = vunpack.c.l.b16 %v4669
      %v4719 = vunpack.c.h.b16 %v4669
      %v4720 = vunpack.c.l.b16 %v4670
      %v4721 = vunpack.c.h.b16 %v4670
      %v4722 = vunpack.c.l.b16 %v4671
      %v4723 = vunpack.c.h.b16 %v4671
      %v4724 = vunpack.c.l.b16 %v4672
      %v4725 = vunpack.c.h.b16 %v4672
      %v4726 = vunpack.c.l.b16 %v4673
      %v4727 = vunpack.c.h.b16 %v4673
      %v4728 = vunpack.c.l.b16 %v4674
      %v4729 = vunpack.c.h.b16 %v4674
      %v4730 = vunpack.c.l.b16 %v4675
      %v4731 = vunpack.c.h.b16 %v4675
      %v4732 = vpack.c.b16 %v4718, %v4716
      %v4733 = vpack.c.b16 %v4719, %v4717
      %v4734 = vpack.c.b16 %v4722, %v4720
      %v4735 = vpack.c.b16 %v4723, %v4721
      %v4736 = vpack.c.b16 %v4726, %v4724
      %v4737 = vpack.c.b16 %v4727, %v4725
      %v4738 = vpack.c.b16 %v4730, %v4728
      %v4739 = vpack.c.b16 %v4731, %v4729
      %v4780 = vunpack.c.l.b16 %v4676
      %v4781 = vunpack.c.l.b16 %v4677
      %v4782 = vunpack.c.l.b16 %v4678
      %v4783 = vunpack.c.l.b16 %v4679
      %v4784 = vunpack.c.l.b16 %v4680
      %v4785 = vunpack.c.l.b16 %v4681
      %v4786 = vunpack.c.l.b16 %v4682
      %v4787 = vunpack.c.l.b16 %v4683
      %v4788 = vunpack.c.l.b16 %v4684
      %v4789 = vunpack.c.l.b16 %v4685
      %v4790 = vunpack.c.l.b16 %v4686
      %v4791 = vunpack.c.l.b16 %v4687
      %v4792 = vunpack.c.l.b16 %v4688
      %v4793 = vunpack.c.l.b16 %v4689
      %v4794 = vunpack.c.l.b16 %v4690
      %v4795 = vunpack.c.l.b16 %v4691
      %v4796 = vunpack.c.l.b16 %v4692
      %v4797 = vunpack.c.l.b16 %v4693
      %v4798 = vunpack.c.l.b16 %v4694
      %v4799 = vunpack.c.l.b16 %v4695
      %v4800 = vunpack.c.l.b16 %v4696
      %v4801 = vunpack.c.l.b16 %v4697
      %v4802 = vunpack.c.l.b16 %v4698
      %v4803 = vunpack.c.l.b16 %v4699
      %v4804 = vunpack.c.l.b16 %v4700
      %v4805 = vunpack.c.l.b16 %v4701
      %v4806 = vunpack.c.l.b16 %v4702
      %v4807 = vunpack.c.l.b16 %v4703
      %v4808 = vunpack.c.l.b16 %v4704
      %v4809 = vunpack.c.l.b16 %v4705
      %v4810 = vunpack.c.l.b16 %v4706
      %v4811 = vunpack.c.l.b16 %v4707
      %v4812 = vpack.c.b16 %v4781, %v4780
      %v4813 = vpack.c.b16 %v4783, %v4782
      %v4814 = vpack.c.b16 %v4785, %v4784
      %v4815 = vpack.c.b16 %v4787, %v4786
      %v4816 = vpack.c.b16 %v4789, %v4788
      %v4817 = vpack.c.b16 %v4791, %v4790
      %v4818 = vpack.c.b16 %v4793, %v4792
      %v4819 = vpack.c.b16 %v4795, %v4794
      %v4820 = vpack.c.b16 %v4797, %v4796
      %v4821 = vpack.c.b16 %v4799, %v4798
      %v4822 = vpack.c.b16 %v4801, %v4800
      %v4823 = vpack.c.b16 %v4803, %v4802
      %v4824 = vpack.c.b16 %v4805, %v4804
      %v4825 = vpack.c.b16 %v4807, %v4806
      %v4826 = vpack.c.b16 %v4809, %v4808
      %v4827 = vpack.c.b16 %v4811, %v4810
      %4844 = vmatprep.subr.bf16.mxu0 0
      %4845 = vmatpush1.bf16.msra.mxu0 %v4819
      %4846 = vmatprep.subr.bf16.mxu0 0
      %4847 = vmatpush1.bf16.msra.mxu0 %v4818
      %4848 = vmatprep.subr.bf16.mxu0 0
      %4849 = vmatpush1.bf16.msra.mxu0 %v4817
      %4850 = vmatprep.subr.bf16.mxu0 0
      %4851 = vmatpush1.bf16.msra.mxu0 %v4816
      %4852 = vmatprep.subr.bf16.mxu0 0
      %4853 = vmatpush1.bf16.msra.mxu0 %v4815
      %4854 = vmatprep.subr.bf16.mxu0 0
      %4855 = vmatpush1.bf16.msra.mxu0 %v4814
      %4856 = vmatprep.subr.bf16.mxu0 0
      %4857 = vmatpush1.bf16.msra.mxu0 %v4813
      %4858 = vmatprep.subr.bf16.mxu0 0
      %4859 = vmatpush1.bf16.msra.mxu0 %v4812
      %4860 = vmatprep.subr.bf16.mxu0 0
      %4861 = vmatpush2.bf16.msra.mxu0 %v4827
      %4862 = vmatprep.subr.bf16.mxu0 0
      %4863 = vmatpush2.bf16.msra.mxu0 %v4826
      %4864 = vmatprep.subr.bf16.mxu0 0
      %4865 = vmatpush2.bf16.msra.mxu0 %v4825
      %4866 = vmatprep.subr.bf16.mxu0 0
      %4867 = vmatpush2.bf16.msra.mxu0 %v4824
      %4868 = vmatprep.subr.bf16.mxu0 0
      %4869 = vmatpush2.bf16.msra.mxu0 %v4823
      %4870 = vmatprep.subr.bf16.mxu0 0
      %4871 = vmatpush2.bf16.msra.mxu0 %v4822
      %4872 = vmatprep.subr.bf16.mxu0 0
      %4873 = vmatpush2.bf16.msra.mxu0 %v4821
      %4874 = vmatprep.subr.bf16.mxu0 0
      %4875 = vmatpush2.bf16.msra.mxu0 %v4820
      %4876 = vmatprep.mubr.bf16.mxu0 %v4733
      %4877 = vmatmul.mubr.bf16.gmra.mxu0 %v4732
      %v4878 = vpop.f32.mrf.mxu0
      %v4879 = vadd.f32 0.0, %v4878
      %v4880 = vpop.f32.mrf.mxu0
      %v4881 = vpop.f32.mrf.mxu0
      %v4882 = vadd.f32 0.0, %v4881
      %v4883 = vpop.f32.mrf.mxu0
      %4884 = vmatprep.mubr.bf16.mxu0 %v4735
      %4885 = vmatmul.mubr.bf16.gmra.mxu0 %v4734
      %v4886 = vpop.f32.mrf.mxu0
      %v4887 = vadd.f32 0.0, %v4886
      %v4888 = vpop.f32.mrf.mxu0
      %v4889 = vpop.f32.mrf.mxu0
      %v4890 = vadd.f32 0.0, %v4889
      %v4891 = vpop.f32.mrf.mxu0
      %4892 = vmatprep.mubr.bf16.mxu0 %v4737
      %4893 = vmatmul.mubr.bf16.gmra.mxu0 %v4736
      %v4894 = vpop.f32.mrf.mxu0
      %v4895 = vadd.f32 0.0, %v4894
      %v4896 = vpop.f32.mrf.mxu0
      %v4897 = vpop.f32.mrf.mxu0
      %v4898 = vadd.f32 0.0, %v4897
      %v4899 = vpop.f32.mrf.mxu0
      %4900 = vmatprep.mubr.bf16.mxu0 %v4739
      %4901 = vmatmul.mubr.bf16.gmra.mxu0 %v4738
      %v4902 = vpop.f32.mrf.mxu0
      %v4903 = vadd.f32 0.0, %v4902
      %v4904 = vpop.f32.mrf.mxu0
      %v4905 = vpop.f32.mrf.mxu0
      %v4906 = vadd.f32 0.0, %v4905
      %v4907 = vpop.f32.mrf.mxu0
      %4908 = vdwg.mxu0
      %s4909 = scalar_lea.vmem [#allocation4], 16
      %4910 = vst [vmem:[%s4909 + $0x1] sm:$0xff] %v4879
      %4911 = vst [vmem:[%s4909 + $0x11] sm:$0xff] %v4882
      %4912 = vst [vmem:[%s4909 + $0x21] sm:$0xff] %v4887
      %4913 = vst [vmem:[%s4909 + $0x31] sm:$0xff] %v4890
      %4914 = vst [vmem:[%s4909 + $0x41] sm:$0xff] %v4895
      %4915 = vst [vmem:[%s4909 + $0x51] sm:$0xff] %v4898
      %4916 = vst [vmem:[%s4909 + $0x61] sm:$0xff] %v4903
      %4917 = vst [vmem:[%s4909 + $0x71] sm:$0xff] %v4906
      %v4918 = vld [vmem:[#allocation4] sm:$0xff]
      %v4919 = vld [vmem:[#allocation4 + $0x10] sm:$0xff]
      %v4920 = vld [vmem:[#allocation4 + $0x20] sm:$0xff]
      %v4921 = vld [vmem:[#allocation4 + $0x30] sm:$0xff]
      %v4922 = vld [vmem:[#allocation4 + $0x40] sm:$0xff]
      %v4923 = vld [vmem:[#allocation4 + $0x50] sm:$0xff]
      %v4924 = vld [vmem:[#allocation4 + $0x60] sm:$0xff]
      %v4925 = vld [vmem:[#allocation4 + $0x70] sm:$0xff]
      %v4926 = vpack.c.bf16 %v4919, %v4918
      %v4927 = vpack.c.bf16 %v4921, %v4920
      %v4928 = vpack.c.bf16 %v4923, %v4922
      %v4929 = vpack.c.bf16 %v4925, %v4924
      %v4934 = vunpack.c.l.b16 %v4926
      %v4935 = vunpack.c.h.b16 %v4926
      %v4936 = vunpack.c.l.b16 %v4927
      %v4937 = vunpack.c.h.b16 %v4927
      %v4938 = vunpack.c.l.b16 %v4928
      %v4939 = vunpack.c.h.b16 %v4928
      %v4940 = vunpack.c.l.b16 %v4929
      %v4941 = vunpack.c.h.b16 %v4929
      %v4942 = vpack.c.b16 %v4934, %v4934
      %v4943 = vpack.c.b16 %v4935, %v4935
      %v4944 = vpack.c.b16 %v4936, %v4936
      %v4945 = vpack.c.b16 %v4937, %v4937
      %v4946 = vpack.c.b16 %v4938, %v4938
      %v4947 = vpack.c.b16 %v4939, %v4939
      %v4948 = vpack.c.b16 %v4940, %v4940
      %v4949 = vpack.c.b16 %v4941, %v4941
      %4958 = vst [vmem:[#allocation2] sm:$0xf] %v4942
      %4959 = vst [vmem:[#allocation2 + $0x24] sm:$0xf] %v4943
      %4960 = vst [vmem:[#allocation2 + $0x48] sm:$0xf] %v4944
      %4961 = vst [vmem:[#allocation2 + $0x6c] sm:$0xf] %v4945
      %4962 = vst [vmem:[#allocation2 + $0x90] sm:$0xf] %v4946
      %4963 = vst [vmem:[#allocation2 + $0xb4] sm:$0xf] %v4947
      %4964 = vst [vmem:[#allocation2 + $0xd8] sm:$0xf] %v4948
      %4965 = vst [vmem:[#allocation2 + $0xfc] sm:$0xf] %v4949
      %v4966 = vld [vmem:[#allocation4 + $0x1] sm:$0xff]
      %v4967 = vld [vmem:[#allocation4 + $0x11] sm:$0xff]
      %v4968 = vld [vmem:[#allocation4 + $0x21] sm:$0xff]
      %v4969 = vld [vmem:[#allocation4 + $0x31] sm:$0xff]
      %v4970 = vld [vmem:[#allocation4 + $0x41] sm:$0xff]
      %v4971 = vld [vmem:[#allocation4 + $0x51] sm:$0xff]
      %v4972 = vld [vmem:[#allocation4 + $0x61] sm:$0xff]
      %v4973 = vld [vmem:[#allocation4 + $0x71] sm:$0xff]
      %v4974 = vpack.c.bf16 %v4967, %v4966
      %v4975 = vpack.c.bf16 %v4969, %v4968
      %v4976 = vpack.c.bf16 %v4971, %v4970
      %v4977 = vpack.c.bf16 %v4973, %v4972
      %v4982 = vunpack.c.l.b16 %v4974
      %v4983 = vunpack.c.h.b16 %v4974
      %v4984 = vunpack.c.l.b16 %v4975
      %v4985 = vunpack.c.h.b16 %v4975
      %v4986 = vunpack.c.l.b16 %v4976
      %v4987 = vunpack.c.h.b16 %v4976
      %v4988 = vunpack.c.l.b16 %v4977
      %v4989 = vunpack.c.h.b16 %v4977
      %v4990 = vpack.c.b16 %v4982, %v4982
      %v4991 = vpack.c.b16 %v4983, %v4983
      %v4992 = vpack.c.b16 %v4984, %v4984
      %v4993 = vpack.c.b16 %v4985, %v4985
      %v4994 = vpack.c.b16 %v4986, %v4986
      %v4995 = vpack.c.b16 %v4987, %v4987
      %v4996 = vpack.c.b16 %v4988, %v4988
      %v4997 = vpack.c.b16 %v4989, %v4989
      %5006 = vst [vmem:[#allocation2 + $0x4] sm:$0xf] %v4990
      %5007 = vst [vmem:[#allocation2 + $0x28] sm:$0xf] %v4991
      %5008 = vst [vmem:[#allocation2 + $0x4c] sm:$0xf] %v4992
      %5009 = vst [vmem:[#allocation2 + $0x70] sm:$0xf] %v4993
      %5010 = vst [vmem:[#allocation2 + $0x94] sm:$0xf] %v4994
      %5011 = vst [vmem:[#allocation2 + $0xb8] sm:$0xf] %v4995
      %5012 = vst [vmem:[#allocation2 + $0xdc] sm:$0xf] %v4996
      %5013 = vst [vmem:[#allocation2 + $0x100] sm:$0xf] %v4997
      %v5014 = vld [vmem:[#allocation4 + $0x2] sm:$0xff]
      %v5015 = vld [vmem:[#allocation4 + $0x12] sm:$0xff]
      %v5016 = vld [vmem:[#allocation4 + $0x22] sm:$0xff]
      %v5017 = vld [vmem:[#allocation4 + $0x32] sm:$0xff]
      %v5018 = vld [vmem:[#allocation4 + $0x42] sm:$0xff]
      %v5019 = vld [vmem:[#allocation4 + $0x52] sm:$0xff]
      %v5020 = vld [vmem:[#allocation4 + $0x62] sm:$0xff]
      %v5021 = vld [vmem:[#allocation4 + $0x72] sm:$0xff]
      %v5022 = vpack.c.bf16 %v5015, %v5014
      %v5023 = vpack.c.bf16 %v5017, %v5016
      %v5024 = vpack.c.bf16 %v5019, %v5018
      %v5025 = vpack.c.bf16 %v5021, %v5020
      %v5030 = vunpack.c.l.b16 %v5022
      %v5031 = vunpack.c.h.b16 %v5022
      %v5032 = vunpack.c.l.b16 %v5023
      %v5033 = vunpack.c.h.b16 %v5023
      %v5034 = vunpack.c.l.b16 %v5024
      %v5035 = vunpack.c.h.b16 %v5024
      %v5036 = vunpack.c.l.b16 %v5025
      %v5037 = vunpack.c.h.b16 %v5025
      %v5038 = vpack.c.b16 %v5030, %v5030
      %v5039 = vpack.c.b16 %v5031, %v5031
      %v5040 = vpack.c.b16 %v5032, %v5032
      %v5041 = vpack.c.b16 %v5033, %v5033
      %v5042 = vpack.c.b16 %v5034, %v5034
      %v5043 = vpack.c.b16 %v5035, %v5035
      %v5044 = vpack.c.b16 %v5036, %v5036
      %v5045 = vpack.c.b16 %v5037, %v5037
      %5054 = vst [vmem:[#allocation2 + $0x8] sm:$0xf] %v5038
      %5055 = vst [vmem:[#allocation2 + $0x2c] sm:$0xf] %v5039
      %5056 = vst [vmem:[#allocation2 + $0x50] sm:$0xf] %v5040
      %5057 = vst [vmem:[#allocation2 + $0x74] sm:$0xf] %v5041
      %5058 = vst [vmem:[#allocation2 + $0x98] sm:$0xf] %v5042
      %5059 = vst [vmem:[#allocation2 + $0xbc] sm:$0xf] %v5043
      %5060 = vst [vmem:[#allocation2 + $0xe0] sm:$0xf] %v5044
      %5061 = vst [vmem:[#allocation2 + $0x104] sm:$0xf] %v5045
      %v5062 = vld [vmem:[%s4909] sm:$0xff]
      %v5063 = vld [vmem:[%s4909 + $0x10] sm:$0xff]
      %v5064 = vld [vmem:[%s4909 + $0x20] sm:$0xff]
      %v5065 = vld [vmem:[%s4909 + $0x30] sm:$0xff]
      %v5066 = vld [vmem:[%s4909 + $0x40] sm:$0xff]
      %v5067 = vld [vmem:[%s4909 + $0x50] sm:$0xff]
      %v5068 = vld [vmem:[%s4909 + $0x60] sm:$0xff]
      %v5069 = vld [vmem:[%s4909 + $0x70] sm:$0xff]
      %v5070 = vpack.c.bf16 %v5063, %v5062
      %v5071 = vpack.c.bf16 %v5065, %v5064
      %v5072 = vpack.c.bf16 %v5067, %v5066
      %v5073 = vpack.c.bf16 %v5069, %v5068
      %v5078 = vunpack.c.l.b16 %v5070
      %v5079 = vunpack.c.h.b16 %v5070
      %v5080 = vunpack.c.l.b16 %v5071
      %v5081 = vunpack.c.h.b16 %v5071
      %v5082 = vunpack.c.l.b16 %v5072
      %v5083 = vunpack.c.h.b16 %v5072
      %v5084 = vunpack.c.l.b16 %v5073
      %v5085 = vunpack.c.h.b16 %v5073
      %v5086 = vpack.c.b16 %v5078, %v5078
      %v5087 = vpack.c.b16 %v5079, %v5079
      %v5088 = vpack.c.b16 %v5080, %v5080
      %v5089 = vpack.c.b16 %v5081, %v5081
      %v5090 = vpack.c.b16 %v5082, %v5082
      %v5091 = vpack.c.b16 %v5083, %v5083
      %v5092 = vpack.c.b16 %v5084, %v5084
      %v5093 = vpack.c.b16 %v5085, %v5085
      %5102 = vst [vmem:[#allocation2 + $0xc] sm:$0xf] %v5086
      %5103 = vst [vmem:[#allocation2 + $0x30] sm:$0xf] %v5087
      %5104 = vst [vmem:[#allocation2 + $0x54] sm:$0xf] %v5088
      %5105 = vst [vmem:[#allocation2 + $0x78] sm:$0xf] %v5089
      %5106 = vst [vmem:[#allocation2 + $0x9c] sm:$0xf] %v5090
      %5107 = vst [vmem:[#allocation2 + $0xc0] sm:$0xf] %v5091
      %5108 = vst [vmem:[#allocation2 + $0xe4] sm:$0xf] %v5092
      %5109 = vst [vmem:[#allocation2 + $0x108] sm:$0xf] %v5093
      %v5110 = vld [vmem:[%s4909 + $0x1] sm:$0xff]
      %v5111 = vld [vmem:[%s4909 + $0x11] sm:$0xff]
      %v5112 = vld [vmem:[%s4909 + $0x21] sm:$0xff]
      %v5113 = vld [vmem:[%s4909 + $0x31] sm:$0xff]
      %v5114 = vld [vmem:[%s4909 + $0x41] sm:$0xff]
      %v5115 = vld [vmem:[%s4909 + $0x51] sm:$0xff]
      %v5116 = vld [vmem:[%s4909 + $0x61] sm:$0xff]
      %v5117 = vld [vmem:[%s4909 + $0x71] sm:$0xff]
      %v5118 = vpack.c.bf16 %v5111, %v5110
      %v5119 = vpack.c.bf16 %v5113, %v5112
      %v5120 = vpack.c.bf16 %v5115, %v5114
      %v5121 = vpack.c.bf16 %v5117, %v5116
      %v5126 = vunpack.c.l.b16 %v5118
      %v5127 = vunpack.c.h.b16 %v5118
      %v5128 = vunpack.c.l.b16 %v5119
      %v5129 = vunpack.c.h.b16 %v5119
      %v5130 = vunpack.c.l.b16 %v5120
      %v5131 = vunpack.c.h.b16 %v5120
      %v5132 = vunpack.c.l.b16 %v5121
      %v5133 = vunpack.c.h.b16 %v5121
      %v5134 = vpack.c.b16 %v5126, %v5126
      %v5135 = vpack.c.b16 %v5127, %v5127
      %v5136 = vpack.c.b16 %v5128, %v5128
      %v5137 = vpack.c.b16 %v5129, %v5129
      %v5138 = vpack.c.b16 %v5130, %v5130
      %v5139 = vpack.c.b16 %v5131, %v5131
      %v5140 = vpack.c.b16 %v5132, %v5132
      %v5141 = vpack.c.b16 %v5133, %v5133
      %5150 = vst [vmem:[#allocation2 + $0x10] sm:$0xf] %v5134
      %5151 = vst [vmem:[#allocation2 + $0x34] sm:$0xf] %v5135
      %5152 = vst [vmem:[#allocation2 + $0x58] sm:$0xf] %v5136
      %5153 = vst [vmem:[#allocation2 + $0x7c] sm:$0xf] %v5137
      %5154 = vst [vmem:[#allocation2 + $0xa0] sm:$0xf] %v5138
      %5155 = vst [vmem:[#allocation2 + $0xc4] sm:$0xf] %v5139
      %5156 = vst [vmem:[#allocation2 + $0xe8] sm:$0xf] %v5140
      %5157 = vst [vmem:[#allocation2 + $0x10c] sm:$0xf] %v5141
      %v5158 = vld [vmem:[%s4909 + $0x2] sm:$0xff]
      %v5159 = vld [vmem:[%s4909 + $0x12] sm:$0xff]
      %v5160 = vld [vmem:[%s4909 + $0x22] sm:$0xff]
      %v5161 = vld [vmem:[%s4909 + $0x32] sm:$0xff]
      %v5162 = vld [vmem:[%s4909 + $0x42] sm:$0xff]
      %v5163 = vld [vmem:[%s4909 + $0x52] sm:$0xff]
      %v5164 = vld [vmem:[%s4909 + $0x62] sm:$0xff]
      %v5165 = vld [vmem:[%s4909 + $0x72] sm:$0xff]
      %v5166 = vpack.c.bf16 %v5159, %v5158
      %v5167 = vpack.c.bf16 %v5161, %v5160
      %v5168 = vpack.c.bf16 %v5163, %v5162
      %v5169 = vpack.c.bf16 %v5165, %v5164
      %v5174 = vunpack.c.l.b16 %v5166
      %v5175 = vunpack.c.h.b16 %v5166
      %v5176 = vunpack.c.l.b16 %v5167
      %v5177 = vunpack.c.h.b16 %v5167
      %v5178 = vunpack.c.l.b16 %v5168
      %v5179 = vunpack.c.h.b16 %v5168
      %v5180 = vunpack.c.l.b16 %v5169
      %v5181 = vunpack.c.h.b16 %v5169
      %v5182 = vpack.c.b16 %v5174, %v5174
      %v5183 = vpack.c.b16 %v5175, %v5175
      %v5184 = vpack.c.b16 %v5176, %v5176
      %v5185 = vpack.c.b16 %v5177, %v5177
      %v5186 = vpack.c.b16 %v5178, %v5178
      %v5187 = vpack.c.b16 %v5179, %v5179
      %v5188 = vpack.c.b16 %v5180, %v5180
      %v5189 = vpack.c.b16 %v5181, %v5181
      %5198 = vst [vmem:[#allocation2 + $0x14] sm:$0xf] %v5182
      %5199 = vst [vmem:[#allocation2 + $0x38] sm:$0xf] %v5183
      %5200 = vst [vmem:[#allocation2 + $0x5c] sm:$0xf] %v5184
      %5201 = vst [vmem:[#allocation2 + $0x80] sm:$0xf] %v5185
      %5202 = vst [vmem:[#allocation2 + $0xa4] sm:$0xf] %v5186
      %5203 = vst [vmem:[#allocation2 + $0xc8] sm:$0xf] %v5187
      %5204 = vst [vmem:[#allocation2 + $0xec] sm:$0xf] %v5188
      %5205 = vst [vmem:[#allocation2 + $0x110] sm:$0xf] %v5189
      %s5206 = scalar_lea.vmem [#allocation4], 32
      %v5207 = vld [vmem:[%s5206] sm:$0xff]
      %v5208 = vld [vmem:[%s5206 + $0x10] sm:$0xff]
      %v5209 = vld [vmem:[%s5206 + $0x20] sm:$0xff]
      %v5210 = vld [vmem:[%s5206 + $0x30] sm:$0xff]
      %v5211 = vld [vmem:[%s5206 + $0x40] sm:$0xff]
      %v5212 = vld [vmem:[%s5206 + $0x50] sm:$0xff]
      %v5213 = vld [vmem:[%s5206 + $0x60] sm:$0xff]
      %v5214 = vld [vmem:[%s5206 + $0x70] sm:$0xff]
      %v5215 = vpack.c.bf16 %v5208, %v5207
      %v5216 = vpack.c.bf16 %v5210, %v5209
      %v5217 = vpack.c.bf16 %v5212, %v5211
      %v5218 = vpack.c.bf16 %v5214, %v5213
      %v5223 = vunpack.c.l.b16 %v5215
      %v5224 = vunpack.c.h.b16 %v5215
      %v5225 = vunpack.c.l.b16 %v5216
      %v5226 = vunpack.c.h.b16 %v5216
      %v5227 = vunpack.c.l.b16 %v5217
      %v5228 = vunpack.c.h.b16 %v5217
      %v5229 = vunpack.c.l.b16 %v5218
      %v5230 = vunpack.c.h.b16 %v5218
      %v5231 = vpack.c.b16 %v5223, %v5223
      %v5232 = vpack.c.b16 %v5224, %v5224
      %v5233 = vpack.c.b16 %v5225, %v5225
      %v5234 = vpack.c.b16 %v5226, %v5226
      %v5235 = vpack.c.b16 %v5227, %v5227
      %v5236 = vpack.c.b16 %v5228, %v5228
      %v5237 = vpack.c.b16 %v5229, %v5229
      %v5238 = vpack.c.b16 %v5230, %v5230
      %5247 = vst [vmem:[#allocation2 + $0x18] sm:$0xf] %v5231
      %5248 = vst [vmem:[#allocation2 + $0x3c] sm:$0xf] %v5232
      %5249 = vst [vmem:[#allocation2 + $0x60] sm:$0xf] %v5233
      %5250 = vst [vmem:[#allocation2 + $0x84] sm:$0xf] %v5234
      %5251 = vst [vmem:[#allocation2 + $0xa8] sm:$0xf] %v5235
      %5252 = vst [vmem:[#allocation2 + $0xcc] sm:$0xf] %v5236
      %5253 = vst [vmem:[#allocation2 + $0xf0] sm:$0xf] %v5237
      %5254 = vst [vmem:[#allocation2 + $0x114] sm:$0xf] %v5238
      %v5255 = vld [vmem:[%s5206 + $0x1] sm:$0xff]
      %v5256 = vld [vmem:[%s5206 + $0x11] sm:$0xff]
      %v5257 = vld [vmem:[%s5206 + $0x21] sm:$0xff]
      %v5258 = vld [vmem:[%s5206 + $0x31] sm:$0xff]
      %v5259 = vld [vmem:[%s5206 + $0x41] sm:$0xff]
      %v5260 = vld [vmem:[%s5206 + $0x51] sm:$0xff]
      %v5261 = vld [vmem:[%s5206 + $0x61] sm:$0xff]
      %v5262 = vld [vmem:[%s5206 + $0x71] sm:$0xff]
      %v5263 = vpack.c.bf16 %v5256, %v5255
      %v5264 = vpack.c.bf16 %v5258, %v5257
      %v5265 = vpack.c.bf16 %v5260, %v5259
      %v5266 = vpack.c.bf16 %v5262, %v5261
      %v5271 = vunpack.c.l.b16 %v5263
      %v5272 = vunpack.c.h.b16 %v5263
      %v5273 = vunpack.c.l.b16 %v5264
      %v5274 = vunpack.c.h.b16 %v5264
      %v5275 = vunpack.c.l.b16 %v5265
      %v5276 = vunpack.c.h.b16 %v5265
      %v5277 = vunpack.c.l.b16 %v5266
      %v5278 = vunpack.c.h.b16 %v5266
      %v5279 = vpack.c.b16 %v5271, %v5271
      %v5280 = vpack.c.b16 %v5272, %v5272
      %v5281 = vpack.c.b16 %v5273, %v5273
      %v5282 = vpack.c.b16 %v5274, %v5274
      %v5283 = vpack.c.b16 %v5275, %v5275
      %v5284 = vpack.c.b16 %v5276, %v5276
      %v5285 = vpack.c.b16 %v5277, %v5277
      %v5286 = vpack.c.b16 %v5278, %v5278
      %5295 = vst [vmem:[#allocation2 + $0x1c] sm:$0xf] %v5279
      %5296 = vst [vmem:[#allocation2 + $0x40] sm:$0xf] %v5280
      %5297 = vst [vmem:[#allocation2 + $0x64] sm:$0xf] %v5281
      %5298 = vst [vmem:[#allocation2 + $0x88] sm:$0xf] %v5282
      %5299 = vst [vmem:[#allocation2 + $0xac] sm:$0xf] %v5283
      %5300 = vst [vmem:[#allocation2 + $0xd0] sm:$0xf] %v5284
      %5301 = vst [vmem:[#allocation2 + $0xf4] sm:$0xf] %v5285
      %5302 = vst [vmem:[#allocation2 + $0x118] sm:$0xf] %v5286
      %v5303 = vld [vmem:[%s5206 + $0x2] sm:$0xff]
      %v5304 = vld [vmem:[%s5206 + $0x12] sm:$0xff]
      %v5305 = vld [vmem:[%s5206 + $0x22] sm:$0xff]
      %v5306 = vld [vmem:[%s5206 + $0x32] sm:$0xff]
      %v5307 = vld [vmem:[%s5206 + $0x42] sm:$0xff]
      %v5308 = vld [vmem:[%s5206 + $0x52] sm:$0xff]
      %v5309 = vld [vmem:[%s5206 + $0x62] sm:$0xff]
      %v5310 = vld [vmem:[%s5206 + $0x72] sm:$0xff]
      %v5311 = vpack.c.bf16 %v5304, %v5303
      %v5312 = vpack.c.bf16 %v5306, %v5305
      %v5313 = vpack.c.bf16 %v5308, %v5307
      %v5314 = vpack.c.bf16 %v5310, %v5309
      %v5319 = vunpack.c.l.b16 %v5311
      %v5320 = vunpack.c.h.b16 %v5311
      %v5321 = vunpack.c.l.b16 %v5312
      %v5322 = vunpack.c.h.b16 %v5312
      %v5323 = vunpack.c.l.b16 %v5313
      %v5324 = vunpack.c.h.b16 %v5313
      %v5325 = vunpack.c.l.b16 %v5314
      %v5326 = vunpack.c.h.b16 %v5314
      %v5327 = vpack.c.b16 %v5319, %v5319
      %v5328 = vpack.c.b16 %v5320, %v5320
      %v5329 = vpack.c.b16 %v5321, %v5321
      %v5330 = vpack.c.b16 %v5322, %v5322
      %v5331 = vpack.c.b16 %v5323, %v5323
      %v5332 = vpack.c.b16 %v5324, %v5324
      %v5333 = vpack.c.b16 %v5325, %v5325
      %v5334 = vpack.c.b16 %v5326, %v5326
      %5343 = vst [vmem:[#allocation2 + $0x20] sm:$0xf] %v5327
      %5344 = vst [vmem:[#allocation2 + $0x44] sm:$0xf] %v5328
      %5345 = vst [vmem:[#allocation2 + $0x68] sm:$0xf] %v5329
      %5346 = vst [vmem:[#allocation2 + $0x8c] sm:$0xf] %v5330
      %5347 = vst [vmem:[#allocation2 + $0xb0] sm:$0xf] %v5331
      %5348 = vst [vmem:[#allocation2 + $0xd4] sm:$0xf] %v5332
      %5349 = vst [vmem:[#allocation2 + $0xf8] sm:$0xf] %v5333
      %5350 = vst [vmem:[#allocation2 + $0x11c] sm:$0xf] %v5334
      %v5351 = vld [vmem:[#allocation2] sm:$0xff]
      %v5352 = vld [vmem:[#allocation2 + $0x8] sm:$0xff]
      %v5353 = vld [vmem:[#allocation2 + $0x10] sm:$0xff]
      %v5354 = vld [vmem:[#allocation2 + $0x18] sm:$0xff]
      %v5355 = vld [vmem:[#allocation2 + $0x20] sm:$0xf]
      %v5356 = vld [vmem:[#allocation2 + $0x24] sm:$0xff]
      %v5357 = vld [vmem:[#allocation2 + $0x2c] sm:$0xff]
      %v5358 = vld [vmem:[#allocation2 + $0x34] sm:$0xff]
      %v5359 = vld [vmem:[#allocation2 + $0x3c] sm:$0xff]
      %v5360 = vld [vmem:[#allocation2 + $0x44] sm:$0xf]
      %v5361 = vld [vmem:[#allocation2 + $0x48] sm:$0xff]
      %v5362 = vld [vmem:[#allocation2 + $0x50] sm:$0xff]
      %v5363 = vld [vmem:[#allocation2 + $0x58] sm:$0xff]
      %v5364 = vld [vmem:[#allocation2 + $0x60] sm:$0xff]
      %v5365 = vld [vmem:[#allocation2 + $0x68] sm:$0xf]
      %v5366 = vld [vmem:[#allocation2 + $0x6c] sm:$0xff]
      %v5367 = vld [vmem:[#allocation2 + $0x74] sm:$0xff]
      %v5368 = vld [vmem:[#allocation2 + $0x7c] sm:$0xff]
      %v5369 = vld [vmem:[#allocation2 + $0x84] sm:$0xff]
      %v5370 = vld [vmem:[#allocation2 + $0x8c] sm:$0xf]
      %v5371 = vld [vmem:[#allocation2 + $0x90] sm:$0xff]
      %v5372 = vld [vmem:[#allocation2 + $0x98] sm:$0xff]
      %v5373 = vld [vmem:[#allocation2 + $0xa0] sm:$0xff]
      %v5374 = vld [vmem:[#allocation2 + $0xa8] sm:$0xff]
      %v5375 = vld [vmem:[#allocation2 + $0xb0] sm:$0xf]
      %v5376 = vld [vmem:[#allocation2 + $0xb4] sm:$0xff]
      %v5377 = vld [vmem:[#allocation2 + $0xbc] sm:$0xff]
      %v5378 = vld [vmem:[#allocation2 + $0xc4] sm:$0xff]
      %v5379 = vld [vmem:[#allocation2 + $0xcc] sm:$0xff]
      %v5380 = vld [vmem:[#allocation2 + $0xd4] sm:$0xf]
      %v5381 = vld [vmem:[#allocation2 + $0xd8] sm:$0xff]
      %v5382 = vld [vmem:[#allocation2 + $0xe0] sm:$0xff]
      %v5383 = vld [vmem:[#allocation2 + $0xe8] sm:$0xff]
      %v5384 = vld [vmem:[#allocation2 + $0xf0] sm:$0xff]
      %v5385 = vld [vmem:[#allocation2 + $0xf8] sm:$0xf]
      %v5386 = vld [vmem:[#allocation2 + $0xfc] sm:$0xff]
      %v5387 = vld [vmem:[#allocation2 + $0x104] sm:$0xff]
      %v5388 = vld [vmem:[#allocation2 + $0x10c] sm:$0xff]
      %v5389 = vld [vmem:[#allocation2 + $0x114] sm:$0xff]
      %v5390 = vld [vmem:[#allocation2 + $0x11c] sm:$0xf]
      %v5391 = vld [vmem:[%s3] sm:$0xf]
      %v5392 = vld [vmem:[%s3 + $0x4] sm:$0xf]
      %v5393 = vld [vmem:[%s3 + $0x8] sm:$0xf]
      %v5394 = vld [vmem:[%s3 + $0xc] sm:$0xf]
      %v5395 = vld [vmem:[%s3 + $0x10] sm:$0xf]
      %v5396 = vld [vmem:[%s3 + $0x14] sm:$0xf]
      %v5397 = vld [vmem:[%s3 + $0x18] sm:$0xf]
      %v5398 = vld [vmem:[%s3 + $0x1c] sm:$0xf]
      %v5399 = vld [vmem:[%s3 + $0x20] sm:$0xf]
      %v5400 = vld [vmem:[%s3 + $0x24] sm:$0xf]
      %v5401 = vld [vmem:[%s3 + $0x28] sm:$0xf]
      %v5402 = vld [vmem:[%s3 + $0x2c] sm:$0xf]
      %v5403 = vld [vmem:[%s3 + $0x30] sm:$0xf]
      %v5404 = vld [vmem:[%s3 + $0x34] sm:$0xf]
      %v5405 = vld [vmem:[%s3 + $0x38] sm:$0xf]
      %v5406 = vld [vmem:[%s3 + $0x3c] sm:$0xf]
      %v5407 = vld [vmem:[%s3 + $0x40] sm:$0xf]
      %v5408 = vld [vmem:[%s3 + $0x44] sm:$0xf]
      %v5409 = vld [vmem:[%s3 + $0x48] sm:$0xf]
      %v5410 = vld [vmem:[%s3 + $0x4c] sm:$0xf]
      %v5411 = vld [vmem:[%s3 + $0x50] sm:$0xf]
      %v5412 = vld [vmem:[%s3 + $0x54] sm:$0xf]
      %v5413 = vld [vmem:[%s3 + $0x58] sm:$0xf]
      %v5414 = vld [vmem:[%s3 + $0x5c] sm:$0xf]
      %v5415 = vld [vmem:[%s3 + $0x60] sm:$0xf]
      %v5416 = vld [vmem:[%s3 + $0x64] sm:$0xf]
      %v5417 = vld [vmem:[%s3 + $0x68] sm:$0xf]
      %v5418 = vld [vmem:[%s3 + $0x6c] sm:$0xf]
      %v5419 = vld [vmem:[%s3 + $0x70] sm:$0xf]
      %v5420 = vld [vmem:[%s3 + $0x74] sm:$0xf]
      %v5421 = vld [vmem:[%s3 + $0x78] sm:$0xf]
      %v5422 = vld [vmem:[%s3 + $0x7c] sm:$0xf]
      %v5423 = vld [vmem:[%s3 + $0x80] sm:$0xf]
      %v5424 = vld [vmem:[%s3 + $0x84] sm:$0xf]
      %v5425 = vld [vmem:[%s3 + $0x88] sm:$0xf]
      %v5426 = vld [vmem:[%s3 + $0x8c] sm:$0xf]
      %v5427 = vld [vmem:[%s3 + $0x90] sm:$0xf]
      %v5428 = vld [vmem:[%s3 + $0x94] sm:$0xf]
      %v5429 = vld [vmem:[%s3 + $0x98] sm:$0xf]
      %v5430 = vld [vmem:[%s3 + $0x9c] sm:$0xf]
      %v5431 = vld [vmem:[%s3 + $0xa0] sm:$0xf]
      %v5432 = vld [vmem:[%s3 + $0xa4] sm:$0xf]
      %v5433 = vld [vmem:[%s3 + $0xa8] sm:$0xf]
      %v5434 = vld [vmem:[%s3 + $0xac] sm:$0xf]
      %v5435 = vld [vmem:[%s3 + $0xb0] sm:$0xf]
      %v5436 = vld [vmem:[%s3 + $0xb4] sm:$0xf]
      %v5437 = vld [vmem:[%s3 + $0xb8] sm:$0xf]
      %v5438 = vld [vmem:[%s3 + $0xbc] sm:$0xf]
      %v5439 = vld [vmem:[%s3 + $0xc0] sm:$0xf]
      %v5440 = vld [vmem:[%s3 + $0xc4] sm:$0xf]
      %v5441 = vld [vmem:[%s3 + $0xc8] sm:$0xf]
      %v5442 = vld [vmem:[%s3 + $0xcc] sm:$0xf]
      %v5443 = vld [vmem:[%s3 + $0xd0] sm:$0xf]
      %v5444 = vld [vmem:[%s3 + $0xd4] sm:$0xf]
      %v5445 = vld [vmem:[%s3 + $0xd8] sm:$0xf]
      %v5446 = vld [vmem:[%s3 + $0xdc] sm:$0xf]
      %v5447 = vld [vmem:[%s3 + $0xe0] sm:$0xf]
      %v5448 = vld [vmem:[%s3 + $0xe4] sm:$0xf]
      %v5449 = vld [vmem:[%s3 + $0xe8] sm:$0xf]
      %v5450 = vld [vmem:[%s3 + $0xec] sm:$0xf]
      %v5451 = vld [vmem:[%s3 + $0xf0] sm:$0xf]
      %v5452 = vld [vmem:[%s3 + $0xf4] sm:$0xf]
      %v5453 = vld [vmem:[%s3 + $0xf8] sm:$0xf]
      %v5454 = vld [vmem:[%s3 + $0xfc] sm:$0xf]
      %v5455 = vld [vmem:[%s3 + $0x100] sm:$0xf]
      %v5456 = vld [vmem:[%s3 + $0x104] sm:$0xf]
      %v5457 = vld [vmem:[%s3 + $0x108] sm:$0xf]
      %v5458 = vld [vmem:[%s3 + $0x10c] sm:$0xf]
      %v5459 = vld [vmem:[%s3 + $0x110] sm:$0xf]
      %v5460 = vld [vmem:[%s3 + $0x114] sm:$0xf]
      %v5461 = vld [vmem:[%s3 + $0x118] sm:$0xf]
      %v5462 = vld [vmem:[%s3 + $0x11c] sm:$0xf]
      %v5463 = vld [vmem:[%s3 + $0x120] sm:$0xf]
      %v5464 = vld [vmem:[%s3 + $0x124] sm:$0xf]
      %v5465 = vld [vmem:[%s3 + $0x128] sm:$0xf]
      %v5466 = vld [vmem:[%s3 + $0x12c] sm:$0xf]
      %v5467 = vld [vmem:[%s3 + $0x130] sm:$0xf]
      %v5468 = vld [vmem:[%s3 + $0x134] sm:$0xf]
      %v5469 = vld [vmem:[%s3 + $0x138] sm:$0xf]
      %v5470 = vld [vmem:[%s3 + $0x13c] sm:$0xf]
      %v5471 = vld [vmem:[%s3 + $0x140] sm:$0xf]
      %v5472 = vld [vmem:[%s3 + $0x144] sm:$0xf]
      %v5473 = vld [vmem:[%s3 + $0x148] sm:$0xf]
      %v5474 = vld [vmem:[%s3 + $0x14c] sm:$0xf]
      %v5475 = vld [vmem:[%s3 + $0x150] sm:$0xf]
      %v5476 = vld [vmem:[%s3 + $0x154] sm:$0xf]
      %v5477 = vld [vmem:[%s3 + $0x158] sm:$0xf]
      %v5478 = vld [vmem:[%s3 + $0x15c] sm:$0xf]
      %v5479 = vld [vmem:[%s3 + $0x160] sm:$0xf]
      %v5480 = vld [vmem:[%s3 + $0x164] sm:$0xf]
      %v5481 = vld [vmem:[%s3 + $0x168] sm:$0xf]
      %v5482 = vld [vmem:[%s3 + $0x16c] sm:$0xf]
      %v5483 = vld [vmem:[%s3 + $0x170] sm:$0xf]
      %v5484 = vld [vmem:[%s3 + $0x174] sm:$0xf]
      %v5485 = vld [vmem:[%s3 + $0x178] sm:$0xf]
      %v5486 = vld [vmem:[%s3 + $0x17c] sm:$0xf]
      %v5487 = vld [vmem:[%s3 + $0x180] sm:$0xf]
      %v5488 = vld [vmem:[%s3 + $0x184] sm:$0xf]
      %v5489 = vld [vmem:[%s3 + $0x188] sm:$0xf]
      %v5490 = vld [vmem:[%s3 + $0x18c] sm:$0xf]
      %v5491 = vld [vmem:[%s3 + $0x190] sm:$0xf]
      %v5492 = vld [vmem:[%s3 + $0x194] sm:$0xf]
      %v5493 = vld [vmem:[%s3 + $0x198] sm:$0xf]
      %v5494 = vld [vmem:[%s3 + $0x19c] sm:$0xf]
      %v5495 = vld [vmem:[%s3 + $0x1a0] sm:$0xf]
      %v5496 = vld [vmem:[%s3 + $0x1a4] sm:$0xf]
      %v5497 = vld [vmem:[%s3 + $0x1a8] sm:$0xf]
      %v5498 = vld [vmem:[%s3 + $0x1ac] sm:$0xf]
      %v5499 = vld [vmem:[%s3 + $0x1b0] sm:$0xf]
      %v5500 = vld [vmem:[%s3 + $0x1b4] sm:$0xf]
      %v5501 = vld [vmem:[%s3 + $0x1b8] sm:$0xf]
      %v5502 = vld [vmem:[%s3 + $0x1bc] sm:$0xf]
      %v5503 = vld [vmem:[%s3 + $0x1c0] sm:$0xf]
      %v5504 = vld [vmem:[%s3 + $0x1c4] sm:$0xf]
      %v5505 = vld [vmem:[%s3 + $0x1c8] sm:$0xf]
      %v5506 = vld [vmem:[%s3 + $0x1cc] sm:$0xf]
      %v5507 = vld [vmem:[%s3 + $0x1d0] sm:$0xf]
      %v5508 = vld [vmem:[%s3 + $0x1d4] sm:$0xf]
      %v5509 = vld [vmem:[%s3 + $0x1d8] sm:$0xf]
      %v5510 = vld [vmem:[%s3 + $0x1dc] sm:$0xf]
      %v5511 = vld [vmem:[%s3 + $0x1e0] sm:$0xf]
      %v5512 = vld [vmem:[%s3 + $0x1e4] sm:$0xf]
      %v5513 = vld [vmem:[%s3 + $0x1e8] sm:$0xf]
      %v5514 = vld [vmem:[%s3 + $0x1ec] sm:$0xf]
      %v5515 = vld [vmem:[%s3 + $0x1f0] sm:$0xf]
      %v5516 = vld [vmem:[%s3 + $0x1f4] sm:$0xf]
      %v5517 = vld [vmem:[%s3 + $0x1f8] sm:$0xf]
      %v5518 = vld [vmem:[%s3 + $0x1fc] sm:$0xf]
      %v5519 = vld [vmem:[%s3 + $0x200] sm:$0xf]
      %v5520 = vld [vmem:[%s3 + $0x204] sm:$0xf]
      %v5521 = vld [vmem:[%s3 + $0x208] sm:$0xf]
      %v5522 = vld [vmem:[%s3 + $0x20c] sm:$0xf]
      %v5523 = vld [vmem:[%s3 + $0x210] sm:$0xf]
      %v5524 = vld [vmem:[%s3 + $0x214] sm:$0xf]
      %v5525 = vld [vmem:[%s3 + $0x218] sm:$0xf]
      %v5526 = vld [vmem:[%s3 + $0x21c] sm:$0xf]
      %v5527 = vld [vmem:[%s3 + $0x220] sm:$0xf]
      %v5528 = vld [vmem:[%s3 + $0x224] sm:$0xf]
      %v5529 = vld [vmem:[%s3 + $0x228] sm:$0xf]
      %v5530 = vld [vmem:[%s3 + $0x22c] sm:$0xf]
      %v5531 = vld [vmem:[%s3 + $0x230] sm:$0xf]
      %v5532 = vld [vmem:[%s3 + $0x234] sm:$0xf]
      %v5533 = vld [vmem:[%s3 + $0x238] sm:$0xf]
      %v5534 = vld [vmem:[%s3 + $0x23c] sm:$0xf]
      %v5535 = vld [vmem:[%s4] sm:$0x1]
      %v5537 = vlaneseq
      %v5538 = vshrl.u32 %v5537, 7
      %v5539 = vsub.s32 0, %v5538
      %v5540 = vrot.slane %v5535, %v5539
      %v5582 = vunpack.c.l.b16 %v5351
      %v5583 = vunpack.c.h.b16 %v5351
      %v5584 = vunpack.c.l.b16 %v5352
      %v5585 = vunpack.c.h.b16 %v5352
      %v5586 = vunpack.c.l.b16 %v5353
      %v5587 = vunpack.c.h.b16 %v5353
      %v5588 = vunpack.c.l.b16 %v5354
      %v5589 = vunpack.c.h.b16 %v5354
      %v5590 = vunpack.c.l.b16 %v5355
      %v5591 = vunpack.c.l.b16 %v5356
      %v5592 = vunpack.c.h.b16 %v5356
      %v5593 = vunpack.c.l.b16 %v5357
      %v5594 = vunpack.c.h.b16 %v5357
      %v5595 = vunpack.c.l.b16 %v5358
      %v5596 = vunpack.c.h.b16 %v5358
      %v5597 = vunpack.c.l.b16 %v5359
      %v5598 = vunpack.c.h.b16 %v5359
      %v5599 = vunpack.c.l.b16 %v5360
      %v5600 = vunpack.c.l.b16 %v5361
      %v5601 = vunpack.c.h.b16 %v5361
      %v5602 = vunpack.c.l.b16 %v5362
      %v5603 = vunpack.c.h.b16 %v5362
      %v5604 = vunpack.c.l.b16 %v5363
      %v5605 = vunpack.c.h.b16 %v5363
      %v5606 = vunpack.c.l.b16 %v5364
      %v5607 = vunpack.c.h.b16 %v5364
      %v5608 = vunpack.c.l.b16 %v5365
      %v5609 = vunpack.c.l.b16 %v5366
      %v5610 = vunpack.c.h.b16 %v5366
      %v5611 = vunpack.c.l.b16 %v5367
      %v5612 = vunpack.c.h.b16 %v5367
      %v5613 = vunpack.c.l.b16 %v5368
      %v5614 = vunpack.c.h.b16 %v5368
      %v5615 = vunpack.c.l.b16 %v5369
      %v5616 = vunpack.c.h.b16 %v5369
      %v5617 = vunpack.c.l.b16 %v5370
      %v5618 = vunpack.c.l.b16 %v5371
      %v5619 = vunpack.c.h.b16 %v5371
      %v5620 = vunpack.c.l.b16 %v5372
      %v5621 = vunpack.c.h.b16 %v5372
      %v5622 = vunpack.c.l.b16 %v5373
      %v5623 = vunpack.c.h.b16 %v5373
      %v5624 = vunpack.c.l.b16 %v5374
      %v5625 = vunpack.c.h.b16 %v5374
      %v5626 = vunpack.c.l.b16 %v5375
      %v5627 = vunpack.c.l.b16 %v5376
      %v5628 = vunpack.c.h.b16 %v5376
      %v5629 = vunpack.c.l.b16 %v5377
      %v5630 = vunpack.c.h.b16 %v5377
      %v5631 = vunpack.c.l.b16 %v5378
      %v5632 = vunpack.c.h.b16 %v5378
      %v5633 = vunpack.c.l.b16 %v5379
      %v5634 = vunpack.c.h.b16 %v5379
      %v5635 = vunpack.c.l.b16 %v5380
      %v5636 = vunpack.c.l.b16 %v5381
      %v5637 = vunpack.c.h.b16 %v5381
      %v5638 = vunpack.c.l.b16 %v5382
      %v5639 = vunpack.c.h.b16 %v5382
      %v5640 = vunpack.c.l.b16 %v5383
      %v5641 = vunpack.c.h.b16 %v5383
      %v5642 = vunpack.c.l.b16 %v5384
      %v5643 = vunpack.c.h.b16 %v5384
      %v5644 = vunpack.c.l.b16 %v5385
      %v5645 = vunpack.c.l.b16 %v5386
      %v5646 = vunpack.c.h.b16 %v5386
      %v5647 = vunpack.c.l.b16 %v5387
      %v5648 = vunpack.c.h.b16 %v5387
      %v5649 = vunpack.c.l.b16 %v5388
      %v5650 = vunpack.c.h.b16 %v5388
      %v5651 = vunpack.c.l.b16 %v5389
      %v5652 = vunpack.c.h.b16 %v5389
      %v5653 = vunpack.c.l.b16 %v5390
      %v5654 = vpack.c.b16 %v5591, %v5582
      %v5655 = vpack.c.b16 %v5592, %v5583
      %v5656 = vpack.c.b16 %v5593, %v5584
      %v5657 = vpack.c.b16 %v5594, %v5585
      %v5658 = vpack.c.b16 %v5595, %v5586
      %v5659 = vpack.c.b16 %v5596, %v5587
      %v5660 = vpack.c.b16 %v5597, %v5588
      %v5661 = vpack.c.b16 %v5598, %v5589
      %v5662 = vpack.c.b16 %v5599, %v5590
      %v5663 = vpack.c.b16 %v5609, %v5600
      %v5664 = vpack.c.b16 %v5610, %v5601
      %v5665 = vpack.c.b16 %v5611, %v5602
      %v5666 = vpack.c.b16 %v5612, %v5603
      %v5667 = vpack.c.b16 %v5613, %v5604
      %v5668 = vpack.c.b16 %v5614, %v5605
      %v5669 = vpack.c.b16 %v5615, %v5606
      %v5670 = vpack.c.b16 %v5616, %v5607
      %v5671 = vpack.c.b16 %v5617, %v5608
      %v5672 = vpack.c.b16 %v5627, %v5618
      %v5673 = vpack.c.b16 %v5628, %v5619
      %v5674 = vpack.c.b16 %v5629, %v5620
      %v5675 = vpack.c.b16 %v5630, %v5621
      %v5676 = vpack.c.b16 %v5631, %v5622
      %v5677 = vpack.c.b16 %v5632, %v5623
      %v5678 = vpack.c.b16 %v5633, %v5624
      %v5679 = vpack.c.b16 %v5634, %v5625
      %v5680 = vpack.c.b16 %v5635, %v5626
      %v5681 = vpack.c.b16 %v5645, %v5636
      %v5682 = vpack.c.b16 %v5646, %v5637
      %v5683 = vpack.c.b16 %v5647, %v5638
      %v5684 = vpack.c.b16 %v5648, %v5639
      %v5685 = vpack.c.b16 %v5649, %v5640
      %v5686 = vpack.c.b16 %v5650, %v5641
      %v5687 = vpack.c.b16 %v5651, %v5642
      %v5688 = vpack.c.b16 %v5652, %v5643
      %v5689 = vpack.c.b16 %v5653, %v5644
      %v5870 = vunpack.c.l.b16 %v5391
      %v5871 = vunpack.c.l.b16 %v5392
      %v5872 = vunpack.c.l.b16 %v5393
      %v5873 = vunpack.c.l.b16 %v5394
      %v5874 = vunpack.c.l.b16 %v5395
      %v5875 = vunpack.c.l.b16 %v5396
      %v5876 = vunpack.c.l.b16 %v5397
      %v5877 = vunpack.c.l.b16 %v5398
      %v5878 = vunpack.c.l.b16 %v5399
      %v5879 = vunpack.c.l.b16 %v5400
      %v5880 = vunpack.c.l.b16 %v5401
      %v5881 = vunpack.c.l.b16 %v5402
      %v5882 = vunpack.c.l.b16 %v5403
      %v5883 = vunpack.c.l.b16 %v5404
      %v5884 = vunpack.c.l.b16 %v5405
      %v5885 = vunpack.c.l.b16 %v5406
      %v5886 = vunpack.c.l.b16 %v5407
      %v5887 = vunpack.c.l.b16 %v5408
      %v5888 = vunpack.c.l.b16 %v5409
      %v5889 = vunpack.c.l.b16 %v5410
      %v5890 = vunpack.c.l.b16 %v5411
      %v5891 = vunpack.c.l.b16 %v5412
      %v5892 = vunpack.c.l.b16 %v5413
      %v5893 = vunpack.c.l.b16 %v5414
      %v5894 = vunpack.c.l.b16 %v5415
      %v5895 = vunpack.c.l.b16 %v5416
      %v5896 = vunpack.c.l.b16 %v5417
      %v5897 = vunpack.c.l.b16 %v5418
      %v5898 = vunpack.c.l.b16 %v5419
      %v5899 = vunpack.c.l.b16 %v5420
      %v5900 = vunpack.c.l.b16 %v5421
      %v5901 = vunpack.c.l.b16 %v5422
      %v5902 = vunpack.c.l.b16 %v5423
      %v5903 = vunpack.c.l.b16 %v5424
      %v5904 = vunpack.c.l.b16 %v5425
      %v5905 = vunpack.c.l.b16 %v5426
      %v5906 = vunpack.c.l.b16 %v5427
      %v5907 = vunpack.c.l.b16 %v5428
      %v5908 = vunpack.c.l.b16 %v5429
      %v5909 = vunpack.c.l.b16 %v5430
      %v5910 = vunpack.c.l.b16 %v5431
      %v5911 = vunpack.c.l.b16 %v5432
      %v5912 = vunpack.c.l.b16 %v5433
      %v5913 = vunpack.c.l.b16 %v5434
      %v5914 = vunpack.c.l.b16 %v5435
      %v5915 = vunpack.c.l.b16 %v5436
      %v5916 = vunpack.c.l.b16 %v5437
      %v5917 = vunpack.c.l.b16 %v5438
      %v5918 = vunpack.c.l.b16 %v5439
      %v5919 = vunpack.c.l.b16 %v5440
      %v5920 = vunpack.c.l.b16 %v5441
      %v5921 = vunpack.c.l.b16 %v5442
      %v5922 = vunpack.c.l.b16 %v5443
      %v5923 = vunpack.c.l.b16 %v5444
      %v5924 = vunpack.c.l.b16 %v5445
      %v5925 = vunpack.c.l.b16 %v5446
      %v5926 = vunpack.c.l.b16 %v5447
      %v5927 = vunpack.c.l.b16 %v5448
      %v5928 = vunpack.c.l.b16 %v5449
      %v5929 = vunpack.c.l.b16 %v5450
      %v5930 = vunpack.c.l.b16 %v5451
      %v5931 = vunpack.c.l.b16 %v5452
      %v5932 = vunpack.c.l.b16 %v5453
      %v5933 = vunpack.c.l.b16 %v5454
      %v5934 = vunpack.c.l.b16 %v5455
      %v5935 = vunpack.c.l.b16 %v5456
      %v5936 = vunpack.c.l.b16 %v5457
      %v5937 = vunpack.c.l.b16 %v5458
      %v5938 = vunpack.c.l.b16 %v5459
      %v5939 = vunpack.c.l.b16 %v5460
      %v5940 = vunpack.c.l.b16 %v5461
      %v5941 = vunpack.c.l.b16 %v5462
      %v5942 = vunpack.c.l.b16 %v5463
      %v5943 = vunpack.c.l.b16 %v5464
      %v5944 = vunpack.c.l.b16 %v5465
      %v5945 = vunpack.c.l.b16 %v5466
      %v5946 = vunpack.c.l.b16 %v5467
      %v5947 = vunpack.c.l.b16 %v5468
      %v5948 = vunpack.c.l.b16 %v5469
      %v5949 = vunpack.c.l.b16 %v5470
      %v5950 = vunpack.c.l.b16 %v5471
      %v5951 = vunpack.c.l.b16 %v5472
      %v5952 = vunpack.c.l.b16 %v5473
      %v5953 = vunpack.c.l.b16 %v5474
      %v5954 = vunpack.c.l.b16 %v5475
      %v5955 = vunpack.c.l.b16 %v5476
      %v5956 = vunpack.c.l.b16 %v5477
      %v5957 = vunpack.c.l.b16 %v5478
      %v5958 = vunpack.c.l.b16 %v5479
      %v5959 = vunpack.c.l.b16 %v5480
      %v5960 = vunpack.c.l.b16 %v5481
      %v5961 = vunpack.c.l.b16 %v5482
      %v5962 = vunpack.c.l.b16 %v5483
      %v5963 = vunpack.c.l.b16 %v5484
      %v5964 = vunpack.c.l.b16 %v5485
      %v5965 = vunpack.c.l.b16 %v5486
      %v5966 = vunpack.c.l.b16 %v5487
      %v5967 = vunpack.c.l.b16 %v5488
      %v5968 = vunpack.c.l.b16 %v5489
      %v5969 = vunpack.c.l.b16 %v5490
      %v5970 = vunpack.c.l.b16 %v5491
      %v5971 = vunpack.c.l.b16 %v5492
      %v5972 = vunpack.c.l.b16 %v5493
      %v5973 = vunpack.c.l.b16 %v5494
      %v5974 = vunpack.c.l.b16 %v5495
      %v5975 = vunpack.c.l.b16 %v5496
      %v5976 = vunpack.c.l.b16 %v5497
      %v5977 = vunpack.c.l.b16 %v5498
      %v5978 = vunpack.c.l.b16 %v5499
      %v5979 = vunpack.c.l.b16 %v5500
      %v5980 = vunpack.c.l.b16 %v5501
      %v5981 = vunpack.c.l.b16 %v5502
      %v5982 = vunpack.c.l.b16 %v5503
      %v5983 = vunpack.c.l.b16 %v5504
      %v5984 = vunpack.c.l.b16 %v5505
      %v5985 = vunpack.c.l.b16 %v5506
      %v5986 = vunpack.c.l.b16 %v5507
      %v5987 = vunpack.c.l.b16 %v5508
      %v5988 = vunpack.c.l.b16 %v5509
      %v5989 = vunpack.c.l.b16 %v5510
      %v5990 = vunpack.c.l.b16 %v5511
      %v5991 = vunpack.c.l.b16 %v5512
      %v5992 = vunpack.c.l.b16 %v5513
      %v5993 = vunpack.c.l.b16 %v5514
      %v5994 = vunpack.c.l.b16 %v5515
      %v5995 = vunpack.c.l.b16 %v5516
      %v5996 = vunpack.c.l.b16 %v5517
      %v5997 = vunpack.c.l.b16 %v5518
      %v5998 = vunpack.c.l.b16 %v5519
      %v5999 = vunpack.c.l.b16 %v5520
      %v6000 = vunpack.c.l.b16 %v5521
      %v6001 = vunpack.c.l.b16 %v5522
      %v6002 = vunpack.c.l.b16 %v5523
      %v6003 = vunpack.c.l.b16 %v5524
      %v6004 = vunpack.c.l.b16 %v5525
      %v6005 = vunpack.c.l.b16 %v5526
      %v6006 = vunpack.c.l.b16 %v5527
      %v6007 = vunpack.c.l.b16 %v5528
      %v6008 = vunpack.c.l.b16 %v5529
      %v6009 = vunpack.c.l.b16 %v5530
      %v6010 = vunpack.c.l.b16 %v5531
      %v6011 = vunpack.c.l.b16 %v5532
      %v6012 = vunpack.c.l.b16 %v5533
      %v6013 = vunpack.c.l.b16 %v5534
      %v6014 = vpack.c.b16 %v5871, %v5870
      %v6015 = vpack.c.b16 %v5873, %v5872
      %v6016 = vpack.c.b16 %v5875, %v5874
      %v6017 = vpack.c.b16 %v5877, %v5876
      %v6018 = vpack.c.b16 %v5879, %v5878
      %v6019 = vpack.c.b16 %v5881, %v5880
      %v6020 = vpack.c.b16 %v5883, %v5882
      %v6021 = vpack.c.b16 %v5885, %v5884
      %v6022 = vpack.c.b16 %v5887, %v5886
      %v6023 = vpack.c.b16 %v5889, %v5888
      %v6024 = vpack.c.b16 %v5891, %v5890
      %v6025 = vpack.c.b16 %v5893, %v5892
      %v6026 = vpack.c.b16 %v5895, %v5894
      %v6027 = vpack.c.b16 %v5897, %v5896
      %v6028 = vpack.c.b16 %v5899, %v5898
      %v6029 = vpack.c.b16 %v5901, %v5900
      %v6030 = vpack.c.b16 %v5903, %v5902
      %v6031 = vpack.c.b16 %v5905, %v5904
      %v6032 = vpack.c.b16 %v5907, %v5906
      %v6033 = vpack.c.b16 %v5909, %v5908
      %v6034 = vpack.c.b16 %v5911, %v5910
      %v6035 = vpack.c.b16 %v5913, %v5912
      %v6036 = vpack.c.b16 %v5915, %v5914
      %v6037 = vpack.c.b16 %v5917, %v5916
      %v6038 = vpack.c.b16 %v5919, %v5918
      %v6039 = vpack.c.b16 %v5921, %v5920
      %v6040 = vpack.c.b16 %v5923, %v5922
      %v6041 = vpack.c.b16 %v5925, %v5924
      %v6042 = vpack.c.b16 %v5927, %v5926
      %v6043 = vpack.c.b16 %v5929, %v5928
      %v6044 = vpack.c.b16 %v5931, %v5930
      %v6045 = vpack.c.b16 %v5933, %v5932
      %v6046 = vpack.c.b16 %v5935, %v5934
      %v6047 = vpack.c.b16 %v5937, %v5936
      %v6048 = vpack.c.b16 %v5939, %v5938
      %v6049 = vpack.c.b16 %v5941, %v5940
      %v6050 = vpack.c.b16 %v5943, %v5942
      %v6051 = vpack.c.b16 %v5945, %v5944
      %v6052 = vpack.c.b16 %v5947, %v5946
      %v6053 = vpack.c.b16 %v5949, %v5948
      %v6054 = vpack.c.b16 %v5951, %v5950
      %v6055 = vpack.c.b16 %v5953, %v5952
      %v6056 = vpack.c.b16 %v5955, %v5954
      %v6057 = vpack.c.b16 %v5957, %v5956
      %v6058 = vpack.c.b16 %v5959, %v5958
      %v6059 = vpack.c.b16 %v5961, %v5960
      %v6060 = vpack.c.b16 %v5963, %v5962
      %v6061 = vpack.c.b16 %v5965, %v5964
      %v6062 = vpack.c.b16 %v5967, %v5966
      %v6063 = vpack.c.b16 %v5969, %v5968
      %v6064 = vpack.c.b16 %v5971, %v5970
      %v6065 = vpack.c.b16 %v5973, %v5972
      %v6066 = vpack.c.b16 %v5975, %v5974
      %v6067 = vpack.c.b16 %v5977, %v5976
      %v6068 = vpack.c.b16 %v5979, %v5978
      %v6069 = vpack.c.b16 %v5981, %v5980
      %v6070 = vpack.c.b16 %v5983, %v5982
      %v6071 = vpack.c.b16 %v5985, %v5984
      %v6072 = vpack.c.b16 %v5987, %v5986
      %v6073 = vpack.c.b16 %v5989, %v5988
      %v6074 = vpack.c.b16 %v5991, %v5990
      %v6075 = vpack.c.b16 %v5993, %v5992
      %v6076 = vpack.c.b16 %v5995, %v5994
      %v6077 = vpack.c.b16 %v5997, %v5996
      %v6078 = vpack.c.b16 %v5999, %v5998
      %v6079 = vpack.c.b16 %v6001, %v6000
      %v6080 = vpack.c.b16 %v6003, %v6002
      %v6081 = vpack.c.b16 %v6005, %v6004
      %v6082 = vpack.c.b16 %v6007, %v6006
      %v6083 = vpack.c.b16 %v6009, %v6008
      %v6084 = vpack.c.b16 %v6011, %v6010
      %v6085 = vpack.c.b16 %v6013, %v6012
      %6158 = vmatprep.subr.bf16.mxu0 0
      %6159 = vmatpush1.bf16.msra.mxu0 %v6021
      %6160 = vmatprep.subr.bf16.mxu0 0
      %6161 = vmatpush1.bf16.msra.mxu0 %v6020
      %6162 = vmatprep.subr.bf16.mxu0 0
      %6163 = vmatpush1.bf16.msra.mxu0 %v6019
      %6164 = vmatprep.subr.bf16.mxu0 0
      %6165 = vmatpush1.bf16.msra.mxu0 %v6018
      %6166 = vmatprep.subr.bf16.mxu0 0
      %6167 = vmatpush1.bf16.msra.mxu0 %v6017
      %6168 = vmatprep.subr.bf16.mxu0 0
      %6169 = vmatpush1.bf16.msra.mxu0 %v6016
      %6170 = vmatprep.subr.bf16.mxu0 0
      %6171 = vmatpush1.bf16.msra.mxu0 %v6015
      %6172 = vmatprep.subr.bf16.mxu0 0
      %6173 = vmatpush1.bf16.msra.mxu0 %v6014
      %6174 = vmatprep.subr.bf16.mxu0 0
      %6175 = vmatpush2.bf16.msra.mxu0 %v6029
      %6176 = vmatprep.subr.bf16.mxu0 0
      %6177 = vmatpush2.bf16.msra.mxu0 %v6028
      %6178 = vmatprep.subr.bf16.mxu0 0
      %6179 = vmatpush2.bf16.msra.mxu0 %v6027
      %6180 = vmatprep.subr.bf16.mxu0 0
      %6181 = vmatpush2.bf16.msra.mxu0 %v6026
      %6182 = vmatprep.subr.bf16.mxu0 0
      %6183 = vmatpush2.bf16.msra.mxu0 %v6025
      %6184 = vmatprep.subr.bf16.mxu0 0
      %6185 = vmatpush2.bf16.msra.mxu0 %v6024
      %6186 = vmatprep.subr.bf16.mxu0 0
      %6187 = vmatpush2.bf16.msra.mxu0 %v6023
      %6188 = vmatprep.subr.bf16.mxu0 0
      %6189 = vmatpush2.bf16.msra.mxu0 %v6022
      %6190 = vmatprep.mubr.bf16.mxu0 %v5655
      %6191 = vmatmul.mubr.bf16.gmra.mxu0 %v5654
      %v6192 = vpop.f32.mrf.mxu0
      %v6193 = vadd.f32 %v5540, %v6192
      %v6194 = vpop.f32.mrf.mxu0
      %v6195 = vpop.f32.mrf.mxu0
      %v6196 = vadd.f32 %v5540, %v6195
      %v6197 = vpop.f32.mrf.mxu0
      %6198 = vmatprep.mubr.bf16.mxu0 %v5664
      %6199 = vmatmul.mubr.bf16.gmra.mxu0 %v5663
      %v6200 = vpop.f32.mrf.mxu0
      %v6201 = vadd.f32 %v5540, %v6200
      %v6202 = vpop.f32.mrf.mxu0
      %v6203 = vpop.f32.mrf.mxu0
      %v6204 = vadd.f32 %v5540, %v6203
      %v6205 = vpop.f32.mrf.mxu0
      %6206 = vmatprep.mubr.bf16.mxu0 %v5673
      %6207 = vmatmul.mubr.bf16.gmra.mxu0 %v5672
      %v6208 = vpop.f32.mrf.mxu0
      %v6209 = vadd.f32 %v5540, %v6208
      %v6210 = vpop.f32.mrf.mxu0
      %v6211 = vpop.f32.mrf.mxu0
      %v6212 = vadd.f32 %v5540, %v6211
      %v6213 = vpop.f32.mrf.mxu0
      %6214 = vmatprep.mubr.bf16.mxu0 %v5682
      %6215 = vmatmul.mubr.bf16.gmra.mxu0 %v5681
      %v6216 = vpop.f32.mrf.mxu0
      %v6217 = vadd.f32 %v5540, %v6216
      %v6218 = vpop.f32.mrf.mxu0
      %v6219 = vpop.f32.mrf.mxu0
      %v6220 = vadd.f32 %v5540, %v6219
      %v6221 = vpop.f32.mrf.mxu0
      %6222 = vdwg.mxu0
      %6223 = vmatprep.subr.bf16.mxu0 0
      %6224 = vmatpush1.bf16.msra.mxu0 %v6037
      %6225 = vmatprep.subr.bf16.mxu0 0
      %6226 = vmatpush1.bf16.msra.mxu0 %v6036
      %6227 = vmatprep.subr.bf16.mxu0 0
      %6228 = vmatpush1.bf16.msra.mxu0 %v6035
      %6229 = vmatprep.subr.bf16.mxu0 0
      %6230 = vmatpush1.bf16.msra.mxu0 %v6034
      %6231 = vmatprep.subr.bf16.mxu0 0
      %6232 = vmatpush1.bf16.msra.mxu0 %v6033
      %6233 = vmatprep.subr.bf16.mxu0 0
      %6234 = vmatpush1.bf16.msra.mxu0 %v6032
      %6235 = vmatprep.subr.bf16.mxu0 0
      %6236 = vmatpush1.bf16.msra.mxu0 %v6031
      %6237 = vmatprep.subr.bf16.mxu0 0
      %6238 = vmatpush1.bf16.msra.mxu0 %v6030
      %6239 = vmatprep.subr.bf16.mxu0 0
      %6240 = vmatpush2.bf16.msra.mxu0 %v6045
      %6241 = vmatprep.subr.bf16.mxu0 0
      %6242 = vmatpush2.bf16.msra.mxu0 %v6044
      %6243 = vmatprep.subr.bf16.mxu0 0
      %6244 = vmatpush2.bf16.msra.mxu0 %v6043
      %6245 = vmatprep.subr.bf16.mxu0 0
      %6246 = vmatpush2.bf16.msra.mxu0 %v6042
      %6247 = vmatprep.subr.bf16.mxu0 0
      %6248 = vmatpush2.bf16.msra.mxu0 %v6041
      %6249 = vmatprep.subr.bf16.mxu0 0
      %6250 = vmatpush2.bf16.msra.mxu0 %v6040
      %6251 = vmatprep.subr.bf16.mxu0 0
      %6252 = vmatpush2.bf16.msra.mxu0 %v6039
      %6253 = vmatprep.subr.bf16.mxu0 0
      %6254 = vmatpush2.bf16.msra.mxu0 %v6038
      %6255 = vmatprep.mubr.bf16.mxu0 %v5657
      %6256 = vmatmul.mubr.bf16.gmra.mxu0 %v5656
      %v6257 = vpop.f32.mrf.mxu0
      %v6258 = vadd.f32 %v6193, %v6257
      %v6259 = vpop.f32.mrf.mxu0
      %v6260 = vpop.f32.mrf.mxu0
      %v6261 = vadd.f32 %v6196, %v6260
      %v6262 = vpop.f32.mrf.mxu0
      %6263 = vmatprep.mubr.bf16.mxu0 %v5666
      %6264 = vmatmul.mubr.bf16.gmra.mxu0 %v5665
      %v6265 = vpop.f32.mrf.mxu0
      %v6266 = vadd.f32 %v6201, %v6265
      %v6267 = vpop.f32.mrf.mxu0
      %v6268 = vpop.f32.mrf.mxu0
      %v6269 = vadd.f32 %v6204, %v6268
      %v6270 = vpop.f32.mrf.mxu0
      %6271 = vmatprep.mubr.bf16.mxu0 %v5675
      %6272 = vmatmul.mubr.bf16.gmra.mxu0 %v5674
      %v6273 = vpop.f32.mrf.mxu0
      %v6274 = vadd.f32 %v6209, %v6273
      %v6275 = vpop.f32.mrf.mxu0
      %v6276 = vpop.f32.mrf.mxu0
      %v6277 = vadd.f32 %v6212, %v6276
      %v6278 = vpop.f32.mrf.mxu0
      %6279 = vmatprep.mubr.bf16.mxu0 %v5684
      %6280 = vmatmul.mubr.bf16.gmra.mxu0 %v5683
      %v6281 = vpop.f32.mrf.mxu0
      %v6282 = vadd.f32 %v6217, %v6281
      %v6283 = vpop.f32.mrf.mxu0
      %v6284 = vpop.f32.mrf.mxu0
      %v6285 = vadd.f32 %v6220, %v6284
      %v6286 = vpop.f32.mrf.mxu0
      %6287 = vdwg.mxu0
      %6288 = vmatprep.subr.bf16.mxu0 0
      %6289 = vmatpush1.bf16.msra.mxu0 %v6053
      %6290 = vmatprep.subr.bf16.mxu0 0
      %6291 = vmatpush1.bf16.msra.mxu0 %v6052
      %6292 = vmatprep.subr.bf16.mxu0 0
      %6293 = vmatpush1.bf16.msra.mxu0 %v6051
      %6294 = vmatprep.subr.bf16.mxu0 0
      %6295 = vmatpush1.bf16.msra.mxu0 %v6050
      %6296 = vmatprep.subr.bf16.mxu0 0
      %6297 = vmatpush1.bf16.msra.mxu0 %v6049
      %6298 = vmatprep.subr.bf16.mxu0 0
      %6299 = vmatpush1.bf16.msra.mxu0 %v6048
      %6300 = vmatprep.subr.bf16.mxu0 0
      %6301 = vmatpush1.bf16.msra.mxu0 %v6047
      %6302 = vmatprep.subr.bf16.mxu0 0
      %6303 = vmatpush1.bf16.msra.mxu0 %v6046
      %6304 = vmatprep.subr.bf16.mxu0 0
      %6305 = vmatpush2.bf16.msra.mxu0 %v6061
      %6306 = vmatprep.subr.bf16.mxu0 0
      %6307 = vmatpush2.bf16.msra.mxu0 %v6060
      %6308 = vmatprep.subr.bf16.mxu0 0
      %6309 = vmatpush2.bf16.msra.mxu0 %v6059
      %6310 = vmatprep.subr.bf16.mxu0 0
      %6311 = vmatpush2.bf16.msra.mxu0 %v6058
      %6312 = vmatprep.subr.bf16.mxu0 0
      %6313 = vmatpush2.bf16.msra.mxu0 %v6057
      %6314 = vmatprep.subr.bf16.mxu0 0
      %6315 = vmatpush2.bf16.msra.mxu0 %v6056
      %6316 = vmatprep.subr.bf16.mxu0 0
      %6317 = vmatpush2.bf16.msra.mxu0 %v6055
      %6318 = vmatprep.subr.bf16.mxu0 0
      %6319 = vmatpush2.bf16.msra.mxu0 %v6054
      %6320 = vmatprep.mubr.bf16.mxu0 %v5659
      %6321 = vmatmul.mubr.bf16.gmra.mxu0 %v5658
      %v6322 = vpop.f32.mrf.mxu0
      %v6323 = vadd.f32 %v6258, %v6322
      %v6324 = vpop.f32.mrf.mxu0
      %v6325 = vpop.f32.mrf.mxu0
      %v6326 = vadd.f32 %v6261, %v6325
      %v6327 = vpop.f32.mrf.mxu0
      %6328 = vmatprep.mubr.bf16.mxu0 %v5668
      %6329 = vmatmul.mubr.bf16.gmra.mxu0 %v5667
      %v6330 = vpop.f32.mrf.mxu0
      %v6331 = vadd.f32 %v6266, %v6330
      %v6332 = vpop.f32.mrf.mxu0
      %v6333 = vpop.f32.mrf.mxu0
      %v6334 = vadd.f32 %v6269, %v6333
      %v6335 = vpop.f32.mrf.mxu0
      %6336 = vmatprep.mubr.bf16.mxu0 %v5677
      %6337 = vmatmul.mubr.bf16.gmra.mxu0 %v5676
      %v6338 = vpop.f32.mrf.mxu0
      %v6339 = vadd.f32 %v6274, %v6338
      %v6340 = vpop.f32.mrf.mxu0
      %v6341 = vpop.f32.mrf.mxu0
      %v6342 = vadd.f32 %v6277, %v6341
      %v6343 = vpop.f32.mrf.mxu0
      %6344 = vmatprep.mubr.bf16.mxu0 %v5686
      %6345 = vmatmul.mubr.bf16.gmra.mxu0 %v5685
      %v6346 = vpop.f32.mrf.mxu0
      %v6347 = vadd.f32 %v6282, %v6346
      %v6348 = vpop.f32.mrf.mxu0
      %v6349 = vpop.f32.mrf.mxu0
      %v6350 = vadd.f32 %v6285, %v6349
      %v6351 = vpop.f32.mrf.mxu0
      %6352 = vdwg.mxu0
      %6353 = vmatprep.subr.bf16.mxu0 0
      %6354 = vmatpush1.bf16.msra.mxu0 %v6069
      %6355 = vmatprep.subr.bf16.mxu0 0
      %6356 = vmatpush1.bf16.msra.mxu0 %v6068
      %6357 = vmatprep.subr.bf16.mxu0 0
      %6358 = vmatpush1.bf16.msra.mxu0 %v6067
      %6359 = vmatprep.subr.bf16.mxu0 0
      %6360 = vmatpush1.bf16.msra.mxu0 %v6066
      %6361 = vmatprep.subr.bf16.mxu0 0
      %6362 = vmatpush1.bf16.msra.mxu0 %v6065
      %6363 = vmatprep.subr.bf16.mxu0 0
      %6364 = vmatpush1.bf16.msra.mxu0 %v6064
      %6365 = vmatprep.subr.bf16.mxu0 0
      %6366 = vmatpush1.bf16.msra.mxu0 %v6063
      %6367 = vmatprep.subr.bf16.mxu0 0
      %6368 = vmatpush1.bf16.msra.mxu0 %v6062
      %6369 = vmatprep.subr.bf16.mxu0 0
      %6370 = vmatpush2.bf16.msra.mxu0 %v6077
      %6371 = vmatprep.subr.bf16.mxu0 0
      %6372 = vmatpush2.bf16.msra.mxu0 %v6076
      %6373 = vmatprep.subr.bf16.mxu0 0
      %6374 = vmatpush2.bf16.msra.mxu0 %v6075
      %6375 = vmatprep.subr.bf16.mxu0 0
      %6376 = vmatpush2.bf16.msra.mxu0 %v6074
      %6377 = vmatprep.subr.bf16.mxu0 0
      %6378 = vmatpush2.bf16.msra.mxu0 %v6073
      %6379 = vmatprep.subr.bf16.mxu0 0
      %6380 = vmatpush2.bf16.msra.mxu0 %v6072
      %6381 = vmatprep.subr.bf16.mxu0 0
      %6382 = vmatpush2.bf16.msra.mxu0 %v6071
      %6383 = vmatprep.subr.bf16.mxu0 0
      %6384 = vmatpush2.bf16.msra.mxu0 %v6070
      %6385 = vmatprep.mubr.bf16.mxu0 %v5661
      %6386 = vmatmul.mubr.bf16.gmra.mxu0 %v5660
      %v6387 = vpop.f32.mrf.mxu0
      %v6388 = vadd.f32 %v6323, %v6387
      %v6389 = vpop.f32.mrf.mxu0
      %v6390 = vpop.f32.mrf.mxu0
      %v6391 = vadd.f32 %v6326, %v6390
      %v6392 = vpop.f32.mrf.mxu0
      %6393 = vmatprep.mubr.bf16.mxu0 %v5670
      %6394 = vmatmul.mubr.bf16.gmra.mxu0 %v5669
      %v6395 = vpop.f32.mrf.mxu0
      %v6396 = vadd.f32 %v6331, %v6395
      %v6397 = vpop.f32.mrf.mxu0
      %v6398 = vpop.f32.mrf.mxu0
      %v6399 = vadd.f32 %v6334, %v6398
      %v6400 = vpop.f32.mrf.mxu0
      %6401 = vmatprep.mubr.bf16.mxu0 %v5679
      %6402 = vmatmul.mubr.bf16.gmra.mxu0 %v5678
      %v6403 = vpop.f32.mrf.mxu0
      %v6404 = vadd.f32 %v6339, %v6403
      %v6405 = vpop.f32.mrf.mxu0
      %v6406 = vpop.f32.mrf.mxu0
      %v6407 = vadd.f32 %v6342, %v6406
      %v6408 = vpop.f32.mrf.mxu0
      %6409 = vmatprep.mubr.bf16.mxu0 %v5688
      %6410 = vmatmul.mubr.bf16.gmra.mxu0 %v5687
      %v6411 = vpop.f32.mrf.mxu0
      %v6412 = vadd.f32 %v6347, %v6411
      %v6413 = vpop.f32.mrf.mxu0
      %v6414 = vpop.f32.mrf.mxu0
      %v6415 = vadd.f32 %v6350, %v6414
      %v6416 = vpop.f32.mrf.mxu0
      %6417 = vdwg.mxu0
      %6418 = vmatprep.subr.bf16.mxu0 0
      %6419 = vmatpush1.bf16.msra.mxu0 %v6085
      %6420 = vmatprep.subr.bf16.mxu0 0
      %6421 = vmatpush1.bf16.msra.mxu0 %v6084
      %6422 = vmatprep.subr.bf16.mxu0 0
      %6423 = vmatpush1.bf16.msra.mxu0 %v6083
      %6424 = vmatprep.subr.bf16.mxu0 0
      %6425 = vmatpush1.bf16.msra.mxu0 %v6082
      %6426 = vmatprep.subr.bf16.mxu0 0
      %6427 = vmatpush1.bf16.msra.mxu0 %v6081
      %6428 = vmatprep.subr.bf16.mxu0 0
      %6429 = vmatpush1.bf16.msra.mxu0 %v6080
      %6430 = vmatprep.subr.bf16.mxu0 0
      %6431 = vmatpush1.bf16.msra.mxu0 %v6079
      %6432 = vmatprep.subr.bf16.mxu0 0
      %6433 = vmatpush1.bf16.msra.mxu0 %v6078
      %6434 = vmatprep.subr.bf16.mxu0 0
      %6435 = vmatpush2.bf16.msra.mxu0 0
      %6436 = vmatprep.subr.bf16.mxu0 0
      %6437 = vmatpush2.bf16.msra.mxu0 0
      %6438 = vmatprep.subr.bf16.mxu0 0
      %6439 = vmatpush2.bf16.msra.mxu0 0
      %6440 = vmatprep.subr.bf16.mxu0 0
      %6441 = vmatpush2.bf16.msra.mxu0 0
      %6442 = vmatprep.subr.bf16.mxu0 0
      %6443 = vmatpush2.bf16.msra.mxu0 0
      %6444 = vmatprep.subr.bf16.mxu0 0
      %6445 = vmatpush2.bf16.msra.mxu0 0
      %6446 = vmatprep.subr.bf16.mxu0 0
      %6447 = vmatpush2.bf16.msra.mxu0 0
      %6448 = vmatprep.subr.bf16.mxu0 0
      %6449 = vmatpush2.bf16.msra.mxu0 0
      %6450 = vmatprep.mubr.bf16.mxu0 0
      %6451 = vmatmul.mubr.bf16.gmra.mxu0 %v5662
      %v6452 = vpop.f32.mrf.mxu0
      %v6453 = vadd.f32 %v6388, %v6452
      %v6454 = vpop.f32.mrf.mxu0
      %v6455 = vpop.f32.mrf.mxu0
      %v6456 = vadd.f32 %v6391, %v6455
      %v6457 = vpop.f32.mrf.mxu0
      %6458 = vmatprep.mubr.bf16.mxu0 0
      %6459 = vmatmul.mubr.bf16.gmra.mxu0 %v5671
      %v6460 = vpop.f32.mrf.mxu0
      %v6461 = vadd.f32 %v6396, %v6460
      %v6462 = vpop.f32.mrf.mxu0
      %v6463 = vpop.f32.mrf.mxu0
      %v6464 = vadd.f32 %v6399, %v6463
      %v6465 = vpop.f32.mrf.mxu0
      %6466 = vmatprep.mubr.bf16.mxu0 0
      %6467 = vmatmul.mubr.bf16.gmra.mxu0 %v5680
      %v6468 = vpop.f32.mrf.mxu0
      %v6469 = vadd.f32 %v6404, %v6468
      %v6470 = vpop.f32.mrf.mxu0
      %v6471 = vpop.f32.mrf.mxu0
      %v6472 = vadd.f32 %v6407, %v6471
      %v6473 = vpop.f32.mrf.mxu0
      %6474 = vmatprep.mubr.bf16.mxu0 0
      %6475 = vmatmul.mubr.bf16.gmra.mxu0 %v5689
      %v6476 = vpop.f32.mrf.mxu0
      %v6477 = vadd.f32 %v6412, %v6476
      %v6478 = vpop.f32.mrf.mxu0
      %v6479 = vpop.f32.mrf.mxu0
      %v6480 = vadd.f32 %v6415, %v6479
      %v6481 = vpop.f32.mrf.mxu0
      %6482 = vdwg.mxu0
      %v6483 = vmax.f32 %v6453, 0.0
      %v6484 = vmax.f32 %v6456, 0.0
      %v6485 = vmax.f32 %v6461, 0.0
      %v6486 = vmax.f32 %v6464, 0.0
      %v6487 = vmax.f32 %v6469, 0.0
      %v6488 = vmax.f32 %v6472, 0.0
      %v6489 = vmax.f32 %v6477, 0.0
      %v6490 = vmax.f32 %v6480, 0.0
      %v6491 = vld [vmem:[%s10] sm:$0xf]
      %v6492 = vld [vmem:[%s10 + $0x4] sm:$0xf]
      %v6493 = vld [vmem:[%s10 + $0x8] sm:$0xf]
      %v6494 = vld [vmem:[%s10 + $0xc] sm:$0xf]
      %v6495 = vld [vmem:[%s10 + $0x10] sm:$0xf]
      %v6496 = vld [vmem:[%s10 + $0x14] sm:$0xf]
      %v6497 = vld [vmem:[%s10 + $0x18] sm:$0xf]
      %v6498 = vld [vmem:[%s10 + $0x1c] sm:$0xf]
      %v6499 = vld [vmem:[%s10 + $0x20] sm:$0xf]
      %v6500 = vld [vmem:[%s10 + $0x24] sm:$0xf]
      %v6501 = vld [vmem:[%s10 + $0x28] sm:$0xf]
      %v6502 = vld [vmem:[%s10 + $0x2c] sm:$0xf]
      %v6503 = vld [vmem:[%s10 + $0x30] sm:$0xf]
      %v6504 = vld [vmem:[%s10 + $0x34] sm:$0xf]
      %v6505 = vld [vmem:[%s10 + $0x38] sm:$0xf]
      %v6506 = vld [vmem:[%s10 + $0x3c] sm:$0xf]
      %v6507 = vld [vmem:[%s10 + $0x40] sm:$0xf]
      %v6508 = vld [vmem:[%s10 + $0x44] sm:$0xf]
      %v6509 = vld [vmem:[%s10 + $0x48] sm:$0xf]
      %v6510 = vld [vmem:[%s10 + $0x4c] sm:$0xf]
      %v6511 = vld [vmem:[%s10 + $0x50] sm:$0xf]
      %v6512 = vld [vmem:[%s10 + $0x54] sm:$0xf]
      %v6513 = vld [vmem:[%s10 + $0x58] sm:$0xf]
      %v6514 = vld [vmem:[%s10 + $0x5c] sm:$0xf]
      %v6515 = vld [vmem:[%s10 + $0x60] sm:$0xf]
      %v6516 = vld [vmem:[%s10 + $0x64] sm:$0xf]
      %v6517 = vld [vmem:[%s10 + $0x68] sm:$0xf]
      %v6518 = vld [vmem:[%s10 + $0x6c] sm:$0xf]
      %v6519 = vld [vmem:[%s10 + $0x70] sm:$0xf]
      %v6520 = vld [vmem:[%s10 + $0x74] sm:$0xf]
      %v6521 = vld [vmem:[%s10 + $0x78] sm:$0xf]
      %v6522 = vld [vmem:[%s10 + $0x7c] sm:$0xf]
      %v6523 = vpack.c.bf16 %v6484, %v6483
      %v6524 = vpack.c.bf16 %v6486, %v6485
      %v6525 = vpack.c.bf16 %v6488, %v6487
      %v6526 = vpack.c.bf16 %v6490, %v6489
      %v6527 = vld [vmem:[#allocation3] sm:$0xf]
      %v6528 = vld [vmem:[#allocation3 + $0x4] sm:$0xf]
      %v6529 = vld [vmem:[#allocation3 + $0x8] sm:$0xf]
      %v6530 = vld [vmem:[#allocation3 + $0xc] sm:$0xf]
      %v6531 = vld [vmem:[#allocation3 + $0x10] sm:$0xf]
      %v6532 = vld [vmem:[#allocation3 + $0x14] sm:$0xf]
      %v6533 = vld [vmem:[#allocation3 + $0x18] sm:$0xf]
      %v6534 = vld [vmem:[#allocation3 + $0x1c] sm:$0xf]
      %v6535 = vld [vmem:[#allocation3 + $0x20] sm:$0xf]
      %v6536 = vld [vmem:[#allocation3 + $0x24] sm:$0xf]
      %v6537 = vld [vmem:[#allocation3 + $0x28] sm:$0xf]
      %v6538 = vld [vmem:[#allocation3 + $0x2c] sm:$0xf]
      %v6539 = vld [vmem:[#allocation3 + $0x30] sm:$0xf]
      %v6540 = vld [vmem:[#allocation3 + $0x34] sm:$0xf]
      %v6541 = vld [vmem:[#allocation3 + $0x38] sm:$0xf]
      %v6542 = vld [vmem:[#allocation3 + $0x3c] sm:$0xf]
      %v6543 = vld [vmem:[#allocation3 + $0x40] sm:$0xf]
      %v6544 = vld [vmem:[#allocation3 + $0x44] sm:$0xf]
      %v6545 = vld [vmem:[#allocation3 + $0x48] sm:$0xf]
      %v6546 = vld [vmem:[#allocation3 + $0x4c] sm:$0xf]
      %v6547 = vld [vmem:[#allocation3 + $0x50] sm:$0xf]
      %v6548 = vld [vmem:[#allocation3 + $0x54] sm:$0xf]
      %v6549 = vld [vmem:[#allocation3 + $0x58] sm:$0xf]
      %v6550 = vld [vmem:[#allocation3 + $0x5c] sm:$0xf]
      %v6551 = vld [vmem:[#allocation3 + $0x60] sm:$0xf]
      %v6552 = vld [vmem:[#allocation3 + $0x64] sm:$0xf]
      %v6553 = vld [vmem:[#allocation3 + $0x68] sm:$0xf]
      %v6554 = vld [vmem:[#allocation3 + $0x6c] sm:$0xf]
      %v6555 = vld [vmem:[#allocation3 + $0x70] sm:$0xf]
      %v6556 = vld [vmem:[#allocation3 + $0x74] sm:$0xf]
      %v6557 = vld [vmem:[#allocation3 + $0x78] sm:$0xf]
      %v6558 = vld [vmem:[#allocation3 + $0x7c] sm:$0xf]
      %v6559 = vunpack.c.l.bf16 %v6527
      %v6560 = vunpack.c.l.bf16 %v6528
      %v6561 = vunpack.c.l.bf16 %v6529
      %v6562 = vunpack.c.l.bf16 %v6530
      %v6563 = vunpack.c.l.bf16 %v6531
      %v6564 = vunpack.c.l.bf16 %v6532
      %v6565 = vunpack.c.l.bf16 %v6533
      %v6566 = vunpack.c.l.bf16 %v6534
      %v6567 = vunpack.c.l.bf16 %v6535
      %v6568 = vunpack.c.l.bf16 %v6536
      %v6569 = vunpack.c.l.bf16 %v6537
      %v6570 = vunpack.c.l.bf16 %v6538
      %v6571 = vunpack.c.l.bf16 %v6539
      %v6572 = vunpack.c.l.bf16 %v6540
      %v6573 = vunpack.c.l.bf16 %v6541
      %v6574 = vunpack.c.l.bf16 %v6542
      %v6575 = vunpack.c.l.bf16 %v6543
      %v6576 = vunpack.c.l.bf16 %v6544
      %v6577 = vunpack.c.l.bf16 %v6545
      %v6578 = vunpack.c.l.bf16 %v6546
      %v6579 = vunpack.c.l.bf16 %v6547
      %v6580 = vunpack.c.l.bf16 %v6548
      %v6581 = vunpack.c.l.bf16 %v6549
      %v6582 = vunpack.c.l.bf16 %v6550
      %v6583 = vunpack.c.l.bf16 %v6551
      %v6584 = vunpack.c.l.bf16 %v6552
      %v6585 = vunpack.c.l.bf16 %v6553
      %v6586 = vunpack.c.l.bf16 %v6554
      %v6587 = vunpack.c.l.bf16 %v6555
      %v6588 = vunpack.c.l.bf16 %v6556
      %v6589 = vunpack.c.l.bf16 %v6557
      %v6590 = vunpack.c.l.bf16 %v6558
      %v6623 = vunpack.c.l.b16 %v6491
      %v6624 = vunpack.c.l.b16 %v6492
      %v6625 = vunpack.c.l.b16 %v6493
      %v6626 = vunpack.c.l.b16 %v6494
      %v6627 = vunpack.c.l.b16 %v6495
      %v6628 = vunpack.c.l.b16 %v6496
      %v6629 = vunpack.c.l.b16 %v6497
      %v6630 = vunpack.c.l.b16 %v6498
      %v6631 = vunpack.c.l.b16 %v6499
      %v6632 = vunpack.c.l.b16 %v6500
      %v6633 = vunpack.c.l.b16 %v6501
      %v6634 = vunpack.c.l.b16 %v6502
      %v6635 = vunpack.c.l.b16 %v6503
      %v6636 = vunpack.c.l.b16 %v6504
      %v6637 = vunpack.c.l.b16 %v6505
      %v6638 = vunpack.c.l.b16 %v6506
      %v6639 = vunpack.c.l.b16 %v6507
      %v6640 = vunpack.c.l.b16 %v6508
      %v6641 = vunpack.c.l.b16 %v6509
      %v6642 = vunpack.c.l.b16 %v6510
      %v6643 = vunpack.c.l.b16 %v6511
      %v6644 = vunpack.c.l.b16 %v6512
      %v6645 = vunpack.c.l.b16 %v6513
      %v6646 = vunpack.c.l.b16 %v6514
      %v6647 = vunpack.c.l.b16 %v6515
      %v6648 = vunpack.c.l.b16 %v6516
      %v6649 = vunpack.c.l.b16 %v6517
      %v6650 = vunpack.c.l.b16 %v6518
      %v6651 = vunpack.c.l.b16 %v6519
      %v6652 = vunpack.c.l.b16 %v6520
      %v6653 = vunpack.c.l.b16 %v6521
      %v6654 = vunpack.c.l.b16 %v6522
      %v6655 = vpack.c.b16 %v6624, %v6623
      %v6656 = vpack.c.b16 %v6626, %v6625
      %v6657 = vpack.c.b16 %v6628, %v6627
      %v6658 = vpack.c.b16 %v6630, %v6629
      %v6659 = vpack.c.b16 %v6632, %v6631
      %v6660 = vpack.c.b16 %v6634, %v6633
      %v6661 = vpack.c.b16 %v6636, %v6635
      %v6662 = vpack.c.b16 %v6638, %v6637
      %v6663 = vpack.c.b16 %v6640, %v6639
      %v6664 = vpack.c.b16 %v6642, %v6641
      %v6665 = vpack.c.b16 %v6644, %v6643
      %v6666 = vpack.c.b16 %v6646, %v6645
      %v6667 = vpack.c.b16 %v6648, %v6647
      %v6668 = vpack.c.b16 %v6650, %v6649
      %v6669 = vpack.c.b16 %v6652, %v6651
      %v6670 = vpack.c.b16 %v6654, %v6653
      %vm6671 = vcmask 523264
      %v6673 = vsel %vm6671, %v6655, 0
      %v6676 = vsel %vm6671, %v6656, 0
      %v6679 = vsel %vm6671, %v6657, 0
      %v6682 = vsel %vm6671, %v6658, 0
      %v6685 = vsel %vm6671, %v6659, 0
      %v6688 = vsel %vm6671, %v6660, 0
      %v6691 = vsel %vm6671, %v6661, 0
      %v6694 = vsel %vm6671, %v6662, 0
      %v6697 = vsel %vm6671, %v6663, 0
      %v6700 = vsel %vm6671, %v6664, 0
      %v6703 = vsel %vm6671, %v6665, 0
      %v6706 = vsel %vm6671, %v6666, 0
      %v6709 = vsel %vm6671, %v6667, 0
      %v6712 = vsel %vm6671, %v6668, 0
      %v6715 = vsel %vm6671, %v6669, 0
      %v6718 = vsel %vm6671, %v6670, 0
      %6720 = vmatprep.subr.bf16.mxu0 0
      %6721 = vmatpush1.bf16.msra.mxu0 0
      %6722 = vmatprep.subr.bf16.mxu0 0
      %6723 = vmatpush1.bf16.msra.mxu0 0
      %6724 = vmatprep.subr.bf16.mxu0 0
      %6725 = vmatpush1.bf16.msra.mxu0 0
      %6726 = vmatprep.subr.bf16.mxu0 0
      %6727 = vmatpush1.bf16.msra.mxu0 0
      %6728 = vmatprep.subr.bf16.mxu0 0
      %6729 = vmatpush1.bf16.msra.mxu0 %v6526
      %6730 = vmatprep.subr.bf16.mxu0 0
      %6731 = vmatpush1.bf16.msra.mxu0 %v6525
      %6732 = vmatprep.subr.bf16.mxu0 0
      %6733 = vmatpush1.bf16.msra.mxu0 %v6524
      %6734 = vmatprep.subr.bf16.mxu0 0
      %6735 = vmatpush1.bf16.msra.mxu0 %v6523
      %6736 = vmatprep.subr.bf16.mxu0 0
      %6737 = vmatpush2.bf16.msra.mxu0 0
      %6738 = vmatprep.subr.bf16.mxu0 0
      %6739 = vmatpush2.bf16.msra.mxu0 0
      %6740 = vmatprep.subr.bf16.mxu0 0
      %6741 = vmatpush2.bf16.msra.mxu0 0
      %6742 = vmatprep.subr.bf16.mxu0 0
      %6743 = vmatpush2.bf16.msra.mxu0 0
      %6744 = vmatprep.subr.bf16.mxu0 0
      %6745 = vmatpush2.bf16.msra.mxu0 0
      %6746 = vmatprep.subr.bf16.mxu0 0
      %6747 = vmatpush2.bf16.msra.mxu0 0
      %6748 = vmatprep.subr.bf16.mxu0 0
      %6749 = vmatpush2.bf16.msra.mxu0 0
      %6750 = vmatprep.subr.bf16.mxu0 0
      %6751 = vmatpush2.bf16.msra.mxu0 0
      %6752 = vmatprep.mubr.bf16.mxu0 0
      %6753 = vmatmul.mubr.bf16.gmra.mxu0 %v6673
      %v6754 = vpop.f32.mrf.mxu0
      %v6755 = vadd.f32 %v6559, %v6754
      %v6756 = vpop.f32.mrf.mxu0
      %v6757 = vpop.f32.mrf.mxu0
      %v6758 = vadd.f32 %v6560, %v6757
      %v6759 = vpop.f32.mrf.mxu0
      %6760 = vmatprep.mubr.bf16.mxu0 0
      %6761 = vmatmul.mubr.bf16.gmra.mxu0 %v6676
      %v6762 = vpop.f32.mrf.mxu0
      %v6763 = vadd.f32 %v6561, %v6762
      %v6764 = vpop.f32.mrf.mxu0
      %v6765 = vpop.f32.mrf.mxu0
      %v6766 = vadd.f32 %v6562, %v6765
      %v6767 = vpop.f32.mrf.mxu0
      %6768 = vmatprep.mubr.bf16.mxu0 0
      %6769 = vmatmul.mubr.bf16.gmra.mxu0 %v6679
      %v6770 = vpop.f32.mrf.mxu0
      %v6771 = vadd.f32 %v6563, %v6770
      %v6772 = vpop.f32.mrf.mxu0
      %v6773 = vpop.f32.mrf.mxu0
      %v6774 = vadd.f32 %v6564, %v6773
      %v6775 = vpop.f32.mrf.mxu0
      %6776 = vmatprep.mubr.bf16.mxu0 0
      %6777 = vmatmul.mubr.bf16.gmra.mxu0 %v6682
      %v6778 = vpop.f32.mrf.mxu0
      %v6779 = vadd.f32 %v6565, %v6778
      %v6780 = vpop.f32.mrf.mxu0
      %v6781 = vpop.f32.mrf.mxu0
      %v6782 = vadd.f32 %v6566, %v6781
      %v6783 = vpop.f32.mrf.mxu0
      %6784 = vmatprep.mubr.bf16.mxu0 0
      %6785 = vmatmul.mubr.bf16.gmra.mxu0 %v6685
      %v6786 = vpop.f32.mrf.mxu0
      %v6787 = vadd.f32 %v6567, %v6786
      %v6788 = vpop.f32.mrf.mxu0
      %v6789 = vpop.f32.mrf.mxu0
      %v6790 = vadd.f32 %v6568, %v6789
      %v6791 = vpop.f32.mrf.mxu0
      %6792 = vmatprep.mubr.bf16.mxu0 0
      %6793 = vmatmul.mubr.bf16.gmra.mxu0 %v6688
      %v6794 = vpop.f32.mrf.mxu0
      %v6795 = vadd.f32 %v6569, %v6794
      %v6796 = vpop.f32.mrf.mxu0
      %v6797 = vpop.f32.mrf.mxu0
      %v6798 = vadd.f32 %v6570, %v6797
      %v6799 = vpop.f32.mrf.mxu0
      %6800 = vmatprep.mubr.bf16.mxu0 0
      %6801 = vmatmul.mubr.bf16.gmra.mxu0 %v6691
      %v6802 = vpop.f32.mrf.mxu0
      %v6803 = vadd.f32 %v6571, %v6802
      %v6804 = vpop.f32.mrf.mxu0
      %v6805 = vpop.f32.mrf.mxu0
      %v6806 = vadd.f32 %v6572, %v6805
      %v6807 = vpop.f32.mrf.mxu0
      %6808 = vmatprep.mubr.bf16.mxu0 0
      %6809 = vmatmul.mubr.bf16.gmra.mxu0 %v6694
      %v6810 = vpop.f32.mrf.mxu0
      %v6811 = vadd.f32 %v6573, %v6810
      %v6812 = vpop.f32.mrf.mxu0
      %v6813 = vpop.f32.mrf.mxu0
      %v6814 = vadd.f32 %v6574, %v6813
      %v6815 = vpop.f32.mrf.mxu0
      %6816 = vmatprep.mubr.bf16.mxu0 0
      %6817 = vmatmul.mubr.bf16.gmra.mxu0 %v6697
      %v6818 = vpop.f32.mrf.mxu0
      %v6819 = vadd.f32 %v6575, %v6818
      %v6820 = vpop.f32.mrf.mxu0
      %v6821 = vpop.f32.mrf.mxu0
      %v6822 = vadd.f32 %v6576, %v6821
      %v6823 = vpop.f32.mrf.mxu0
      %6824 = vmatprep.mubr.bf16.mxu0 0
      %6825 = vmatmul.mubr.bf16.gmra.mxu0 %v6700
      %v6826 = vpop.f32.mrf.mxu0
      %v6827 = vadd.f32 %v6577, %v6826
      %v6828 = vpop.f32.mrf.mxu0
      %v6829 = vpop.f32.mrf.mxu0
      %v6830 = vadd.f32 %v6578, %v6829
      %v6831 = vpop.f32.mrf.mxu0
      %6832 = vmatprep.mubr.bf16.mxu0 0
      %6833 = vmatmul.mubr.bf16.gmra.mxu0 %v6703
      %v6834 = vpop.f32.mrf.mxu0
      %v6835 = vadd.f32 %v6579, %v6834
      %v6836 = vpop.f32.mrf.mxu0
      %v6837 = vpop.f32.mrf.mxu0
      %v6838 = vadd.f32 %v6580, %v6837
      %v6839 = vpop.f32.mrf.mxu0
      %6840 = vmatprep.mubr.bf16.mxu0 0
      %6841 = vmatmul.mubr.bf16.gmra.mxu0 %v6706
      %v6842 = vpop.f32.mrf.mxu0
      %v6843 = vadd.f32 %v6581, %v6842
      %v6844 = vpop.f32.mrf.mxu0
      %v6845 = vpop.f32.mrf.mxu0
      %v6846 = vadd.f32 %v6582, %v6845
      %v6847 = vpop.f32.mrf.mxu0
      %6848 = vmatprep.mubr.bf16.mxu0 0
      %6849 = vmatmul.mubr.bf16.gmra.mxu0 %v6709
      %v6850 = vpop.f32.mrf.mxu0
      %v6851 = vadd.f32 %v6583, %v6850
      %v6852 = vpop.f32.mrf.mxu0
      %v6853 = vpop.f32.mrf.mxu0
      %v6854 = vadd.f32 %v6584, %v6853
      %v6855 = vpop.f32.mrf.mxu0
      %6856 = vmatprep.mubr.bf16.mxu0 0
      %6857 = vmatmul.mubr.bf16.gmra.mxu0 %v6712
      %v6858 = vpop.f32.mrf.mxu0
      %v6859 = vadd.f32 %v6585, %v6858
      %v6860 = vpop.f32.mrf.mxu0
      %v6861 = vpop.f32.mrf.mxu0
      %v6862 = vadd.f32 %v6586, %v6861
      %v6863 = vpop.f32.mrf.mxu0
      %6864 = vmatprep.mubr.bf16.mxu0 0
      %6865 = vmatmul.mubr.bf16.gmra.mxu0 %v6715
      %v6866 = vpop.f32.mrf.mxu0
      %v6867 = vadd.f32 %v6587, %v6866
      %v6868 = vpop.f32.mrf.mxu0
      %v6869 = vpop.f32.mrf.mxu0
      %v6870 = vadd.f32 %v6588, %v6869
      %v6871 = vpop.f32.mrf.mxu0
      %6872 = vmatprep.mubr.bf16.mxu0 0
      %6873 = vmatmul.mubr.bf16.gmra.mxu0 %v6718
      %v6874 = vpop.f32.mrf.mxu0
      %v6875 = vadd.f32 %v6589, %v6874
      %v6876 = vpop.f32.mrf.mxu0
      %v6877 = vpop.f32.mrf.mxu0
      %v6878 = vadd.f32 %v6590, %v6877
      %v6879 = vpop.f32.mrf.mxu0
      %6880 = vdwg.mxu0
      %s6881 = scalar_lea.vmem [#allocation5], 24
      %6882 = vst [vmem:[%s6881 + $0x1] sm:$0xff] %v6755
      %6883 = vst [vmem:[%s6881 + $0x9] sm:$0xff] %v6758
      %6884 = vst [vmem:[%s6881 + $0x19] sm:$0xff] %v6763
      %6885 = vst [vmem:[%s6881 + $0x21] sm:$0xff] %v6766
      %6886 = vst [vmem:[%s6881 + $0x31] sm:$0xff] %v6771
      %6887 = vst [vmem:[%s6881 + $0x39] sm:$0xff] %v6774
      %6888 = vst [vmem:[%s6881 + $0x49] sm:$0xff] %v6779
      %6889 = vst [vmem:[%s6881 + $0x51] sm:$0xff] %v6782
      %6890 = vst [vmem:[%s6881 + $0x61] sm:$0xff] %v6787
      %6891 = vst [vmem:[%s6881 + $0x69] sm:$0xff] %v6790
      %6892 = vst [vmem:[%s6881 + $0x79] sm:$0xff] %v6795
      %6893 = vst [vmem:[%s6881 + $0x81] sm:$0xff] %v6798
      %6894 = vst [vmem:[%s6881 + $0x91] sm:$0xff] %v6803
      %6895 = vst [vmem:[%s6881 + $0x99] sm:$0xff] %v6806
      %6896 = vst [vmem:[%s6881 + $0xa9] sm:$0xff] %v6811
      %6897 = vst [vmem:[%s6881 + $0xb1] sm:$0xff] %v6814
      %6898 = vst [vmem:[%s6881 + $0xc1] sm:$0xff] %v6819
      %6899 = vst [vmem:[%s6881 + $0xc9] sm:$0xff] %v6822
      %6900 = vst [vmem:[%s6881 + $0xd9] sm:$0xff] %v6827
      %6901 = vst [vmem:[%s6881 + $0xe1] sm:$0xff] %v6830
      %6902 = vst [vmem:[%s6881 + $0xf1] sm:$0xff] %v6835
      %6903 = vst [vmem:[%s6881 + $0xf9] sm:$0xff] %v6838
      %6904 = vst [vmem:[%s6881 + $0x109] sm:$0xff] %v6843
      %6905 = vst [vmem:[%s6881 + $0x111] sm:$0xff] %v6846
      %6906 = vst [vmem:[%s6881 + $0x121] sm:$0xff] %v6851
      %6907 = vst [vmem:[%s6881 + $0x129] sm:$0xff] %v6854
      %6908 = vst [vmem:[%s6881 + $0x139] sm:$0xff] %v6859
      %6909 = vst [vmem:[%s6881 + $0x141] sm:$0xff] %v6862
      %6910 = vst [vmem:[%s6881 + $0x151] sm:$0xff] %v6867
      %6911 = vst [vmem:[%s6881 + $0x159] sm:$0xff] %v6870
      %6912 = vst [vmem:[%s6881 + $0x169] sm:$0xff] %v6875
      %6913 = vst [vmem:[%s6881 + $0x171] sm:$0xff] %v6878
      %v6914 = vld [vmem:[#allocation5] sm:$0xff]
      %v6915 = vld [vmem:[#allocation5 + $0x8] sm:$0xff]
      %v6916 = vld [vmem:[#allocation5 + $0x18] sm:$0xff]
      %v6917 = vld [vmem:[#allocation5 + $0x20] sm:$0xff]
      %v6918 = vld [vmem:[#allocation5 + $0x30] sm:$0xff]
      %v6919 = vld [vmem:[#allocation5 + $0x38] sm:$0xff]
      %v6920 = vld [vmem:[#allocation5 + $0x48] sm:$0xff]
      %v6921 = vld [vmem:[#allocation5 + $0x50] sm:$0xff]
      %v6922 = vld [vmem:[#allocation5 + $0x60] sm:$0xff]
      %v6923 = vld [vmem:[#allocation5 + $0x68] sm:$0xff]
      %v6924 = vld [vmem:[#allocation5 + $0x78] sm:$0xff]
      %v6925 = vld [vmem:[#allocation5 + $0x80] sm:$0xff]
      %v6926 = vld [vmem:[#allocation5 + $0x90] sm:$0xff]
      %v6927 = vld [vmem:[#allocation5 + $0x98] sm:$0xff]
      %v6928 = vld [vmem:[#allocation5 + $0xa8] sm:$0xff]
      %v6929 = vld [vmem:[#allocation5 + $0xb0] sm:$0xff]
      %v6930 = vld [vmem:[#allocation5 + $0xc0] sm:$0xff]
      %v6931 = vld [vmem:[#allocation5 + $0xc8] sm:$0xff]
      %v6932 = vld [vmem:[#allocation5 + $0xd8] sm:$0xff]
      %v6933 = vld [vmem:[#allocation5 + $0xe0] sm:$0xff]
      %v6934 = vld [vmem:[#allocation5 + $0xf0] sm:$0xff]
      %v6935 = vld [vmem:[#allocation5 + $0xf8] sm:$0xff]
      %v6936 = vld [vmem:[#allocation5 + $0x108] sm:$0xff]
      %v6937 = vld [vmem:[#allocation5 + $0x110] sm:$0xff]
      %v6938 = vld [vmem:[#allocation5 + $0x120] sm:$0xff]
      %v6939 = vld [vmem:[#allocation5 + $0x128] sm:$0xff]
      %v6940 = vld [vmem:[#allocation5 + $0x138] sm:$0xff]
      %v6941 = vld [vmem:[#allocation5 + $0x140] sm:$0xff]
      %v6942 = vld [vmem:[#allocation5 + $0x150] sm:$0xff]
      %v6943 = vld [vmem:[#allocation5 + $0x158] sm:$0xff]
      %v6944 = vld [vmem:[#allocation5 + $0x168] sm:$0xff]
      %v6945 = vld [vmem:[#allocation5 + $0x170] sm:$0xff]
      %v6946 = vpack.c.bf16 %v6915, %v6914
      %v6947 = vpack.c.bf16 %v6917, %v6916
      %v6948 = vpack.c.bf16 %v6919, %v6918
      %v6949 = vpack.c.bf16 %v6921, %v6920
      %v6950 = vpack.c.bf16 %v6923, %v6922
      %v6951 = vpack.c.bf16 %v6925, %v6924
      %v6952 = vpack.c.bf16 %v6927, %v6926
      %v6953 = vpack.c.bf16 %v6929, %v6928
      %v6954 = vpack.c.bf16 %v6931, %v6930
      %v6955 = vpack.c.bf16 %v6933, %v6932
      %v6956 = vpack.c.bf16 %v6935, %v6934
      %v6957 = vpack.c.bf16 %v6937, %v6936
      %v6958 = vpack.c.bf16 %v6939, %v6938
      %v6959 = vpack.c.bf16 %v6941, %v6940
      %v6960 = vpack.c.bf16 %v6943, %v6942
      %v6961 = vpack.c.bf16 %v6945, %v6944
      %v6978 = vunpack.c.l.b16 %v6946
      %v6979 = vunpack.c.h.b16 %v6946
      %v6980 = vunpack.c.l.b16 %v6947
      %v6981 = vunpack.c.h.b16 %v6947
      %v6982 = vunpack.c.l.b16 %v6948
      %v6983 = vunpack.c.h.b16 %v6948
      %v6984 = vunpack.c.l.b16 %v6949
      %v6985 = vunpack.c.h.b16 %v6949
      %v6986 = vunpack.c.l.b16 %v6950
      %v6987 = vunpack.c.h.b16 %v6950
      %v6988 = vunpack.c.l.b16 %v6951
      %v6989 = vunpack.c.h.b16 %v6951
      %v6990 = vunpack.c.l.b16 %v6952
      %v6991 = vunpack.c.h.b16 %v6952
      %v6992 = vunpack.c.l.b16 %v6953
      %v6993 = vunpack.c.h.b16 %v6953
      %v6994 = vunpack.c.l.b16 %v6954
      %v6995 = vunpack.c.h.b16 %v6954
      %v6996 = vunpack.c.l.b16 %v6955
      %v6997 = vunpack.c.h.b16 %v6955
      %v6998 = vunpack.c.l.b16 %v6956
      %v6999 = vunpack.c.h.b16 %v6956
      %v7000 = vunpack.c.l.b16 %v6957
      %v7001 = vunpack.c.h.b16 %v6957
      %v7002 = vunpack.c.l.b16 %v6958
      %v7003 = vunpack.c.h.b16 %v6958
      %v7004 = vunpack.c.l.b16 %v6959
      %v7005 = vunpack.c.h.b16 %v6959
      %v7006 = vunpack.c.l.b16 %v6960
      %v7007 = vunpack.c.h.b16 %v6960
      %v7008 = vunpack.c.l.b16 %v6961
      %v7009 = vunpack.c.h.b16 %v6961
      %v7010 = vpack.c.b16 %v6978, %v6978
      %v7011 = vpack.c.b16 %v6979, %v6979
      %v7012 = vpack.c.b16 %v6980, %v6980
      %v7013 = vpack.c.b16 %v6981, %v6981
      %v7014 = vpack.c.b16 %v6982, %v6982
      %v7015 = vpack.c.b16 %v6983, %v6983
      %v7016 = vpack.c.b16 %v6984, %v6984
      %v7017 = vpack.c.b16 %v6985, %v6985
      %v7018 = vpack.c.b16 %v6986, %v6986
      %v7019 = vpack.c.b16 %v6987, %v6987
      %v7020 = vpack.c.b16 %v6988, %v6988
      %v7021 = vpack.c.b16 %v6989, %v6989
      %v7022 = vpack.c.b16 %v6990, %v6990
      %v7023 = vpack.c.b16 %v6991, %v6991
      %v7024 = vpack.c.b16 %v6992, %v6992
      %v7025 = vpack.c.b16 %v6993, %v6993
      %v7026 = vpack.c.b16 %v6994, %v6994
      %v7027 = vpack.c.b16 %v6995, %v6995
      %v7028 = vpack.c.b16 %v6996, %v6996
      %v7029 = vpack.c.b16 %v6997, %v6997
      %v7030 = vpack.c.b16 %v6998, %v6998
      %v7031 = vpack.c.b16 %v6999, %v6999
      %v7032 = vpack.c.b16 %v7000, %v7000
      %v7033 = vpack.c.b16 %v7001, %v7001
      %v7034 = vpack.c.b16 %v7002, %v7002
      %v7035 = vpack.c.b16 %v7003, %v7003
      %v7036 = vpack.c.b16 %v7004, %v7004
      %v7037 = vpack.c.b16 %v7005, %v7005
      %v7038 = vpack.c.b16 %v7006, %v7006
      %v7039 = vpack.c.b16 %v7007, %v7007
      %v7040 = vpack.c.b16 %v7008, %v7008
      %v7041 = vpack.c.b16 %v7009, %v7009
      %7074 = vst [vmem:[#allocation2] sm:$0xf] %v7010
      %7075 = vst [vmem:[#allocation2 + $0x24] sm:$0xf] %v7011
      %7076 = vst [vmem:[#allocation2 + $0x48] sm:$0xf] %v7012
      %7077 = vst [vmem:[#allocation2 + $0x6c] sm:$0xf] %v7013
      %7078 = vst [vmem:[#allocation2 + $0x90] sm:$0xf] %v7014
      %7079 = vst [vmem:[#allocation2 + $0xb4] sm:$0xf] %v7015
      %7080 = vst [vmem:[#allocation2 + $0xd8] sm:$0xf] %v7016
      %7081 = vst [vmem:[#allocation2 + $0xfc] sm:$0xf] %v7017
      %7082 = vst [vmem:[#allocation2 + $0x120] sm:$0xf] %v7018
      %7083 = vst [vmem:[#allocation2 + $0x144] sm:$0xf] %v7019
      %7084 = vst [vmem:[#allocation2 + $0x168] sm:$0xf] %v7020
      %7085 = vst [vmem:[#allocation2 + $0x18c] sm:$0xf] %v7021
      %7086 = vst [vmem:[#allocation2 + $0x1b0] sm:$0xf] %v7022
      %7087 = vst [vmem:[#allocation2 + $0x1d4] sm:$0xf] %v7023
      %7088 = vst [vmem:[#allocation2 + $0x1f8] sm:$0xf] %v7024
      %7089 = vst [vmem:[#allocation2 + $0x21c] sm:$0xf] %v7025
      %7090 = vst [vmem:[#allocation2 + $0x240] sm:$0xf] %v7026
      %7091 = vst [vmem:[#allocation2 + $0x264] sm:$0xf] %v7027
      %7092 = vst [vmem:[#allocation2 + $0x288] sm:$0xf] %v7028
      %7093 = vst [vmem:[#allocation2 + $0x2ac] sm:$0xf] %v7029
      %7094 = vst [vmem:[#allocation2 + $0x2d0] sm:$0xf] %v7030
      %7095 = vst [vmem:[#allocation2 + $0x2f4] sm:$0xf] %v7031
      %7096 = vst [vmem:[#allocation2 + $0x318] sm:$0xf] %v7032
      %7097 = vst [vmem:[#allocation2 + $0x33c] sm:$0xf] %v7033
      %7098 = vst [vmem:[#allocation2 + $0x360] sm:$0xf] %v7034
      %7099 = vst [vmem:[#allocation2 + $0x384] sm:$0xf] %v7035
      %7100 = vst [vmem:[#allocation2 + $0x3a8] sm:$0xf] %v7036
      %7101 = vst [vmem:[#allocation2 + $0x3cc] sm:$0xf] %v7037
      %7102 = vst [vmem:[#allocation2 + $0x3f0] sm:$0xf] %v7038
      %7103 = vst [vmem:[#allocation2 + $0x414] sm:$0xf] %v7039
      %7104 = vst [vmem:[#allocation2 + $0x438] sm:$0xf] %v7040
      %7105 = vst [vmem:[#allocation2 + $0x45c] sm:$0xf] %v7041
      %v7106 = vld [vmem:[#allocation5 + $0x1] sm:$0xff]
      %v7107 = vld [vmem:[#allocation5 + $0x9] sm:$0xff]
      %v7108 = vld [vmem:[#allocation5 + $0x19] sm:$0xff]
      %v7109 = vld [vmem:[#allocation5 + $0x21] sm:$0xff]
      %v7110 = vld [vmem:[#allocation5 + $0x31] sm:$0xff]
      %v7111 = vld [vmem:[#allocation5 + $0x39] sm:$0xff]
      %v7112 = vld [vmem:[#allocation5 + $0x49] sm:$0xff]
      %v7113 = vld [vmem:[#allocation5 + $0x51] sm:$0xff]
      %v7114 = vld [vmem:[#allocation5 + $0x61] sm:$0xff]
      %v7115 = vld [vmem:[#allocation5 + $0x69] sm:$0xff]
      %v7116 = vld [vmem:[#allocation5 + $0x79] sm:$0xff]
      %v7117 = vld [vmem:[#allocation5 + $0x81] sm:$0xff]
      %v7118 = vld [vmem:[#allocation5 + $0x91] sm:$0xff]
      %v7119 = vld [vmem:[#allocation5 + $0x99] sm:$0xff]
      %v7120 = vld [vmem:[#allocation5 + $0xa9] sm:$0xff]
      %v7121 = vld [vmem:[#allocation5 + $0xb1] sm:$0xff]
      %v7122 = vld [vmem:[#allocation5 + $0xc1] sm:$0xff]
      %v7123 = vld [vmem:[#allocation5 + $0xc9] sm:$0xff]
      %v7124 = vld [vmem:[#allocation5 + $0xd9] sm:$0xff]
      %v7125 = vld [vmem:[#allocation5 + $0xe1] sm:$0xff]
      %v7126 = vld [vmem:[#allocation5 + $0xf1] sm:$0xff]
      %v7127 = vld [vmem:[#allocation5 + $0xf9] sm:$0xff]
      %v7128 = vld [vmem:[#allocation5 + $0x109] sm:$0xff]
      %v7129 = vld [vmem:[#allocation5 + $0x111] sm:$0xff]
      %v7130 = vld [vmem:[#allocation5 + $0x121] sm:$0xff]
      %v7131 = vld [vmem:[#allocation5 + $0x129] sm:$0xff]
      %v7132 = vld [vmem:[#allocation5 + $0x139] sm:$0xff]
      %v7133 = vld [vmem:[#allocation5 + $0x141] sm:$0xff]
      %v7134 = vld [vmem:[#allocation5 + $0x151] sm:$0xff]
      %v7135 = vld [vmem:[#allocation5 + $0x159] sm:$0xff]
      %v7136 = vld [vmem:[#allocation5 + $0x169] sm:$0xff]
      %v7137 = vld [vmem:[#allocation5 + $0x171] sm:$0xff]
      %v7138 = vpack.c.bf16 %v7107, %v7106
      %v7139 = vpack.c.bf16 %v7109, %v7108
      %v7140 = vpack.c.bf16 %v7111, %v7110
      %v7141 = vpack.c.bf16 %v7113, %v7112
      %v7142 = vpack.c.bf16 %v7115, %v7114
      %v7143 = vpack.c.bf16 %v7117, %v7116
      %v7144 = vpack.c.bf16 %v7119, %v7118
      %v7145 = vpack.c.bf16 %v7121, %v7120
      %v7146 = vpack.c.bf16 %v7123, %v7122
      %v7147 = vpack.c.bf16 %v7125, %v7124
      %v7148 = vpack.c.bf16 %v7127, %v7126
      %v7149 = vpack.c.bf16 %v7129, %v7128
      %v7150 = vpack.c.bf16 %v7131, %v7130
      %v7151 = vpack.c.bf16 %v7133, %v7132
      %v7152 = vpack.c.bf16 %v7135, %v7134
      %v7153 = vpack.c.bf16 %v7137, %v7136
      %v7170 = vunpack.c.l.b16 %v7138
      %v7171 = vunpack.c.h.b16 %v7138
      %v7172 = vunpack.c.l.b16 %v7139
      %v7173 = vunpack.c.h.b16 %v7139
      %v7174 = vunpack.c.l.b16 %v7140
      %v7175 = vunpack.c.h.b16 %v7140
      %v7176 = vunpack.c.l.b16 %v7141
      %v7177 = vunpack.c.h.b16 %v7141
      %v7178 = vunpack.c.l.b16 %v7142
      %v7179 = vunpack.c.h.b16 %v7142
      %v7180 = vunpack.c.l.b16 %v7143
      %v7181 = vunpack.c.h.b16 %v7143
      %v7182 = vunpack.c.l.b16 %v7144
      %v7183 = vunpack.c.h.b16 %v7144
      %v7184 = vunpack.c.l.b16 %v7145
      %v7185 = vunpack.c.h.b16 %v7145
      %v7186 = vunpack.c.l.b16 %v7146
      %v7187 = vunpack.c.h.b16 %v7146
      %v7188 = vunpack.c.l.b16 %v7147
      %v7189 = vunpack.c.h.b16 %v7147
      %v7190 = vunpack.c.l.b16 %v7148
      %v7191 = vunpack.c.h.b16 %v7148
      %v7192 = vunpack.c.l.b16 %v7149
      %v7193 = vunpack.c.h.b16 %v7149
      %v7194 = vunpack.c.l.b16 %v7150
      %v7195 = vunpack.c.h.b16 %v7150
      %v7196 = vunpack.c.l.b16 %v7151
      %v7197 = vunpack.c.h.b16 %v7151
      %v7198 = vunpack.c.l.b16 %v7152
      %v7199 = vunpack.c.h.b16 %v7152
      %v7200 = vunpack.c.l.b16 %v7153
      %v7201 = vunpack.c.h.b16 %v7153
      %v7202 = vpack.c.b16 %v7170, %v7170
      %v7203 = vpack.c.b16 %v7171, %v7171
      %v7204 = vpack.c.b16 %v7172, %v7172
      %v7205 = vpack.c.b16 %v7173, %v7173
      %v7206 = vpack.c.b16 %v7174, %v7174
      %v7207 = vpack.c.b16 %v7175, %v7175
      %v7208 = vpack.c.b16 %v7176, %v7176
      %v7209 = vpack.c.b16 %v7177, %v7177
      %v7210 = vpack.c.b16 %v7178, %v7178
      %v7211 = vpack.c.b16 %v7179, %v7179
      %v7212 = vpack.c.b16 %v7180, %v7180
      %v7213 = vpack.c.b16 %v7181, %v7181
      %v7214 = vpack.c.b16 %v7182, %v7182
      %v7215 = vpack.c.b16 %v7183, %v7183
      %v7216 = vpack.c.b16 %v7184, %v7184
      %v7217 = vpack.c.b16 %v7185, %v7185
      %v7218 = vpack.c.b16 %v7186, %v7186
      %v7219 = vpack.c.b16 %v7187, %v7187
      %v7220 = vpack.c.b16 %v7188, %v7188
      %v7221 = vpack.c.b16 %v7189, %v7189
      %v7222 = vpack.c.b16 %v7190, %v7190
      %v7223 = vpack.c.b16 %v7191, %v7191
      %v7224 = vpack.c.b16 %v7192, %v7192
      %v7225 = vpack.c.b16 %v7193, %v7193
      %v7226 = vpack.c.b16 %v7194, %v7194
      %v7227 = vpack.c.b16 %v7195, %v7195
      %v7228 = vpack.c.b16 %v7196, %v7196
      %v7229 = vpack.c.b16 %v7197, %v7197
      %v7230 = vpack.c.b16 %v7198, %v7198
      %v7231 = vpack.c.b16 %v7199, %v7199
      %v7232 = vpack.c.b16 %v7200, %v7200
      %v7233 = vpack.c.b16 %v7201, %v7201
      %7266 = vst [vmem:[#allocation2 + $0x4] sm:$0xf] %v7202
      %7267 = vst [vmem:[#allocation2 + $0x28] sm:$0xf] %v7203
      %7268 = vst [vmem:[#allocation2 + $0x4c] sm:$0xf] %v7204
      %7269 = vst [vmem:[#allocation2 + $0x70] sm:$0xf] %v7205
      %7270 = vst [vmem:[#allocation2 + $0x94] sm:$0xf] %v7206
      %7271 = vst [vmem:[#allocation2 + $0xb8] sm:$0xf] %v7207
      %7272 = vst [vmem:[#allocation2 + $0xdc] sm:$0xf] %v7208
      %7273 = vst [vmem:[#allocation2 + $0x100] sm:$0xf] %v7209
      %7274 = vst [vmem:[#allocation2 + $0x124] sm:$0xf] %v7210
      %7275 = vst [vmem:[#allocation2 + $0x148] sm:$0xf] %v7211
      %7276 = vst [vmem:[#allocation2 + $0x16c] sm:$0xf] %v7212
      %7277 = vst [vmem:[#allocation2 + $0x190] sm:$0xf] %v7213
      %7278 = vst [vmem:[#allocation2 + $0x1b4] sm:$0xf] %v7214
      %7279 = vst [vmem:[#allocation2 + $0x1d8] sm:$0xf] %v7215
      %7280 = vst [vmem:[#allocation2 + $0x1fc] sm:$0xf] %v7216
      %7281 = vst [vmem:[#allocation2 + $0x220] sm:$0xf] %v7217
      %7282 = vst [vmem:[#allocation2 + $0x244] sm:$0xf] %v7218
      %7283 = vst [vmem:[#allocation2 + $0x268] sm:$0xf] %v7219
      %7284 = vst [vmem:[#allocation2 + $0x28c] sm:$0xf] %v7220
      %7285 = vst [vmem:[#allocation2 + $0x2b0] sm:$0xf] %v7221
      %7286 = vst [vmem:[#allocation2 + $0x2d4] sm:$0xf] %v7222
      %7287 = vst [vmem:[#allocation2 + $0x2f8] sm:$0xf] %v7223
      %7288 = vst [vmem:[#allocation2 + $0x31c] sm:$0xf] %v7224
      %7289 = vst [vmem:[#allocation2 + $0x340] sm:$0xf] %v7225
      %7290 = vst [vmem:[#allocation2 + $0x364] sm:$0xf] %v7226
      %7291 = vst [vmem:[#allocation2 + $0x388] sm:$0xf] %v7227
      %7292 = vst [vmem:[#allocation2 + $0x3ac] sm:$0xf] %v7228
      %7293 = vst [vmem:[#allocation2 + $0x3d0] sm:$0xf] %v7229
      %7294 = vst [vmem:[#allocation2 + $0x3f4] sm:$0xf] %v7230
      %7295 = vst [vmem:[#allocation2 + $0x418] sm:$0xf] %v7231
      %7296 = vst [vmem:[#allocation2 + $0x43c] sm:$0xf] %v7232
      %7297 = vst [vmem:[#allocation2 + $0x460] sm:$0xf] %v7233
      %v7298 = vld [vmem:[#allocation5 + $0x2] sm:$0xff]
      %v7299 = vld [vmem:[#allocation5 + $0xa] sm:$0xff]
      %v7300 = vld [vmem:[#allocation5 + $0x1a] sm:$0xff]
      %v7301 = vld [vmem:[#allocation5 + $0x22] sm:$0xff]
      %v7302 = vld [vmem:[#allocation5 + $0x32] sm:$0xff]
      %v7303 = vld [vmem:[#allocation5 + $0x3a] sm:$0xff]
      %v7304 = vld [vmem:[#allocation5 + $0x4a] sm:$0xff]
      %v7305 = vld [vmem:[#allocation5 + $0x52] sm:$0xff]
      %v7306 = vld [vmem:[#allocation5 + $0x62] sm:$0xff]
      %v7307 = vld [vmem:[#allocation5 + $0x6a] sm:$0xff]
      %v7308 = vld [vmem:[#allocation5 + $0x7a] sm:$0xff]
      %v7309 = vld [vmem:[#allocation5 + $0x82] sm:$0xff]
      %v7310 = vld [vmem:[#allocation5 + $0x92] sm:$0xff]
      %v7311 = vld [vmem:[#allocation5 + $0x9a] sm:$0xff]
      %v7312 = vld [vmem:[#allocation5 + $0xaa] sm:$0xff]
      %v7313 = vld [vmem:[#allocation5 + $0xb2] sm:$0xff]
      %v7314 = vld [vmem:[#allocation5 + $0xc2] sm:$0xff]
      %v7315 = vld [vmem:[#allocation5 + $0xca] sm:$0xff]
      %v7316 = vld [vmem:[#allocation5 + $0xda] sm:$0xff]
      %v7317 = vld [vmem:[#allocation5 + $0xe2] sm:$0xff]
      %v7318 = vld [vmem:[#allocation5 + $0xf2] sm:$0xff]
      %v7319 = vld [vmem:[#allocation5 + $0xfa] sm:$0xff]
      %v7320 = vld [vmem:[#allocation5 + $0x10a] sm:$0xff]
      %v7321 = vld [vmem:[#allocation5 + $0x112] sm:$0xff]
      %v7322 = vld [vmem:[#allocation5 + $0x122] sm:$0xff]
      %v7323 = vld [vmem:[#allocation5 + $0x12a] sm:$0xff]
      %v7324 = vld [vmem:[#allocation5 + $0x13a] sm:$0xff]
      %v7325 = vld [vmem:[#allocation5 + $0x142] sm:$0xff]
      %v7326 = vld [vmem:[#allocation5 + $0x152] sm:$0xff]
      %v7327 = vld [vmem:[#allocation5 + $0x15a] sm:$0xff]
      %v7328 = vld [vmem:[#allocation5 + $0x16a] sm:$0xff]
      %v7329 = vld [vmem:[#allocation5 + $0x172] sm:$0xff]
      %v7330 = vpack.c.bf16 %v7299, %v7298
      %v7331 = vpack.c.bf16 %v7301, %v7300
      %v7332 = vpack.c.bf16 %v7303, %v7302
      %v7333 = vpack.c.bf16 %v7305, %v7304
      %v7334 = vpack.c.bf16 %v7307, %v7306
      %v7335 = vpack.c.bf16 %v7309, %v7308
      %v7336 = vpack.c.bf16 %v7311, %v7310
      %v7337 = vpack.c.bf16 %v7313, %v7312
      %v7338 = vpack.c.bf16 %v7315, %v7314
      %v7339 = vpack.c.bf16 %v7317, %v7316
      %v7340 = vpack.c.bf16 %v7319, %v7318
      %v7341 = vpack.c.bf16 %v7321, %v7320
      %v7342 = vpack.c.bf16 %v7323, %v7322
      %v7343 = vpack.c.bf16 %v7325, %v7324
      %v7344 = vpack.c.bf16 %v7327, %v7326
      %v7345 = vpack.c.bf16 %v7329, %v7328
      %v7362 = vunpack.c.l.b16 %v7330
      %v7363 = vunpack.c.h.b16 %v7330
      %v7364 = vunpack.c.l.b16 %v7331
      %v7365 = vunpack.c.h.b16 %v7331
      %v7366 = vunpack.c.l.b16 %v7332
      %v7367 = vunpack.c.h.b16 %v7332
      %v7368 = vunpack.c.l.b16 %v7333
      %v7369 = vunpack.c.h.b16 %v7333
      %v7370 = vunpack.c.l.b16 %v7334
      %v7371 = vunpack.c.h.b16 %v7334
      %v7372 = vunpack.c.l.b16 %v7335
      %v7373 = vunpack.c.h.b16 %v7335
      %v7374 = vunpack.c.l.b16 %v7336
      %v7375 = vunpack.c.h.b16 %v7336
      %v7376 = vunpack.c.l.b16 %v7337
      %v7377 = vunpack.c.h.b16 %v7337
      %v7378 = vunpack.c.l.b16 %v7338
      %v7379 = vunpack.c.h.b16 %v7338
      %v7380 = vunpack.c.l.b16 %v7339
      %v7381 = vunpack.c.h.b16 %v7339
      %v7382 = vunpack.c.l.b16 %v7340
      %v7383 = vunpack.c.h.b16 %v7340
      %v7384 = vunpack.c.l.b16 %v7341
      %v7385 = vunpack.c.h.b16 %v7341
      %v7386 = vunpack.c.l.b16 %v7342
      %v7387 = vunpack.c.h.b16 %v7342
      %v7388 = vunpack.c.l.b16 %v7343
      %v7389 = vunpack.c.h.b16 %v7343
      %v7390 = vunpack.c.l.b16 %v7344
      %v7391 = vunpack.c.h.b16 %v7344
      %v7392 = vunpack.c.l.b16 %v7345
      %v7393 = vunpack.c.h.b16 %v7345
      %v7394 = vpack.c.b16 %v7362, %v7362
      %v7395 = vpack.c.b16 %v7363, %v7363
      %v7396 = vpack.c.b16 %v7364, %v7364
      %v7397 = vpack.c.b16 %v7365, %v7365
      %v7398 = vpack.c.b16 %v7366, %v7366
      %v7399 = vpack.c.b16 %v7367, %v7367
      %v7400 = vpack.c.b16 %v7368, %v7368
      %v7401 = vpack.c.b16 %v7369, %v7369
      %v7402 = vpack.c.b16 %v7370, %v7370
      %v7403 = vpack.c.b16 %v7371, %v7371
      %v7404 = vpack.c.b16 %v7372, %v7372
      %v7405 = vpack.c.b16 %v7373, %v7373
      %v7406 = vpack.c.b16 %v7374, %v7374
      %v7407 = vpack.c.b16 %v7375, %v7375
      %v7408 = vpack.c.b16 %v7376, %v7376
      %v7409 = vpack.c.b16 %v7377, %v7377
      %v7410 = vpack.c.b16 %v7378, %v7378
      %v7411 = vpack.c.b16 %v7379, %v7379
      %v7412 = vpack.c.b16 %v7380, %v7380
      %v7413 = vpack.c.b16 %v7381, %v7381
      %v7414 = vpack.c.b16 %v7382, %v7382
      %v7415 = vpack.c.b16 %v7383, %v7383
      %v7416 = vpack.c.b16 %v7384, %v7384
      %v7417 = vpack.c.b16 %v7385, %v7385
      %v7418 = vpack.c.b16 %v7386, %v7386
      %v7419 = vpack.c.b16 %v7387, %v7387
      %v7420 = vpack.c.b16 %v7388, %v7388
      %v7421 = vpack.c.b16 %v7389, %v7389
      %v7422 = vpack.c.b16 %v7390, %v7390
      %v7423 = vpack.c.b16 %v7391, %v7391
      %v7424 = vpack.c.b16 %v7392, %v7392
      %v7425 = vpack.c.b16 %v7393, %v7393
      %7458 = vst [vmem:[#allocation2 + $0x8] sm:$0xf] %v7394
      %7459 = vst [vmem:[#allocation2 + $0x2c] sm:$0xf] %v7395
      %7460 = vst [vmem:[#allocation2 + $0x50] sm:$0xf] %v7396
      %7461 = vst [vmem:[#allocation2 + $0x74] sm:$0xf] %v7397
      %7462 = vst [vmem:[#allocation2 + $0x98] sm:$0xf] %v7398
      %7463 = vst [vmem:[#allocation2 + $0xbc] sm:$0xf] %v7399
      %7464 = vst [vmem:[#allocation2 + $0xe0] sm:$0xf] %v7400
      %7465 = vst [vmem:[#allocation2 + $0x104] sm:$0xf] %v7401
      %7466 = vst [vmem:[#allocation2 + $0x128] sm:$0xf] %v7402
      %7467 = vst [vmem:[#allocation2 + $0x14c] sm:$0xf] %v7403
      %7468 = vst [vmem:[#allocation2 + $0x170] sm:$0xf] %v7404
      %7469 = vst [vmem:[#allocation2 + $0x194] sm:$0xf] %v7405
      %7470 = vst [vmem:[#allocation2 + $0x1b8] sm:$0xf] %v7406
      %7471 = vst [vmem:[#allocation2 + $0x1dc] sm:$0xf] %v7407
      %7472 = vst [vmem:[#allocation2 + $0x200] sm:$0xf] %v7408
      %7473 = vst [vmem:[#allocation2 + $0x224] sm:$0xf] %v7409
      %7474 = vst [vmem:[#allocation2 + $0x248] sm:$0xf] %v7410
      %7475 = vst [vmem:[#allocation2 + $0x26c] sm:$0xf] %v7411
      %7476 = vst [vmem:[#allocation2 + $0x290] sm:$0xf] %v7412
      %7477 = vst [vmem:[#allocation2 + $0x2b4] sm:$0xf] %v7413
      %7478 = vst [vmem:[#allocation2 + $0x2d8] sm:$0xf] %v7414
      %7479 = vst [vmem:[#allocation2 + $0x2fc] sm:$0xf] %v7415
      %7480 = vst [vmem:[#allocation2 + $0x320] sm:$0xf] %v7416
      %7481 = vst [vmem:[#allocation2 + $0x344] sm:$0xf] %v7417
      %7482 = vst [vmem:[#allocation2 + $0x368] sm:$0xf] %v7418
      %7483 = vst [vmem:[#allocation2 + $0x38c] sm:$0xf] %v7419
      %7484 = vst [vmem:[#allocation2 + $0x3b0] sm:$0xf] %v7420
      %7485 = vst [vmem:[#allocation2 + $0x3d4] sm:$0xf] %v7421
      %7486 = vst [vmem:[#allocation2 + $0x3f8] sm:$0xf] %v7422
      %7487 = vst [vmem:[#allocation2 + $0x41c] sm:$0xf] %v7423
      %7488 = vst [vmem:[#allocation2 + $0x440] sm:$0xf] %v7424
      %7489 = vst [vmem:[#allocation2 + $0x464] sm:$0xf] %v7425
      %v7490 = vld [vmem:[%s6881] sm:$0xff]
      %v7491 = vld [vmem:[%s6881 + $0x8] sm:$0xff]
      %v7492 = vld [vmem:[%s6881 + $0x18] sm:$0xff]
      %v7493 = vld [vmem:[%s6881 + $0x20] sm:$0xff]
      %v7494 = vld [vmem:[%s6881 + $0x30] sm:$0xff]
      %v7495 = vld [vmem:[%s6881 + $0x38] sm:$0xff]
      %v7496 = vld [vmem:[%s6881 + $0x48] sm:$0xff]
      %v7497 = vld [vmem:[%s6881 + $0x50] sm:$0xff]
      %v7498 = vld [vmem:[%s6881 + $0x60] sm:$0xff]
      %v7499 = vld [vmem:[%s6881 + $0x68] sm:$0xff]
      %v7500 = vld [vmem:[%s6881 + $0x78] sm:$0xff]
      %v7501 = vld [vmem:[%s6881 + $0x80] sm:$0xff]
      %v7502 = vld [vmem:[%s6881 + $0x90] sm:$0xff]
      %v7503 = vld [vmem:[%s6881 + $0x98] sm:$0xff]
      %v7504 = vld [vmem:[%s6881 + $0xa8] sm:$0xff]
      %v7505 = vld [vmem:[%s6881 + $0xb0] sm:$0xff]
      %v7506 = vld [vmem:[%s6881 + $0xc0] sm:$0xff]
      %v7507 = vld [vmem:[%s6881 + $0xc8] sm:$0xff]
      %v7508 = vld [vmem:[%s6881 + $0xd8] sm:$0xff]
      %v7509 = vld [vmem:[%s6881 + $0xe0] sm:$0xff]
      %v7510 = vld [vmem:[%s6881 + $0xf0] sm:$0xff]
      %v7511 = vld [vmem:[%s6881 + $0xf8] sm:$0xff]
      %v7512 = vld [vmem:[%s6881 + $0x108] sm:$0xff]
      %v7513 = vld [vmem:[%s6881 + $0x110] sm:$0xff]
      %v7514 = vld [vmem:[%s6881 + $0x120] sm:$0xff]
      %v7515 = vld [vmem:[%s6881 + $0x128] sm:$0xff]
      %v7516 = vld [vmem:[%s6881 + $0x138] sm:$0xff]
      %v7517 = vld [vmem:[%s6881 + $0x140] sm:$0xff]
      %v7518 = vld [vmem:[%s6881 + $0x150] sm:$0xff]
      %v7519 = vld [vmem:[%s6881 + $0x158] sm:$0xff]
      %v7520 = vld [vmem:[%s6881 + $0x168] sm:$0xff]
      %v7521 = vld [vmem:[%s6881 + $0x170] sm:$0xff]
      %v7522 = vpack.c.bf16 %v7491, %v7490
      %v7523 = vpack.c.bf16 %v7493, %v7492
      %v7524 = vpack.c.bf16 %v7495, %v7494
      %v7525 = vpack.c.bf16 %v7497, %v7496
      %v7526 = vpack.c.bf16 %v7499, %v7498
      %v7527 = vpack.c.bf16 %v7501, %v7500
      %v7528 = vpack.c.bf16 %v7503, %v7502
      %v7529 = vpack.c.bf16 %v7505, %v7504
      %v7530 = vpack.c.bf16 %v7507, %v7506
      %v7531 = vpack.c.bf16 %v7509, %v7508
      %v7532 = vpack.c.bf16 %v7511, %v7510
      %v7533 = vpack.c.bf16 %v7513, %v7512
      %v7534 = vpack.c.bf16 %v7515, %v7514
      %v7535 = vpack.c.bf16 %v7517, %v7516
      %v7536 = vpack.c.bf16 %v7519, %v7518
      %v7537 = vpack.c.bf16 %v7521, %v7520
      %v7554 = vunpack.c.l.b16 %v7522
      %v7555 = vunpack.c.h.b16 %v7522
      %v7556 = vunpack.c.l.b16 %v7523
      %v7557 = vunpack.c.h.b16 %v7523
      %v7558 = vunpack.c.l.b16 %v7524
      %v7559 = vunpack.c.h.b16 %v7524
      %v7560 = vunpack.c.l.b16 %v7525
      %v7561 = vunpack.c.h.b16 %v7525
      %v7562 = vunpack.c.l.b16 %v7526
      %v7563 = vunpack.c.h.b16 %v7526
      %v7564 = vunpack.c.l.b16 %v7527
      %v7565 = vunpack.c.h.b16 %v7527
      %v7566 = vunpack.c.l.b16 %v7528
      %v7567 = vunpack.c.h.b16 %v7528
      %v7568 = vunpack.c.l.b16 %v7529
      %v7569 = vunpack.c.h.b16 %v7529
      %v7570 = vunpack.c.l.b16 %v7530
      %v7571 = vunpack.c.h.b16 %v7530
      %v7572 = vunpack.c.l.b16 %v7531
      %v7573 = vunpack.c.h.b16 %v7531
      %v7574 = vunpack.c.l.b16 %v7532
      %v7575 = vunpack.c.h.b16 %v7532
      %v7576 = vunpack.c.l.b16 %v7533
      %v7577 = vunpack.c.h.b16 %v7533
      %v7578 = vunpack.c.l.b16 %v7534
      %v7579 = vunpack.c.h.b16 %v7534
      %v7580 = vunpack.c.l.b16 %v7535
      %v7581 = vunpack.c.h.b16 %v7535
      %v7582 = vunpack.c.l.b16 %v7536
      %v7583 = vunpack.c.h.b16 %v7536
      %v7584 = vunpack.c.l.b16 %v7537
      %v7585 = vunpack.c.h.b16 %v7537
      %v7586 = vpack.c.b16 %v7554, %v7554
      %v7587 = vpack.c.b16 %v7555, %v7555
      %v7588 = vpack.c.b16 %v7556, %v7556
      %v7589 = vpack.c.b16 %v7557, %v7557
      %v7590 = vpack.c.b16 %v7558, %v7558
      %v7591 = vpack.c.b16 %v7559, %v7559
      %v7592 = vpack.c.b16 %v7560, %v7560
      %v7593 = vpack.c.b16 %v7561, %v7561
      %v7594 = vpack.c.b16 %v7562, %v7562
      %v7595 = vpack.c.b16 %v7563, %v7563
      %v7596 = vpack.c.b16 %v7564, %v7564
      %v7597 = vpack.c.b16 %v7565, %v7565
      %v7598 = vpack.c.b16 %v7566, %v7566
      %v7599 = vpack.c.b16 %v7567, %v7567
      %v7600 = vpack.c.b16 %v7568, %v7568
      %v7601 = vpack.c.b16 %v7569, %v7569
      %v7602 = vpack.c.b16 %v7570, %v7570
      %v7603 = vpack.c.b16 %v7571, %v7571
      %v7604 = vpack.c.b16 %v7572, %v7572
      %v7605 = vpack.c.b16 %v7573, %v7573
      %v7606 = vpack.c.b16 %v7574, %v7574
      %v7607 = vpack.c.b16 %v7575, %v7575
      %v7608 = vpack.c.b16 %v7576, %v7576
      %v7609 = vpack.c.b16 %v7577, %v7577
      %v7610 = vpack.c.b16 %v7578, %v7578
      %v7611 = vpack.c.b16 %v7579, %v7579
      %v7612 = vpack.c.b16 %v7580, %v7580
      %v7613 = vpack.c.b16 %v7581, %v7581
      %v7614 = vpack.c.b16 %v7582, %v7582
      %v7615 = vpack.c.b16 %v7583, %v7583
      %v7616 = vpack.c.b16 %v7584, %v7584
      %v7617 = vpack.c.b16 %v7585, %v7585
      %7650 = vst [vmem:[#allocation2 + $0xc] sm:$0xf] %v7586
      %7651 = vst [vmem:[#allocation2 + $0x30] sm:$0xf] %v7587
      %7652 = vst [vmem:[#allocation2 + $0x54] sm:$0xf] %v7588
      %7653 = vst [vmem:[#allocation2 + $0x78] sm:$0xf] %v7589
      %7654 = vst [vmem:[#allocation2 + $0x9c] sm:$0xf] %v7590
      %7655 = vst [vmem:[#allocation2 + $0xc0] sm:$0xf] %v7591
      %7656 = vst [vmem:[#allocation2 + $0xe4] sm:$0xf] %v7592
      %7657 = vst [vmem:[#allocation2 + $0x108] sm:$0xf] %v7593
      %7658 = vst [vmem:[#allocation2 + $0x12c] sm:$0xf] %v7594
      %7659 = vst [vmem:[#allocation2 + $0x150] sm:$0xf] %v7595
      %7660 = vst [vmem:[#allocation2 + $0x174] sm:$0xf] %v7596
      %7661 = vst [vmem:[#allocation2 + $0x198] sm:$0xf] %v7597
      %7662 = vst [vmem:[#allocation2 + $0x1bc] sm:$0xf] %v7598
      %7663 = vst [vmem:[#allocation2 + $0x1e0] sm:$0xf] %v7599
      %7664 = vst [vmem:[#allocation2 + $0x204] sm:$0xf] %v7600
      %7665 = vst [vmem:[#allocation2 + $0x228] sm:$0xf] %v7601
      %7666 = vst [vmem:[#allocation2 + $0x24c] sm:$0xf] %v7602
      %7667 = vst [vmem:[#allocation2 + $0x270] sm:$0xf] %v7603
      %7668 = vst [vmem:[#allocation2 + $0x294] sm:$0xf] %v7604
      %7669 = vst [vmem:[#allocation2 + $0x2b8] sm:$0xf] %v7605
      %7670 = vst [vmem:[#allocation2 + $0x2dc] sm:$0xf] %v7606
      %7671 = vst [vmem:[#allocation2 + $0x300] sm:$0xf] %v7607
      %7672 = vst [vmem:[#allocation2 + $0x324] sm:$0xf] %v7608
      %7673 = vst [vmem:[#allocation2 + $0x348] sm:$0xf] %v7609
      %7674 = vst [vmem:[#allocation2 + $0x36c] sm:$0xf] %v7610
      %7675 = vst [vmem:[#allocation2 + $0x390] sm:$0xf] %v7611
      %7676 = vst [vmem:[#allocation2 + $0x3b4] sm:$0xf] %v7612
      %7677 = vst [vmem:[#allocation2 + $0x3d8] sm:$0xf] %v7613
      %7678 = vst [vmem:[#allocation2 + $0x3fc] sm:$0xf] %v7614
      %7679 = vst [vmem:[#allocation2 + $0x420] sm:$0xf] %v7615
      %7680 = vst [vmem:[#allocation2 + $0x444] sm:$0xf] %v7616
      %7681 = vst [vmem:[#allocation2 + $0x468] sm:$0xf] %v7617
      %v7682 = vld [vmem:[%s6881 + $0x1] sm:$0xff]
      %v7683 = vld [vmem:[%s6881 + $0x9] sm:$0xff]
      %v7684 = vld [vmem:[%s6881 + $0x19] sm:$0xff]
      %v7685 = vld [vmem:[%s6881 + $0x21] sm:$0xff]
      %v7686 = vld [vmem:[%s6881 + $0x31] sm:$0xff]
      %v7687 = vld [vmem:[%s6881 + $0x39] sm:$0xff]
      %v7688 = vld [vmem:[%s6881 + $0x49] sm:$0xff]
      %v7689 = vld [vmem:[%s6881 + $0x51] sm:$0xff]
      %v7690 = vld [vmem:[%s6881 + $0x61] sm:$0xff]
      %v7691 = vld [vmem:[%s6881 + $0x69] sm:$0xff]
      %v7692 = vld [vmem:[%s6881 + $0x79] sm:$0xff]
      %v7693 = vld [vmem:[%s6881 + $0x81] sm:$0xff]
      %v7694 = vld [vmem:[%s6881 + $0x91] sm:$0xff]
      %v7695 = vld [vmem:[%s6881 + $0x99] sm:$0xff]
      %v7696 = vld [vmem:[%s6881 + $0xa9] sm:$0xff]
      %v7697 = vld [vmem:[%s6881 + $0xb1] sm:$0xff]
      %v7698 = vld [vmem:[%s6881 + $0xc1] sm:$0xff]
      %v7699 = vld [vmem:[%s6881 + $0xc9] sm:$0xff]
      %v7700 = vld [vmem:[%s6881 + $0xd9] sm:$0xff]
      %v7701 = vld [vmem:[%s6881 + $0xe1] sm:$0xff]
      %v7702 = vld [vmem:[%s6881 + $0xf1] sm:$0xff]
      %v7703 = vld [vmem:[%s6881 + $0xf9] sm:$0xff]
      %v7704 = vld [vmem:[%s6881 + $0x109] sm:$0xff]
      %v7705 = vld [vmem:[%s6881 + $0x111] sm:$0xff]
      %v7706 = vld [vmem:[%s6881 + $0x121] sm:$0xff]
      %v7707 = vld [vmem:[%s6881 + $0x129] sm:$0xff]
      %v7708 = vld [vmem:[%s6881 + $0x139] sm:$0xff]
      %v7709 = vld [vmem:[%s6881 + $0x141] sm:$0xff]
      %v7710 = vld [vmem:[%s6881 + $0x151] sm:$0xff]
      %v7711 = vld [vmem:[%s6881 + $0x159] sm:$0xff]
      %v7712 = vld [vmem:[%s6881 + $0x169] sm:$0xff]
      %v7713 = vld [vmem:[%s6881 + $0x171] sm:$0xff]
      %v7714 = vpack.c.bf16 %v7683, %v7682
      %v7715 = vpack.c.bf16 %v7685, %v7684
      %v7716 = vpack.c.bf16 %v7687, %v7686
      %v7717 = vpack.c.bf16 %v7689, %v7688
      %v7718 = vpack.c.bf16 %v7691, %v7690
      %v7719 = vpack.c.bf16 %v7693, %v7692
      %v7720 = vpack.c.bf16 %v7695, %v7694
      %v7721 = vpack.c.bf16 %v7697, %v7696
      %v7722 = vpack.c.bf16 %v7699, %v7698
      %v7723 = vpack.c.bf16 %v7701, %v7700
      %v7724 = vpack.c.bf16 %v7703, %v7702
      %v7725 = vpack.c.bf16 %v7705, %v7704
      %v7726 = vpack.c.bf16 %v7707, %v7706
      %v7727 = vpack.c.bf16 %v7709, %v7708
      %v7728 = vpack.c.bf16 %v7711, %v7710
      %v7729 = vpack.c.bf16 %v7713, %v7712
      %v7746 = vunpack.c.l.b16 %v7714
      %v7747 = vunpack.c.h.b16 %v7714
      %v7748 = vunpack.c.l.b16 %v7715
      %v7749 = vunpack.c.h.b16 %v7715
      %v7750 = vunpack.c.l.b16 %v7716
      %v7751 = vunpack.c.h.b16 %v7716
      %v7752 = vunpack.c.l.b16 %v7717
      %v7753 = vunpack.c.h.b16 %v7717
      %v7754 = vunpack.c.l.b16 %v7718
      %v7755 = vunpack.c.h.b16 %v7718
      %v7756 = vunpack.c.l.b16 %v7719
      %v7757 = vunpack.c.h.b16 %v7719
      %v7758 = vunpack.c.l.b16 %v7720
      %v7759 = vunpack.c.h.b16 %v7720
      %v7760 = vunpack.c.l.b16 %v7721
      %v7761 = vunpack.c.h.b16 %v7721
      %v7762 = vunpack.c.l.b16 %v7722
      %v7763 = vunpack.c.h.b16 %v7722
      %v7764 = vunpack.c.l.b16 %v7723
      %v7765 = vunpack.c.h.b16 %v7723
      %v7766 = vunpack.c.l.b16 %v7724
      %v7767 = vunpack.c.h.b16 %v7724
      %v7768 = vunpack.c.l.b16 %v7725
      %v7769 = vunpack.c.h.b16 %v7725
      %v7770 = vunpack.c.l.b16 %v7726
      %v7771 = vunpack.c.h.b16 %v7726
      %v7772 = vunpack.c.l.b16 %v7727
      %v7773 = vunpack.c.h.b16 %v7727
      %v7774 = vunpack.c.l.b16 %v7728
      %v7775 = vunpack.c.h.b16 %v7728
      %v7776 = vunpack.c.l.b16 %v7729
      %v7777 = vunpack.c.h.b16 %v7729
      %v7778 = vpack.c.b16 %v7746, %v7746
      %v7779 = vpack.c.b16 %v7747, %v7747
      %v7780 = vpack.c.b16 %v7748, %v7748
      %v7781 = vpack.c.b16 %v7749, %v7749
      %v7782 = vpack.c.b16 %v7750, %v7750
      %v7783 = vpack.c.b16 %v7751, %v7751
      %v7784 = vpack.c.b16 %v7752, %v7752
      %v7785 = vpack.c.b16 %v7753, %v7753
      %v7786 = vpack.c.b16 %v7754, %v7754
      %v7787 = vpack.c.b16 %v7755, %v7755
      %v7788 = vpack.c.b16 %v7756, %v7756
      %v7789 = vpack.c.b16 %v7757, %v7757
      %v7790 = vpack.c.b16 %v7758, %v7758
      %v7791 = vpack.c.b16 %v7759, %v7759
      %v7792 = vpack.c.b16 %v7760, %v7760
      %v7793 = vpack.c.b16 %v7761, %v7761
      %v7794 = vpack.c.b16 %v7762, %v7762
      %v7795 = vpack.c.b16 %v7763, %v7763
      %v7796 = vpack.c.b16 %v7764, %v7764
      %v7797 = vpack.c.b16 %v7765, %v7765
      %v7798 = vpack.c.b16 %v7766, %v7766
      %v7799 = vpack.c.b16 %v7767, %v7767
      %v7800 = vpack.c.b16 %v7768, %v7768
      %v7801 = vpack.c.b16 %v7769, %v7769
      %v7802 = vpack.c.b16 %v7770, %v7770
      %v7803 = vpack.c.b16 %v7771, %v7771
      %v7804 = vpack.c.b16 %v7772, %v7772
      %v7805 = vpack.c.b16 %v7773, %v7773
      %v7806 = vpack.c.b16 %v7774, %v7774
      %v7807 = vpack.c.b16 %v7775, %v7775
      %v7808 = vpack.c.b16 %v7776, %v7776
      %v7809 = vpack.c.b16 %v7777, %v7777
      %7842 = vst [vmem:[#allocation2 + $0x10] sm:$0xf] %v7778
      %7843 = vst [vmem:[#allocation2 + $0x34] sm:$0xf] %v7779
      %7844 = vst [vmem:[#allocation2 + $0x58] sm:$0xf] %v7780
      %7845 = vst [vmem:[#allocation2 + $0x7c] sm:$0xf] %v7781
      %7846 = vst [vmem:[#allocation2 + $0xa0] sm:$0xf] %v7782
      %7847 = vst [vmem:[#allocation2 + $0xc4] sm:$0xf] %v7783
      %7848 = vst [vmem:[#allocation2 + $0xe8] sm:$0xf] %v7784
      %7849 = vst [vmem:[#allocation2 + $0x10c] sm:$0xf] %v7785
      %7850 = vst [vmem:[#allocation2 + $0x130] sm:$0xf] %v7786
      %7851 = vst [vmem:[#allocation2 + $0x154] sm:$0xf] %v7787
      %7852 = vst [vmem:[#allocation2 + $0x178] sm:$0xf] %v7788
      %7853 = vst [vmem:[#allocation2 + $0x19c] sm:$0xf] %v7789
      %7854 = vst [vmem:[#allocation2 + $0x1c0] sm:$0xf] %v7790
      %7855 = vst [vmem:[#allocation2 + $0x1e4] sm:$0xf] %v7791
      %7856 = vst [vmem:[#allocation2 + $0x208] sm:$0xf] %v7792
      %7857 = vst [vmem:[#allocation2 + $0x22c] sm:$0xf] %v7793
      %7858 = vst [vmem:[#allocation2 + $0x250] sm:$0xf] %v7794
      %7859 = vst [vmem:[#allocation2 + $0x274] sm:$0xf] %v7795
      %7860 = vst [vmem:[#allocation2 + $0x298] sm:$0xf] %v7796
      %7861 = vst [vmem:[#allocation2 + $0x2bc] sm:$0xf] %v7797
      %7862 = vst [vmem:[#allocation2 + $0x2e0] sm:$0xf] %v7798
      %7863 = vst [vmem:[#allocation2 + $0x304] sm:$0xf] %v7799
      %7864 = vst [vmem:[#allocation2 + $0x328] sm:$0xf] %v7800
      %7865 = vst [vmem:[#allocation2 + $0x34c] sm:$0xf] %v7801
      %7866 = vst [vmem:[#allocation2 + $0x370] sm:$0xf] %v7802
      %7867 = vst [vmem:[#allocation2 + $0x394] sm:$0xf] %v7803
      %7868 = vst [vmem:[#allocation2 + $0x3b8] sm:$0xf] %v7804
      %7869 = vst [vmem:[#allocation2 + $0x3dc] sm:$0xf] %v7805
      %7870 = vst [vmem:[#allocation2 + $0x400] sm:$0xf] %v7806
      %7871 = vst [vmem:[#allocation2 + $0x424] sm:$0xf] %v7807
      %7872 = vst [vmem:[#allocation2 + $0x448] sm:$0xf] %v7808
      %7873 = vst [vmem:[#allocation2 + $0x46c] sm:$0xf] %v7809
      %v7874 = vld [vmem:[%s6881 + $0x2] sm:$0xff]
      %v7875 = vld [vmem:[%s6881 + $0xa] sm:$0xff]
      %v7876 = vld [vmem:[%s6881 + $0x1a] sm:$0xff]
      %v7877 = vld [vmem:[%s6881 + $0x22] sm:$0xff]
      %v7878 = vld [vmem:[%s6881 + $0x32] sm:$0xff]
      %v7879 = vld [vmem:[%s6881 + $0x3a] sm:$0xff]
      %v7880 = vld [vmem:[%s6881 + $0x4a] sm:$0xff]
      %v7881 = vld [vmem:[%s6881 + $0x52] sm:$0xff]
      %v7882 = vld [vmem:[%s6881 + $0x62] sm:$0xff]
      %v7883 = vld [vmem:[%s6881 + $0x6a] sm:$0xff]
      %v7884 = vld [vmem:[%s6881 + $0x7a] sm:$0xff]
      %v7885 = vld [vmem:[%s6881 + $0x82] sm:$0xff]
      %v7886 = vld [vmem:[%s6881 + $0x92] sm:$0xff]
      %v7887 = vld [vmem:[%s6881 + $0x9a] sm:$0xff]
      %v7888 = vld [vmem:[%s6881 + $0xaa] sm:$0xff]
      %v7889 = vld [vmem:[%s6881 + $0xb2] sm:$0xff]
      %v7890 = vld [vmem:[%s6881 + $0xc2] sm:$0xff]
      %v7891 = vld [vmem:[%s6881 + $0xca] sm:$0xff]
      %v7892 = vld [vmem:[%s6881 + $0xda] sm:$0xff]
      %v7893 = vld [vmem:[%s6881 + $0xe2] sm:$0xff]
      %v7894 = vld [vmem:[%s6881 + $0xf2] sm:$0xff]
      %v7895 = vld [vmem:[%s6881 + $0xfa] sm:$0xff]
      %v7896 = vld [vmem:[%s6881 + $0x10a] sm:$0xff]
      %v7897 = vld [vmem:[%s6881 + $0x112] sm:$0xff]
      %v7898 = vld [vmem:[%s6881 + $0x122] sm:$0xff]
      %v7899 = vld [vmem:[%s6881 + $0x12a] sm:$0xff]
      %v7900 = vld [vmem:[%s6881 + $0x13a] sm:$0xff]
      %v7901 = vld [vmem:[%s6881 + $0x142] sm:$0xff]
      %v7902 = vld [vmem:[%s6881 + $0x152] sm:$0xff]
      %v7903 = vld [vmem:[%s6881 + $0x15a] sm:$0xff]
      %v7904 = vld [vmem:[%s6881 + $0x16a] sm:$0xff]
      %v7905 = vld [vmem:[%s6881 + $0x172] sm:$0xff]
      %v7906 = vpack.c.bf16 %v7875, %v7874
      %v7907 = vpack.c.bf16 %v7877, %v7876
      %v7908 = vpack.c.bf16 %v7879, %v7878
      %v7909 = vpack.c.bf16 %v7881, %v7880
      %v7910 = vpack.c.bf16 %v7883, %v7882
      %v7911 = vpack.c.bf16 %v7885, %v7884
      %v7912 = vpack.c.bf16 %v7887, %v7886
      %v7913 = vpack.c.bf16 %v7889, %v7888
      %v7914 = vpack.c.bf16 %v7891, %v7890
      %v7915 = vpack.c.bf16 %v7893, %v7892
      %v7916 = vpack.c.bf16 %v7895, %v7894
      %v7917 = vpack.c.bf16 %v7897, %v7896
      %v7918 = vpack.c.bf16 %v7899, %v7898
      %v7919 = vpack.c.bf16 %v7901, %v7900
      %v7920 = vpack.c.bf16 %v7903, %v7902
      %v7921 = vpack.c.bf16 %v7905, %v7904
      %v7938 = vunpack.c.l.b16 %v7906
      %v7939 = vunpack.c.h.b16 %v7906
      %v7940 = vunpack.c.l.b16 %v7907
      %v7941 = vunpack.c.h.b16 %v7907
      %v7942 = vunpack.c.l.b16 %v7908
      %v7943 = vunpack.c.h.b16 %v7908
      %v7944 = vunpack.c.l.b16 %v7909
      %v7945 = vunpack.c.h.b16 %v7909
      %v7946 = vunpack.c.l.b16 %v7910
      %v7947 = vunpack.c.h.b16 %v7910
      %v7948 = vunpack.c.l.b16 %v7911
      %v7949 = vunpack.c.h.b16 %v7911
      %v7950 = vunpack.c.l.b16 %v7912
      %v7951 = vunpack.c.h.b16 %v7912
      %v7952 = vunpack.c.l.b16 %v7913
      %v7953 = vunpack.c.h.b16 %v7913
      %v7954 = vunpack.c.l.b16 %v7914
      %v7955 = vunpack.c.h.b16 %v7914
      %v7956 = vunpack.c.l.b16 %v7915
      %v7957 = vunpack.c.h.b16 %v7915
      %v7958 = vunpack.c.l.b16 %v7916
      %v7959 = vunpack.c.h.b16 %v7916
      %v7960 = vunpack.c.l.b16 %v7917
      %v7961 = vunpack.c.h.b16 %v7917
      %v7962 = vunpack.c.l.b16 %v7918
      %v7963 = vunpack.c.h.b16 %v7918
      %v7964 = vunpack.c.l.b16 %v7919
      %v7965 = vunpack.c.h.b16 %v7919
      %v7966 = vunpack.c.l.b16 %v7920
      %v7967 = vunpack.c.h.b16 %v7920
      %v7968 = vunpack.c.l.b16 %v7921
      %v7969 = vunpack.c.h.b16 %v7921
      %v7970 = vpack.c.b16 %v7938, %v7938
      %v7971 = vpack.c.b16 %v7939, %v7939
      %v7972 = vpack.c.b16 %v7940, %v7940
      %v7973 = vpack.c.b16 %v7941, %v7941
      %v7974 = vpack.c.b16 %v7942, %v7942
      %v7975 = vpack.c.b16 %v7943, %v7943
      %v7976 = vpack.c.b16 %v7944, %v7944
      %v7977 = vpack.c.b16 %v7945, %v7945
      %v7978 = vpack.c.b16 %v7946, %v7946
      %v7979 = vpack.c.b16 %v7947, %v7947
      %v7980 = vpack.c.b16 %v7948, %v7948
      %v7981 = vpack.c.b16 %v7949, %v7949
      %v7982 = vpack.c.b16 %v7950, %v7950
      %v7983 = vpack.c.b16 %v7951, %v7951
      %v7984 = vpack.c.b16 %v7952, %v7952
      %v7985 = vpack.c.b16 %v7953, %v7953
      %v7986 = vpack.c.b16 %v7954, %v7954
      %v7987 = vpack.c.b16 %v7955, %v7955
      %v7988 = vpack.c.b16 %v7956, %v7956
      %v7989 = vpack.c.b16 %v7957, %v7957
      %v7990 = vpack.c.b16 %v7958, %v7958
      %v7991 = vpack.c.b16 %v7959, %v7959
      %v7992 = vpack.c.b16 %v7960, %v7960
      %v7993 = vpack.c.b16 %v7961, %v7961
      %v7994 = vpack.c.b16 %v7962, %v7962
      %v7995 = vpack.c.b16 %v7963, %v7963
      %v7996 = vpack.c.b16 %v7964, %v7964
      %v7997 = vpack.c.b16 %v7965, %v7965
      %v7998 = vpack.c.b16 %v7966, %v7966
      %v7999 = vpack.c.b16 %v7967, %v7967
      %v8000 = vpack.c.b16 %v7968, %v7968
      %v8001 = vpack.c.b16 %v7969, %v7969
      %8034 = vst [vmem:[#allocation2 + $0x14] sm:$0xf] %v7970
      %8035 = vst [vmem:[#allocation2 + $0x38] sm:$0xf] %v7971
      %8036 = vst [vmem:[#allocation2 + $0x5c] sm:$0xf] %v7972
      %8037 = vst [vmem:[#allocation2 + $0x80] sm:$0xf] %v7973
      %8038 = vst [vmem:[#allocation2 + $0xa4] sm:$0xf] %v7974
      %8039 = vst [vmem:[#allocation2 + $0xc8] sm:$0xf] %v7975
      %8040 = vst [vmem:[#allocation2 + $0xec] sm:$0xf] %v7976
      %8041 = vst [vmem:[#allocation2 + $0x110] sm:$0xf] %v7977
      %8042 = vst [vmem:[#allocation2 + $0x134] sm:$0xf] %v7978
      %8043 = vst [vmem:[#allocation2 + $0x158] sm:$0xf] %v7979
      %8044 = vst [vmem:[#allocation2 + $0x17c] sm:$0xf] %v7980
      %8045 = vst [vmem:[#allocation2 + $0x1a0] sm:$0xf] %v7981
      %8046 = vst [vmem:[#allocation2 + $0x1c4] sm:$0xf] %v7982
      %8047 = vst [vmem:[#allocation2 + $0x1e8] sm:$0xf] %v7983
      %8048 = vst [vmem:[#allocation2 + $0x20c] sm:$0xf] %v7984
      %8049 = vst [vmem:[#allocation2 + $0x230] sm:$0xf] %v7985
      %8050 = vst [vmem:[#allocation2 + $0x254] sm:$0xf] %v7986
      %8051 = vst [vmem:[#allocation2 + $0x278] sm:$0xf] %v7987
      %8052 = vst [vmem:[#allocation2 + $0x29c] sm:$0xf] %v7988
      %8053 = vst [vmem:[#allocation2 + $0x2c0] sm:$0xf] %v7989
      %8054 = vst [vmem:[#allocation2 + $0x2e4] sm:$0xf] %v7990
      %8055 = vst [vmem:[#allocation2 + $0x308] sm:$0xf] %v7991
      %8056 = vst [vmem:[#allocation2 + $0x32c] sm:$0xf] %v7992
      %8057 = vst [vmem:[#allocation2 + $0x350] sm:$0xf] %v7993
      %8058 = vst [vmem:[#allocation2 + $0x374] sm:$0xf] %v7994
      %8059 = vst [vmem:[#allocation2 + $0x398] sm:$0xf] %v7995
      %8060 = vst [vmem:[#allocation2 + $0x3bc] sm:$0xf] %v7996
      %8061 = vst [vmem:[#allocation2 + $0x3e0] sm:$0xf] %v7997
      %8062 = vst [vmem:[#allocation2 + $0x404] sm:$0xf] %v7998
      %8063 = vst [vmem:[#allocation2 + $0x428] sm:$0xf] %v7999
      %8064 = vst [vmem:[#allocation2 + $0x44c] sm:$0xf] %v8000
      %8065 = vst [vmem:[#allocation2 + $0x470] sm:$0xf] %v8001
      %s8066 = scalar_lea.vmem [#allocation5], 48
      %v8067 = vld [vmem:[%s8066] sm:$0xff]
      %v8068 = vld [vmem:[%s8066 + $0x8] sm:$0xff]
      %v8069 = vld [vmem:[%s8066 + $0x18] sm:$0xff]
      %v8070 = vld [vmem:[%s8066 + $0x20] sm:$0xff]
      %v8071 = vld [vmem:[%s8066 + $0x30] sm:$0xff]
      %v8072 = vld [vmem:[%s8066 + $0x38] sm:$0xff]
      %v8073 = vld [vmem:[%s8066 + $0x48] sm:$0xff]
      %v8074 = vld [vmem:[%s8066 + $0x50] sm:$0xff]
      %v8075 = vld [vmem:[%s8066 + $0x60] sm:$0xff]
      %v8076 = vld [vmem:[%s8066 + $0x68] sm:$0xff]
      %v8077 = vld [vmem:[%s8066 + $0x78] sm:$0xff]
      %v8078 = vld [vmem:[%s8066 + $0x80] sm:$0xff]
      %v8079 = vld [vmem:[%s8066 + $0x90] sm:$0xff]
      %v8080 = vld [vmem:[%s8066 + $0x98] sm:$0xff]
      %v8081 = vld [vmem:[%s8066 + $0xa8] sm:$0xff]
      %v8082 = vld [vmem:[%s8066 + $0xb0] sm:$0xff]
      %v8083 = vld [vmem:[%s8066 + $0xc0] sm:$0xff]
      %v8084 = vld [vmem:[%s8066 + $0xc8] sm:$0xff]
      %v8085 = vld [vmem:[%s8066 + $0xd8] sm:$0xff]
      %v8086 = vld [vmem:[%s8066 + $0xe0] sm:$0xff]
      %v8087 = vld [vmem:[%s8066 + $0xf0] sm:$0xff]
      %v8088 = vld [vmem:[%s8066 + $0xf8] sm:$0xff]
      %v8089 = vld [vmem:[%s8066 + $0x108] sm:$0xff]
      %v8090 = vld [vmem:[%s8066 + $0x110] sm:$0xff]
      %v8091 = vld [vmem:[%s8066 + $0x120] sm:$0xff]
      %v8092 = vld [vmem:[%s8066 + $0x128] sm:$0xff]
      %v8093 = vld [vmem:[%s8066 + $0x138] sm:$0xff]
      %v8094 = vld [vmem:[%s8066 + $0x140] sm:$0xff]
      %v8095 = vld [vmem:[%s8066 + $0x150] sm:$0xff]
      %v8096 = vld [vmem:[%s8066 + $0x158] sm:$0xff]
      %v8097 = vld [vmem:[%s8066 + $0x168] sm:$0xff]
      %v8098 = vld [vmem:[%s8066 + $0x170] sm:$0xff]
      %v8099 = vpack.c.bf16 %v8068, %v8067
      %v8100 = vpack.c.bf16 %v8070, %v8069
      %v8101 = vpack.c.bf16 %v8072, %v8071
      %v8102 = vpack.c.bf16 %v8074, %v8073
      %v8103 = vpack.c.bf16 %v8076, %v8075
      %v8104 = vpack.c.bf16 %v8078, %v8077
      %v8105 = vpack.c.bf16 %v8080, %v8079
      %v8106 = vpack.c.bf16 %v8082, %v8081
      %v8107 = vpack.c.bf16 %v8084, %v8083
      %v8108 = vpack.c.bf16 %v8086, %v8085
      %v8109 = vpack.c.bf16 %v8088, %v8087
      %v8110 = vpack.c.bf16 %v8090, %v8089
      %v8111 = vpack.c.bf16 %v8092, %v8091
      %v8112 = vpack.c.bf16 %v8094, %v8093
      %v8113 = vpack.c.bf16 %v8096, %v8095
      %v8114 = vpack.c.bf16 %v8098, %v8097
      %v8131 = vunpack.c.l.b16 %v8099
      %v8132 = vunpack.c.h.b16 %v8099
      %v8133 = vunpack.c.l.b16 %v8100
      %v8134 = vunpack.c.h.b16 %v8100
      %v8135 = vunpack.c.l.b16 %v8101
      %v8136 = vunpack.c.h.b16 %v8101
      %v8137 = vunpack.c.l.b16 %v8102
      %v8138 = vunpack.c.h.b16 %v8102
      %v8139 = vunpack.c.l.b16 %v8103
      %v8140 = vunpack.c.h.b16 %v8103
      %v8141 = vunpack.c.l.b16 %v8104
      %v8142 = vunpack.c.h.b16 %v8104
      %v8143 = vunpack.c.l.b16 %v8105
      %v8144 = vunpack.c.h.b16 %v8105
      %v8145 = vunpack.c.l.b16 %v8106
      %v8146 = vunpack.c.h.b16 %v8106
      %v8147 = vunpack.c.l.b16 %v8107
      %v8148 = vunpack.c.h.b16 %v8107
      %v8149 = vunpack.c.l.b16 %v8108
      %v8150 = vunpack.c.h.b16 %v8108
      %v8151 = vunpack.c.l.b16 %v8109
      %v8152 = vunpack.c.h.b16 %v8109
      %v8153 = vunpack.c.l.b16 %v8110
      %v8154 = vunpack.c.h.b16 %v8110
      %v8155 = vunpack.c.l.b16 %v8111
      %v8156 = vunpack.c.h.b16 %v8111
      %v8157 = vunpack.c.l.b16 %v8112
      %v8158 = vunpack.c.h.b16 %v8112
      %v8159 = vunpack.c.l.b16 %v8113
      %v8160 = vunpack.c.h.b16 %v8113
      %v8161 = vunpack.c.l.b16 %v8114
      %v8162 = vunpack.c.h.b16 %v8114
      %v8163 = vpack.c.b16 %v8131, %v8131
      %v8164 = vpack.c.b16 %v8132, %v8132
      %v8165 = vpack.c.b16 %v8133, %v8133
      %v8166 = vpack.c.b16 %v8134, %v8134
      %v8167 = vpack.c.b16 %v8135, %v8135
      %v8168 = vpack.c.b16 %v8136, %v8136
      %v8169 = vpack.c.b16 %v8137, %v8137
      %v8170 = vpack.c.b16 %v8138, %v8138
      %v8171 = vpack.c.b16 %v8139, %v8139
      %v8172 = vpack.c.b16 %v8140, %v8140
      %v8173 = vpack.c.b16 %v8141, %v8141
      %v8174 = vpack.c.b16 %v8142, %v8142
      %v8175 = vpack.c.b16 %v8143, %v8143
      %v8176 = vpack.c.b16 %v8144, %v8144
      %v8177 = vpack.c.b16 %v8145, %v8145
      %v8178 = vpack.c.b16 %v8146, %v8146
      %v8179 = vpack.c.b16 %v8147, %v8147
      %v8180 = vpack.c.b16 %v8148, %v8148
      %v8181 = vpack.c.b16 %v8149, %v8149
      %v8182 = vpack.c.b16 %v8150, %v8150
      %v8183 = vpack.c.b16 %v8151, %v8151
      %v8184 = vpack.c.b16 %v8152, %v8152
      %v8185 = vpack.c.b16 %v8153, %v8153
      %v8186 = vpack.c.b16 %v8154, %v8154
      %v8187 = vpack.c.b16 %v8155, %v8155
      %v8188 = vpack.c.b16 %v8156, %v8156
      %v8189 = vpack.c.b16 %v8157, %v8157
      %v8190 = vpack.c.b16 %v8158, %v8158
      %v8191 = vpack.c.b16 %v8159, %v8159
      %v8192 = vpack.c.b16 %v8160, %v8160
      %v8193 = vpack.c.b16 %v8161, %v8161
      %v8194 = vpack.c.b16 %v8162, %v8162
      %8227 = vst [vmem:[#allocation2 + $0x18] sm:$0xf] %v8163
      %8228 = vst [vmem:[#allocation2 + $0x3c] sm:$0xf] %v8164
      %8229 = vst [vmem:[#allocation2 + $0x60] sm:$0xf] %v8165
      %8230 = vst [vmem:[#allocation2 + $0x84] sm:$0xf] %v8166
      %8231 = vst [vmem:[#allocation2 + $0xa8] sm:$0xf] %v8167
      %8232 = vst [vmem:[#allocation2 + $0xcc] sm:$0xf] %v8168
      %8233 = vst [vmem:[#allocation2 + $0xf0] sm:$0xf] %v8169
      %8234 = vst [vmem:[#allocation2 + $0x114] sm:$0xf] %v8170
      %8235 = vst [vmem:[#allocation2 + $0x138] sm:$0xf] %v8171
      %8236 = vst [vmem:[#allocation2 + $0x15c] sm:$0xf] %v8172
      %8237 = vst [vmem:[#allocation2 + $0x180] sm:$0xf] %v8173
      %8238 = vst [vmem:[#allocation2 + $0x1a4] sm:$0xf] %v8174
      %8239 = vst [vmem:[#allocation2 + $0x1c8] sm:$0xf] %v8175
      %8240 = vst [vmem:[#allocation2 + $0x1ec] sm:$0xf] %v8176
      %8241 = vst [vmem:[#allocation2 + $0x210] sm:$0xf] %v8177
      %8242 = vst [vmem:[#allocation2 + $0x234] sm:$0xf] %v8178
      %8243 = vst [vmem:[#allocation2 + $0x258] sm:$0xf] %v8179
      %8244 = vst [vmem:[#allocation2 + $0x27c] sm:$0xf] %v8180
      %8245 = vst [vmem:[#allocation2 + $0x2a0] sm:$0xf] %v8181
      %8246 = vst [vmem:[#allocation2 + $0x2c4] sm:$0xf] %v8182
      %8247 = vst [vmem:[#allocation2 + $0x2e8] sm:$0xf] %v8183
      %8248 = vst [vmem:[#allocation2 + $0x30c] sm:$0xf] %v8184
      %8249 = vst [vmem:[#allocation2 + $0x330] sm:$0xf] %v8185
      %8250 = vst [vmem:[#allocation2 + $0x354] sm:$0xf] %v8186
      %8251 = vst [vmem:[#allocation2 + $0x378] sm:$0xf] %v8187
      %8252 = vst [vmem:[#allocation2 + $0x39c] sm:$0xf] %v8188
      %8253 = vst [vmem:[#allocation2 + $0x3c0] sm:$0xf] %v8189
      %8254 = vst [vmem:[#allocation2 + $0x3e4] sm:$0xf] %v8190
      %8255 = vst [vmem:[#allocation2 + $0x408] sm:$0xf] %v8191
      %8256 = vst [vmem:[#allocation2 + $0x42c] sm:$0xf] %v8192
      %8257 = vst [vmem:[#allocation2 + $0x450] sm:$0xf] %v8193
      %8258 = vst [vmem:[#allocation2 + $0x474] sm:$0xf] %v8194
      %v8259 = vld [vmem:[%s8066 + $0x1] sm:$0xff]
      %v8260 = vld [vmem:[%s8066 + $0x9] sm:$0xff]
      %v8261 = vld [vmem:[%s8066 + $0x19] sm:$0xff]
      %v8262 = vld [vmem:[%s8066 + $0x21] sm:$0xff]
      %v8263 = vld [vmem:[%s8066 + $0x31] sm:$0xff]
      %v8264 = vld [vmem:[%s8066 + $0x39] sm:$0xff]
      %v8265 = vld [vmem:[%s8066 + $0x49] sm:$0xff]
      %v8266 = vld [vmem:[%s8066 + $0x51] sm:$0xff]
      %v8267 = vld [vmem:[%s8066 + $0x61] sm:$0xff]
      %v8268 = vld [vmem:[%s8066 + $0x69] sm:$0xff]
      %v8269 = vld [vmem:[%s8066 + $0x79] sm:$0xff]
      %v8270 = vld [vmem:[%s8066 + $0x81] sm:$0xff]
      %v8271 = vld [vmem:[%s8066 + $0x91] sm:$0xff]
      %v8272 = vld [vmem:[%s8066 + $0x99] sm:$0xff]
      %v8273 = vld [vmem:[%s8066 + $0xa9] sm:$0xff]
      %v8274 = vld [vmem:[%s8066 + $0xb1] sm:$0xff]
      %v8275 = vld [vmem:[%s8066 + $0xc1] sm:$0xff]
      %v8276 = vld [vmem:[%s8066 + $0xc9] sm:$0xff]
      %v8277 = vld [vmem:[%s8066 + $0xd9] sm:$0xff]
      %v8278 = vld [vmem:[%s8066 + $0xe1] sm:$0xff]
      %v8279 = vld [vmem:[%s8066 + $0xf1] sm:$0xff]
      %v8280 = vld [vmem:[%s8066 + $0xf9] sm:$0xff]
      %v8281 = vld [vmem:[%s8066 + $0x109] sm:$0xff]
      %v8282 = vld [vmem:[%s8066 + $0x111] sm:$0xff]
      %v8283 = vld [vmem:[%s8066 + $0x121] sm:$0xff]
      %v8284 = vld [vmem:[%s8066 + $0x129] sm:$0xff]
      %v8285 = vld [vmem:[%s8066 + $0x139] sm:$0xff]
      %v8286 = vld [vmem:[%s8066 + $0x141] sm:$0xff]
      %v8287 = vld [vmem:[%s8066 + $0x151] sm:$0xff]
      %v8288 = vld [vmem:[%s8066 + $0x159] sm:$0xff]
      %v8289 = vld [vmem:[%s8066 + $0x169] sm:$0xff]
      %v8290 = vld [vmem:[%s8066 + $0x171] sm:$0xff]
      %v8291 = vpack.c.bf16 %v8260, %v8259
      %v8292 = vpack.c.bf16 %v8262, %v8261
      %v8293 = vpack.c.bf16 %v8264, %v8263
      %v8294 = vpack.c.bf16 %v8266, %v8265
      %v8295 = vpack.c.bf16 %v8268, %v8267
      %v8296 = vpack.c.bf16 %v8270, %v8269
      %v8297 = vpack.c.bf16 %v8272, %v8271
      %v8298 = vpack.c.bf16 %v8274, %v8273
      %v8299 = vpack.c.bf16 %v8276, %v8275
      %v8300 = vpack.c.bf16 %v8278, %v8277
      %v8301 = vpack.c.bf16 %v8280, %v8279
      %v8302 = vpack.c.bf16 %v8282, %v8281
      %v8303 = vpack.c.bf16 %v8284, %v8283
      %v8304 = vpack.c.bf16 %v8286, %v8285
      %v8305 = vpack.c.bf16 %v8288, %v8287
      %v8306 = vpack.c.bf16 %v8290, %v8289
      %v8323 = vunpack.c.l.b16 %v8291
      %v8324 = vunpack.c.h.b16 %v8291
      %v8325 = vunpack.c.l.b16 %v8292
      %v8326 = vunpack.c.h.b16 %v8292
      %v8327 = vunpack.c.l.b16 %v8293
      %v8328 = vunpack.c.h.b16 %v8293
      %v8329 = vunpack.c.l.b16 %v8294
      %v8330 = vunpack.c.h.b16 %v8294
      %v8331 = vunpack.c.l.b16 %v8295
      %v8332 = vunpack.c.h.b16 %v8295
      %v8333 = vunpack.c.l.b16 %v8296
      %v8334 = vunpack.c.h.b16 %v8296
      %v8335 = vunpack.c.l.b16 %v8297
      %v8336 = vunpack.c.h.b16 %v8297
      %v8337 = vunpack.c.l.b16 %v8298
      %v8338 = vunpack.c.h.b16 %v8298
      %v8339 = vunpack.c.l.b16 %v8299
      %v8340 = vunpack.c.h.b16 %v8299
      %v8341 = vunpack.c.l.b16 %v8300
      %v8342 = vunpack.c.h.b16 %v8300
      %v8343 = vunpack.c.l.b16 %v8301
      %v8344 = vunpack.c.h.b16 %v8301
      %v8345 = vunpack.c.l.b16 %v8302
      %v8346 = vunpack.c.h.b16 %v8302
      %v8347 = vunpack.c.l.b16 %v8303
      %v8348 = vunpack.c.h.b16 %v8303
      %v8349 = vunpack.c.l.b16 %v8304
      %v8350 = vunpack.c.h.b16 %v8304
      %v8351 = vunpack.c.l.b16 %v8305
      %v8352 = vunpack.c.h.b16 %v8305
      %v8353 = vunpack.c.l.b16 %v8306
      %v8354 = vunpack.c.h.b16 %v8306
      %v8355 = vpack.c.b16 %v8323, %v8323
      %v8356 = vpack.c.b16 %v8324, %v8324
      %v8357 = vpack.c.b16 %v8325, %v8325
      %v8358 = vpack.c.b16 %v8326, %v8326
      %v8359 = vpack.c.b16 %v8327, %v8327
      %v8360 = vpack.c.b16 %v8328, %v8328
      %v8361 = vpack.c.b16 %v8329, %v8329
      %v8362 = vpack.c.b16 %v8330, %v8330
      %v8363 = vpack.c.b16 %v8331, %v8331
      %v8364 = vpack.c.b16 %v8332, %v8332
      %v8365 = vpack.c.b16 %v8333, %v8333
      %v8366 = vpack.c.b16 %v8334, %v8334
      %v8367 = vpack.c.b16 %v8335, %v8335
      %v8368 = vpack.c.b16 %v8336, %v8336
      %v8369 = vpack.c.b16 %v8337, %v8337
      %v8370 = vpack.c.b16 %v8338, %v8338
      %v8371 = vpack.c.b16 %v8339, %v8339
      %v8372 = vpack.c.b16 %v8340, %v8340
      %v8373 = vpack.c.b16 %v8341, %v8341
      %v8374 = vpack.c.b16 %v8342, %v8342
      %v8375 = vpack.c.b16 %v8343, %v8343
      %v8376 = vpack.c.b16 %v8344, %v8344
      %v8377 = vpack.c.b16 %v8345, %v8345
      %v8378 = vpack.c.b16 %v8346, %v8346
      %v8379 = vpack.c.b16 %v8347, %v8347
      %v8380 = vpack.c.b16 %v8348, %v8348
      %v8381 = vpack.c.b16 %v8349, %v8349
      %v8382 = vpack.c.b16 %v8350, %v8350
      %v8383 = vpack.c.b16 %v8351, %v8351
      %v8384 = vpack.c.b16 %v8352, %v8352
      %v8385 = vpack.c.b16 %v8353, %v8353
      %v8386 = vpack.c.b16 %v8354, %v8354
      %8419 = vst [vmem:[#allocation2 + $0x1c] sm:$0xf] %v8355
      %8420 = vst [vmem:[#allocation2 + $0x40] sm:$0xf] %v8356
      %8421 = vst [vmem:[#allocation2 + $0x64] sm:$0xf] %v8357
      %8422 = vst [vmem:[#allocation2 + $0x88] sm:$0xf] %v8358
      %8423 = vst [vmem:[#allocation2 + $0xac] sm:$0xf] %v8359
      %8424 = vst [vmem:[#allocation2 + $0xd0] sm:$0xf] %v8360
      %8425 = vst [vmem:[#allocation2 + $0xf4] sm:$0xf] %v8361
      %8426 = vst [vmem:[#allocation2 + $0x118] sm:$0xf] %v8362
      %8427 = vst [vmem:[#allocation2 + $0x13c] sm:$0xf] %v8363
      %8428 = vst [vmem:[#allocation2 + $0x160] sm:$0xf] %v8364
      %8429 = vst [vmem:[#allocation2 + $0x184] sm:$0xf] %v8365
      %8430 = vst [vmem:[#allocation2 + $0x1a8] sm:$0xf] %v8366
      %8431 = vst [vmem:[#allocation2 + $0x1cc] sm:$0xf] %v8367
      %8432 = vst [vmem:[#allocation2 + $0x1f0] sm:$0xf] %v8368
      %8433 = vst [vmem:[#allocation2 + $0x214] sm:$0xf] %v8369
      %8434 = vst [vmem:[#allocation2 + $0x238] sm:$0xf] %v8370
      %8435 = vst [vmem:[#allocation2 + $0x25c] sm:$0xf] %v8371
      %8436 = vst [vmem:[#allocation2 + $0x280] sm:$0xf] %v8372
      %8437 = vst [vmem:[#allocation2 + $0x2a4] sm:$0xf] %v8373
      %8438 = vst [vmem:[#allocation2 + $0x2c8] sm:$0xf] %v8374
      %8439 = vst [vmem:[#allocation2 + $0x2ec] sm:$0xf] %v8375
      %8440 = vst [vmem:[#allocation2 + $0x310] sm:$0xf] %v8376
      %8441 = vst [vmem:[#allocation2 + $0x334] sm:$0xf] %v8377
      %8442 = vst [vmem:[#allocation2 + $0x358] sm:$0xf] %v8378
      %8443 = vst [vmem:[#allocation2 + $0x37c] sm:$0xf] %v8379
      %8444 = vst [vmem:[#allocation2 + $0x3a0] sm:$0xf] %v8380
      %8445 = vst [vmem:[#allocation2 + $0x3c4] sm:$0xf] %v8381
      %8446 = vst [vmem:[#allocation2 + $0x3e8] sm:$0xf] %v8382
      %8447 = vst [vmem:[#allocation2 + $0x40c] sm:$0xf] %v8383
      %8448 = vst [vmem:[#allocation2 + $0x430] sm:$0xf] %v8384
      %8449 = vst [vmem:[#allocation2 + $0x454] sm:$0xf] %v8385
      %8450 = vst [vmem:[#allocation2 + $0x478] sm:$0xf] %v8386
      %v8451 = vld [vmem:[%s8066 + $0x2] sm:$0xff]
      %v8452 = vld [vmem:[%s8066 + $0xa] sm:$0xff]
      %v8453 = vld [vmem:[%s8066 + $0x1a] sm:$0xff]
      %v8454 = vld [vmem:[%s8066 + $0x22] sm:$0xff]
      %v8455 = vld [vmem:[%s8066 + $0x32] sm:$0xff]
      %v8456 = vld [vmem:[%s8066 + $0x3a] sm:$0xff]
      %v8457 = vld [vmem:[%s8066 + $0x4a] sm:$0xff]
      %v8458 = vld [vmem:[%s8066 + $0x52] sm:$0xff]
      %v8459 = vld [vmem:[%s8066 + $0x62] sm:$0xff]
      %v8460 = vld [vmem:[%s8066 + $0x6a] sm:$0xff]
      %v8461 = vld [vmem:[%s8066 + $0x7a] sm:$0xff]
      %v8462 = vld [vmem:[%s8066 + $0x82] sm:$0xff]
      %v8463 = vld [vmem:[%s8066 + $0x92] sm:$0xff]
      %v8464 = vld [vmem:[%s8066 + $0x9a] sm:$0xff]
      %v8465 = vld [vmem:[%s8066 + $0xaa] sm:$0xff]
      %v8466 = vld [vmem:[%s8066 + $0xb2] sm:$0xff]
      %v8467 = vld [vmem:[%s8066 + $0xc2] sm:$0xff]
      %v8468 = vld [vmem:[%s8066 + $0xca] sm:$0xff]
      %v8469 = vld [vmem:[%s8066 + $0xda] sm:$0xff]
      %v8470 = vld [vmem:[%s8066 + $0xe2] sm:$0xff]
      %v8471 = vld [vmem:[%s8066 + $0xf2] sm:$0xff]
      %v8472 = vld [vmem:[%s8066 + $0xfa] sm:$0xff]
      %v8473 = vld [vmem:[%s8066 + $0x10a] sm:$0xff]
      %v8474 = vld [vmem:[%s8066 + $0x112] sm:$0xff]
      %v8475 = vld [vmem:[%s8066 + $0x122] sm:$0xff]
      %v8476 = vld [vmem:[%s8066 + $0x12a] sm:$0xff]
      %v8477 = vld [vmem:[%s8066 + $0x13a] sm:$0xff]
      %v8478 = vld [vmem:[%s8066 + $0x142] sm:$0xff]
      %v8479 = vld [vmem:[%s8066 + $0x152] sm:$0xff]
      %v8480 = vld [vmem:[%s8066 + $0x15a] sm:$0xff]
      %v8481 = vld [vmem:[%s8066 + $0x16a] sm:$0xff]
      %v8482 = vld [vmem:[%s8066 + $0x172] sm:$0xff]
      %v8483 = vpack.c.bf16 %v8452, %v8451
      %v8484 = vpack.c.bf16 %v8454, %v8453
      %v8485 = vpack.c.bf16 %v8456, %v8455
      %v8486 = vpack.c.bf16 %v8458, %v8457
      %v8487 = vpack.c.bf16 %v8460, %v8459
      %v8488 = vpack.c.bf16 %v8462, %v8461
      %v8489 = vpack.c.bf16 %v8464, %v8463
      %v8490 = vpack.c.bf16 %v8466, %v8465
      %v8491 = vpack.c.bf16 %v8468, %v8467
      %v8492 = vpack.c.bf16 %v8470, %v8469
      %v8493 = vpack.c.bf16 %v8472, %v8471
      %v8494 = vpack.c.bf16 %v8474, %v8473
      %v8495 = vpack.c.bf16 %v8476, %v8475
      %v8496 = vpack.c.bf16 %v8478, %v8477
      %v8497 = vpack.c.bf16 %v8480, %v8479
      %v8498 = vpack.c.bf16 %v8482, %v8481
      %v8515 = vunpack.c.l.b16 %v8483
      %v8516 = vunpack.c.h.b16 %v8483
      %v8517 = vunpack.c.l.b16 %v8484
      %v8518 = vunpack.c.h.b16 %v8484
      %v8519 = vunpack.c.l.b16 %v8485
      %v8520 = vunpack.c.h.b16 %v8485
      %v8521 = vunpack.c.l.b16 %v8486
      %v8522 = vunpack.c.h.b16 %v8486
      %v8523 = vunpack.c.l.b16 %v8487
      %v8524 = vunpack.c.h.b16 %v8487
      %v8525 = vunpack.c.l.b16 %v8488
      %v8526 = vunpack.c.h.b16 %v8488
      %v8527 = vunpack.c.l.b16 %v8489
      %v8528 = vunpack.c.h.b16 %v8489
      %v8529 = vunpack.c.l.b16 %v8490
      %v8530 = vunpack.c.h.b16 %v8490
      %v8531 = vunpack.c.l.b16 %v8491
      %v8532 = vunpack.c.h.b16 %v8491
      %v8533 = vunpack.c.l.b16 %v8492
      %v8534 = vunpack.c.h.b16 %v8492
      %v8535 = vunpack.c.l.b16 %v8493
      %v8536 = vunpack.c.h.b16 %v8493
      %v8537 = vunpack.c.l.b16 %v8494
      %v8538 = vunpack.c.h.b16 %v8494
      %v8539 = vunpack.c.l.b16 %v8495
      %v8540 = vunpack.c.h.b16 %v8495
      %v8541 = vunpack.c.l.b16 %v8496
      %v8542 = vunpack.c.h.b16 %v8496
      %v8543 = vunpack.c.l.b16 %v8497
      %v8544 = vunpack.c.h.b16 %v8497
      %v8545 = vunpack.c.l.b16 %v8498
      %v8546 = vunpack.c.h.b16 %v8498
      %v8547 = vpack.c.b16 %v8515, %v8515
      %v8548 = vpack.c.b16 %v8516, %v8516
      %v8549 = vpack.c.b16 %v8517, %v8517
      %v8550 = vpack.c.b16 %v8518, %v8518
      %v8551 = vpack.c.b16 %v8519, %v8519
      %v8552 = vpack.c.b16 %v8520, %v8520
      %v8553 = vpack.c.b16 %v8521, %v8521
      %v8554 = vpack.c.b16 %v8522, %v8522
      %v8555 = vpack.c.b16 %v8523, %v8523
      %v8556 = vpack.c.b16 %v8524, %v8524
      %v8557 = vpack.c.b16 %v8525, %v8525
      %v8558 = vpack.c.b16 %v8526, %v8526
      %v8559 = vpack.c.b16 %v8527, %v8527
      %v8560 = vpack.c.b16 %v8528, %v8528
      %v8561 = vpack.c.b16 %v8529, %v8529
      %v8562 = vpack.c.b16 %v8530, %v8530
      %v8563 = vpack.c.b16 %v8531, %v8531
      %v8564 = vpack.c.b16 %v8532, %v8532
      %v8565 = vpack.c.b16 %v8533, %v8533
      %v8566 = vpack.c.b16 %v8534, %v8534
      %v8567 = vpack.c.b16 %v8535, %v8535
      %v8568 = vpack.c.b16 %v8536, %v8536
      %v8569 = vpack.c.b16 %v8537, %v8537
      %v8570 = vpack.c.b16 %v8538, %v8538
      %v8571 = vpack.c.b16 %v8539, %v8539
      %v8572 = vpack.c.b16 %v8540, %v8540
      %v8573 = vpack.c.b16 %v8541, %v8541
      %v8574 = vpack.c.b16 %v8542, %v8542
      %v8575 = vpack.c.b16 %v8543, %v8543
      %v8576 = vpack.c.b16 %v8544, %v8544
      %v8577 = vpack.c.b16 %v8545, %v8545
      %v8578 = vpack.c.b16 %v8546, %v8546
      %8611 = vst [vmem:[#allocation2 + $0x20] sm:$0xf] %v8547
      %8612 = vst [vmem:[#allocation2 + $0x44] sm:$0xf] %v8548
      %8613 = vst [vmem:[#allocation2 + $0x68] sm:$0xf] %v8549
      %8614 = vst [vmem:[#allocation2 + $0x8c] sm:$0xf] %v8550
      %8615 = vst [vmem:[#allocation2 + $0xb0] sm:$0xf] %v8551
      %8616 = vst [vmem:[#allocation2 + $0xd4] sm:$0xf] %v8552
      %8617 = vst [vmem:[#allocation2 + $0xf8] sm:$0xf] %v8553
      %8618 = vst [vmem:[#allocation2 + $0x11c] sm:$0xf] %v8554
      %8619 = vst [vmem:[#allocation2 + $0x140] sm:$0xf] %v8555
      %8620 = vst [vmem:[#allocation2 + $0x164] sm:$0xf] %v8556
      %8621 = vst [vmem:[#allocation2 + $0x188] sm:$0xf] %v8557
      %8622 = vst [vmem:[#allocation2 + $0x1ac] sm:$0xf] %v8558
      %8623 = vst [vmem:[#allocation2 + $0x1d0] sm:$0xf] %v8559
      %8624 = vst [vmem:[#allocation2 + $0x1f4] sm:$0xf] %v8560
      %8625 = vst [vmem:[#allocation2 + $0x218] sm:$0xf] %v8561
      %8626 = vst [vmem:[#allocation2 + $0x23c] sm:$0xf] %v8562
      %8627 = vst [vmem:[#allocation2 + $0x260] sm:$0xf] %v8563
      %8628 = vst [vmem:[#allocation2 + $0x284] sm:$0xf] %v8564
      %8629 = vst [vmem:[#allocation2 + $0x2a8] sm:$0xf] %v8565
      %8630 = vst [vmem:[#allocation2 + $0x2cc] sm:$0xf] %v8566
      %8631 = vst [vmem:[#allocation2 + $0x2f0] sm:$0xf] %v8567
      %8632 = vst [vmem:[#allocation2 + $0x314] sm:$0xf] %v8568
      %8633 = vst [vmem:[#allocation2 + $0x338] sm:$0xf] %v8569
      %8634 = vst [vmem:[#allocation2 + $0x35c] sm:$0xf] %v8570
      %8635 = vst [vmem:[#allocation2 + $0x380] sm:$0xf] %v8571
      %8636 = vst [vmem:[#allocation2 + $0x3a4] sm:$0xf] %v8572
      %8637 = vst [vmem:[#allocation2 + $0x3c8] sm:$0xf] %v8573
      %8638 = vst [vmem:[#allocation2 + $0x3ec] sm:$0xf] %v8574
      %8639 = vst [vmem:[#allocation2 + $0x410] sm:$0xf] %v8575
      %8640 = vst [vmem:[#allocation2 + $0x434] sm:$0xf] %v8576
      %8641 = vst [vmem:[#allocation2 + $0x458] sm:$0xf] %v8577
      %8642 = vst [vmem:[#allocation2 + $0x47c] sm:$0xf] %v8578
      %v8643 = vld [vmem:[#allocation2] sm:$0xff]
      %v8644 = vld [vmem:[#allocation2 + $0x8] sm:$0xff]
      %v8645 = vld [vmem:[#allocation2 + $0x10] sm:$0xff]
      %v8646 = vld [vmem:[#allocation2 + $0x18] sm:$0xff]
      %v8647 = vld [vmem:[#allocation2 + $0x20] sm:$0xf]
      %v8648 = vld [vmem:[#allocation2 + $0x24] sm:$0xff]
      %v8649 = vld [vmem:[#allocation2 + $0x2c] sm:$0xff]
      %v8650 = vld [vmem:[#allocation2 + $0x34] sm:$0xff]
      %v8651 = vld [vmem:[#allocation2 + $0x3c] sm:$0xff]
      %v8652 = vld [vmem:[#allocation2 + $0x44] sm:$0xf]
      %v8653 = vld [vmem:[#allocation2 + $0x48] sm:$0xff]
      %v8654 = vld [vmem:[#allocation2 + $0x50] sm:$0xff]
      %v8655 = vld [vmem:[#allocation2 + $0x58] sm:$0xff]
      %v8656 = vld [vmem:[#allocation2 + $0x60] sm:$0xff]
      %v8657 = vld [vmem:[#allocation2 + $0x68] sm:$0xf]
      %v8658 = vld [vmem:[#allocation2 + $0x6c] sm:$0xff]
      %v8659 = vld [vmem:[#allocation2 + $0x74] sm:$0xff]
      %v8660 = vld [vmem:[#allocation2 + $0x7c] sm:$0xff]
      %v8661 = vld [vmem:[#allocation2 + $0x84] sm:$0xff]
      %v8662 = vld [vmem:[#allocation2 + $0x8c] sm:$0xf]
      %v8663 = vld [vmem:[#allocation2 + $0x90] sm:$0xff]
      %v8664 = vld [vmem:[#allocation2 + $0x98] sm:$0xff]
      %v8665 = vld [vmem:[#allocation2 + $0xa0] sm:$0xff]
      %v8666 = vld [vmem:[#allocation2 + $0xa8] sm:$0xff]
      %v8667 = vld [vmem:[#allocation2 + $0xb0] sm:$0xf]
      %v8668 = vld [vmem:[#allocation2 + $0xb4] sm:$0xff]
      %v8669 = vld [vmem:[#allocation2 + $0xbc] sm:$0xff]
      %v8670 = vld [vmem:[#allocation2 + $0xc4] sm:$0xff]
      %v8671 = vld [vmem:[#allocation2 + $0xcc] sm:$0xff]
      %v8672 = vld [vmem:[#allocation2 + $0xd4] sm:$0xf]
      %v8673 = vld [vmem:[#allocation2 + $0xd8] sm:$0xff]
      %v8674 = vld [vmem:[#allocation2 + $0xe0] sm:$0xff]
      %v8675 = vld [vmem:[#allocation2 + $0xe8] sm:$0xff]
      %v8676 = vld [vmem:[#allocation2 + $0xf0] sm:$0xff]
      %v8677 = vld [vmem:[#allocation2 + $0xf8] sm:$0xf]
      %v8678 = vld [vmem:[#allocation2 + $0xfc] sm:$0xff]
      %v8679 = vld [vmem:[#allocation2 + $0x104] sm:$0xff]
      %v8680 = vld [vmem:[#allocation2 + $0x10c] sm:$0xff]
      %v8681 = vld [vmem:[#allocation2 + $0x114] sm:$0xff]
      %v8682 = vld [vmem:[#allocation2 + $0x11c] sm:$0xf]
      %v8683 = vld [vmem:[#allocation2 + $0x120] sm:$0xff]
      %v8684 = vld [vmem:[#allocation2 + $0x128] sm:$0xff]
      %v8685 = vld [vmem:[#allocation2 + $0x130] sm:$0xff]
      %v8686 = vld [vmem:[#allocation2 + $0x138] sm:$0xff]
      %v8687 = vld [vmem:[#allocation2 + $0x140] sm:$0xf]
      %v8688 = vld [vmem:[#allocation2 + $0x144] sm:$0xff]
      %v8689 = vld [vmem:[#allocation2 + $0x14c] sm:$0xff]
      %v8690 = vld [vmem:[#allocation2 + $0x154] sm:$0xff]
      %v8691 = vld [vmem:[#allocation2 + $0x15c] sm:$0xff]
      %v8692 = vld [vmem:[#allocation2 + $0x164] sm:$0xf]
      %v8693 = vld [vmem:[#allocation2 + $0x168] sm:$0xff]
      %v8694 = vld [vmem:[#allocation2 + $0x170] sm:$0xff]
      %v8695 = vld [vmem:[#allocation2 + $0x178] sm:$0xff]
      %v8696 = vld [vmem:[#allocation2 + $0x180] sm:$0xff]
      %v8697 = vld [vmem:[#allocation2 + $0x188] sm:$0xf]
      %v8698 = vld [vmem:[#allocation2 + $0x18c] sm:$0xff]
      %v8699 = vld [vmem:[#allocation2 + $0x194] sm:$0xff]
      %v8700 = vld [vmem:[#allocation2 + $0x19c] sm:$0xff]
      %v8701 = vld [vmem:[#allocation2 + $0x1a4] sm:$0xff]
      %v8702 = vld [vmem:[#allocation2 + $0x1ac] sm:$0xf]
      %v8703 = vld [vmem:[#allocation2 + $0x1b0] sm:$0xff]
      %v8704 = vld [vmem:[#allocation2 + $0x1b8] sm:$0xff]
      %v8705 = vld [vmem:[#allocation2 + $0x1c0] sm:$0xff]
      %v8706 = vld [vmem:[#allocation2 + $0x1c8] sm:$0xff]
      %v8707 = vld [vmem:[#allocation2 + $0x1d0] sm:$0xf]
      %v8708 = vld [vmem:[#allocation2 + $0x1d4] sm:$0xff]
      %v8709 = vld [vmem:[#allocation2 + $0x1dc] sm:$0xff]
      %v8710 = vld [vmem:[#allocation2 + $0x1e4] sm:$0xff]
      %v8711 = vld [vmem:[#allocation2 + $0x1ec] sm:$0xff]
      %v8712 = vld [vmem:[#allocation2 + $0x1f4] sm:$0xf]
      %v8713 = vld [vmem:[#allocation2 + $0x1f8] sm:$0xff]
      %v8714 = vld [vmem:[#allocation2 + $0x200] sm:$0xff]
      %v8715 = vld [vmem:[#allocation2 + $0x208] sm:$0xff]
      %v8716 = vld [vmem:[#allocation2 + $0x210] sm:$0xff]
      %v8717 = vld [vmem:[#allocation2 + $0x218] sm:$0xf]
      %v8718 = vld [vmem:[#allocation2 + $0x21c] sm:$0xff]
      %v8719 = vld [vmem:[#allocation2 + $0x224] sm:$0xff]
      %v8720 = vld [vmem:[#allocation2 + $0x22c] sm:$0xff]
      %v8721 = vld [vmem:[#allocation2 + $0x234] sm:$0xff]
      %v8722 = vld [vmem:[#allocation2 + $0x23c] sm:$0xf]
      %v8723 = vld [vmem:[#allocation2 + $0x240] sm:$0xff]
      %v8724 = vld [vmem:[#allocation2 + $0x248] sm:$0xff]
      %v8725 = vld [vmem:[#allocation2 + $0x250] sm:$0xff]
      %v8726 = vld [vmem:[#allocation2 + $0x258] sm:$0xff]
      %v8727 = vld [vmem:[#allocation2 + $0x260] sm:$0xf]
      %v8728 = vld [vmem:[#allocation2 + $0x264] sm:$0xff]
      %v8729 = vld [vmem:[#allocation2 + $0x26c] sm:$0xff]
      %v8730 = vld [vmem:[#allocation2 + $0x274] sm:$0xff]
      %v8731 = vld [vmem:[#allocation2 + $0x27c] sm:$0xff]
      %v8732 = vld [vmem:[#allocation2 + $0x284] sm:$0xf]
      %v8733 = vld [vmem:[#allocation2 + $0x288] sm:$0xff]
      %v8734 = vld [vmem:[#allocation2 + $0x290] sm:$0xff]
      %v8735 = vld [vmem:[#allocation2 + $0x298] sm:$0xff]
      %v8736 = vld [vmem:[#allocation2 + $0x2a0] sm:$0xff]
      %v8737 = vld [vmem:[#allocation2 + $0x2a8] sm:$0xf]
      %v8738 = vld [vmem:[#allocation2 + $0x2ac] sm:$0xff]
      %v8739 = vld [vmem:[#allocation2 + $0x2b4] sm:$0xff]
      %v8740 = vld [vmem:[#allocation2 + $0x2bc] sm:$0xff]
      %v8741 = vld [vmem:[#allocation2 + $0x2c4] sm:$0xff]
      %v8742 = vld [vmem:[#allocation2 + $0x2cc] sm:$0xf]
      %v8743 = vld [vmem:[#allocation2 + $0x2d0] sm:$0xff]
      %v8744 = vld [vmem:[#allocation2 + $0x2d8] sm:$0xff]
      %v8745 = vld [vmem:[#allocation2 + $0x2e0] sm:$0xff]
      %v8746 = vld [vmem:[#allocation2 + $0x2e8] sm:$0xff]
      %v8747 = vld [vmem:[#allocation2 + $0x2f0] sm:$0xf]
      %v8748 = vld [vmem:[#allocation2 + $0x2f4] sm:$0xff]
      %v8749 = vld [vmem:[#allocation2 + $0x2fc] sm:$0xff]
      %v8750 = vld [vmem:[#allocation2 + $0x304] sm:$0xff]
      %v8751 = vld [vmem:[#allocation2 + $0x30c] sm:$0xff]
      %v8752 = vld [vmem:[#allocation2 + $0x314] sm:$0xf]
      %v8753 = vld [vmem:[#allocation2 + $0x318] sm:$0xff]
      %v8754 = vld [vmem:[#allocation2 + $0x320] sm:$0xff]
      %v8755 = vld [vmem:[#allocation2 + $0x328] sm:$0xff]
      %v8756 = vld [vmem:[#allocation2 + $0x330] sm:$0xff]
      %v8757 = vld [vmem:[#allocation2 + $0x338] sm:$0xf]
      %v8758 = vld [vmem:[#allocation2 + $0x33c] sm:$0xff]
      %v8759 = vld [vmem:[#allocation2 + $0x344] sm:$0xff]
      %v8760 = vld [vmem:[#allocation2 + $0x34c] sm:$0xff]
      %v8761 = vld [vmem:[#allocation2 + $0x354] sm:$0xff]
      %v8762 = vld [vmem:[#allocation2 + $0x35c] sm:$0xf]
      %v8763 = vld [vmem:[#allocation2 + $0x360] sm:$0xff]
      %v8764 = vld [vmem:[#allocation2 + $0x368] sm:$0xff]
      %v8765 = vld [vmem:[#allocation2 + $0x370] sm:$0xff]
      %v8766 = vld [vmem:[#allocation2 + $0x378] sm:$0xff]
      %v8767 = vld [vmem:[#allocation2 + $0x380] sm:$0xf]
      %v8768 = vld [vmem:[#allocation2 + $0x384] sm:$0xff]
      %v8769 = vld [vmem:[#allocation2 + $0x38c] sm:$0xff]
      %v8770 = vld [vmem:[#allocation2 + $0x394] sm:$0xff]
      %v8771 = vld [vmem:[#allocation2 + $0x39c] sm:$0xff]
      %v8772 = vld [vmem:[#allocation2 + $0x3a4] sm:$0xf]
      %v8773 = vld [vmem:[#allocation2 + $0x3a8] sm:$0xff]
      %v8774 = vld [vmem:[#allocation2 + $0x3b0] sm:$0xff]
      %v8775 = vld [vmem:[#allocation2 + $0x3b8] sm:$0xff]
      %v8776 = vld [vmem:[#allocation2 + $0x3c0] sm:$0xff]
      %v8777 = vld [vmem:[#allocation2 + $0x3c8] sm:$0xf]
      %v8778 = vld [vmem:[#allocation2 + $0x3cc] sm:$0xff]
      %v8779 = vld [vmem:[#allocation2 + $0x3d4] sm:$0xff]
      %v8780 = vld [vmem:[#allocation2 + $0x3dc] sm:$0xff]
      %v8781 = vld [vmem:[#allocation2 + $0x3e4] sm:$0xff]
      %v8782 = vld [vmem:[#allocation2 + $0x3ec] sm:$0xf]
      %v8783 = vld [vmem:[#allocation2 + $0x3f0] sm:$0xff]
      %v8784 = vld [vmem:[#allocation2 + $0x3f8] sm:$0xff]
      %v8785 = vld [vmem:[#allocation2 + $0x400] sm:$0xff]
      %v8786 = vld [vmem:[#allocation2 + $0x408] sm:$0xff]
      %v8787 = vld [vmem:[#allocation2 + $0x410] sm:$0xf]
      %v8788 = vld [vmem:[#allocation2 + $0x414] sm:$0xff]
      %v8789 = vld [vmem:[#allocation2 + $0x41c] sm:$0xff]
      %v8790 = vld [vmem:[#allocation2 + $0x424] sm:$0xff]
      %v8791 = vld [vmem:[#allocation2 + $0x42c] sm:$0xff]
      %v8792 = vld [vmem:[#allocation2 + $0x434] sm:$0xf]
      %v8793 = vld [vmem:[#allocation2 + $0x438] sm:$0xff]
      %v8794 = vld [vmem:[#allocation2 + $0x440] sm:$0xff]
      %v8795 = vld [vmem:[#allocation2 + $0x448] sm:$0xff]
      %v8796 = vld [vmem:[#allocation2 + $0x450] sm:$0xff]
      %v8797 = vld [vmem:[#allocation2 + $0x458] sm:$0xf]
      %v8798 = vld [vmem:[#allocation2 + $0x45c] sm:$0xff]
      %v8799 = vld [vmem:[#allocation2 + $0x464] sm:$0xff]
      %v8800 = vld [vmem:[#allocation2 + $0x46c] sm:$0xff]
      %v8801 = vld [vmem:[#allocation2 + $0x474] sm:$0xff]
      %v8802 = vld [vmem:[#allocation2 + $0x47c] sm:$0xf]
      %v8803 = vld [vmem:[%s5] sm:$0xf]
      %v8804 = vld [vmem:[%s5 + $0x4] sm:$0xf]
      %v8805 = vld [vmem:[%s5 + $0x8] sm:$0xf]
      %v8806 = vld [vmem:[%s5 + $0xc] sm:$0xf]
      %v8807 = vld [vmem:[%s5 + $0x10] sm:$0xf]
      %v8808 = vld [vmem:[%s5 + $0x14] sm:$0xf]
      %v8809 = vld [vmem:[%s5 + $0x18] sm:$0xf]
      %v8810 = vld [vmem:[%s5 + $0x1c] sm:$0xf]
      %v8811 = vld [vmem:[%s5 + $0x20] sm:$0xf]
      %v8812 = vld [vmem:[%s5 + $0x24] sm:$0xf]
      %v8813 = vld [vmem:[%s5 + $0x28] sm:$0xf]
      %v8814 = vld [vmem:[%s5 + $0x2c] sm:$0xf]
      %v8815 = vld [vmem:[%s5 + $0x30] sm:$0xf]
      %v8816 = vld [vmem:[%s5 + $0x34] sm:$0xf]
      %v8817 = vld [vmem:[%s5 + $0x38] sm:$0xf]
      %v8818 = vld [vmem:[%s5 + $0x3c] sm:$0xf]
      %v8819 = vld [vmem:[%s5 + $0x40] sm:$0xf]
      %v8820 = vld [vmem:[%s5 + $0x44] sm:$0xf]
      %v8821 = vld [vmem:[%s5 + $0x48] sm:$0xf]
      %v8822 = vld [vmem:[%s5 + $0x4c] sm:$0xf]
      %v8823 = vld [vmem:[%s5 + $0x50] sm:$0xf]
      %v8824 = vld [vmem:[%s5 + $0x54] sm:$0xf]
      %v8825 = vld [vmem:[%s5 + $0x58] sm:$0xf]
      %v8826 = vld [vmem:[%s5 + $0x5c] sm:$0xf]
      %v8827 = vld [vmem:[%s5 + $0x60] sm:$0xf]
      %v8828 = vld [vmem:[%s5 + $0x64] sm:$0xf]
      %v8829 = vld [vmem:[%s5 + $0x68] sm:$0xf]
      %v8830 = vld [vmem:[%s5 + $0x6c] sm:$0xf]
      %v8831 = vld [vmem:[%s5 + $0x70] sm:$0xf]
      %v8832 = vld [vmem:[%s5 + $0x74] sm:$0xf]
      %v8833 = vld [vmem:[%s5 + $0x78] sm:$0xf]
      %v8834 = vld [vmem:[%s5 + $0x7c] sm:$0xf]
      %v8835 = vld [vmem:[%s5 + $0x80] sm:$0xf]
      %v8836 = vld [vmem:[%s5 + $0x84] sm:$0xf]
      %v8837 = vld [vmem:[%s5 + $0x88] sm:$0xf]
      %v8838 = vld [vmem:[%s5 + $0x8c] sm:$0xf]
      %v8839 = vld [vmem:[%s5 + $0x90] sm:$0xf]
      %v8840 = vld [vmem:[%s5 + $0x94] sm:$0xf]
      %v8841 = vld [vmem:[%s5 + $0x98] sm:$0xf]
      %v8842 = vld [vmem:[%s5 + $0x9c] sm:$0xf]
      %v8843 = vld [vmem:[%s5 + $0xa0] sm:$0xf]
      %v8844 = vld [vmem:[%s5 + $0xa4] sm:$0xf]
      %v8845 = vld [vmem:[%s5 + $0xa8] sm:$0xf]
      %v8846 = vld [vmem:[%s5 + $0xac] sm:$0xf]
      %v8847 = vld [vmem:[%s5 + $0xb0] sm:$0xf]
      %v8848 = vld [vmem:[%s5 + $0xb4] sm:$0xf]
      %v8849 = vld [vmem:[%s5 + $0xb8] sm:$0xf]
      %v8850 = vld [vmem:[%s5 + $0xbc] sm:$0xf]
      %v8851 = vld [vmem:[%s5 + $0xc0] sm:$0xf]
      %v8852 = vld [vmem:[%s5 + $0xc4] sm:$0xf]
      %v8853 = vld [vmem:[%s5 + $0xc8] sm:$0xf]
      %v8854 = vld [vmem:[%s5 + $0xcc] sm:$0xf]
      %v8855 = vld [vmem:[%s5 + $0xd0] sm:$0xf]
      %v8856 = vld [vmem:[%s5 + $0xd4] sm:$0xf]
      %v8857 = vld [vmem:[%s5 + $0xd8] sm:$0xf]
      %v8858 = vld [vmem:[%s5 + $0xdc] sm:$0xf]
      %v8859 = vld [vmem:[%s5 + $0xe0] sm:$0xf]
      %v8860 = vld [vmem:[%s5 + $0xe4] sm:$0xf]
      %v8861 = vld [vmem:[%s5 + $0xe8] sm:$0xf]
      %v8862 = vld [vmem:[%s5 + $0xec] sm:$0xf]
      %v8863 = vld [vmem:[%s5 + $0xf0] sm:$0xf]
      %v8864 = vld [vmem:[%s5 + $0xf4] sm:$0xf]
      %v8865 = vld [vmem:[%s5 + $0xf8] sm:$0xf]
      %v8866 = vld [vmem:[%s5 + $0xfc] sm:$0xf]
      %v8867 = vld [vmem:[%s5 + $0x100] sm:$0xf]
      %v8868 = vld [vmem:[%s5 + $0x104] sm:$0xf]
      %v8869 = vld [vmem:[%s5 + $0x108] sm:$0xf]
      %v8870 = vld [vmem:[%s5 + $0x10c] sm:$0xf]
      %v8871 = vld [vmem:[%s5 + $0x110] sm:$0xf]
      %v8872 = vld [vmem:[%s5 + $0x114] sm:$0xf]
      %v8873 = vld [vmem:[%s5 + $0x118] sm:$0xf]
      %v8874 = vld [vmem:[%s5 + $0x11c] sm:$0xf]
      %v8875 = vld [vmem:[%s5 + $0x120] sm:$0xf]
      %v8876 = vld [vmem:[%s5 + $0x124] sm:$0xf]
      %v8877 = vld [vmem:[%s5 + $0x128] sm:$0xf]
      %v8878 = vld [vmem:[%s5 + $0x12c] sm:$0xf]
      %v8879 = vld [vmem:[%s5 + $0x130] sm:$0xf]
      %v8880 = vld [vmem:[%s5 + $0x134] sm:$0xf]
      %v8881 = vld [vmem:[%s5 + $0x138] sm:$0xf]
      %v8882 = vld [vmem:[%s5 + $0x13c] sm:$0xf]
      %v8883 = vld [vmem:[%s5 + $0x140] sm:$0xf]
      %v8884 = vld [vmem:[%s5 + $0x144] sm:$0xf]
      %v8885 = vld [vmem:[%s5 + $0x148] sm:$0xf]
      %v8886 = vld [vmem:[%s5 + $0x14c] sm:$0xf]
      %v8887 = vld [vmem:[%s5 + $0x150] sm:$0xf]
      %v8888 = vld [vmem:[%s5 + $0x154] sm:$0xf]
      %v8889 = vld [vmem:[%s5 + $0x158] sm:$0xf]
      %v8890 = vld [vmem:[%s5 + $0x15c] sm:$0xf]
      %v8891 = vld [vmem:[%s5 + $0x160] sm:$0xf]
      %v8892 = vld [vmem:[%s5 + $0x164] sm:$0xf]
      %v8893 = vld [vmem:[%s5 + $0x168] sm:$0xf]
      %v8894 = vld [vmem:[%s5 + $0x16c] sm:$0xf]
      %v8895 = vld [vmem:[%s5 + $0x170] sm:$0xf]
      %v8896 = vld [vmem:[%s5 + $0x174] sm:$0xf]
      %v8897 = vld [vmem:[%s5 + $0x178] sm:$0xf]
      %v8898 = vld [vmem:[%s5 + $0x17c] sm:$0xf]
      %v8899 = vld [vmem:[%s5 + $0x180] sm:$0xf]
      %v8900 = vld [vmem:[%s5 + $0x184] sm:$0xf]
      %v8901 = vld [vmem:[%s5 + $0x188] sm:$0xf]
      %v8902 = vld [vmem:[%s5 + $0x18c] sm:$0xf]
      %v8903 = vld [vmem:[%s5 + $0x190] sm:$0xf]
      %v8904 = vld [vmem:[%s5 + $0x194] sm:$0xf]
      %v8905 = vld [vmem:[%s5 + $0x198] sm:$0xf]
      %v8906 = vld [vmem:[%s5 + $0x19c] sm:$0xf]
      %v8907 = vld [vmem:[%s5 + $0x1a0] sm:$0xf]
      %v8908 = vld [vmem:[%s5 + $0x1a4] sm:$0xf]
      %v8909 = vld [vmem:[%s5 + $0x1a8] sm:$0xf]
      %v8910 = vld [vmem:[%s5 + $0x1ac] sm:$0xf]
      %v8911 = vld [vmem:[%s5 + $0x1b0] sm:$0xf]
      %v8912 = vld [vmem:[%s5 + $0x1b4] sm:$0xf]
      %v8913 = vld [vmem:[%s5 + $0x1b8] sm:$0xf]
      %v8914 = vld [vmem:[%s5 + $0x1bc] sm:$0xf]
      %v8915 = vld [vmem:[%s5 + $0x1c0] sm:$0xf]
      %v8916 = vld [vmem:[%s5 + $0x1c4] sm:$0xf]
      %v8917 = vld [vmem:[%s5 + $0x1c8] sm:$0xf]
      %v8918 = vld [vmem:[%s5 + $0x1cc] sm:$0xf]
      %v8919 = vld [vmem:[%s5 + $0x1d0] sm:$0xf]
      %v8920 = vld [vmem:[%s5 + $0x1d4] sm:$0xf]
      %v8921 = vld [vmem:[%s5 + $0x1d8] sm:$0xf]
      %v8922 = vld [vmem:[%s5 + $0x1dc] sm:$0xf]
      %v8923 = vld [vmem:[%s5 + $0x1e0] sm:$0xf]
      %v8924 = vld [vmem:[%s5 + $0x1e4] sm:$0xf]
      %v8925 = vld [vmem:[%s5 + $0x1e8] sm:$0xf]
      %v8926 = vld [vmem:[%s5 + $0x1ec] sm:$0xf]
      %v8927 = vld [vmem:[%s5 + $0x1f0] sm:$0xf]
      %v8928 = vld [vmem:[%s5 + $0x1f4] sm:$0xf]
      %v8929 = vld [vmem:[%s5 + $0x1f8] sm:$0xf]
      %v8930 = vld [vmem:[%s5 + $0x1fc] sm:$0xf]
      %v8931 = vld [vmem:[%s5 + $0x200] sm:$0xf]
      %v8932 = vld [vmem:[%s5 + $0x204] sm:$0xf]
      %v8933 = vld [vmem:[%s5 + $0x208] sm:$0xf]
      %v8934 = vld [vmem:[%s5 + $0x20c] sm:$0xf]
      %v8935 = vld [vmem:[%s5 + $0x210] sm:$0xf]
      %v8936 = vld [vmem:[%s5 + $0x214] sm:$0xf]
      %v8937 = vld [vmem:[%s5 + $0x218] sm:$0xf]
      %v8938 = vld [vmem:[%s5 + $0x21c] sm:$0xf]
      %v8939 = vld [vmem:[%s5 + $0x220] sm:$0xf]
      %v8940 = vld [vmem:[%s5 + $0x224] sm:$0xf]
      %v8941 = vld [vmem:[%s5 + $0x228] sm:$0xf]
      %v8942 = vld [vmem:[%s5 + $0x22c] sm:$0xf]
      %v8943 = vld [vmem:[%s5 + $0x230] sm:$0xf]
      %v8944 = vld [vmem:[%s5 + $0x234] sm:$0xf]
      %v8945 = vld [vmem:[%s5 + $0x238] sm:$0xf]
      %v8946 = vld [vmem:[%s5 + $0x23c] sm:$0xf]
      %v8947 = vld [vmem:[%s6] sm:$0x1]
      %v8949 = vlaneseq
      %v8950 = vshrl.u32 %v8949, 7
      %v8951 = vsub.s32 0, %v8950
      %v8952 = vrot.slane %v8947, %v8951
      %v9114 = vunpack.c.l.b16 %v8643
      %v9115 = vunpack.c.h.b16 %v8643
      %v9116 = vunpack.c.l.b16 %v8644
      %v9117 = vunpack.c.h.b16 %v8644
      %v9118 = vunpack.c.l.b16 %v8645
      %v9119 = vunpack.c.h.b16 %v8645
      %v9120 = vunpack.c.l.b16 %v8646
      %v9121 = vunpack.c.h.b16 %v8646
      %v9122 = vunpack.c.l.b16 %v8647
      %v9123 = vunpack.c.l.b16 %v8648
      %v9124 = vunpack.c.h.b16 %v8648
      %v9125 = vunpack.c.l.b16 %v8649
      %v9126 = vunpack.c.h.b16 %v8649
      %v9127 = vunpack.c.l.b16 %v8650
      %v9128 = vunpack.c.h.b16 %v8650
      %v9129 = vunpack.c.l.b16 %v8651
      %v9130 = vunpack.c.h.b16 %v8651
      %v9131 = vunpack.c.l.b16 %v8652
      %v9132 = vunpack.c.l.b16 %v8653
      %v9133 = vunpack.c.h.b16 %v8653
      %v9134 = vunpack.c.l.b16 %v8654
      %v9135 = vunpack.c.h.b16 %v8654
      %v9136 = vunpack.c.l.b16 %v8655
      %v9137 = vunpack.c.h.b16 %v8655
      %v9138 = vunpack.c.l.b16 %v8656
      %v9139 = vunpack.c.h.b16 %v8656
      %v9140 = vunpack.c.l.b16 %v8657
      %v9141 = vunpack.c.l.b16 %v8658
      %v9142 = vunpack.c.h.b16 %v8658
      %v9143 = vunpack.c.l.b16 %v8659
      %v9144 = vunpack.c.h.b16 %v8659
      %v9145 = vunpack.c.l.b16 %v8660
      %v9146 = vunpack.c.h.b16 %v8660
      %v9147 = vunpack.c.l.b16 %v8661
      %v9148 = vunpack.c.h.b16 %v8661
      %v9149 = vunpack.c.l.b16 %v8662
      %v9150 = vunpack.c.l.b16 %v8663
      %v9151 = vunpack.c.h.b16 %v8663
      %v9152 = vunpack.c.l.b16 %v8664
      %v9153 = vunpack.c.h.b16 %v8664
      %v9154 = vunpack.c.l.b16 %v8665
      %v9155 = vunpack.c.h.b16 %v8665
      %v9156 = vunpack.c.l.b16 %v8666
      %v9157 = vunpack.c.h.b16 %v8666
      %v9158 = vunpack.c.l.b16 %v8667
      %v9159 = vunpack.c.l.b16 %v8668
      %v9160 = vunpack.c.h.b16 %v8668
      %v9161 = vunpack.c.l.b16 %v8669
      %v9162 = vunpack.c.h.b16 %v8669
      %v9163 = vunpack.c.l.b16 %v8670
      %v9164 = vunpack.c.h.b16 %v8670
      %v9165 = vunpack.c.l.b16 %v8671
      %v9166 = vunpack.c.h.b16 %v8671
      %v9167 = vunpack.c.l.b16 %v8672
      %v9168 = vunpack.c.l.b16 %v8673
      %v9169 = vunpack.c.h.b16 %v8673
      %v9170 = vunpack.c.l.b16 %v8674
      %v9171 = vunpack.c.h.b16 %v8674
      %v9172 = vunpack.c.l.b16 %v8675
      %v9173 = vunpack.c.h.b16 %v8675
      %v9174 = vunpack.c.l.b16 %v8676
      %v9175 = vunpack.c.h.b16 %v8676
      %v9176 = vunpack.c.l.b16 %v8677
      %v9177 = vunpack.c.l.b16 %v8678
      %v9178 = vunpack.c.h.b16 %v8678
      %v9179 = vunpack.c.l.b16 %v8679
      %v9180 = vunpack.c.h.b16 %v8679
      %v9181 = vunpack.c.l.b16 %v8680
      %v9182 = vunpack.c.h.b16 %v8680
      %v9183 = vunpack.c.l.b16 %v8681
      %v9184 = vunpack.c.h.b16 %v8681
      %v9185 = vunpack.c.l.b16 %v8682
      %v9186 = vunpack.c.l.b16 %v8683
      %v9187 = vunpack.c.h.b16 %v8683
      %v9188 = vunpack.c.l.b16 %v8684
      %v9189 = vunpack.c.h.b16 %v8684
      %v9190 = vunpack.c.l.b16 %v8685
      %v9191 = vunpack.c.h.b16 %v8685
      %v9192 = vunpack.c.l.b16 %v8686
      %v9193 = vunpack.c.h.b16 %v8686
      %v9194 = vunpack.c.l.b16 %v8687
      %v9195 = vunpack.c.l.b16 %v8688
      %v9196 = vunpack.c.h.b16 %v8688
      %v9197 = vunpack.c.l.b16 %v8689
      %v9198 = vunpack.c.h.b16 %v8689
      %v9199 = vunpack.c.l.b16 %v8690
      %v9200 = vunpack.c.h.b16 %v8690
      %v9201 = vunpack.c.l.b16 %v8691
      %v9202 = vunpack.c.h.b16 %v8691
      %v9203 = vunpack.c.l.b16 %v8692
      %v9204 = vunpack.c.l.b16 %v8693
      %v9205 = vunpack.c.h.b16 %v8693
      %v9206 = vunpack.c.l.b16 %v8694
      %v9207 = vunpack.c.h.b16 %v8694
      %v9208 = vunpack.c.l.b16 %v8695
      %v9209 = vunpack.c.h.b16 %v8695
      %v9210 = vunpack.c.l.b16 %v8696
      %v9211 = vunpack.c.h.b16 %v8696
      %v9212 = vunpack.c.l.b16 %v8697
      %v9213 = vunpack.c.l.b16 %v8698
      %v9214 = vunpack.c.h.b16 %v8698
      %v9215 = vunpack.c.l.b16 %v8699
      %v9216 = vunpack.c.h.b16 %v8699
      %v9217 = vunpack.c.l.b16 %v8700
      %v9218 = vunpack.c.h.b16 %v8700
      %v9219 = vunpack.c.l.b16 %v8701
      %v9220 = vunpack.c.h.b16 %v8701
      %v9221 = vunpack.c.l.b16 %v8702
      %v9222 = vunpack.c.l.b16 %v8703
      %v9223 = vunpack.c.h.b16 %v8703
      %v9224 = vunpack.c.l.b16 %v8704
      %v9225 = vunpack.c.h.b16 %v8704
      %v9226 = vunpack.c.l.b16 %v8705
      %v9227 = vunpack.c.h.b16 %v8705
      %v9228 = vunpack.c.l.b16 %v8706
      %v9229 = vunpack.c.h.b16 %v8706
      %v9230 = vunpack.c.l.b16 %v8707
      %v9231 = vunpack.c.l.b16 %v8708
      %v9232 = vunpack.c.h.b16 %v8708
      %v9233 = vunpack.c.l.b16 %v8709
      %v9234 = vunpack.c.h.b16 %v8709
      %v9235 = vunpack.c.l.b16 %v8710
      %v9236 = vunpack.c.h.b16 %v8710
      %v9237 = vunpack.c.l.b16 %v8711
      %v9238 = vunpack.c.h.b16 %v8711
      %v9239 = vunpack.c.l.b16 %v8712
      %v9240 = vunpack.c.l.b16 %v8713
      %v9241 = vunpack.c.h.b16 %v8713
      %v9242 = vunpack.c.l.b16 %v8714
      %v9243 = vunpack.c.h.b16 %v8714
      %v9244 = vunpack.c.l.b16 %v8715
      %v9245 = vunpack.c.h.b16 %v8715
      %v9246 = vunpack.c.l.b16 %v8716
      %v9247 = vunpack.c.h.b16 %v8716
      %v9248 = vunpack.c.l.b16 %v8717
      %v9249 = vunpack.c.l.b16 %v8718
      %v9250 = vunpack.c.h.b16 %v8718
      %v9251 = vunpack.c.l.b16 %v8719
      %v9252 = vunpack.c.h.b16 %v8719
      %v9253 = vunpack.c.l.b16 %v8720
      %v9254 = vunpack.c.h.b16 %v8720
      %v9255 = vunpack.c.l.b16 %v8721
      %v9256 = vunpack.c.h.b16 %v8721
      %v9257 = vunpack.c.l.b16 %v8722
      %v9258 = vunpack.c.l.b16 %v8723
      %v9259 = vunpack.c.h.b16 %v8723
      %v9260 = vunpack.c.l.b16 %v8724
      %v9261 = vunpack.c.h.b16 %v8724
      %v9262 = vunpack.c.l.b16 %v8725
      %v9263 = vunpack.c.h.b16 %v8725
      %v9264 = vunpack.c.l.b16 %v8726
      %v9265 = vunpack.c.h.b16 %v8726
      %v9266 = vunpack.c.l.b16 %v8727
      %v9267 = vunpack.c.l.b16 %v8728
      %v9268 = vunpack.c.h.b16 %v8728
      %v9269 = vunpack.c.l.b16 %v8729
      %v9270 = vunpack.c.h.b16 %v8729
      %v9271 = vunpack.c.l.b16 %v8730
      %v9272 = vunpack.c.h.b16 %v8730
      %v9273 = vunpack.c.l.b16 %v8731
      %v9274 = vunpack.c.h.b16 %v8731
      %v9275 = vunpack.c.l.b16 %v8732
      %v9276 = vunpack.c.l.b16 %v8733
      %v9277 = vunpack.c.h.b16 %v8733
      %v9278 = vunpack.c.l.b16 %v8734
      %v9279 = vunpack.c.h.b16 %v8734
      %v9280 = vunpack.c.l.b16 %v8735
      %v9281 = vunpack.c.h.b16 %v8735
      %v9282 = vunpack.c.l.b16 %v8736
      %v9283 = vunpack.c.h.b16 %v8736
      %v9284 = vunpack.c.l.b16 %v8737
      %v9285 = vunpack.c.l.b16 %v8738
      %v9286 = vunpack.c.h.b16 %v8738
      %v9287 = vunpack.c.l.b16 %v8739
      %v9288 = vunpack.c.h.b16 %v8739
      %v9289 = vunpack.c.l.b16 %v8740
      %v9290 = vunpack.c.h.b16 %v8740
      %v9291 = vunpack.c.l.b16 %v8741
      %v9292 = vunpack.c.h.b16 %v8741
      %v9293 = vunpack.c.l.b16 %v8742
      %v9294 = vunpack.c.l.b16 %v8743
      %v9295 = vunpack.c.h.b16 %v8743
      %v9296 = vunpack.c.l.b16 %v8744
      %v9297 = vunpack.c.h.b16 %v8744
      %v9298 = vunpack.c.l.b16 %v8745
      %v9299 = vunpack.c.h.b16 %v8745
      %v9300 = vunpack.c.l.b16 %v8746
      %v9301 = vunpack.c.h.b16 %v8746
      %v9302 = vunpack.c.l.b16 %v8747
      %v9303 = vunpack.c.l.b16 %v8748
      %v9304 = vunpack.c.h.b16 %v8748
      %v9305 = vunpack.c.l.b16 %v8749
      %v9306 = vunpack.c.h.b16 %v8749
      %v9307 = vunpack.c.l.b16 %v8750
      %v9308 = vunpack.c.h.b16 %v8750
      %v9309 = vunpack.c.l.b16 %v8751
      %v9310 = vunpack.c.h.b16 %v8751
      %v9311 = vunpack.c.l.b16 %v8752
      %v9312 = vunpack.c.l.b16 %v8753
      %v9313 = vunpack.c.h.b16 %v8753
      %v9314 = vunpack.c.l.b16 %v8754
      %v9315 = vunpack.c.h.b16 %v8754
      %v9316 = vunpack.c.l.b16 %v8755
      %v9317 = vunpack.c.h.b16 %v8755
      %v9318 = vunpack.c.l.b16 %v8756
      %v9319 = vunpack.c.h.b16 %v8756
      %v9320 = vunpack.c.l.b16 %v8757
      %v9321 = vunpack.c.l.b16 %v8758
      %v9322 = vunpack.c.h.b16 %v8758
      %v9323 = vunpack.c.l.b16 %v8759
      %v9324 = vunpack.c.h.b16 %v8759
      %v9325 = vunpack.c.l.b16 %v8760
      %v9326 = vunpack.c.h.b16 %v8760
      %v9327 = vunpack.c.l.b16 %v8761
      %v9328 = vunpack.c.h.b16 %v8761
      %v9329 = vunpack.c.l.b16 %v8762
      %v9330 = vunpack.c.l.b16 %v8763
      %v9331 = vunpack.c.h.b16 %v8763
      %v9332 = vunpack.c.l.b16 %v8764
      %v9333 = vunpack.c.h.b16 %v8764
      %v9334 = vunpack.c.l.b16 %v8765
      %v9335 = vunpack.c.h.b16 %v8765
      %v9336 = vunpack.c.l.b16 %v8766
      %v9337 = vunpack.c.h.b16 %v8766
      %v9338 = vunpack.c.l.b16 %v8767
      %v9339 = vunpack.c.l.b16 %v8768
      %v9340 = vunpack.c.h.b16 %v8768
      %v9341 = vunpack.c.l.b16 %v8769
      %v9342 = vunpack.c.h.b16 %v8769
      %v9343 = vunpack.c.l.b16 %v8770
      %v9344 = vunpack.c.h.b16 %v8770
      %v9345 = vunpack.c.l.b16 %v8771
      %v9346 = vunpack.c.h.b16 %v8771
      %v9347 = vunpack.c.l.b16 %v8772
      %v9348 = vunpack.c.l.b16 %v8773
      %v9349 = vunpack.c.h.b16 %v8773
      %v9350 = vunpack.c.l.b16 %v8774
      %v9351 = vunpack.c.h.b16 %v8774
      %v9352 = vunpack.c.l.b16 %v8775
      %v9353 = vunpack.c.h.b16 %v8775
      %v9354 = vunpack.c.l.b16 %v8776
      %v9355 = vunpack.c.h.b16 %v8776
      %v9356 = vunpack.c.l.b16 %v8777
      %v9357 = vunpack.c.l.b16 %v8778
      %v9358 = vunpack.c.h.b16 %v8778
      %v9359 = vunpack.c.l.b16 %v8779
      %v9360 = vunpack.c.h.b16 %v8779
      %v9361 = vunpack.c.l.b16 %v8780
      %v9362 = vunpack.c.h.b16 %v8780
      %v9363 = vunpack.c.l.b16 %v8781
      %v9364 = vunpack.c.h.b16 %v8781
      %v9365 = vunpack.c.l.b16 %v8782
      %v9366 = vunpack.c.l.b16 %v8783
      %v9367 = vunpack.c.h.b16 %v8783
      %v9368 = vunpack.c.l.b16 %v8784
      %v9369 = vunpack.c.h.b16 %v8784
      %v9370 = vunpack.c.l.b16 %v8785
      %v9371 = vunpack.c.h.b16 %v8785
      %v9372 = vunpack.c.l.b16 %v8786
      %v9373 = vunpack.c.h.b16 %v8786
      %v9374 = vunpack.c.l.b16 %v8787
      %v9375 = vunpack.c.l.b16 %v8788
      %v9376 = vunpack.c.h.b16 %v8788
      %v9377 = vunpack.c.l.b16 %v8789
      %v9378 = vunpack.c.h.b16 %v8789
      %v9379 = vunpack.c.l.b16 %v8790
      %v9380 = vunpack.c.h.b16 %v8790
      %v9381 = vunpack.c.l.b16 %v8791
      %v9382 = vunpack.c.h.b16 %v8791
      %v9383 = vunpack.c.l.b16 %v8792
      %v9384 = vunpack.c.l.b16 %v8793
      %v9385 = vunpack.c.h.b16 %v8793
      %v9386 = vunpack.c.l.b16 %v8794
      %v9387 = vunpack.c.h.b16 %v8794
      %v9388 = vunpack.c.l.b16 %v8795
      %v9389 = vunpack.c.h.b16 %v8795
      %v9390 = vunpack.c.l.b16 %v8796
      %v9391 = vunpack.c.h.b16 %v8796
      %v9392 = vunpack.c.l.b16 %v8797
      %v9393 = vunpack.c.l.b16 %v8798
      %v9394 = vunpack.c.h.b16 %v8798
      %v9395 = vunpack.c.l.b16 %v8799
      %v9396 = vunpack.c.h.b16 %v8799
      %v9397 = vunpack.c.l.b16 %v8800
      %v9398 = vunpack.c.h.b16 %v8800
      %v9399 = vunpack.c.l.b16 %v8801
      %v9400 = vunpack.c.h.b16 %v8801
      %v9401 = vunpack.c.l.b16 %v8802
      %v9402 = vpack.c.b16 %v9123, %v9114
      %v9403 = vpack.c.b16 %v9124, %v9115
      %v9404 = vpack.c.b16 %v9125, %v9116
      %v9405 = vpack.c.b16 %v9126, %v9117
      %v9406 = vpack.c.b16 %v9127, %v9118
      %v9407 = vpack.c.b16 %v9128, %v9119
      %v9408 = vpack.c.b16 %v9129, %v9120
      %v9409 = vpack.c.b16 %v9130, %v9121
      %v9410 = vpack.c.b16 %v9131, %v9122
      %v9411 = vpack.c.b16 %v9141, %v9132
      %v9412 = vpack.c.b16 %v9142, %v9133
      %v9413 = vpack.c.b16 %v9143, %v9134
      %v9414 = vpack.c.b16 %v9144, %v9135
      %v9415 = vpack.c.b16 %v9145, %v9136
      %v9416 = vpack.c.b16 %v9146, %v9137
      %v9417 = vpack.c.b16 %v9147, %v9138
      %v9418 = vpack.c.b16 %v9148, %v9139
      %v9419 = vpack.c.b16 %v9149, %v9140
      %v9420 = vpack.c.b16 %v9159, %v9150
      %v9421 = vpack.c.b16 %v9160, %v9151
      %v9422 = vpack.c.b16 %v9161, %v9152
      %v9423 = vpack.c.b16 %v9162, %v9153
      %v9424 = vpack.c.b16 %v9163, %v9154
      %v9425 = vpack.c.b16 %v9164, %v9155
      %v9426 = vpack.c.b16 %v9165, %v9156
      %v9427 = vpack.c.b16 %v9166, %v9157
      %v9428 = vpack.c.b16 %v9167, %v9158
      %v9429 = vpack.c.b16 %v9177, %v9168
      %v9430 = vpack.c.b16 %v9178, %v9169
      %v9431 = vpack.c.b16 %v9179, %v9170
      %v9432 = vpack.c.b16 %v9180, %v9171
      %v9433 = vpack.c.b16 %v9181, %v9172
      %v9434 = vpack.c.b16 %v9182, %v9173
      %v9435 = vpack.c.b16 %v9183, %v9174
      %v9436 = vpack.c.b16 %v9184, %v9175
      %v9437 = vpack.c.b16 %v9185, %v9176
      %v9438 = vpack.c.b16 %v9195, %v9186
      %v9439 = vpack.c.b16 %v9196, %v9187
      %v9440 = vpack.c.b16 %v9197, %v9188
      %v9441 = vpack.c.b16 %v9198, %v9189
      %v9442 = vpack.c.b16 %v9199, %v9190
      %v9443 = vpack.c.b16 %v9200, %v9191
      %v9444 = vpack.c.b16 %v9201, %v9192
      %v9445 = vpack.c.b16 %v9202, %v9193
      %v9446 = vpack.c.b16 %v9203, %v9194
      %v9447 = vpack.c.b16 %v9213, %v9204
      %v9448 = vpack.c.b16 %v9214, %v9205
      %v9449 = vpack.c.b16 %v9215, %v9206
      %v9450 = vpack.c.b16 %v9216, %v9207
      %v9451 = vpack.c.b16 %v9217, %v9208
      %v9452 = vpack.c.b16 %v9218, %v9209
      %v9453 = vpack.c.b16 %v9219, %v9210
      %v9454 = vpack.c.b16 %v9220, %v9211
      %v9455 = vpack.c.b16 %v9221, %v9212
      %v9456 = vpack.c.b16 %v9231, %v9222
      %v9457 = vpack.c.b16 %v9232, %v9223
      %v9458 = vpack.c.b16 %v9233, %v9224
      %v9459 = vpack.c.b16 %v9234, %v9225
      %v9460 = vpack.c.b16 %v9235, %v9226
      %v9461 = vpack.c.b16 %v9236, %v9227
      %v9462 = vpack.c.b16 %v9237, %v9228
      %v9463 = vpack.c.b16 %v9238, %v9229
      %v9464 = vpack.c.b16 %v9239, %v9230
      %v9465 = vpack.c.b16 %v9249, %v9240
      %v9466 = vpack.c.b16 %v9250, %v9241
      %v9467 = vpack.c.b16 %v9251, %v9242
      %v9468 = vpack.c.b16 %v9252, %v9243
      %v9469 = vpack.c.b16 %v9253, %v9244
      %v9470 = vpack.c.b16 %v9254, %v9245
      %v9471 = vpack.c.b16 %v9255, %v9246
      %v9472 = vpack.c.b16 %v9256, %v9247
      %v9473 = vpack.c.b16 %v9257, %v9248
      %v9474 = vpack.c.b16 %v9267, %v9258
      %v9475 = vpack.c.b16 %v9268, %v9259
      %v9476 = vpack.c.b16 %v9269, %v9260
      %v9477 = vpack.c.b16 %v9270, %v9261
      %v9478 = vpack.c.b16 %v9271, %v9262
      %v9479 = vpack.c.b16 %v9272, %v9263
      %v9480 = vpack.c.b16 %v9273, %v9264
      %v9481 = vpack.c.b16 %v9274, %v9265
      %v9482 = vpack.c.b16 %v9275, %v9266
      %v9483 = vpack.c.b16 %v9285, %v9276
      %v9484 = vpack.c.b16 %v9286, %v9277
      %v9485 = vpack.c.b16 %v9287, %v9278
      %v9486 = vpack.c.b16 %v9288, %v9279
      %v9487 = vpack.c.b16 %v9289, %v9280
      %v9488 = vpack.c.b16 %v9290, %v9281
      %v9489 = vpack.c.b16 %v9291, %v9282
      %v9490 = vpack.c.b16 %v9292, %v9283
      %v9491 = vpack.c.b16 %v9293, %v9284
      %v9492 = vpack.c.b16 %v9303, %v9294
      %v9493 = vpack.c.b16 %v9304, %v9295
      %v9494 = vpack.c.b16 %v9305, %v9296
      %v9495 = vpack.c.b16 %v9306, %v9297
      %v9496 = vpack.c.b16 %v9307, %v9298
      %v9497 = vpack.c.b16 %v9308, %v9299
      %v9498 = vpack.c.b16 %v9309, %v9300
      %v9499 = vpack.c.b16 %v9310, %v9301
      %v9500 = vpack.c.b16 %v9311, %v9302
      %v9501 = vpack.c.b16 %v9321, %v9312
      %v9502 = vpack.c.b16 %v9322, %v9313
      %v9503 = vpack.c.b16 %v9323, %v9314
      %v9504 = vpack.c.b16 %v9324, %v9315
      %v9505 = vpack.c.b16 %v9325, %v9316
      %v9506 = vpack.c.b16 %v9326, %v9317
      %v9507 = vpack.c.b16 %v9327, %v9318
      %v9508 = vpack.c.b16 %v9328, %v9319
      %v9509 = vpack.c.b16 %v9329, %v9320
      %v9510 = vpack.c.b16 %v9339, %v9330
      %v9511 = vpack.c.b16 %v9340, %v9331
      %v9512 = vpack.c.b16 %v9341, %v9332
      %v9513 = vpack.c.b16 %v9342, %v9333
      %v9514 = vpack.c.b16 %v9343, %v9334
      %v9515 = vpack.c.b16 %v9344, %v9335
      %v9516 = vpack.c.b16 %v9345, %v9336
      %v9517 = vpack.c.b16 %v9346, %v9337
      %v9518 = vpack.c.b16 %v9347, %v9338
      %v9519 = vpack.c.b16 %v9357, %v9348
      %v9520 = vpack.c.b16 %v9358, %v9349
      %v9521 = vpack.c.b16 %v9359, %v9350
      %v9522 = vpack.c.b16 %v9360, %v9351
      %v9523 = vpack.c.b16 %v9361, %v9352
      %v9524 = vpack.c.b16 %v9362, %v9353
      %v9525 = vpack.c.b16 %v9363, %v9354
      %v9526 = vpack.c.b16 %v9364, %v9355
      %v9527 = vpack.c.b16 %v9365, %v9356
      %v9528 = vpack.c.b16 %v9375, %v9366
      %v9529 = vpack.c.b16 %v9376, %v9367
      %v9530 = vpack.c.b16 %v9377, %v9368
      %v9531 = vpack.c.b16 %v9378, %v9369
      %v9532 = vpack.c.b16 %v9379, %v9370
      %v9533 = vpack.c.b16 %v9380, %v9371
      %v9534 = vpack.c.b16 %v9381, %v9372
      %v9535 = vpack.c.b16 %v9382, %v9373
      %v9536 = vpack.c.b16 %v9383, %v9374
      %v9537 = vpack.c.b16 %v9393, %v9384
      %v9538 = vpack.c.b16 %v9394, %v9385
      %v9539 = vpack.c.b16 %v9395, %v9386
      %v9540 = vpack.c.b16 %v9396, %v9387
      %v9541 = vpack.c.b16 %v9397, %v9388
      %v9542 = vpack.c.b16 %v9398, %v9389
      %v9543 = vpack.c.b16 %v9399, %v9390
      %v9544 = vpack.c.b16 %v9400, %v9391
      %v9545 = vpack.c.b16 %v9401, %v9392
      %v9834 = vunpack.c.l.b16 %v8803
      %v9835 = vunpack.c.l.b16 %v8804
      %v9836 = vunpack.c.l.b16 %v8805
      %v9837 = vunpack.c.l.b16 %v8806
      %v9838 = vunpack.c.l.b16 %v8807
      %v9839 = vunpack.c.l.b16 %v8808
      %v9840 = vunpack.c.l.b16 %v8809
      %v9841 = vunpack.c.l.b16 %v8810
      %v9842 = vunpack.c.l.b16 %v8811
      %v9843 = vunpack.c.l.b16 %v8812
      %v9844 = vunpack.c.l.b16 %v8813
      %v9845 = vunpack.c.l.b16 %v8814
      %v9846 = vunpack.c.l.b16 %v8815
      %v9847 = vunpack.c.l.b16 %v8816
      %v9848 = vunpack.c.l.b16 %v8817
      %v9849 = vunpack.c.l.b16 %v8818
      %v9850 = vunpack.c.l.b16 %v8819
      %v9851 = vunpack.c.l.b16 %v8820
      %v9852 = vunpack.c.l.b16 %v8821
      %v9853 = vunpack.c.l.b16 %v8822
      %v9854 = vunpack.c.l.b16 %v8823
      %v9855 = vunpack.c.l.b16 %v8824
      %v9856 = vunpack.c.l.b16 %v8825
      %v9857 = vunpack.c.l.b16 %v8826
      %v9858 = vunpack.c.l.b16 %v8827
      %v9859 = vunpack.c.l.b16 %v8828
      %v9860 = vunpack.c.l.b16 %v8829
      %v9861 = vunpack.c.l.b16 %v8830
      %v9862 = vunpack.c.l.b16 %v8831
      %v9863 = vunpack.c.l.b16 %v8832
      %v9864 = vunpack.c.l.b16 %v8833
      %v9865 = vunpack.c.l.b16 %v8834
      %v9866 = vunpack.c.l.b16 %v8835
      %v9867 = vunpack.c.l.b16 %v8836
      %v9868 = vunpack.c.l.b16 %v8837
      %v9869 = vunpack.c.l.b16 %v8838
      %v9870 = vunpack.c.l.b16 %v8839
      %v9871 = vunpack.c.l.b16 %v8840
      %v9872 = vunpack.c.l.b16 %v8841
      %v9873 = vunpack.c.l.b16 %v8842
      %v9874 = vunpack.c.l.b16 %v8843
      %v9875 = vunpack.c.l.b16 %v8844
      %v9876 = vunpack.c.l.b16 %v8845
      %v9877 = vunpack.c.l.b16 %v8846
      %v9878 = vunpack.c.l.b16 %v8847
      %v9879 = vunpack.c.l.b16 %v8848
      %v9880 = vunpack.c.l.b16 %v8849
      %v9881 = vunpack.c.l.b16 %v8850
      %v9882 = vunpack.c.l.b16 %v8851
      %v9883 = vunpack.c.l.b16 %v8852
      %v9884 = vunpack.c.l.b16 %v8853
      %v9885 = vunpack.c.l.b16 %v8854
      %v9886 = vunpack.c.l.b16 %v8855
      %v9887 = vunpack.c.l.b16 %v8856
      %v9888 = vunpack.c.l.b16 %v8857
      %v9889 = vunpack.c.l.b16 %v8858
      %v9890 = vunpack.c.l.b16 %v8859
      %v9891 = vunpack.c.l.b16 %v8860
      %v9892 = vunpack.c.l.b16 %v8861
      %v9893 = vunpack.c.l.b16 %v8862
      %v9894 = vunpack.c.l.b16 %v8863
      %v9895 = vunpack.c.l.b16 %v8864
      %v9896 = vunpack.c.l.b16 %v8865
      %v9897 = vunpack.c.l.b16 %v8866
      %v9898 = vunpack.c.l.b16 %v8867
      %v9899 = vunpack.c.l.b16 %v8868
      %v9900 = vunpack.c.l.b16 %v8869
      %v9901 = vunpack.c.l.b16 %v8870
      %v9902 = vunpack.c.l.b16 %v8871
      %v9903 = vunpack.c.l.b16 %v8872
      %v9904 = vunpack.c.l.b16 %v8873
      %v9905 = vunpack.c.l.b16 %v8874
      %v9906 = vunpack.c.l.b16 %v8875
      %v9907 = vunpack.c.l.b16 %v8876
      %v9908 = vunpack.c.l.b16 %v8877
      %v9909 = vunpack.c.l.b16 %v8878
      %v9910 = vunpack.c.l.b16 %v8879
      %v9911 = vunpack.c.l.b16 %v8880
      %v9912 = vunpack.c.l.b16 %v8881
      %v9913 = vunpack.c.l.b16 %v8882
      %v9914 = vunpack.c.l.b16 %v8883
      %v9915 = vunpack.c.l.b16 %v8884
      %v9916 = vunpack.c.l.b16 %v8885
      %v9917 = vunpack.c.l.b16 %v8886
      %v9918 = vunpack.c.l.b16 %v8887
      %v9919 = vunpack.c.l.b16 %v8888
      %v9920 = vunpack.c.l.b16 %v8889
      %v9921 = vunpack.c.l.b16 %v8890
      %v9922 = vunpack.c.l.b16 %v8891
      %v9923 = vunpack.c.l.b16 %v8892
      %v9924 = vunpack.c.l.b16 %v8893
      %v9925 = vunpack.c.l.b16 %v8894
      %v9926 = vunpack.c.l.b16 %v8895
      %v9927 = vunpack.c.l.b16 %v8896
      %v9928 = vunpack.c.l.b16 %v8897
      %v9929 = vunpack.c.l.b16 %v8898
      %v9930 = vunpack.c.l.b16 %v8899
      %v9931 = vunpack.c.l.b16 %v8900
      %v9932 = vunpack.c.l.b16 %v8901
      %v9933 = vunpack.c.l.b16 %v8902
      %v9934 = vunpack.c.l.b16 %v8903
      %v9935 = vunpack.c.l.b16 %v8904
      %v9936 = vunpack.c.l.b16 %v8905
      %v9937 = vunpack.c.l.b16 %v8906
      %v9938 = vunpack.c.l.b16 %v8907
      %v9939 = vunpack.c.l.b16 %v8908
      %v9940 = vunpack.c.l.b16 %v8909
      %v9941 = vunpack.c.l.b16 %v8910
      %v9942 = vunpack.c.l.b16 %v8911
      %v9943 = vunpack.c.l.b16 %v8912
      %v9944 = vunpack.c.l.b16 %v8913
      %v9945 = vunpack.c.l.b16 %v8914
      %v9946 = vunpack.c.l.b16 %v8915
      %v9947 = vunpack.c.l.b16 %v8916
      %v9948 = vunpack.c.l.b16 %v8917
      %v9949 = vunpack.c.l.b16 %v8918
      %v9950 = vunpack.c.l.b16 %v8919
      %v9951 = vunpack.c.l.b16 %v8920
      %v9952 = vunpack.c.l.b16 %v8921
      %v9953 = vunpack.c.l.b16 %v8922
      %v9954 = vunpack.c.l.b16 %v8923
      %v9955 = vunpack.c.l.b16 %v8924
      %v9956 = vunpack.c.l.b16 %v8925
      %v9957 = vunpack.c.l.b16 %v8926
      %v9958 = vunpack.c.l.b16 %v8927
      %v9959 = vunpack.c.l.b16 %v8928
      %v9960 = vunpack.c.l.b16 %v8929
      %v9961 = vunpack.c.l.b16 %v8930
      %v9962 = vunpack.c.l.b16 %v8931
      %v9963 = vunpack.c.l.b16 %v8932
      %v9964 = vunpack.c.l.b16 %v8933
      %v9965 = vunpack.c.l.b16 %v8934
      %v9966 = vunpack.c.l.b16 %v8935
      %v9967 = vunpack.c.l.b16 %v8936
      %v9968 = vunpack.c.l.b16 %v8937
      %v9969 = vunpack.c.l.b16 %v8938
      %v9970 = vunpack.c.l.b16 %v8939
      %v9971 = vunpack.c.l.b16 %v8940
      %v9972 = vunpack.c.l.b16 %v8941
      %v9973 = vunpack.c.l.b16 %v8942
      %v9974 = vunpack.c.l.b16 %v8943
      %v9975 = vunpack.c.l.b16 %v8944
      %v9976 = vunpack.c.l.b16 %v8945
      %v9977 = vunpack.c.l.b16 %v8946
      %v9978 = vpack.c.b16 %v9835, %v9834
      %v9979 = vpack.c.b16 %v9837, %v9836
      %v9980 = vpack.c.b16 %v9839, %v9838
      %v9981 = vpack.c.b16 %v9841, %v9840
      %v9982 = vpack.c.b16 %v9843, %v9842
      %v9983 = vpack.c.b16 %v9845, %v9844
      %v9984 = vpack.c.b16 %v9847, %v9846
      %v9985 = vpack.c.b16 %v9849, %v9848
      %v9986 = vpack.c.b16 %v9851, %v9850
      %v9987 = vpack.c.b16 %v9853, %v9852
      %v9988 = vpack.c.b16 %v9855, %v9854
      %v9989 = vpack.c.b16 %v9857, %v9856
      %v9990 = vpack.c.b16 %v9859, %v9858
      %v9991 = vpack.c.b16 %v9861, %v9860
      %v9992 = vpack.c.b16 %v9863, %v9862
      %v9993 = vpack.c.b16 %v9865, %v9864
      %v9994 = vpack.c.b16 %v9867, %v9866
      %v9995 = vpack.c.b16 %v9869, %v9868
      %v9996 = vpack.c.b16 %v9871, %v9870
      %v9997 = vpack.c.b16 %v9873, %v9872
      %v9998 = vpack.c.b16 %v9875, %v9874
      %v9999 = vpack.c.b16 %v9877, %v9876
      %v10000 = vpack.c.b16 %v9879, %v9878
      %v10001 = vpack.c.b16 %v9881, %v9880
      %v10002 = vpack.c.b16 %v9883, %v9882
      %v10003 = vpack.c.b16 %v9885, %v9884
      %v10004 = vpack.c.b16 %v9887, %v9886
      %v10005 = vpack.c.b16 %v9889, %v9888
      %v10006 = vpack.c.b16 %v9891, %v9890
      %v10007 = vpack.c.b16 %v9893, %v9892
      %v10008 = vpack.c.b16 %v9895, %v9894
      %v10009 = vpack.c.b16 %v9897, %v9896
      %v10010 = vpack.c.b16 %v9899, %v9898
      %v10011 = vpack.c.b16 %v9901, %v9900
      %v10012 = vpack.c.b16 %v9903, %v9902
      %v10013 = vpack.c.b16 %v9905, %v9904
      %v10014 = vpack.c.b16 %v9907, %v9906
      %v10015 = vpack.c.b16 %v9909, %v9908
      %v10016 = vpack.c.b16 %v9911, %v9910
      %v10017 = vpack.c.b16 %v9913, %v9912
      %v10018 = vpack.c.b16 %v9915, %v9914
      %v10019 = vpack.c.b16 %v9917, %v9916
      %v10020 = vpack.c.b16 %v9919, %v9918
      %v10021 = vpack.c.b16 %v9921, %v9920
      %v10022 = vpack.c.b16 %v9923, %v9922
      %v10023 = vpack.c.b16 %v9925, %v9924
      %v10024 = vpack.c.b16 %v9927, %v9926
      %v10025 = vpack.c.b16 %v9929, %v9928
      %v10026 = vpack.c.b16 %v9931, %v9930
      %v10027 = vpack.c.b16 %v9933, %v9932
      %v10028 = vpack.c.b16 %v9935, %v9934
      %v10029 = vpack.c.b16 %v9937, %v9936
      %v10030 = vpack.c.b16 %v9939, %v9938
      %v10031 = vpack.c.b16 %v9941, %v9940
      %v10032 = vpack.c.b16 %v9943, %v9942
      %v10033 = vpack.c.b16 %v9945, %v9944
      %v10034 = vpack.c.b16 %v9947, %v9946
      %v10035 = vpack.c.b16 %v9949, %v9948
      %v10036 = vpack.c.b16 %v9951, %v9950
      %v10037 = vpack.c.b16 %v9953, %v9952
      %v10038 = vpack.c.b16 %v9955, %v9954
      %v10039 = vpack.c.b16 %v9957, %v9956
      %v10040 = vpack.c.b16 %v9959, %v9958
      %v10041 = vpack.c.b16 %v9961, %v9960
      %v10042 = vpack.c.b16 %v9963, %v9962
      %v10043 = vpack.c.b16 %v9965, %v9964
      %v10044 = vpack.c.b16 %v9967, %v9966
      %v10045 = vpack.c.b16 %v9969, %v9968
      %v10046 = vpack.c.b16 %v9971, %v9970
      %v10047 = vpack.c.b16 %v9973, %v9972
      %v10048 = vpack.c.b16 %v9975, %v9974
      %v10049 = vpack.c.b16 %v9977, %v9976
      %10122 = vmatprep.subr.bf16.mxu0 0
      %10123 = vmatpush1.bf16.msra.mxu0 %v9985
      %10124 = vmatprep.subr.bf16.mxu0 0
      %10125 = vmatpush1.bf16.msra.mxu0 %v9984
      %10126 = vmatprep.subr.bf16.mxu0 0
      %10127 = vmatpush1.bf16.msra.mxu0 %v9983
      %10128 = vmatprep.subr.bf16.mxu0 0
      %10129 = vmatpush1.bf16.msra.mxu0 %v9982
      %10130 = vmatprep.subr.bf16.mxu0 0
      %10131 = vmatpush1.bf16.msra.mxu0 %v9981
      %10132 = vmatprep.subr.bf16.mxu0 0
      %10133 = vmatpush1.bf16.msra.mxu0 %v9980
      %10134 = vmatprep.subr.bf16.mxu0 0
      %10135 = vmatpush1.bf16.msra.mxu0 %v9979
      %10136 = vmatprep.subr.bf16.mxu0 0
      %10137 = vmatpush1.bf16.msra.mxu0 %v9978
      %10138 = vmatprep.subr.bf16.mxu0 0
      %10139 = vmatpush2.bf16.msra.mxu0 %v9993
      %10140 = vmatprep.subr.bf16.mxu0 0
      %10141 = vmatpush2.bf16.msra.mxu0 %v9992
      %10142 = vmatprep.subr.bf16.mxu0 0
      %10143 = vmatpush2.bf16.msra.mxu0 %v9991
      %10144 = vmatprep.subr.bf16.mxu0 0
      %10145 = vmatpush2.bf16.msra.mxu0 %v9990
      %10146 = vmatprep.subr.bf16.mxu0 0
      %10147 = vmatpush2.bf16.msra.mxu0 %v9989
      %10148 = vmatprep.subr.bf16.mxu0 0
      %10149 = vmatpush2.bf16.msra.mxu0 %v9988
      %10150 = vmatprep.subr.bf16.mxu0 0
      %10151 = vmatpush2.bf16.msra.mxu0 %v9987
      %10152 = vmatprep.subr.bf16.mxu0 0
      %10153 = vmatpush2.bf16.msra.mxu0 %v9986
      %10154 = vmatprep.mubr.bf16.mxu0 %v9403
      %10155 = vmatmul.mubr.bf16.gmra.mxu0 %v9402
      %v10156 = vpop.f32.mrf.mxu0
      %v10157 = vadd.f32 %v8952, %v10156
      %v10158 = vpop.f32.mrf.mxu0
      %v10159 = vpop.f32.mrf.mxu0
      %v10160 = vadd.f32 %v8952, %v10159
      %v10161 = vpop.f32.mrf.mxu0
      %10162 = vmatprep.mubr.bf16.mxu0 %v9412
      %10163 = vmatmul.mubr.bf16.gmra.mxu0 %v9411
      %v10164 = vpop.f32.mrf.mxu0
      %v10165 = vadd.f32 %v8952, %v10164
      %v10166 = vpop.f32.mrf.mxu0
      %v10167 = vpop.f32.mrf.mxu0
      %v10168 = vadd.f32 %v8952, %v10167
      %v10169 = vpop.f32.mrf.mxu0
      %10170 = vmatprep.mubr.bf16.mxu0 %v9421
      %10171 = vmatmul.mubr.bf16.gmra.mxu0 %v9420
      %v10172 = vpop.f32.mrf.mxu0
      %v10173 = vadd.f32 %v8952, %v10172
      %v10174 = vpop.f32.mrf.mxu0
      %v10175 = vpop.f32.mrf.mxu0
      %v10176 = vadd.f32 %v8952, %v10175
      %v10177 = vpop.f32.mrf.mxu0
      %10178 = vmatprep.mubr.bf16.mxu0 %v9430
      %10179 = vmatmul.mubr.bf16.gmra.mxu0 %v9429
      %v10180 = vpop.f32.mrf.mxu0
      %v10181 = vadd.f32 %v8952, %v10180
      %v10182 = vpop.f32.mrf.mxu0
      %v10183 = vpop.f32.mrf.mxu0
      %v10184 = vadd.f32 %v8952, %v10183
      %v10185 = vpop.f32.mrf.mxu0
      %10186 = vmatprep.mubr.bf16.mxu0 %v9439
      %10187 = vmatmul.mubr.bf16.gmra.mxu0 %v9438
      %v10188 = vpop.f32.mrf.mxu0
      %v10189 = vadd.f32 %v8952, %v10188
      %v10190 = vpop.f32.mrf.mxu0
      %v10191 = vpop.f32.mrf.mxu0
      %v10192 = vadd.f32 %v8952, %v10191
      %v10193 = vpop.f32.mrf.mxu0
      %10194 = vmatprep.mubr.bf16.mxu0 %v9448
      %10195 = vmatmul.mubr.bf16.gmra.mxu0 %v9447
      %v10196 = vpop.f32.mrf.mxu0
      %v10197 = vadd.f32 %v8952, %v10196
      %v10198 = vpop.f32.mrf.mxu0
      %v10199 = vpop.f32.mrf.mxu0
      %v10200 = vadd.f32 %v8952, %v10199
      %v10201 = vpop.f32.mrf.mxu0
      %10202 = vmatprep.mubr.bf16.mxu0 %v9457
      %10203 = vmatmul.mubr.bf16.gmra.mxu0 %v9456
      %v10204 = vpop.f32.mrf.mxu0
      %v10205 = vadd.f32 %v8952, %v10204
      %v10206 = vpop.f32.mrf.mxu0
      %v10207 = vpop.f32.mrf.mxu0
      %v10208 = vadd.f32 %v8952, %v10207
      %v10209 = vpop.f32.mrf.mxu0
      %10210 = vmatprep.mubr.bf16.mxu0 %v9466
      %10211 = vmatmul.mubr.bf16.gmra.mxu0 %v9465
      %v10212 = vpop.f32.mrf.mxu0
      %v10213 = vadd.f32 %v8952, %v10212
      %v10214 = vpop.f32.mrf.mxu0
      %v10215 = vpop.f32.mrf.mxu0
      %v10216 = vadd.f32 %v8952, %v10215
      %v10217 = vpop.f32.mrf.mxu0
      %10218 = vmatprep.mubr.bf16.mxu0 %v9475
      %10219 = vmatmul.mubr.bf16.gmra.mxu0 %v9474
      %v10220 = vpop.f32.mrf.mxu0
      %v10221 = vadd.f32 %v8952, %v10220
      %v10222 = vpop.f32.mrf.mxu0
      %v10223 = vpop.f32.mrf.mxu0
      %v10224 = vadd.f32 %v8952, %v10223
      %v10225 = vpop.f32.mrf.mxu0
      %10226 = vmatprep.mubr.bf16.mxu0 %v9484
      %10227 = vmatmul.mubr.bf16.gmra.mxu0 %v9483
      %v10228 = vpop.f32.mrf.mxu0
      %v10229 = vadd.f32 %v8952, %v10228
      %v10230 = vpop.f32.mrf.mxu0
      %v10231 = vpop.f32.mrf.mxu0
      %v10232 = vadd.f32 %v8952, %v10231
      %v10233 = vpop.f32.mrf.mxu0
      %10234 = vmatprep.mubr.bf16.mxu0 %v9493
      %10235 = vmatmul.mubr.bf16.gmra.mxu0 %v9492
      %v10236 = vpop.f32.mrf.mxu0
      %v10237 = vadd.f32 %v8952, %v10236
      %v10238 = vpop.f32.mrf.mxu0
      %v10239 = vpop.f32.mrf.mxu0
      %v10240 = vadd.f32 %v8952, %v10239
      %v10241 = vpop.f32.mrf.mxu0
      %10242 = vmatprep.mubr.bf16.mxu0 %v9502
      %10243 = vmatmul.mubr.bf16.gmra.mxu0 %v9501
      %v10244 = vpop.f32.mrf.mxu0
      %v10245 = vadd.f32 %v8952, %v10244
      %v10246 = vpop.f32.mrf.mxu0
      %v10247 = vpop.f32.mrf.mxu0
      %v10248 = vadd.f32 %v8952, %v10247
      %v10249 = vpop.f32.mrf.mxu0
      %10250 = vmatprep.mubr.bf16.mxu0 %v9511
      %10251 = vmatmul.mubr.bf16.gmra.mxu0 %v9510
      %v10252 = vpop.f32.mrf.mxu0
      %v10253 = vadd.f32 %v8952, %v10252
      %v10254 = vpop.f32.mrf.mxu0
      %v10255 = vpop.f32.mrf.mxu0
      %v10256 = vadd.f32 %v8952, %v10255
      %v10257 = vpop.f32.mrf.mxu0
      %10258 = vmatprep.mubr.bf16.mxu0 %v9520
      %10259 = vmatmul.mubr.bf16.gmra.mxu0 %v9519
      %v10260 = vpop.f32.mrf.mxu0
      %v10261 = vadd.f32 %v8952, %v10260
      %v10262 = vpop.f32.mrf.mxu0
      %v10263 = vpop.f32.mrf.mxu0
      %v10264 = vadd.f32 %v8952, %v10263
      %v10265 = vpop.f32.mrf.mxu0
      %10266 = vmatprep.mubr.bf16.mxu0 %v9529
      %10267 = vmatmul.mubr.bf16.gmra.mxu0 %v9528
      %v10268 = vpop.f32.mrf.mxu0
      %v10269 = vadd.f32 %v8952, %v10268
      %v10270 = vpop.f32.mrf.mxu0
      %v10271 = vpop.f32.mrf.mxu0
      %v10272 = vadd.f32 %v8952, %v10271
      %v10273 = vpop.f32.mrf.mxu0
      %10274 = vmatprep.mubr.bf16.mxu0 %v9538
      %10275 = vmatmul.mubr.bf16.gmra.mxu0 %v9537
      %v10276 = vpop.f32.mrf.mxu0
      %v10277 = vadd.f32 %v8952, %v10276
      %v10278 = vpop.f32.mrf.mxu0
      %v10279 = vpop.f32.mrf.mxu0
      %v10280 = vadd.f32 %v8952, %v10279
      %v10281 = vpop.f32.mrf.mxu0
      %10282 = vdwg.mxu0
      %10283 = vmatprep.subr.bf16.mxu0 0
      %10284 = vmatpush1.bf16.msra.mxu0 %v10001
      %10285 = vmatprep.subr.bf16.mxu0 0
      %10286 = vmatpush1.bf16.msra.mxu0 %v10000
      %10287 = vmatprep.subr.bf16.mxu0 0
      %10288 = vmatpush1.bf16.msra.mxu0 %v9999
      %10289 = vmatprep.subr.bf16.mxu0 0
      %10290 = vmatpush1.bf16.msra.mxu0 %v9998
      %10291 = vmatprep.subr.bf16.mxu0 0
      %10292 = vmatpush1.bf16.msra.mxu0 %v9997
      %10293 = vmatprep.subr.bf16.mxu0 0
      %10294 = vmatpush1.bf16.msra.mxu0 %v9996
      %10295 = vmatprep.subr.bf16.mxu0 0
      %10296 = vmatpush1.bf16.msra.mxu0 %v9995
      %10297 = vmatprep.subr.bf16.mxu0 0
      %10298 = vmatpush1.bf16.msra.mxu0 %v9994
      %10299 = vmatprep.subr.bf16.mxu0 0
      %10300 = vmatpush2.bf16.msra.mxu0 %v10009
      %10301 = vmatprep.subr.bf16.mxu0 0
      %10302 = vmatpush2.bf16.msra.mxu0 %v10008
      %10303 = vmatprep.subr.bf16.mxu0 0
      %10304 = vmatpush2.bf16.msra.mxu0 %v10007
      %10305 = vmatprep.subr.bf16.mxu0 0
      %10306 = vmatpush2.bf16.msra.mxu0 %v10006
      %10307 = vmatprep.subr.bf16.mxu0 0
      %10308 = vmatpush2.bf16.msra.mxu0 %v10005
      %10309 = vmatprep.subr.bf16.mxu0 0
      %10310 = vmatpush2.bf16.msra.mxu0 %v10004
      %10311 = vmatprep.subr.bf16.mxu0 0
      %10312 = vmatpush2.bf16.msra.mxu0 %v10003
      %10313 = vmatprep.subr.bf16.mxu0 0
      %10314 = vmatpush2.bf16.msra.mxu0 %v10002
      %10315 = vmatprep.mubr.bf16.mxu0 %v9405
      %10316 = vmatmul.mubr.bf16.gmra.mxu0 %v9404
      %v10317 = vpop.f32.mrf.mxu0
      %v10318 = vadd.f32 %v10157, %v10317
      %v10319 = vpop.f32.mrf.mxu0
      %v10320 = vpop.f32.mrf.mxu0
      %v10321 = vadd.f32 %v10160, %v10320
      %v10322 = vpop.f32.mrf.mxu0
      %10323 = vmatprep.mubr.bf16.mxu0 %v9414
      %10324 = vmatmul.mubr.bf16.gmra.mxu0 %v9413
      %v10325 = vpop.f32.mrf.mxu0
      %v10326 = vadd.f32 %v10165, %v10325
      %v10327 = vpop.f32.mrf.mxu0
      %v10328 = vpop.f32.mrf.mxu0
      %v10329 = vadd.f32 %v10168, %v10328
      %v10330 = vpop.f32.mrf.mxu0
      %10331 = vmatprep.mubr.bf16.mxu0 %v9423
      %10332 = vmatmul.mubr.bf16.gmra.mxu0 %v9422
      %v10333 = vpop.f32.mrf.mxu0
      %v10334 = vadd.f32 %v10173, %v10333
      %v10335 = vpop.f32.mrf.mxu0
      %v10336 = vpop.f32.mrf.mxu0
      %v10337 = vadd.f32 %v10176, %v10336
      %v10338 = vpop.f32.mrf.mxu0
      %10339 = vmatprep.mubr.bf16.mxu0 %v9432
      %10340 = vmatmul.mubr.bf16.gmra.mxu0 %v9431
      %v10341 = vpop.f32.mrf.mxu0
      %v10342 = vadd.f32 %v10181, %v10341
      %v10343 = vpop.f32.mrf.mxu0
      %v10344 = vpop.f32.mrf.mxu0
      %v10345 = vadd.f32 %v10184, %v10344
      %v10346 = vpop.f32.mrf.mxu0
      %10347 = vmatprep.mubr.bf16.mxu0 %v9441
      %10348 = vmatmul.mubr.bf16.gmra.mxu0 %v9440
      %v10349 = vpop.f32.mrf.mxu0
      %v10350 = vadd.f32 %v10189, %v10349
      %v10351 = vpop.f32.mrf.mxu0
      %v10352 = vpop.f32.mrf.mxu0
      %v10353 = vadd.f32 %v10192, %v10352
      %v10354 = vpop.f32.mrf.mxu0
      %10355 = vmatprep.mubr.bf16.mxu0 %v9450
      %10356 = vmatmul.mubr.bf16.gmra.mxu0 %v9449
      %v10357 = vpop.f32.mrf.mxu0
      %v10358 = vadd.f32 %v10197, %v10357
      %v10359 = vpop.f32.mrf.mxu0
      %v10360 = vpop.f32.mrf.mxu0
      %v10361 = vadd.f32 %v10200, %v10360
      %v10362 = vpop.f32.mrf.mxu0
      %10363 = vmatprep.mubr.bf16.mxu0 %v9459
      %10364 = vmatmul.mubr.bf16.gmra.mxu0 %v9458
      %v10365 = vpop.f32.mrf.mxu0
      %v10366 = vadd.f32 %v10205, %v10365
      %v10367 = vpop.f32.mrf.mxu0
      %v10368 = vpop.f32.mrf.mxu0
      %v10369 = vadd.f32 %v10208, %v10368
      %v10370 = vpop.f32.mrf.mxu0
      %10371 = vmatprep.mubr.bf16.mxu0 %v9468
      %10372 = vmatmul.mubr.bf16.gmra.mxu0 %v9467
      %v10373 = vpop.f32.mrf.mxu0
      %v10374 = vadd.f32 %v10213, %v10373
      %v10375 = vpop.f32.mrf.mxu0
      %v10376 = vpop.f32.mrf.mxu0
      %v10377 = vadd.f32 %v10216, %v10376
      %v10378 = vpop.f32.mrf.mxu0
      %10379 = vmatprep.mubr.bf16.mxu0 %v9477
      %10380 = vmatmul.mubr.bf16.gmra.mxu0 %v9476
      %v10381 = vpop.f32.mrf.mxu0
      %v10382 = vadd.f32 %v10221, %v10381
      %v10383 = vpop.f32.mrf.mxu0
      %v10384 = vpop.f32.mrf.mxu0
      %v10385 = vadd.f32 %v10224, %v10384
      %v10386 = vpop.f32.mrf.mxu0
      %10387 = vmatprep.mubr.bf16.mxu0 %v9486
      %10388 = vmatmul.mubr.bf16.gmra.mxu0 %v9485
      %v10389 = vpop.f32.mrf.mxu0
      %v10390 = vadd.f32 %v10229, %v10389
      %v10391 = vpop.f32.mrf.mxu0
      %v10392 = vpop.f32.mrf.mxu0
      %v10393 = vadd.f32 %v10232, %v10392
      %v10394 = vpop.f32.mrf.mxu0
      %10395 = vmatprep.mubr.bf16.mxu0 %v9495
      %10396 = vmatmul.mubr.bf16.gmra.mxu0 %v9494
      %v10397 = vpop.f32.mrf.mxu0
      %v10398 = vadd.f32 %v10237, %v10397
      %v10399 = vpop.f32.mrf.mxu0
      %v10400 = vpop.f32.mrf.mxu0
      %v10401 = vadd.f32 %v10240, %v10400
      %v10402 = vpop.f32.mrf.mxu0
      %10403 = vmatprep.mubr.bf16.mxu0 %v9504
      %10404 = vmatmul.mubr.bf16.gmra.mxu0 %v9503
      %v10405 = vpop.f32.mrf.mxu0
      %v10406 = vadd.f32 %v10245, %v10405
      %v10407 = vpop.f32.mrf.mxu0
      %v10408 = vpop.f32.mrf.mxu0
      %v10409 = vadd.f32 %v10248, %v10408
      %v10410 = vpop.f32.mrf.mxu0
      %10411 = vmatprep.mubr.bf16.mxu0 %v9513
      %10412 = vmatmul.mubr.bf16.gmra.mxu0 %v9512
      %v10413 = vpop.f32.mrf.mxu0
      %v10414 = vadd.f32 %v10253, %v10413
      %v10415 = vpop.f32.mrf.mxu0
      %v10416 = vpop.f32.mrf.mxu0
      %v10417 = vadd.f32 %v10256, %v10416
      %v10418 = vpop.f32.mrf.mxu0
      %10419 = vmatprep.mubr.bf16.mxu0 %v9522
      %10420 = vmatmul.mubr.bf16.gmra.mxu0 %v9521
      %v10421 = vpop.f32.mrf.mxu0
      %v10422 = vadd.f32 %v10261, %v10421
      %v10423 = vpop.f32.mrf.mxu0
      %v10424 = vpop.f32.mrf.mxu0
      %v10425 = vadd.f32 %v10264, %v10424
      %v10426 = vpop.f32.mrf.mxu0
      %10427 = vmatprep.mubr.bf16.mxu0 %v9531
      %10428 = vmatmul.mubr.bf16.gmra.mxu0 %v9530
      %v10429 = vpop.f32.mrf.mxu0
      %v10430 = vadd.f32 %v10269, %v10429
      %v10431 = vpop.f32.mrf.mxu0
      %v10432 = vpop.f32.mrf.mxu0
      %v10433 = vadd.f32 %v10272, %v10432
      %v10434 = vpop.f32.mrf.mxu0
      %10435 = vmatprep.mubr.bf16.mxu0 %v9540
      %10436 = vmatmul.mubr.bf16.gmra.mxu0 %v9539
      %v10437 = vpop.f32.mrf.mxu0
      %v10438 = vadd.f32 %v10277, %v10437
      %v10439 = vpop.f32.mrf.mxu0
      %v10440 = vpop.f32.mrf.mxu0
      %v10441 = vadd.f32 %v10280, %v10440
      %v10442 = vpop.f32.mrf.mxu0
      %10443 = vdwg.mxu0
      %10444 = vmatprep.subr.bf16.mxu0 0
      %10445 = vmatpush1.bf16.msra.mxu0 %v10017
      %10446 = vmatprep.subr.bf16.mxu0 0
      %10447 = vmatpush1.bf16.msra.mxu0 %v10016
      %10448 = vmatprep.subr.bf16.mxu0 0
      %10449 = vmatpush1.bf16.msra.mxu0 %v10015
      %10450 = vmatprep.subr.bf16.mxu0 0
      %10451 = vmatpush1.bf16.msra.mxu0 %v10014
      %10452 = vmatprep.subr.bf16.mxu0 0
      %10453 = vmatpush1.bf16.msra.mxu0 %v10013
      %10454 = vmatprep.subr.bf16.mxu0 0
      %10455 = vmatpush1.bf16.msra.mxu0 %v10012
      %10456 = vmatprep.subr.bf16.mxu0 0
      %10457 = vmatpush1.bf16.msra.mxu0 %v10011
      %10458 = vmatprep.subr.bf16.mxu0 0
      %10459 = vmatpush1.bf16.msra.mxu0 %v10010
      %10460 = vmatprep.subr.bf16.mxu0 0
      %10461 = vmatpush2.bf16.msra.mxu0 %v10025
      %10462 = vmatprep.subr.bf16.mxu0 0
      %10463 = vmatpush2.bf16.msra.mxu0 %v10024
      %10464 = vmatprep.subr.bf16.mxu0 0
      %10465 = vmatpush2.bf16.msra.mxu0 %v10023
      %10466 = vmatprep.subr.bf16.mxu0 0
      %10467 = vmatpush2.bf16.msra.mxu0 %v10022
      %10468 = vmatprep.subr.bf16.mxu0 0
      %10469 = vmatpush2.bf16.msra.mxu0 %v10021
      %10470 = vmatprep.subr.bf16.mxu0 0
      %10471 = vmatpush2.bf16.msra.mxu0 %v10020
      %10472 = vmatprep.subr.bf16.mxu0 0
      %10473 = vmatpush2.bf16.msra.mxu0 %v10019
      %10474 = vmatprep.subr.bf16.mxu0 0
      %10475 = vmatpush2.bf16.msra.mxu0 %v10018
      %10476 = vmatprep.mubr.bf16.mxu0 %v9407
      %10477 = vmatmul.mubr.bf16.gmra.mxu0 %v9406
      %v10478 = vpop.f32.mrf.mxu0
      %v10479 = vadd.f32 %v10318, %v10478
      %v10480 = vpop.f32.mrf.mxu0
      %v10481 = vpop.f32.mrf.mxu0
      %v10482 = vadd.f32 %v10321, %v10481
      %v10483 = vpop.f32.mrf.mxu0
      %10484 = vmatprep.mubr.bf16.mxu0 %v9416
      %10485 = vmatmul.mubr.bf16.gmra.mxu0 %v9415
      %v10486 = vpop.f32.mrf.mxu0
      %v10487 = vadd.f32 %v10326, %v10486
      %v10488 = vpop.f32.mrf.mxu0
      %v10489 = vpop.f32.mrf.mxu0
      %v10490 = vadd.f32 %v10329, %v10489
      %v10491 = vpop.f32.mrf.mxu0
      %10492 = vmatprep.mubr.bf16.mxu0 %v9425
      %10493 = vmatmul.mubr.bf16.gmra.mxu0 %v9424
      %v10494 = vpop.f32.mrf.mxu0
      %v10495 = vadd.f32 %v10334, %v10494
      %v10496 = vpop.f32.mrf.mxu0
      %v10497 = vpop.f32.mrf.mxu0
      %v10498 = vadd.f32 %v10337, %v10497
      %v10499 = vpop.f32.mrf.mxu0
      %10500 = vmatprep.mubr.bf16.mxu0 %v9434
      %10501 = vmatmul.mubr.bf16.gmra.mxu0 %v9433
      %v10502 = vpop.f32.mrf.mxu0
      %v10503 = vadd.f32 %v10342, %v10502
      %v10504 = vpop.f32.mrf.mxu0
      %v10505 = vpop.f32.mrf.mxu0
      %v10506 = vadd.f32 %v10345, %v10505
      %v10507 = vpop.f32.mrf.mxu0
      %10508 = vmatprep.mubr.bf16.mxu0 %v9443
      %10509 = vmatmul.mubr.bf16.gmra.mxu0 %v9442
      %v10510 = vpop.f32.mrf.mxu0
      %v10511 = vadd.f32 %v10350, %v10510
      %v10512 = vpop.f32.mrf.mxu0
      %v10513 = vpop.f32.mrf.mxu0
      %v10514 = vadd.f32 %v10353, %v10513
      %v10515 = vpop.f32.mrf.mxu0
      %10516 = vmatprep.mubr.bf16.mxu0 %v9452
      %10517 = vmatmul.mubr.bf16.gmra.mxu0 %v9451
      %v10518 = vpop.f32.mrf.mxu0
      %v10519 = vadd.f32 %v10358, %v10518
      %v10520 = vpop.f32.mrf.mxu0
      %v10521 = vpop.f32.mrf.mxu0
      %v10522 = vadd.f32 %v10361, %v10521
      %v10523 = vpop.f32.mrf.mxu0
      %10524 = vmatprep.mubr.bf16.mxu0 %v9461
      %10525 = vmatmul.mubr.bf16.gmra.mxu0 %v9460
      %v10526 = vpop.f32.mrf.mxu0
      %v10527 = vadd.f32 %v10366, %v10526
      %v10528 = vpop.f32.mrf.mxu0
      %v10529 = vpop.f32.mrf.mxu0
      %v10530 = vadd.f32 %v10369, %v10529
      %v10531 = vpop.f32.mrf.mxu0
      %10532 = vmatprep.mubr.bf16.mxu0 %v9470
      %10533 = vmatmul.mubr.bf16.gmra.mxu0 %v9469
      %v10534 = vpop.f32.mrf.mxu0
      %v10535 = vadd.f32 %v10374, %v10534
      %v10536 = vpop.f32.mrf.mxu0
      %v10537 = vpop.f32.mrf.mxu0
      %v10538 = vadd.f32 %v10377, %v10537
      %v10539 = vpop.f32.mrf.mxu0
      %10540 = vmatprep.mubr.bf16.mxu0 %v9479
      %10541 = vmatmul.mubr.bf16.gmra.mxu0 %v9478
      %v10542 = vpop.f32.mrf.mxu0
      %v10543 = vadd.f32 %v10382, %v10542
      %v10544 = vpop.f32.mrf.mxu0
      %v10545 = vpop.f32.mrf.mxu0
      %v10546 = vadd.f32 %v10385, %v10545
      %v10547 = vpop.f32.mrf.mxu0
      %10548 = vmatprep.mubr.bf16.mxu0 %v9488
      %10549 = vmatmul.mubr.bf16.gmra.mxu0 %v9487
      %v10550 = vpop.f32.mrf.mxu0
      %v10551 = vadd.f32 %v10390, %v10550
      %v10552 = vpop.f32.mrf.mxu0
      %v10553 = vpop.f32.mrf.mxu0
      %v10554 = vadd.f32 %v10393, %v10553
      %v10555 = vpop.f32.mrf.mxu0
      %10556 = vmatprep.mubr.bf16.mxu0 %v9497
      %10557 = vmatmul.mubr.bf16.gmra.mxu0 %v9496
      %v10558 = vpop.f32.mrf.mxu0
      %v10559 = vadd.f32 %v10398, %v10558
      %v10560 = vpop.f32.mrf.mxu0
      %v10561 = vpop.f32.mrf.mxu0
      %v10562 = vadd.f32 %v10401, %v10561
      %v10563 = vpop.f32.mrf.mxu0
      %10564 = vmatprep.mubr.bf16.mxu0 %v9506
      %10565 = vmatmul.mubr.bf16.gmra.mxu0 %v9505
      %v10566 = vpop.f32.mrf.mxu0
      %v10567 = vadd.f32 %v10406, %v10566
      %v10568 = vpop.f32.mrf.mxu0
      %v10569 = vpop.f32.mrf.mxu0
      %v10570 = vadd.f32 %v10409, %v10569
      %v10571 = vpop.f32.mrf.mxu0
      %10572 = vmatprep.mubr.bf16.mxu0 %v9515
      %10573 = vmatmul.mubr.bf16.gmra.mxu0 %v9514
      %v10574 = vpop.f32.mrf.mxu0
      %v10575 = vadd.f32 %v10414, %v10574
      %v10576 = vpop.f32.mrf.mxu0
      %v10577 = vpop.f32.mrf.mxu0
      %v10578 = vadd.f32 %v10417, %v10577
      %v10579 = vpop.f32.mrf.mxu0
      %10580 = vmatprep.mubr.bf16.mxu0 %v9524
      %10581 = vmatmul.mubr.bf16.gmra.mxu0 %v9523
      %v10582 = vpop.f32.mrf.mxu0
      %v10583 = vadd.f32 %v10422, %v10582
      %v10584 = vpop.f32.mrf.mxu0
      %v10585 = vpop.f32.mrf.mxu0
      %v10586 = vadd.f32 %v10425, %v10585
      %v10587 = vpop.f32.mrf.mxu0
      %10588 = vmatprep.mubr.bf16.mxu0 %v9533
      %10589 = vmatmul.mubr.bf16.gmra.mxu0 %v9532
      %v10590 = vpop.f32.mrf.mxu0
      %v10591 = vadd.f32 %v10430, %v10590
      %v10592 = vpop.f32.mrf.mxu0
      %v10593 = vpop.f32.mrf.mxu0
      %v10594 = vadd.f32 %v10433, %v10593
      %v10595 = vpop.f32.mrf.mxu0
      %10596 = vmatprep.mubr.bf16.mxu0 %v9542
      %10597 = vmatmul.mubr.bf16.gmra.mxu0 %v9541
      %v10598 = vpop.f32.mrf.mxu0
      %v10599 = vadd.f32 %v10438, %v10598
      %v10600 = vpop.f32.mrf.mxu0
      %v10601 = vpop.f32.mrf.mxu0
      %v10602 = vadd.f32 %v10441, %v10601
      %v10603 = vpop.f32.mrf.mxu0
      %10604 = vdwg.mxu0
      %10605 = vmatprep.subr.bf16.mxu0 0
      %10606 = vmatpush1.bf16.msra.mxu0 %v10033
      %10607 = vmatprep.subr.bf16.mxu0 0
      %10608 = vmatpush1.bf16.msra.mxu0 %v10032
      %10609 = vmatprep.subr.bf16.mxu0 0
      %10610 = vmatpush1.bf16.msra.mxu0 %v10031
      %10611 = vmatprep.subr.bf16.mxu0 0
      %10612 = vmatpush1.bf16.msra.mxu0 %v10030
      %10613 = vmatprep.subr.bf16.mxu0 0
      %10614 = vmatpush1.bf16.msra.mxu0 %v10029
      %10615 = vmatprep.subr.bf16.mxu0 0
      %10616 = vmatpush1.bf16.msra.mxu0 %v10028
      %10617 = vmatprep.subr.bf16.mxu0 0
      %10618 = vmatpush1.bf16.msra.mxu0 %v10027
      %10619 = vmatprep.subr.bf16.mxu0 0
      %10620 = vmatpush1.bf16.msra.mxu0 %v10026
      %10621 = vmatprep.subr.bf16.mxu0 0
      %10622 = vmatpush2.bf16.msra.mxu0 %v10041
      %10623 = vmatprep.subr.bf16.mxu0 0
      %10624 = vmatpush2.bf16.msra.mxu0 %v10040
      %10625 = vmatprep.subr.bf16.mxu0 0
      %10626 = vmatpush2.bf16.msra.mxu0 %v10039
      %10627 = vmatprep.subr.bf16.mxu0 0
      %10628 = vmatpush2.bf16.msra.mxu0 %v10038
      %10629 = vmatprep.subr.bf16.mxu0 0
      %10630 = vmatpush2.bf16.msra.mxu0 %v10037
      %10631 = vmatprep.subr.bf16.mxu0 0
      %10632 = vmatpush2.bf16.msra.mxu0 %v10036
      %10633 = vmatprep.subr.bf16.mxu0 0
      %10634 = vmatpush2.bf16.msra.mxu0 %v10035
      %10635 = vmatprep.subr.bf16.mxu0 0
      %10636 = vmatpush2.bf16.msra.mxu0 %v10034
      %10637 = vmatprep.mubr.bf16.mxu0 %v9409
      %10638 = vmatmul.mubr.bf16.gmra.mxu0 %v9408
      %v10639 = vpop.f32.mrf.mxu0
      %v10640 = vadd.f32 %v10479, %v10639
      %v10641 = vpop.f32.mrf.mxu0
      %v10642 = vpop.f32.mrf.mxu0
      %v10643 = vadd.f32 %v10482, %v10642
      %v10644 = vpop.f32.mrf.mxu0
      %10645 = vmatprep.mubr.bf16.mxu0 %v9418
      %10646 = vmatmul.mubr.bf16.gmra.mxu0 %v9417
      %v10647 = vpop.f32.mrf.mxu0
      %v10648 = vadd.f32 %v10487, %v10647
      %v10649 = vpop.f32.mrf.mxu0
      %v10650 = vpop.f32.mrf.mxu0
      %v10651 = vadd.f32 %v10490, %v10650
      %v10652 = vpop.f32.mrf.mxu0
      %10653 = vmatprep.mubr.bf16.mxu0 %v9427
      %10654 = vmatmul.mubr.bf16.gmra.mxu0 %v9426
      %v10655 = vpop.f32.mrf.mxu0
      %v10656 = vadd.f32 %v10495, %v10655
      %v10657 = vpop.f32.mrf.mxu0
      %v10658 = vpop.f32.mrf.mxu0
      %v10659 = vadd.f32 %v10498, %v10658
      %v10660 = vpop.f32.mrf.mxu0
      %10661 = vmatprep.mubr.bf16.mxu0 %v9436
      %10662 = vmatmul.mubr.bf16.gmra.mxu0 %v9435
      %v10663 = vpop.f32.mrf.mxu0
      %v10664 = vadd.f32 %v10503, %v10663
      %v10665 = vpop.f32.mrf.mxu0
      %v10666 = vpop.f32.mrf.mxu0
      %v10667 = vadd.f32 %v10506, %v10666
      %v10668 = vpop.f32.mrf.mxu0
      %10669 = vmatprep.mubr.bf16.mxu0 %v9445
      %10670 = vmatmul.mubr.bf16.gmra.mxu0 %v9444
      %v10671 = vpop.f32.mrf.mxu0
      %v10672 = vadd.f32 %v10511, %v10671
      %v10673 = vpop.f32.mrf.mxu0
      %v10674 = vpop.f32.mrf.mxu0
      %v10675 = vadd.f32 %v10514, %v10674
      %v10676 = vpop.f32.mrf.mxu0
      %10677 = vmatprep.mubr.bf16.mxu0 %v9454
      %10678 = vmatmul.mubr.bf16.gmra.mxu0 %v9453
      %v10679 = vpop.f32.mrf.mxu0
      %v10680 = vadd.f32 %v10519, %v10679
      %v10681 = vpop.f32.mrf.mxu0
      %v10682 = vpop.f32.mrf.mxu0
      %v10683 = vadd.f32 %v10522, %v10682
      %v10684 = vpop.f32.mrf.mxu0
      %10685 = vmatprep.mubr.bf16.mxu0 %v9463
      %10686 = vmatmul.mubr.bf16.gmra.mxu0 %v9462
      %v10687 = vpop.f32.mrf.mxu0
      %v10688 = vadd.f32 %v10527, %v10687
      %v10689 = vpop.f32.mrf.mxu0
      %v10690 = vpop.f32.mrf.mxu0
      %v10691 = vadd.f32 %v10530, %v10690
      %v10692 = vpop.f32.mrf.mxu0
      %10693 = vmatprep.mubr.bf16.mxu0 %v9472
      %10694 = vmatmul.mubr.bf16.gmra.mxu0 %v9471
      %v10695 = vpop.f32.mrf.mxu0
      %v10696 = vadd.f32 %v10535, %v10695
      %v10697 = vpop.f32.mrf.mxu0
      %v10698 = vpop.f32.mrf.mxu0
      %v10699 = vadd.f32 %v10538, %v10698
      %v10700 = vpop.f32.mrf.mxu0
      %10701 = vmatprep.mubr.bf16.mxu0 %v9481
      %10702 = vmatmul.mubr.bf16.gmra.mxu0 %v9480
      %v10703 = vpop.f32.mrf.mxu0
      %v10704 = vadd.f32 %v10543, %v10703
      %v10705 = vpop.f32.mrf.mxu0
      %v10706 = vpop.f32.mrf.mxu0
      %v10707 = vadd.f32 %v10546, %v10706
      %v10708 = vpop.f32.mrf.mxu0
      %10709 = vmatprep.mubr.bf16.mxu0 %v9490
      %10710 = vmatmul.mubr.bf16.gmra.mxu0 %v9489
      %v10711 = vpop.f32.mrf.mxu0
      %v10712 = vadd.f32 %v10551, %v10711
      %v10713 = vpop.f32.mrf.mxu0
      %v10714 = vpop.f32.mrf.mxu0
      %v10715 = vadd.f32 %v10554, %v10714
      %v10716 = vpop.f32.mrf.mxu0
      %10717 = vmatprep.mubr.bf16.mxu0 %v9499
      %10718 = vmatmul.mubr.bf16.gmra.mxu0 %v9498
      %v10719 = vpop.f32.mrf.mxu0
      %v10720 = vadd.f32 %v10559, %v10719
      %v10721 = vpop.f32.mrf.mxu0
      %v10722 = vpop.f32.mrf.mxu0
      %v10723 = vadd.f32 %v10562, %v10722
      %v10724 = vpop.f32.mrf.mxu0
      %10725 = vmatprep.mubr.bf16.mxu0 %v9508
      %10726 = vmatmul.mubr.bf16.gmra.mxu0 %v9507
      %v10727 = vpop.f32.mrf.mxu0
      %v10728 = vadd.f32 %v10567, %v10727
      %v10729 = vpop.f32.mrf.mxu0
      %v10730 = vpop.f32.mrf.mxu0
      %v10731 = vadd.f32 %v10570, %v10730
      %v10732 = vpop.f32.mrf.mxu0
      %10733 = vmatprep.mubr.bf16.mxu0 %v9517
      %10734 = vmatmul.mubr.bf16.gmra.mxu0 %v9516
      %v10735 = vpop.f32.mrf.mxu0
      %v10736 = vadd.f32 %v10575, %v10735
      %v10737 = vpop.f32.mrf.mxu0
      %v10738 = vpop.f32.mrf.mxu0
      %v10739 = vadd.f32 %v10578, %v10738
      %v10740 = vpop.f32.mrf.mxu0
      %10741 = vmatprep.mubr.bf16.mxu0 %v9526
      %10742 = vmatmul.mubr.bf16.gmra.mxu0 %v9525
      %v10743 = vpop.f32.mrf.mxu0
      %v10744 = vadd.f32 %v10583, %v10743
      %v10745 = vpop.f32.mrf.mxu0
      %v10746 = vpop.f32.mrf.mxu0
      %v10747 = vadd.f32 %v10586, %v10746
      %v10748 = vpop.f32.mrf.mxu0
      %10749 = vmatprep.mubr.bf16.mxu0 %v9535
      %10750 = vmatmul.mubr.bf16.gmra.mxu0 %v9534
      %v10751 = vpop.f32.mrf.mxu0
      %v10752 = vadd.f32 %v10591, %v10751
      %v10753 = vpop.f32.mrf.mxu0
      %v10754 = vpop.f32.mrf.mxu0
      %v10755 = vadd.f32 %v10594, %v10754
      %v10756 = vpop.f32.mrf.mxu0
      %10757 = vmatprep.mubr.bf16.mxu0 %v9544
      %10758 = vmatmul.mubr.bf16.gmra.mxu0 %v9543
      %v10759 = vpop.f32.mrf.mxu0
      %v10760 = vadd.f32 %v10599, %v10759
      %v10761 = vpop.f32.mrf.mxu0
      %v10762 = vpop.f32.mrf.mxu0
      %v10763 = vadd.f32 %v10602, %v10762
      %v10764 = vpop.f32.mrf.mxu0
      %10765 = vdwg.mxu0
      %10766 = vmatprep.subr.bf16.mxu0 0
      %10767 = vmatpush1.bf16.msra.mxu0 %v10049
      %10768 = vmatprep.subr.bf16.mxu0 0
      %10769 = vmatpush1.bf16.msra.mxu0 %v10048
      %10770 = vmatprep.subr.bf16.mxu0 0
      %10771 = vmatpush1.bf16.msra.mxu0 %v10047
      %10772 = vmatprep.subr.bf16.mxu0 0
      %10773 = vmatpush1.bf16.msra.mxu0 %v10046
      %10774 = vmatprep.subr.bf16.mxu0 0
      %10775 = vmatpush1.bf16.msra.mxu0 %v10045
      %10776 = vmatprep.subr.bf16.mxu0 0
      %10777 = vmatpush1.bf16.msra.mxu0 %v10044
      %10778 = vmatprep.subr.bf16.mxu0 0
      %10779 = vmatpush1.bf16.msra.mxu0 %v10043
      %10780 = vmatprep.subr.bf16.mxu0 0
      %10781 = vmatpush1.bf16.msra.mxu0 %v10042
      %10782 = vmatprep.subr.bf16.mxu0 0
      %10783 = vmatpush2.bf16.msra.mxu0 0
      %10784 = vmatprep.subr.bf16.mxu0 0
      %10785 = vmatpush2.bf16.msra.mxu0 0
      %10786 = vmatprep.subr.bf16.mxu0 0
      %10787 = vmatpush2.bf16.msra.mxu0 0
      %10788 = vmatprep.subr.bf16.mxu0 0
      %10789 = vmatpush2.bf16.msra.mxu0 0
      %10790 = vmatprep.subr.bf16.mxu0 0
      %10791 = vmatpush2.bf16.msra.mxu0 0
      %10792 = vmatprep.subr.bf16.mxu0 0
      %10793 = vmatpush2.bf16.msra.mxu0 0
      %10794 = vmatprep.subr.bf16.mxu0 0
      %10795 = vmatpush2.bf16.msra.mxu0 0
      %10796 = vmatprep.subr.bf16.mxu0 0
      %10797 = vmatpush2.bf16.msra.mxu0 0
      %10798 = vmatprep.mubr.bf16.mxu0 0
      %10799 = vmatmul.mubr.bf16.gmra.mxu0 %v9410
      %v10800 = vpop.f32.mrf.mxu0
      %v10801 = vadd.f32 %v10640, %v10800
      %v10802 = vpop.f32.mrf.mxu0
      %v10803 = vpop.f32.mrf.mxu0
      %v10804 = vadd.f32 %v10643, %v10803
      %v10805 = vpop.f32.mrf.mxu0
      %10806 = vmatprep.mubr.bf16.mxu0 0
      %10807 = vmatmul.mubr.bf16.gmra.mxu0 %v9419
      %v10808 = vpop.f32.mrf.mxu0
      %v10809 = vadd.f32 %v10648, %v10808
      %v10810 = vpop.f32.mrf.mxu0
      %v10811 = vpop.f32.mrf.mxu0
      %v10812 = vadd.f32 %v10651, %v10811
      %v10813 = vpop.f32.mrf.mxu0
      %10814 = vmatprep.mubr.bf16.mxu0 0
      %10815 = vmatmul.mubr.bf16.gmra.mxu0 %v9428
      %v10816 = vpop.f32.mrf.mxu0
      %v10817 = vadd.f32 %v10656, %v10816
      %v10818 = vpop.f32.mrf.mxu0
      %v10819 = vpop.f32.mrf.mxu0
      %v10820 = vadd.f32 %v10659, %v10819
      %v10821 = vpop.f32.mrf.mxu0
      %10822 = vmatprep.mubr.bf16.mxu0 0
      %10823 = vmatmul.mubr.bf16.gmra.mxu0 %v9437
      %v10824 = vpop.f32.mrf.mxu0
      %v10825 = vadd.f32 %v10664, %v10824
      %v10826 = vpop.f32.mrf.mxu0
      %v10827 = vpop.f32.mrf.mxu0
      %v10828 = vadd.f32 %v10667, %v10827
      %v10829 = vpop.f32.mrf.mxu0
      %10830 = vmatprep.mubr.bf16.mxu0 0
      %10831 = vmatmul.mubr.bf16.gmra.mxu0 %v9446
      %v10832 = vpop.f32.mrf.mxu0
      %v10833 = vadd.f32 %v10672, %v10832
      %v10834 = vpop.f32.mrf.mxu0
      %v10835 = vpop.f32.mrf.mxu0
      %v10836 = vadd.f32 %v10675, %v10835
      %v10837 = vpop.f32.mrf.mxu0
      %10838 = vmatprep.mubr.bf16.mxu0 0
      %10839 = vmatmul.mubr.bf16.gmra.mxu0 %v9455
      %v10840 = vpop.f32.mrf.mxu0
      %v10841 = vadd.f32 %v10680, %v10840
      %v10842 = vpop.f32.mrf.mxu0
      %v10843 = vpop.f32.mrf.mxu0
      %v10844 = vadd.f32 %v10683, %v10843
      %v10845 = vpop.f32.mrf.mxu0
      %10846 = vmatprep.mubr.bf16.mxu0 0
      %10847 = vmatmul.mubr.bf16.gmra.mxu0 %v9464
      %v10848 = vpop.f32.mrf.mxu0
      %v10849 = vadd.f32 %v10688, %v10848
      %v10850 = vpop.f32.mrf.mxu0
      %v10851 = vpop.f32.mrf.mxu0
      %v10852 = vadd.f32 %v10691, %v10851
      %v10853 = vpop.f32.mrf.mxu0
      %10854 = vmatprep.mubr.bf16.mxu0 0
      %10855 = vmatmul.mubr.bf16.gmra.mxu0 %v9473
      %v10856 = vpop.f32.mrf.mxu0
      %v10857 = vadd.f32 %v10696, %v10856
      %v10858 = vpop.f32.mrf.mxu0
      %v10859 = vpop.f32.mrf.mxu0
      %v10860 = vadd.f32 %v10699, %v10859
      %v10861 = vpop.f32.mrf.mxu0
      %10862 = vmatprep.mubr.bf16.mxu0 0
      %10863 = vmatmul.mubr.bf16.gmra.mxu0 %v9482
      %v10864 = vpop.f32.mrf.mxu0
      %v10865 = vadd.f32 %v10704, %v10864
      %v10866 = vpop.f32.mrf.mxu0
      %v10867 = vpop.f32.mrf.mxu0
      %v10868 = vadd.f32 %v10707, %v10867
      %v10869 = vpop.f32.mrf.mxu0
      %10870 = vmatprep.mubr.bf16.mxu0 0
      %10871 = vmatmul.mubr.bf16.gmra.mxu0 %v9491
      %v10872 = vpop.f32.mrf.mxu0
      %v10873 = vadd.f32 %v10712, %v10872
      %v10874 = vpop.f32.mrf.mxu0
      %v10875 = vpop.f32.mrf.mxu0
      %v10876 = vadd.f32 %v10715, %v10875
      %v10877 = vpop.f32.mrf.mxu0
      %10878 = vmatprep.mubr.bf16.mxu0 0
      %10879 = vmatmul.mubr.bf16.gmra.mxu0 %v9500
      %v10880 = vpop.f32.mrf.mxu0
      %v10881 = vadd.f32 %v10720, %v10880
      %v10882 = vpop.f32.mrf.mxu0
      %v10883 = vpop.f32.mrf.mxu0
      %v10884 = vadd.f32 %v10723, %v10883
      %v10885 = vpop.f32.mrf.mxu0
      %10886 = vmatprep.mubr.bf16.mxu0 0
      %10887 = vmatmul.mubr.bf16.gmra.mxu0 %v9509
      %v10888 = vpop.f32.mrf.mxu0
      %v10889 = vadd.f32 %v10728, %v10888
      %v10890 = vpop.f32.mrf.mxu0
      %v10891 = vpop.f32.mrf.mxu0
      %v10892 = vadd.f32 %v10731, %v10891
      %v10893 = vpop.f32.mrf.mxu0
      %10894 = vmatprep.mubr.bf16.mxu0 0
      %10895 = vmatmul.mubr.bf16.gmra.mxu0 %v9518
      %v10896 = vpop.f32.mrf.mxu0
      %v10897 = vadd.f32 %v10736, %v10896
      %v10898 = vpop.f32.mrf.mxu0
      %v10899 = vpop.f32.mrf.mxu0
      %v10900 = vadd.f32 %v10739, %v10899
      %v10901 = vpop.f32.mrf.mxu0
      %10902 = vmatprep.mubr.bf16.mxu0 0
      %10903 = vmatmul.mubr.bf16.gmra.mxu0 %v9527
      %v10904 = vpop.f32.mrf.mxu0
      %v10905 = vadd.f32 %v10744, %v10904
      %v10906 = vpop.f32.mrf.mxu0
      %v10907 = vpop.f32.mrf.mxu0
      %v10908 = vadd.f32 %v10747, %v10907
      %v10909 = vpop.f32.mrf.mxu0
      %10910 = vmatprep.mubr.bf16.mxu0 0
      %10911 = vmatmul.mubr.bf16.gmra.mxu0 %v9536
      %v10912 = vpop.f32.mrf.mxu0
      %v10913 = vadd.f32 %v10752, %v10912
      %v10914 = vpop.f32.mrf.mxu0
      %v10915 = vpop.f32.mrf.mxu0
      %v10916 = vadd.f32 %v10755, %v10915
      %v10917 = vpop.f32.mrf.mxu0
      %10918 = vmatprep.mubr.bf16.mxu0 0
      %10919 = vmatmul.mubr.bf16.gmra.mxu0 %v9545
      %v10920 = vpop.f32.mrf.mxu0
      %v10921 = vadd.f32 %v10760, %v10920
      %v10922 = vpop.f32.mrf.mxu0
      %v10923 = vpop.f32.mrf.mxu0
      %v10924 = vadd.f32 %v10763, %v10923
      %v10925 = vpop.f32.mrf.mxu0
      %10926 = vdwg.mxu0
      %v10927 = vmax.f32 %v10801, 0.0
      %v10928 = vmax.f32 %v10804, 0.0
      %v10929 = vmax.f32 %v10809, 0.0
      %v10930 = vmax.f32 %v10812, 0.0
      %v10931 = vmax.f32 %v10817, 0.0
      %v10932 = vmax.f32 %v10820, 0.0
      %v10933 = vmax.f32 %v10825, 0.0
      %v10934 = vmax.f32 %v10828, 0.0
      %v10935 = vmax.f32 %v10833, 0.0
      %v10936 = vmax.f32 %v10836, 0.0
      %v10937 = vmax.f32 %v10841, 0.0
      %v10938 = vmax.f32 %v10844, 0.0
      %v10939 = vmax.f32 %v10849, 0.0
      %v10940 = vmax.f32 %v10852, 0.0
      %v10941 = vmax.f32 %v10857, 0.0
      %v10942 = vmax.f32 %v10860, 0.0
      %v10943 = vmax.f32 %v10865, 0.0
      %v10944 = vmax.f32 %v10868, 0.0
      %v10945 = vmax.f32 %v10873, 0.0
      %v10946 = vmax.f32 %v10876, 0.0
      %v10947 = vmax.f32 %v10881, 0.0
      %v10948 = vmax.f32 %v10884, 0.0
      %v10949 = vmax.f32 %v10889, 0.0
      %v10950 = vmax.f32 %v10892, 0.0
      %v10951 = vmax.f32 %v10897, 0.0
      %v10952 = vmax.f32 %v10900, 0.0
      %v10953 = vmax.f32 %v10905, 0.0
      %v10954 = vmax.f32 %v10908, 0.0
      %v10955 = vmax.f32 %v10913, 0.0
      %v10956 = vmax.f32 %v10916, 0.0
      %v10957 = vmax.f32 %v10921, 0.0
      %v10958 = vmax.f32 %v10924, 0.0
      %v10959 = vpack.c.bf16 %v10928, %v10927
      %v10960 = vpack.c.bf16 %v10930, %v10929
      %v10961 = vpack.c.bf16 %v10932, %v10931
      %v10962 = vpack.c.bf16 %v10934, %v10933
      %v10963 = vpack.c.bf16 %v10936, %v10935
      %v10964 = vpack.c.bf16 %v10938, %v10937
      %v10965 = vpack.c.bf16 %v10940, %v10939
      %v10966 = vpack.c.bf16 %v10942, %v10941
      %v10967 = vpack.c.bf16 %v10944, %v10943
      %v10968 = vpack.c.bf16 %v10946, %v10945
      %v10969 = vpack.c.bf16 %v10948, %v10947
      %v10970 = vpack.c.bf16 %v10950, %v10949
      %v10971 = vpack.c.bf16 %v10952, %v10951
      %v10972 = vpack.c.bf16 %v10954, %v10953
      %v10973 = vpack.c.bf16 %v10956, %v10955
      %v10974 = vpack.c.bf16 %v10958, %v10957
      %v10975 = vld [vmem:[%s7] sm:$0xf]
      %v10976 = vld [vmem:[%s7 + $0x4] sm:$0xf]
      %v10977 = vld [vmem:[%s7 + $0x8] sm:$0xf]
      %v10978 = vld [vmem:[%s7 + $0xc] sm:$0xf]
      %v10979 = vld [vmem:[%s7 + $0x10] sm:$0xf]
      %v10980 = vld [vmem:[%s7 + $0x14] sm:$0xf]
      %v10981 = vld [vmem:[%s7 + $0x18] sm:$0xf]
      %v10982 = vld [vmem:[%s7 + $0x1c] sm:$0xf]
      %v10983 = vld [vmem:[%s7 + $0x20] sm:$0xf]
      %v10984 = vld [vmem:[%s7 + $0x24] sm:$0xf]
      %v10985 = vld [vmem:[%s7 + $0x28] sm:$0xf]
      %v10986 = vld [vmem:[%s7 + $0x2c] sm:$0xf]
      %v10987 = vld [vmem:[%s7 + $0x30] sm:$0xf]
      %v10988 = vld [vmem:[%s7 + $0x34] sm:$0xf]
      %v10989 = vld [vmem:[%s7 + $0x38] sm:$0xf]
      %v10990 = vld [vmem:[%s7 + $0x3c] sm:$0xf]
      %v10991 = vld [vmem:[%s8] sm:$0x1]
      %v10993 = vlaneseq
      %v10994 = vshrl.u32 %v10993, 7
      %v10995 = vsub.s32 0, %v10994
      %v10996 = vrot.slane %v10991, %v10995
      %v11014 = vunpack.c.l.b16 %v10975
      %v11015 = vunpack.c.l.b16 %v10976
      %v11016 = vunpack.c.l.b16 %v10977
      %v11017 = vunpack.c.l.b16 %v10978
      %v11018 = vunpack.c.l.b16 %v10979
      %v11019 = vunpack.c.l.b16 %v10980
      %v11020 = vunpack.c.l.b16 %v10981
      %v11021 = vunpack.c.l.b16 %v10982
      %v11022 = vunpack.c.l.b16 %v10983
      %v11023 = vunpack.c.l.b16 %v10984
      %v11024 = vunpack.c.l.b16 %v10985
      %v11025 = vunpack.c.l.b16 %v10986
      %v11026 = vunpack.c.l.b16 %v10987
      %v11027 = vunpack.c.l.b16 %v10988
      %v11028 = vunpack.c.l.b16 %v10989
      %v11029 = vunpack.c.l.b16 %v10990
      %v11030 = vpack.c.b16 %v11015, %v11014
      %v11031 = vpack.c.b16 %v11017, %v11016
      %v11032 = vpack.c.b16 %v11019, %v11018
      %v11033 = vpack.c.b16 %v11021, %v11020
      %v11034 = vpack.c.b16 %v11023, %v11022
      %v11035 = vpack.c.b16 %v11025, %v11024
      %v11036 = vpack.c.b16 %v11027, %v11026
      %v11037 = vpack.c.b16 %v11029, %v11028
      %11046 = vmatprep.subr.bf16.mxu0 0
      %11047 = vmatpush1.bf16.msra.mxu0 %v11037
      %11048 = vmatprep.subr.bf16.mxu0 0
      %11049 = vmatpush1.bf16.msra.mxu0 %v11036
      %11050 = vmatprep.subr.bf16.mxu0 0
      %11051 = vmatpush1.bf16.msra.mxu0 %v11035
      %11052 = vmatprep.subr.bf16.mxu0 0
      %11053 = vmatpush1.bf16.msra.mxu0 %v11034
      %11054 = vmatprep.subr.bf16.mxu0 0
      %11055 = vmatpush1.bf16.msra.mxu0 %v11033
      %11056 = vmatprep.subr.bf16.mxu0 0
      %11057 = vmatpush1.bf16.msra.mxu0 %v11032
      %11058 = vmatprep.subr.bf16.mxu0 0
      %11059 = vmatpush1.bf16.msra.mxu0 %v11031
      %11060 = vmatprep.subr.bf16.mxu0 0
      %11061 = vmatpush1.bf16.msra.mxu0 %v11030
      %11062 = vmatprep.subr.bf16.mxu0 0
      %11063 = vmatpush2.bf16.msra.mxu0 0
      %11064 = vmatprep.subr.bf16.mxu0 0
      %11065 = vmatpush2.bf16.msra.mxu0 0
      %11066 = vmatprep.subr.bf16.mxu0 0
      %11067 = vmatpush2.bf16.msra.mxu0 0
      %11068 = vmatprep.subr.bf16.mxu0 0
      %11069 = vmatpush2.bf16.msra.mxu0 0
      %11070 = vmatprep.subr.bf16.mxu0 0
      %11071 = vmatpush2.bf16.msra.mxu0 0
      %11072 = vmatprep.subr.bf16.mxu0 0
      %11073 = vmatpush2.bf16.msra.mxu0 0
      %11074 = vmatprep.subr.bf16.mxu0 0
      %11075 = vmatpush2.bf16.msra.mxu0 0
      %11076 = vmatprep.subr.bf16.mxu0 0
      %11077 = vmatpush2.bf16.msra.mxu0 0
      %11078 = vmatprep.mubr.bf16.mxu0 0
      %11079 = vmatmul.mubr.bf16.gmra.mxu0 %v10959
      %v11080 = vpop.f32.mrf.mxu0
      %v11081 = vadd.f32 %v10996, %v11080
      %v11082 = vpop.f32.mrf.mxu0
      %v11083 = vpop.f32.mrf.mxu0
      %v11084 = vadd.f32 %v10996, %v11083
      %v11085 = vpop.f32.mrf.mxu0
      %11086 = vmatprep.mubr.bf16.mxu0 0
      %11087 = vmatmul.mubr.bf16.gmra.mxu0 %v10960
      %v11088 = vpop.f32.mrf.mxu0
      %v11089 = vadd.f32 %v10996, %v11088
      %v11090 = vpop.f32.mrf.mxu0
      %v11091 = vpop.f32.mrf.mxu0
      %v11092 = vadd.f32 %v10996, %v11091
      %v11093 = vpop.f32.mrf.mxu0
      %11094 = vmatprep.mubr.bf16.mxu0 0
      %11095 = vmatmul.mubr.bf16.gmra.mxu0 %v10961
      %v11096 = vpop.f32.mrf.mxu0
      %v11097 = vadd.f32 %v10996, %v11096
      %v11098 = vpop.f32.mrf.mxu0
      %v11099 = vpop.f32.mrf.mxu0
      %v11100 = vadd.f32 %v10996, %v11099
      %v11101 = vpop.f32.mrf.mxu0
      %11102 = vmatprep.mubr.bf16.mxu0 0
      %11103 = vmatmul.mubr.bf16.gmra.mxu0 %v10962
      %v11104 = vpop.f32.mrf.mxu0
      %v11105 = vadd.f32 %v10996, %v11104
      %v11106 = vpop.f32.mrf.mxu0
      %v11107 = vpop.f32.mrf.mxu0
      %v11108 = vadd.f32 %v10996, %v11107
      %v11109 = vpop.f32.mrf.mxu0
      %11110 = vmatprep.mubr.bf16.mxu0 0
      %11111 = vmatmul.mubr.bf16.gmra.mxu0 %v10963
      %v11112 = vpop.f32.mrf.mxu0
      %v11113 = vadd.f32 %v10996, %v11112
      %v11114 = vpop.f32.mrf.mxu0
      %v11115 = vpop.f32.mrf.mxu0
      %v11116 = vadd.f32 %v10996, %v11115
      %v11117 = vpop.f32.mrf.mxu0
      %11118 = vmatprep.mubr.bf16.mxu0 0
      %11119 = vmatmul.mubr.bf16.gmra.mxu0 %v10964
      %v11120 = vpop.f32.mrf.mxu0
      %v11121 = vadd.f32 %v10996, %v11120
      %v11122 = vpop.f32.mrf.mxu0
      %v11123 = vpop.f32.mrf.mxu0
      %v11124 = vadd.f32 %v10996, %v11123
      %v11125 = vpop.f32.mrf.mxu0
      %11126 = vmatprep.mubr.bf16.mxu0 0
      %11127 = vmatmul.mubr.bf16.gmra.mxu0 %v10965
      %v11128 = vpop.f32.mrf.mxu0
      %v11129 = vadd.f32 %v10996, %v11128
      %v11130 = vpop.f32.mrf.mxu0
      %v11131 = vpop.f32.mrf.mxu0
      %v11132 = vadd.f32 %v10996, %v11131
      %v11133 = vpop.f32.mrf.mxu0
      %11134 = vmatprep.mubr.bf16.mxu0 0
      %11135 = vmatmul.mubr.bf16.gmra.mxu0 %v10966
      %v11136 = vpop.f32.mrf.mxu0
      %v11137 = vadd.f32 %v10996, %v11136
      %v11138 = vpop.f32.mrf.mxu0
      %v11139 = vpop.f32.mrf.mxu0
      %v11140 = vadd.f32 %v10996, %v11139
      %v11141 = vpop.f32.mrf.mxu0
      %11142 = vmatprep.mubr.bf16.mxu0 0
      %11143 = vmatmul.mubr.bf16.gmra.mxu0 %v10967
      %v11144 = vpop.f32.mrf.mxu0
      %v11145 = vadd.f32 %v10996, %v11144
      %v11146 = vpop.f32.mrf.mxu0
      %v11147 = vpop.f32.mrf.mxu0
      %v11148 = vadd.f32 %v10996, %v11147
      %v11149 = vpop.f32.mrf.mxu0
      %11150 = vmatprep.mubr.bf16.mxu0 0
      %11151 = vmatmul.mubr.bf16.gmra.mxu0 %v10968
      %v11152 = vpop.f32.mrf.mxu0
      %v11153 = vadd.f32 %v10996, %v11152
      %v11154 = vpop.f32.mrf.mxu0
      %v11155 = vpop.f32.mrf.mxu0
      %v11156 = vadd.f32 %v10996, %v11155
      %v11157 = vpop.f32.mrf.mxu0
      %11158 = vmatprep.mubr.bf16.mxu0 0
      %11159 = vmatmul.mubr.bf16.gmra.mxu0 %v10969
      %v11160 = vpop.f32.mrf.mxu0
      %v11161 = vadd.f32 %v10996, %v11160
      %v11162 = vpop.f32.mrf.mxu0
      %v11163 = vpop.f32.mrf.mxu0
      %v11164 = vadd.f32 %v10996, %v11163
      %v11165 = vpop.f32.mrf.mxu0
      %11166 = vmatprep.mubr.bf16.mxu0 0
      %11167 = vmatmul.mubr.bf16.gmra.mxu0 %v10970
      %v11168 = vpop.f32.mrf.mxu0
      %v11169 = vadd.f32 %v10996, %v11168
      %v11170 = vpop.f32.mrf.mxu0
      %v11171 = vpop.f32.mrf.mxu0
      %v11172 = vadd.f32 %v10996, %v11171
      %v11173 = vpop.f32.mrf.mxu0
      %11174 = vmatprep.mubr.bf16.mxu0 0
      %11175 = vmatmul.mubr.bf16.gmra.mxu0 %v10971
      %v11176 = vpop.f32.mrf.mxu0
      %v11177 = vadd.f32 %v10996, %v11176
      %v11178 = vpop.f32.mrf.mxu0
      %v11179 = vpop.f32.mrf.mxu0
      %v11180 = vadd.f32 %v10996, %v11179
      %v11181 = vpop.f32.mrf.mxu0
      %11182 = vmatprep.mubr.bf16.mxu0 0
      %11183 = vmatmul.mubr.bf16.gmra.mxu0 %v10972
      %v11184 = vpop.f32.mrf.mxu0
      %v11185 = vadd.f32 %v10996, %v11184
      %v11186 = vpop.f32.mrf.mxu0
      %v11187 = vpop.f32.mrf.mxu0
      %v11188 = vadd.f32 %v10996, %v11187
      %v11189 = vpop.f32.mrf.mxu0
      %11190 = vmatprep.mubr.bf16.mxu0 0
      %11191 = vmatmul.mubr.bf16.gmra.mxu0 %v10973
      %v11192 = vpop.f32.mrf.mxu0
      %v11193 = vadd.f32 %v10996, %v11192
      %v11194 = vpop.f32.mrf.mxu0
      %v11195 = vpop.f32.mrf.mxu0
      %v11196 = vadd.f32 %v10996, %v11195
      %v11197 = vpop.f32.mrf.mxu0
      %11198 = vmatprep.mubr.bf16.mxu0 0
      %11199 = vmatmul.mubr.bf16.gmra.mxu0 %v10974
      %v11200 = vpop.f32.mrf.mxu0
      %v11201 = vadd.f32 %v10996, %v11200
      %v11202 = vpop.f32.mrf.mxu0
      %v11203 = vpop.f32.mrf.mxu0
      %v11204 = vadd.f32 %v10996, %v11203
      %v11205 = vpop.f32.mrf.mxu0
      %11206 = vdwg.mxu0
      %11207 = vst [vmem:[%s386] sm:$0xff] %v11081
      %11208 = vst [vmem:[%s386 + $0x8] sm:$0xff] %v11084
      %11209 = vst [vmem:[%s386 + $0x10] sm:$0xff] %v11089
      %11210 = vst [vmem:[%s386 + $0x18] sm:$0xff] %v11092
      %11211 = vst [vmem:[%s386 + $0x20] sm:$0xff] %v11097
      %11212 = vst [vmem:[%s386 + $0x28] sm:$0xff] %v11100
      %11213 = vst [vmem:[%s386 + $0x30] sm:$0xff] %v11105
      %11214 = vst [vmem:[%s386 + $0x38] sm:$0xff] %v11108
      %11215 = vst [vmem:[%s386 + $0x40] sm:$0xff] %v11113
      %11216 = vst [vmem:[%s386 + $0x48] sm:$0xff] %v11116
      %11217 = vst [vmem:[%s386 + $0x50] sm:$0xff] %v11121
      %11218 = vst [vmem:[%s386 + $0x58] sm:$0xff] %v11124
      %11219 = vst [vmem:[%s386 + $0x60] sm:$0xff] %v11129
      %11220 = vst [vmem:[%s386 + $0x68] sm:$0xff] %v11132
      %11221 = vst [vmem:[%s386 + $0x70] sm:$0xff] %v11137
      %11222 = vst [vmem:[%s386 + $0x78] sm:$0xff] %v11140
      %11223 = vst [vmem:[%s386 + $0x80] sm:$0xff] %v11145
      %11224 = vst [vmem:[%s386 + $0x88] sm:$0xff] %v11148
      %11225 = vst [vmem:[%s386 + $0x90] sm:$0xff] %v11153
      %11226 = vst [vmem:[%s386 + $0x98] sm:$0xff] %v11156
      %11227 = vst [vmem:[%s386 + $0xa0] sm:$0xff] %v11161
      %11228 = vst [vmem:[%s386 + $0xa8] sm:$0xff] %v11164
      %11229 = vst [vmem:[%s386 + $0xb0] sm:$0xff] %v11169
      %11230 = vst [vmem:[%s386 + $0xb8] sm:$0xff] %v11172
      %11231 = vst [vmem:[%s386 + $0xc0] sm:$0xff] %v11177
      %11232 = vst [vmem:[%s386 + $0xc8] sm:$0xff] %v11180
      %11233 = vst [vmem:[%s386 + $0xd0] sm:$0xff] %v11185
      %11234 = vst [vmem:[%s386 + $0xd8] sm:$0xff] %v11188
      %11235 = vst [vmem:[%s386 + $0xe0] sm:$0xff] %v11193
      %11236 = vst [vmem:[%s386 + $0xe8] sm:$0xff] %v11196
      %11237 = vst [vmem:[%s386 + $0xf0] sm:$0xff] %v11201
      %11238 = vst [vmem:[%s386 + $0xf8] sm:$0xff] %v11204
      %p11239 = scmp.lt.s32.totalorder %s22, 1
      %s11240 = scalar_select %p11239, %s22, 1
      %s11241 = smul.addr %s11240, 32
      %s11242 = smul.addr %s11241, 8
      %s11243 = scalar_lea.vmem %s11, %s11242
      // Predicated region
      $region65: #{model_forward.1} parent=63 // pred_check
        %p11244 = pneg %p276
      $region66: #{model_forward.1} parent=63 // pred_check_branch
        %11246 = sbr.rel (%p11244) target = $region68
      $region67: #{model_forward.1} parent=63 // pred_region
        _
      $region68: #{model_forward.1} parent=63 // pred_fallthru
        _
    $region64: #{model_forward.1} parent=5 // pred_fallthru
      _
    %p11247 = scmp.le.s32.totalorder 2, %s17
    // Predicated region
    $region69: #{model_forward.1} parent=5 // pred_check
      %p11248 = pneg %p11247
    $region70: #{model_forward.1} parent=5 // pred_check_branch
      %11250 = sbr.rel (%p11248) target = $region72
    $region71: #{model_forward.1} parent=5 // pred_region
      %s11251 = ssub.s32 %s17, 2
      // Predicated region
      $region73: #{model_forward.1} parent=71 // pred_check
        %p11252 = pneg %p282
      $region74: #{model_forward.1} parent=71 // pred_check_branch
        %11254 = sbr.rel (%p11252) target = $region76
      $region75: #{model_forward.1} parent=71 // pred_region
        %p11255 = scmp.lt.s32.totalorder %s23, 1
        %s11256 = scalar_select %p11255, %s23, 1
        %s11257 = smul.addr %s11256, 32
        %s11258 = smul.addr %s11257, 8
        %s11259 = scalar_lea.vmem %s11, %s11258
      $region76: #{model_forward.1} parent=71 // pred_fallthru
        _
    $region72: #{model_forward.1} parent=5 // pred_fallthru
      _
  $region6: #{model_forward.1} parent=0 // loop_footer
    %s21 = sadd.s32 1, %s17
  $region7: #{model_forward.1} parent=0 // loop_footer_branch
    %16 = sbr.rel target = $region3
  $region8: #{model_forward.1} parent=0 // loop_exit
    _

</llo_original>
